<compile_context>
chip_gen: v5e
topology: v5e:2x2
jax: 0.10.0
libtpu: 0.0.40
codegen_flags: <defaults>
</compile_context>

<pallas_src>
import functools

import jax
import jax.numpy as jnp
from jax.experimental import pallas as pl
from jax.experimental.pallas import tpu as pltpu


def _hlstm_kernel(x_ref, wih0_ref, b0_ref, wf_ref, b1_ref, avg_ref,
                  out_ref, xproj_ref, hcat_ref, *, num_steps, batch, hp):
    """Whole sequence handled in one kernel invocation (no grid).

    Layouts (Hp = hidden padded to a 128-lane multiple):
      x_ref     : (T*B, F)     time-major rows (row = t*B + b)
      wih0_ref  : (F, 4*Hp)    layer-0 input weights, gate-block padded
      b0_ref    : (1, 4*Hp)    combined layer-0 bias (f32)
      wf_ref    : (2*Hp, 8*Hp) wavefront-fused weight [[Whh0, Wih1],[0, Whh1]]
      b1_ref    : (1, 4*Hp)    combined layer-1 bias (f32)
      avg_ref   : (S, B)       averaging matrix (AdaptiveAvgPool1d(1))
      out_ref   : (S, Hp)
      xproj_ref : (T*B, 4*Hp)  VMEM scratch: hoisted layer-0 input projection
      hcat_ref  : (B, 2*Hp)    VMEM scratch: persistent [h0 | h1] carry
    """
    mm_dt = wf_ref.dtype

    # ---- Prologue: hoist the layer-0 input projection out of the recurrence.
    # One big GEMM instead of T tiny ones; bias folded in here once.
    xproj_ref[...] = (
        jnp.dot(x_ref[...], wih0_ref[...], preferred_element_type=jnp.float32)
        + b0_ref[...])

    # Loop-invariant layer-1 bias: load + broadcast exactly once.
    b1b = jnp.broadcast_to(b1_ref[...], (batch, 4 * hp))

    def sig(v):
        # sigmoid(x) == 0.5*tanh(0.5*x) + 0.5 exactly; single EUP push per
        # gate instead of exp + divide.
        return 0.5 * jnp.tanh(0.5 * v) + 0.5

    def act(gates, c):
        # PyTorch gate order along lanes: [i | f | g | o], each hp wide
        # (hp is a 128-lane multiple -> plain vreg views, no XLU shuffles).
        i = sig(gates[:, 0 * hp:1 * hp])
        f = sig(gates[:, 1 * hp:2 * hp])
        g = jnp.tanh(gates[:, 2 * hp:3 * hp])
        o = sig(gates[:, 3 * hp:4 * hp])
        c_new = f * c + i * g
        h_new = o * jnp.tanh(c_new)
        return h_new, c_new

    zero = jnp.zeros((batch, hp), jnp.float32)

    # ---- Wavefront prologue: layer 0 at t=0 (h0(-1)=0, no recurrent term).
    h0, c0 = act(xproj_ref[pl.ds(0, batch), :], zero)
    hcat_ref[:, 0 * hp:1 * hp] = h0.astype(mm_dt)
    hcat_ref[:, 1 * hp:2 * hp] = jnp.zeros((batch, hp), mm_dt)   # h1(-1) = 0

    # ---- Skewed recurrence: iteration t computes layer 1 at time t and
    # layer 0 at time t+1 from ONE dot against the fused, loop-invariant RHS:
    #   fused[:, :4hp] = h0(t) @ Whh0                   (layer-0 rec. for t+1)
    #   fused[:, 4hp:] = h0(t) @ Wih1 + h1(t-1) @ Whh1  (layer-1 gates at t)
    def step(t, carry):
        c0, c1 = carry
        fused = jnp.dot(hcat_ref[...], wf_ref[...],
                        preferred_element_type=jnp.float32)      # (B, 8*hp)
        # Layer 1 at time t.
        h1, c1 = act(fused[:, 4 * hp:8 * hp] + b1b, c1)
        # Layer 0 at time t+1.
        row = pl.multiple_of((t + 1) * batch, batch)
        g0 = xproj_ref[pl.ds(row, batch), :] + fused[:, 0 * hp:4 * hp]
        h0, c0 = act(g0, c0)
        hcat_ref[:, 0 * hp:1 * hp] = h0.astype(mm_dt)
        hcat_ref[:, 1 * hp:2 * hp] = h1.astype(mm_dt)
        return c0, c1

    # Full unroll only for short sequences; partial unroll keeps instruction
    # memory and compile time bounded for long T.
    unroll = True if num_steps <= 16 else 4
    _, c1 = jax.lax.fori_loop(0, num_steps - 1, step, (c0, zero),
                              unroll=unroll)

    # ---- Wavefront epilogue: layer 1 at the last time step (the layer-0
    # half of the fused product is simply discarded).
    fused = jnp.dot(hcat_ref[...], wf_ref[...],
                    preferred_element_type=jnp.float32)
    h1, _ = act(fused[:, 4 * hp:8 * hp] + b1b, c1)

    # ---- Epilogue (runs once): AdaptiveAvgPool1d(1) over the time-series
    # axis on the final layer-1 hidden state, as a tiny (S,B)@(B,Hp) matmul.
    out_ref[...] = jnp.dot(avg_ref[...], h1,
                           preferred_element_type=jnp.float32)


def _pad_gates_cols(w_t, h, hp):
    """(in, 4h) -> (in, 4hp): zero-pad each gate block [i|f|g|o] to hp lanes."""
    if h == hp:
        return w_t
    out = jnp.zeros((w_t.shape[0], 4 * hp), w_t.dtype)
    for k in range(4):
        out = out.at[:, k * hp:k * hp + h].set(w_t[:, k * h:(k + 1) * h])
    return out


def _pad_rows(w, hp):
    pad = hp - w.shape[0]
    return w if pad == 0 else jnp.pad(w, ((0, pad), (0, 0)))


def hierarchical_lstm_forward(x, params, *, matmul_dtype=jnp.float32):
    """x: (S, N, T, F) float32. Returns (S, H) float32.

    matmul_dtype=jnp.bfloat16 is the v6e/v7x fast path (f32 accumulation and
    f32 h/c state are preserved); default f32 keeps exact parity with the
    reference.
    """
    S, N, T, F = x.shape
    H = params["whh_l0"].shape[1]
    B = S * N
    Hp = ((H + 127) // 128) * 128          # pad hidden to a 128-lane multiple

    # Time-major rows so the hoisted projection can be sliced per time step.
    x_tbf = jnp.transpose(x.reshape(B, T, F), (1, 0, 2))       # (T, B, F)
    x2d = x_tbf.reshape(T * B, F).astype(matmul_dtype)

    # Weights pre-transposed to (in, 4H) so gates sit on the lane axis, each
    # gate block padded to Hp lanes and each h input padded to Hp rows.
    # NOTE: correctness of the padding relies on the padded weight/bias
    # entries being exact zeros (padded gate pre-activations are then 0, so
    # padded c stays 0 and padded h stays 0 through the recurrence).
    wih0 = _pad_gates_cols(params["wih_l0"].T, H, Hp).astype(matmul_dtype)
    whh0 = _pad_rows(_pad_gates_cols(params["whh_l0"].T, H, Hp), Hp)
    wih1 = _pad_rows(_pad_gates_cols(params["wih_l1"].T, H, Hp), Hp)
    whh1 = _pad_rows(_pad_gates_cols(params["whh_l1"].T, H, Hp), Hp)
    # Wavefront-fused weight: [h0(t) | h1(t-1)] @ wf gives the layer-0(t+1)
    # recurrent term in the first 4Hp lanes and the layer-1(t) gates in the
    # last 4Hp lanes.
    wf = jnp.concatenate(
        [jnp.concatenate([whh0, wih1], axis=1),
         jnp.concatenate([jnp.zeros_like(whh1), whh1], axis=1)],
        axis=0).astype(matmul_dtype)                            # (2Hp, 8Hp)

    b0 = _pad_gates_cols(
        (params["bih_l0"] + params["bhh_l0"]).reshape(1, 4 * H), H, Hp)
    b1 = _pad_gates_cols(
        (params["bih_l1"] + params["bhh_l1"]).reshape(1, 4 * H), H, Hp)

    # avg[s, s*N + n] = 1/N  ->  mean over the time-series axis.
    avg = jnp.repeat(jnp.eye(S, dtype=jnp.float32), N, axis=1) / float(N)

    kernel = functools.partial(_hlstm_kernel, num_steps=T, batch=B, hp=Hp)

    # Explicit scoped-VMEM budget sized from the real operand+scratch
    # footprint (scoped defaults are only 16/32 MiB), capped at v7x's 64 MiB.
    operands = (x2d, wih0, b0, wf, b1, avg)
    footprint = sum(int(a.size) * a.dtype.itemsize for a in operands)
    footprint += S * Hp * 4                                     # output
    footprint += T * B * 4 * Hp * 4                             # xproj scratch
    footprint += B * 2 * Hp * jnp.dtype(matmul_dtype).itemsize  # hcat scratch
    vmem_limit = int(min(64 * 2**20, max(2 * footprint + (2 << 20), 32 << 20)))

    # TODO(synk): for B >= 16 add a 2-way "parallel" batch grid axis (second
    # v7x TensorCore) and, once the xproj scratch approaches ~32 MiB, switch
    # to a time-chunked pipeline (emit_pipeline with x kept in HBM); both are
    # no-ops at this demo size.
    out_padded = pl.pallas_call(
        kernel,
        out_shape=jax.ShapeDtypeStruct((S, Hp), jnp.float32),
        # No grid / no BlockSpecs: all operands are loaded to VMEM exactly once.
        scratch_shapes=[
            pltpu.VMEM((T * B, 4 * Hp), jnp.float32),   # hoisted x projection
            pltpu.VMEM((B, 2 * Hp), matmul_dtype),      # persistent [h0 | h1]
        ],
        compiler_params=pltpu.CompilerParams(vmem_limit_bytes=vmem_limit),
    )(x2d, wih0, b0, wf, b1, avg)

    # Strip the lane padding outside the kernel (kernel stores stay lane-dense).
    return out_padded[:, :H]


def reference_forward(x, params):
    """Pure-JAX reference matching torch.nn.LSTM(num_layers=2) + avg pool."""
    S, N, T, F = x.shape
    H = params["whh_l0"].shape[1]
    B = S * N
    xb = x.reshape(B, T, F)

    def cell(x_t, h, c, wih, whh, bih, bhh):
        gates = x_t @ wih.T + bih + h @ whh.T + bhh
        i, f, g, o = jnp.split(gates, 4, axis=-1)
        c_new = jax.nn.sigmoid(f) * c + jax.nn.sigmoid(i) * jnp.tanh(g)
        h_new = jax.nn.sigmoid(o) * jnp.tanh(c_new)
        return h_new, c_new

    h0 = jnp.zeros((B, H), jnp.float32)
    c0 = jnp.zeros((B, H), jnp.float32)
    h1 = jnp.zeros((B, H), jnp.float32)
    c1 = jnp.zeros((B, H), jnp.float32)
    for t in range(T):
        h0, c0 = cell(xb[:, t, :], h0, c0, params["wih_l0"], params["whh_l0"],
                      params["bih_l0"], params["bhh_l0"])
        h1, c1 = cell(h0, h1, c1, params["wih_l1"], params["whh_l1"],
                      params["bih_l1"], params["bhh_l1"])
    last = h1.reshape(S, N, H)           # (S, N, H)
    return jnp.mean(last, axis=1)        # AdaptiveAvgPool1d(1) + squeeze


def init_params(key, num_features, hidden_size):
    """Deterministic init matching PyTorch LSTM parameter shapes."""
    H = hidden_size
    k = 1.0 / jnp.sqrt(jnp.float32(H))
    shapes = {
        "wih_l0": (4 * H, num_features),
        "whh_l0": (4 * H, H),
        "bih_l0": (4 * H,),
        "bhh_l0": (4 * H,),
        "wih_l1": (4 * H, H),
        "whh_l1": (4 * H, H),
        "bih_l1": (4 * H,),
        "bhh_l1": (4 * H,),
    }
    params = {}
    for name, shape in shapes.items():
        key, sub = jax.random.split(key)
        params[name] = jax.random.uniform(sub, shape, jnp.float32, -k, k)
    return params


if __name__ == "__main__":
    # Small shapes consistent with the module's forward pass.
    num_samples, num_time_series = 2, 4
    num_time_steps, num_features = 8, 8
    hidden_size = 32

    key = jax.random.PRNGKey(0)
    key, pk, xk = jax.random.split(key, 3)
    params = init_params(pk, num_features, hidden_size)
    x = jax.random.normal(
        xk, (num_samples, num_time_series, num_time_steps, num_features),
        dtype=jnp.float32)

    out = jax.block_until_ready(hierarchical_lstm_forward(x, params))
    ref = jax.block_until_ready(reference_forward(x, params))

    assert out.shape == (num_samples, hidden_size), out.shape
    assert jnp.allclose(out, ref, rtol=1e-5, atol=1e-5), (
        "mismatch vs reference: max abs err "
        f"{float(jnp.max(jnp.abs(out - ref)))}")
    print("KERNEL_OK")
</pallas_src>

<mosaic_0001>
module attributes {stable_mosaic.version = 11 : i64} {
  func.func @_hlstm_kernel(%arg0: memref<64x8xf32, #tpu.memory_space<vmem>>, %arg1: memref<8x512xf32, #tpu.memory_space<vmem>>, %arg2: memref<1x512xf32, #tpu.memory_space<vmem>>, %arg3: memref<256x1024xf32, #tpu.memory_space<vmem>>, %arg4: memref<1x512xf32, #tpu.memory_space<vmem>>, %arg5: memref<2x8xf32, #tpu.memory_space<vmem>>, %arg6: memref<2x128xf32, #tpu.memory_space<vmem>>, %arg7: memref<64x512xf32, #tpu.memory_space<vmem>>, %arg8: memref<8x256xf32, #tpu.memory_space<vmem>>) attributes {dimension_semantics = [], scalar_prefetch = 0 : i64, scratch_operands = 2 : i64, tpu.core_type = #tpu.core_type<tc>} {
    %c0 = arith.constant 0 : index
    %c0_0 = arith.constant 0 : index
    %0 = vector.load %arg0[%c0, %c0_0] : memref<64x8xf32, #tpu.memory_space<vmem>>, vector<64x8xf32>
    %c0_1 = arith.constant 0 : index
    %c0_2 = arith.constant 0 : index
    %1 = vector.load %arg1[%c0_1, %c0_2] : memref<8x512xf32, #tpu.memory_space<vmem>>, vector<8x512xf32>
    %cst = arith.constant dense<0.000000e+00> : vector<64x512xf32>
    %2 = tpu.matmul %0, %1, %cst {dimension_numbers = #tpu.dot_dimension_numbers<[1], [0], [0], [1], [0, 0, 1, 1], [], []>} : vector<64x8xf32>, vector<8x512xf32>, vector<64x512xf32> -> vector<64x512xf32>
    %c0_3 = arith.constant 0 : index
    %c0_4 = arith.constant 0 : index
    %3 = vector.load %arg2[%c0_3, %c0_4] : memref<1x512xf32, #tpu.memory_space<vmem>>, vector<1x512xf32>
    %4 = vector.broadcast %3 : vector<1x512xf32> to vector<64x512xf32>
    %5 = arith.addf %2, %4 : vector<64x512xf32>
    %c0_5 = arith.constant 0 : index
    %c0_6 = arith.constant 0 : index
    %6 = vector.load %arg7[%c0_5, %c0_6] : memref<64x512xf32, #tpu.memory_space<vmem>>, vector<64x512xf32>
    tpu.vector_store %arg7[%c0_5, %c0_6], %5 {strides = array<i32>} : memref<64x512xf32, #tpu.memory_space<vmem>>, vector<64x512xf32>,
    %c0_7 = arith.constant 0 : index
    %c0_8 = arith.constant 0 : index
    %7 = vector.load %arg4[%c0_7, %c0_8] : memref<1x512xf32, #tpu.memory_space<vmem>>, vector<1x512xf32>
    %8 = vector.shape_cast %7 : vector<1x512xf32> to vector<1x512xf32>
    %9 = vector.broadcast %8 : vector<1x512xf32> to vector<8x512xf32>
    %cst_9 = arith.constant 0.000000e+00 : f32
    %10 = vector.broadcast %cst_9 : f32 to vector<8x128xf32>
    %c0_10 = arith.constant 0 : index
    %c0_11 = arith.constant 0 : index
    %11 = vector.load %arg7[%c0_10, %c0_11] : memref<64x512xf32, #tpu.memory_space<vmem>>, vector<8x512xf32>
    %12 = vector.extract_strided_slice %11 {offsets = [0, 0], sizes = [8, 128], strides = [1, 1]} : vector<8x512xf32> to vector<8x128xf32>
    %cst_12 = arith.constant 5.000000e-01 : f32
    %13 = vector.broadcast %cst_12 : f32 to vector<8x128xf32>
    %14 = arith.mulf %13, %12 : vector<8x128xf32>
    %15 = math.tanh %14 : vector<8x128xf32>
    %cst_13 = arith.constant 5.000000e-01 : f32
    %16 = vector.broadcast %cst_13 : f32 to vector<8x128xf32>
    %17 = arith.mulf %16, %15 : vector<8x128xf32>
    %cst_14 = arith.constant 5.000000e-01 : f32
    %18 = vector.broadcast %cst_14 : f32 to vector<8x128xf32>
    %19 = arith.addf %17, %18 : vector<8x128xf32>
    %20 = vector.extract_strided_slice %11 {offsets = [0, 128], sizes = [8, 128], strides = [1, 1]} : vector<8x512xf32> to vector<8x128xf32>
    %cst_15 = arith.constant 5.000000e-01 : f32
    %21 = vector.broadcast %cst_15 : f32 to vector<8x128xf32>
    %22 = arith.mulf %21, %20 : vector<8x128xf32>
    %23 = math.tanh %22 : vector<8x128xf32>
    %cst_16 = arith.constant 5.000000e-01 : f32
    %24 = vector.broadcast %cst_16 : f32 to vector<8x128xf32>
    %25 = arith.mulf %24, %23 : vector<8x128xf32>
    %cst_17 = arith.constant 5.000000e-01 : f32
    %26 = vector.broadcast %cst_17 : f32 to vector<8x128xf32>
    %27 = arith.addf %25, %26 : vector<8x128xf32>
    %28 = vector.extract_strided_slice %11 {offsets = [0, 256], sizes = [8, 128], strides = [1, 1]} : vector<8x512xf32> to vector<8x128xf32>
    %29 = math.tanh %28 : vector<8x128xf32>
    %30 = vector.extract_strided_slice %11 {offsets = [0, 384], sizes = [8, 128], strides = [1, 1]} : vector<8x512xf32> to vector<8x128xf32>
    %cst_18 = arith.constant 5.000000e-01 : f32
    %31 = vector.broadcast %cst_18 : f32 to vector<8x128xf32>
    %32 = arith.mulf %31, %30 : vector<8x128xf32>
    %33 = math.tanh %32 : vector<8x128xf32>
    %cst_19 = arith.constant 5.000000e-01 : f32
    %34 = vector.broadcast %cst_19 : f32 to vector<8x128xf32>
    %35 = arith.mulf %34, %33 : vector<8x128xf32>
    %cst_20 = arith.constant 5.000000e-01 : f32
    %36 = vector.broadcast %cst_20 : f32 to vector<8x128xf32>
    %37 = arith.addf %35, %36 : vector<8x128xf32>
    %38 = arith.mulf %27, %10 : vector<8x128xf32>
    %39 = arith.mulf %19, %29 : vector<8x128xf32>
    %40 = arith.addf %38, %39 : vector<8x128xf32>
    %41 = math.tanh %40 : vector<8x128xf32>
    %42 = arith.mulf %37, %41 : vector<8x128xf32>
    %c0_21 = arith.constant 0 : index
    %c0_22 = arith.constant 0 : index
    %43 = vector.load %arg8[%c0_21, %c0_22] : memref<8x256xf32, #tpu.memory_space<vmem>>, vector<8x128xf32>
    tpu.vector_store %arg8[%c0_21, %c0_22], %42 {strides = array<i32>} : memref<8x256xf32, #tpu.memory_space<vmem>>, vector<8x128xf32>,
    %cst_23 = arith.constant 0.000000e+00 : f32
    %44 = vector.broadcast %cst_23 : f32 to vector<8x128xf32>
    %c0_24 = arith.constant 0 : index
    %c128 = arith.constant 128 : index
    %45 = vector.load %arg8[%c0_24, %c128] : memref<8x256xf32, #tpu.memory_space<vmem>>, vector<8x128xf32>
    tpu.vector_store %arg8[%c0_24, %c128], %44 {strides = array<i32>} : memref<8x256xf32, #tpu.memory_space<vmem>>, vector<8x128xf32>,
    %c0_i32 = arith.constant 0 : i32
    %c0_25 = arith.constant 0 : index
    %c0_26 = arith.constant 0 : index
    %46 = vector.load %arg8[%c0_25, %c0_26] : memref<8x256xf32, #tpu.memory_space<vmem>>, vector<8x256xf32>
    %c0_27 = arith.constant 0 : index
    %c0_28 = arith.constant 0 : index
    %47 = vector.load %arg3[%c0_27, %c0_28] : memref<256x1024xf32, #tpu.memory_space<vmem>>, vector<256x1024xf32>
    %cst_29 = arith.constant dense<0.000000e+00> : vector<8x1024xf32>
    %48 = tpu.matmul %46, %47, %cst_29 {dimension_numbers = #tpu.dot_dimension_numbers<[1], [0], [0], [1], [0, 0, 1, 1], [], []>} : vector<8x256xf32>, vector<256x1024xf32>, vector<8x1024xf32> -> vector<8x1024xf32>
    %49 = vector.extract_strided_slice %48 {offsets = [0, 512], sizes = [8, 512], strides = [1, 1]} : vector<8x1024xf32> to vector<8x512xf32>
    %50 = arith.addf %49, %9 : vector<8x512xf32>
    %51 = vector.extract_strided_slice %50 {offsets = [0, 0], sizes = [8, 128], strides = [1, 1]} : vector<8x512xf32> to vector<8x128xf32>
    %cst_30 = arith.constant 5.000000e-01 : f32
    %52 = vector.broadcast %cst_30 : f32 to vector<8x128xf32>
    %53 = arith.mulf %52, %51 : vector<8x128xf32>
    %54 = math.tanh %53 : vector<8x128xf32>
    %cst_31 = arith.constant 5.000000e-01 : f32
    %55 = vector.broadcast %cst_31 : f32 to vector<8x128xf32>
    %56 = arith.mulf %55, %54 : vector<8x128xf32>
    %cst_32 = arith.constant 5.000000e-01 : f32
    %57 = vector.broadcast %cst_32 : f32 to vector<8x128xf32>
    %58 = arith.addf %56, %57 : vector<8x128xf32>
    %59 = vector.extract_strided_slice %50 {offsets = [0, 128], sizes = [8, 128], strides = [1, 1]} : vector<8x512xf32> to vector<8x128xf32>
    %cst_33 = arith.constant 5.000000e-01 : f32
    %60 = vector.broadcast %cst_33 : f32 to vector<8x128xf32>
    %61 = arith.mulf %60, %59 : vector<8x128xf32>
    %62 = math.tanh %61 : vector<8x128xf32>
    %cst_34 = arith.constant 5.000000e-01 : f32
    %63 = vector.broadcast %cst_34 : f32 to vector<8x128xf32>
    %64 = arith.mulf %63, %62 : vector<8x128xf32>
    %cst_35 = arith.constant 5.000000e-01 : f32
    %65 = vector.broadcast %cst_35 : f32 to vector<8x128xf32>
    %66 = arith.addf %64, %65 : vector<8x128xf32>
    %67 = vector.extract_strided_slice %50 {offsets = [0, 256], sizes = [8, 128], strides = [1, 1]} : vector<8x512xf32> to vector<8x128xf32>
    %68 = math.tanh %67 : vector<8x128xf32>
    %69 = vector.extract_strided_slice %50 {offsets = [0, 384], sizes = [8, 128], strides = [1, 1]} : vector<8x512xf32> to vector<8x128xf32>
    %cst_36 = arith.constant 5.000000e-01 : f32
    %70 = vector.broadcast %cst_36 : f32 to vector<8x128xf32>
    %71 = arith.mulf %70, %69 : vector<8x128xf32>
    %72 = math.tanh %71 : vector<8x128xf32>
    %cst_37 = arith.constant 5.000000e-01 : f32
    %73 = vector.broadcast %cst_37 : f32 to vector<8x128xf32>
    %74 = arith.mulf %73, %72 : vector<8x128xf32>
    %cst_38 = arith.constant 5.000000e-01 : f32
    %75 = vector.broadcast %cst_38 : f32 to vector<8x128xf32>
    %76 = arith.addf %74, %75 : vector<8x128xf32>
    %77 = arith.mulf %66, %10 : vector<8x128xf32>
    %78 = arith.mulf %58, %68 : vector<8x128xf32>
    %79 = arith.addf %77, %78 : vector<8x128xf32>
    %80 = math.tanh %79 : vector<8x128xf32>
    %81 = arith.mulf %76, %80 : vector<8x128xf32>
    %c1_i32 = arith.constant 1 : i32
    %82 = arith.addi %c0_i32, %c1_i32 : i32
    %c8_i32 = arith.constant 8 : i32
    %83 = arith.muli %82, %c8_i32 : i32
    %84 = tpu.assume_multiple %83, 8 : i32
    %85 = arith.index_cast %84 : i32 to index
    %c0_39 = arith.constant 0 : index
    %86 = vector.load %arg7[%85, %c0_39] : memref<64x512xf32, #tpu.memory_space<vmem>>, vector<8x512xf32>
    %87 = vector.extract_strided_slice %48 {offsets = [0, 0], sizes = [8, 512], strides = [1, 1]} : vector<8x1024xf32> to vector<8x512xf32>
    %88 = arith.addf %86, %87 : vector<8x512xf32>
    %89 = vector.extract_strided_slice %88 {offsets = [0, 0], sizes = [8, 128], strides = [1, 1]} : vector<8x512xf32> to vector<8x128xf32>
    %cst_40 = arith.constant 5.000000e-01 : f32
    %90 = vector.broadcast %cst_40 : f32 to vector<8x128xf32>
    %91 = arith.mulf %90, %89 : vector<8x128xf32>
    %92 = math.tanh %91 : vector<8x128xf32>
    %cst_41 = arith.constant 5.000000e-01 : f32
    %93 = vector.broadcast %cst_41 : f32 to vector<8x128xf32>
    %94 = arith.mulf %93, %92 : vector<8x128xf32>
    %cst_42 = arith.constant 5.000000e-01 : f32
    %95 = vector.broadcast %cst_42 : f32 to vector<8x128xf32>
    %96 = arith.addf %94, %95 : vector<8x128xf32>
    %97 = vector.extract_strided_slice %88 {offsets = [0, 128], sizes = [8, 128], strides = [1, 1]} : vector<8x512xf32> to vector<8x128xf32>
    %cst_43 = arith.constant 5.000000e-01 : f32
    %98 = vector.broadcast %cst_43 : f32 to vector<8x128xf32>
    %99 = arith.mulf %98, %97 : vector<8x128xf32>
    %100 = math.tanh %99 : vector<8x128xf32>
    %cst_44 = arith.constant 5.000000e-01 : f32
    %101 = vector.broadcast %cst_44 : f32 to vector<8x128xf32>
    %102 = arith.mulf %101, %100 : vector<8x128xf32>
    %cst_45 = arith.constant 5.000000e-01 : f32
    %103 = vector.broadcast %cst_45 : f32 to vector<8x128xf32>
    %104 = arith.addf %102, %103 : vector<8x128xf32>
    %105 = vector.extract_strided_slice %88 {offsets = [0, 256], sizes = [8, 128], strides = [1, 1]} : vector<8x512xf32> to vector<8x128xf32>
    %106 = math.tanh %105 : vector<8x128xf32>
    %107 = vector.extract_strided_slice %88 {offsets = [0, 384], sizes = [8, 128], strides = [1, 1]} : vector<8x512xf32> to vector<8x128xf32>
    %cst_46 = arith.constant 5.000000e-01 : f32
    %108 = vector.broadcast %cst_46 : f32 to vector<8x128xf32>
    %109 = arith.mulf %108, %107 : vector<8x128xf32>
    %110 = math.tanh %109 : vector<8x128xf32>
    %cst_47 = arith.constant 5.000000e-01 : f32
    %111 = vector.broadcast %cst_47 : f32 to vector<8x128xf32>
    %112 = arith.mulf %111, %110 : vector<8x128xf32>
    %cst_48 = arith.constant 5.000000e-01 : f32
    %113 = vector.broadcast %cst_48 : f32 to vector<8x128xf32>
    %114 = arith.addf %112, %113 : vector<8x128xf32>
    %115 = arith.mulf %104, %40 : vector<8x128xf32>
    %116 = arith.mulf %96, %106 : vector<8x128xf32>
    %117 = arith.addf %115, %116 : vector<8x128xf32>
    %118 = math.tanh %117 : vector<8x128xf32>
    %119 = arith.mulf %114, %118 : vector<8x128xf32>
    %c0_49 = arith.constant 0 : index
    %c0_50 = arith.constant 0 : index
    %120 = vector.load %arg8[%c0_49, %c0_50] : memref<8x256xf32, #tpu.memory_space<vmem>>, vector<8x128xf32>
    tpu.vector_store %arg8[%c0_49, %c0_50], %119 {strides = array<i32>} : memref<8x256xf32, #tpu.memory_space<vmem>>, vector<8x128xf32>,
    %c0_51 = arith.constant 0 : index
    %c128_52 = arith.constant 128 : index
    %121 = vector.load %arg8[%c0_51, %c128_52] : memref<8x256xf32, #tpu.memory_space<vmem>>, vector<8x128xf32>
    tpu.vector_store %arg8[%c0_51, %c128_52], %81 {strides = array<i32>} : memref<8x256xf32, #tpu.memory_space<vmem>>, vector<8x128xf32>,
    %c1_i32_53 = arith.constant 1 : i32
    %c0_54 = arith.constant 0 : index
    %c0_55 = arith.constant 0 : index
    %122 = vector.load %arg8[%c0_54, %c0_55] : memref<8x256xf32, #tpu.memory_space<vmem>>, vector<8x256xf32>
    %c0_56 = arith.constant 0 : index
    %c0_57 = arith.constant 0 : index
    %123 = vector.load %arg3[%c0_56, %c0_57] : memref<256x1024xf32, #tpu.memory_space<vmem>>, vector<256x1024xf32>
    %cst_58 = arith.constant dense<0.000000e+00> : vector<8x1024xf32>
    %124 = tpu.matmul %122, %123, %cst_58 {dimension_numbers = #tpu.dot_dimension_numbers<[1], [0], [0], [1], [0, 0, 1, 1], [], []>} : vector<8x256xf32>, vector<256x1024xf32>, vector<8x1024xf32> -> vector<8x1024xf32>
    %125 = vector.extract_strided_slice %124 {offsets = [0, 512], sizes = [8, 512], strides = [1, 1]} : vector<8x1024xf32> to vector<8x512xf32>
    %126 = arith.addf %125, %9 : vector<8x512xf32>
    %127 = vector.extract_strided_slice %126 {offsets = [0, 0], sizes = [8, 128], strides = [1, 1]} : vector<8x512xf32> to vector<8x128xf32>
    %cst_59 = arith.constant 5.000000e-01 : f32
    %128 = vector.broadcast %cst_59 : f32 to vector<8x128xf32>
    %129 = arith.mulf %128, %127 : vector<8x128xf32>
    %130 = math.tanh %129 : vector<8x128xf32>
    %cst_60 = arith.constant 5.000000e-01 : f32
    %131 = vector.broadcast %cst_60 : f32 to vector<8x128xf32>
    %132 = arith.mulf %131, %130 : vector<8x128xf32>
    %cst_61 = arith.constant 5.000000e-01 : f32
    %133 = vector.broadcast %cst_61 : f32 to vector<8x128xf32>
    %134 = arith.addf %132, %133 : vector<8x128xf32>
    %135 = vector.extract_strided_slice %126 {offsets = [0, 128], sizes = [8, 128], strides = [1, 1]} : vector<8x512xf32> to vector<8x128xf32>
    %cst_62 = arith.constant 5.000000e-01 : f32
    %136 = vector.broadcast %cst_62 : f32 to vector<8x128xf32>
    %137 = arith.mulf %136, %135 : vector<8x128xf32>
    %138 = math.tanh %137 : vector<8x128xf32>
    %cst_63 = arith.constant 5.000000e-01 : f32
    %139 = vector.broadcast %cst_63 : f32 to vector<8x128xf32>
    %140 = arith.mulf %139, %138 : vector<8x128xf32>
    %cst_64 = arith.constant 5.000000e-01 : f32
    %141 = vector.broadcast %cst_64 : f32 to vector<8x128xf32>
    %142 = arith.addf %140, %141 : vector<8x128xf32>
    %143 = vector.extract_strided_slice %126 {offsets = [0, 256], sizes = [8, 128], strides = [1, 1]} : vector<8x512xf32> to vector<8x128xf32>
    %144 = math.tanh %143 : vector<8x128xf32>
    %145 = vector.extract_strided_slice %126 {offsets = [0, 384], sizes = [8, 128], strides = [1, 1]} : vector<8x512xf32> to vector<8x128xf32>
    %cst_65 = arith.constant 5.000000e-01 : f32
    %146 = vector.broadcast %cst_65 : f32 to vector<8x128xf32>
    %147 = arith.mulf %146, %145 : vector<8x128xf32>
    %148 = math.tanh %147 : vector<8x128xf32>
    %cst_66 = arith.constant 5.000000e-01 : f32
    %149 = vector.broadcast %cst_66 : f32 to vector<8x128xf32>
    %150 = arith.mulf %149, %148 : vector<8x128xf32>
    %cst_67 = arith.constant 5.000000e-01 : f32
    %151 = vector.broadcast %cst_67 : f32 to vector<8x128xf32>
    %152 = arith.addf %150, %151 : vector<8x128xf32>
    %153 = arith.mulf %142, %79 : vector<8x128xf32>
    %154 = arith.mulf %134, %144 : vector<8x128xf32>
    %155 = arith.addf %153, %154 : vector<8x128xf32>
    %156 = math.tanh %155 : vector<8x128xf32>
    %157 = arith.mulf %152, %156 : vector<8x128xf32>
    %c1_i32_68 = arith.constant 1 : i32
    %158 = arith.addi %c1_i32_53, %c1_i32_68 : i32
    %c8_i32_69 = arith.constant 8 : i32
    %159 = arith.muli %158, %c8_i32_69 : i32
    %160 = tpu.assume_multiple %159, 8 : i32
    %161 = arith.index_cast %160 : i32 to index
    %c0_70 = arith.constant 0 : index
    %162 = vector.load %arg7[%161, %c0_70] : memref<64x512xf32, #tpu.memory_space<vmem>>, vector<8x512xf32>
    %163 = vector.extract_strided_slice %124 {offsets = [0, 0], sizes = [8, 512], strides = [1, 1]} : vector<8x1024xf32> to vector<8x512xf32>
    %164 = arith.addf %162, %163 : vector<8x512xf32>
    %165 = vector.extract_strided_slice %164 {offsets = [0, 0], sizes = [8, 128], strides = [1, 1]} : vector<8x512xf32> to vector<8x128xf32>
    %cst_71 = arith.constant 5.000000e-01 : f32
    %166 = vector.broadcast %cst_71 : f32 to vector<8x128xf32>
    %167 = arith.mulf %166, %165 : vector<8x128xf32>
    %168 = math.tanh %167 : vector<8x128xf32>
    %cst_72 = arith.constant 5.000000e-01 : f32
    %169 = vector.broadcast %cst_72 : f32 to vector<8x128xf32>
    %170 = arith.mulf %169, %168 : vector<8x128xf32>
    %cst_73 = arith.constant 5.000000e-01 : f32
    %171 = vector.broadcast %cst_73 : f32 to vector<8x128xf32>
    %172 = arith.addf %170, %171 : vector<8x128xf32>
    %173 = vector.extract_strided_slice %164 {offsets = [0, 128], sizes = [8, 128], strides = [1, 1]} : vector<8x512xf32> to vector<8x128xf32>
    %cst_74 = arith.constant 5.000000e-01 : f32
    %174 = vector.broadcast %cst_74 : f32 to vector<8x128xf32>
    %175 = arith.mulf %174, %173 : vector<8x128xf32>
    %176 = math.tanh %175 : vector<8x128xf32>
    %cst_75 = arith.constant 5.000000e-01 : f32
    %177 = vector.broadcast %cst_75 : f32 to vector<8x128xf32>
    %178 = arith.mulf %177, %176 : vector<8x128xf32>
    %cst_76 = arith.constant 5.000000e-01 : f32
    %179 = vector.broadcast %cst_76 : f32 to vector<8x128xf32>
    %180 = arith.addf %178, %179 : vector<8x128xf32>
    %181 = vector.extract_strided_slice %164 {offsets = [0, 256], sizes = [8, 128], strides = [1, 1]} : vector<8x512xf32> to vector<8x128xf32>
    %182 = math.tanh %181 : vector<8x128xf32>
    %183 = vector.extract_strided_slice %164 {offsets = [0, 384], sizes = [8, 128], strides = [1, 1]} : vector<8x512xf32> to vector<8x128xf32>
    %cst_77 = arith.constant 5.000000e-01 : f32
    %184 = vector.broadcast %cst_77 : f32 to vector<8x128xf32>
    %185 = arith.mulf %184, %183 : vector<8x128xf32>
    %186 = math.tanh %185 : vector<8x128xf32>
    %cst_78 = arith.constant 5.000000e-01 : f32
    %187 = vector.broadcast %cst_78 : f32 to vector<8x128xf32>
    %188 = arith.mulf %187, %186 : vector<8x128xf32>
    %cst_79 = arith.constant 5.000000e-01 : f32
    %189 = vector.broadcast %cst_79 : f32 to vector<8x128xf32>
    %190 = arith.addf %188, %189 : vector<8x128xf32>
    %191 = arith.mulf %180, %117 : vector<8x128xf32>
    %192 = arith.mulf %172, %182 : vector<8x128xf32>
    %193 = arith.addf %191, %192 : vector<8x128xf32>
    %194 = math.tanh %193 : vector<8x128xf32>
    %195 = arith.mulf %190, %194 : vector<8x128xf32>
    %c0_80 = arith.constant 0 : index
    %c0_81 = arith.constant 0 : index
    %196 = vector.load %arg8[%c0_80, %c0_81] : memref<8x256xf32, #tpu.memory_space<vmem>>, vector<8x128xf32>
    tpu.vector_store %arg8[%c0_80, %c0_81], %195 {strides = array<i32>} : memref<8x256xf32, #tpu.memory_space<vmem>>, vector<8x128xf32>,
    %c0_82 = arith.constant 0 : index
    %c128_83 = arith.constant 128 : index
    %197 = vector.load %arg8[%c0_82, %c128_83] : memref<8x256xf32, #tpu.memory_space<vmem>>, vector<8x128xf32>
    tpu.vector_store %arg8[%c0_82, %c128_83], %157 {strides = array<i32>} : memref<8x256xf32, #tpu.memory_space<vmem>>, vector<8x128xf32>,
    %c2_i32 = arith.constant 2 : i32
    %c0_84 = arith.constant 0 : index
    %c0_85 = arith.constant 0 : index
    %198 = vector.load %arg8[%c0_84, %c0_85] : memref<8x256xf32, #tpu.memory_space<vmem>>, vector<8x256xf32>
    %c0_86 = arith.constant 0 : index
    %c0_87 = arith.constant 0 : index
    %199 = vector.load %arg3[%c0_86, %c0_87] : memref<256x1024xf32, #tpu.memory_space<vmem>>, vector<256x1024xf32>
    %cst_88 = arith.constant dense<0.000000e+00> : vector<8x1024xf32>
    %200 = tpu.matmul %198, %199, %cst_88 {dimension_numbers = #tpu.dot_dimension_numbers<[1], [0], [0], [1], [0, 0, 1, 1], [], []>} : vector<8x256xf32>, vector<256x1024xf32>, vector<8x1024xf32> -> vector<8x1024xf32>
    %201 = vector.extract_strided_slice %200 {offsets = [0, 512], sizes = [8, 512], strides = [1, 1]} : vector<8x1024xf32> to vector<8x512xf32>
    %202 = arith.addf %201, %9 : vector<8x512xf32>
    %203 = vector.extract_strided_slice %202 {offsets = [0, 0], sizes = [8, 128], strides = [1, 1]} : vector<8x512xf32> to vector<8x128xf32>
    %cst_89 = arith.constant 5.000000e-01 : f32
    %204 = vector.broadcast %cst_89 : f32 to vector<8x128xf32>
    %205 = arith.mulf %204, %203 : vector<8x128xf32>
    %206 = math.tanh %205 : vector<8x128xf32>
    %cst_90 = arith.constant 5.000000e-01 : f32
    %207 = vector.broadcast %cst_90 : f32 to vector<8x128xf32>
    %208 = arith.mulf %207, %206 : vector<8x128xf32>
    %cst_91 = arith.constant 5.000000e-01 : f32
    %209 = vector.broadcast %cst_91 : f32 to vector<8x128xf32>
    %210 = arith.addf %208, %209 : vector<8x128xf32>
    %211 = vector.extract_strided_slice %202 {offsets = [0, 128], sizes = [8, 128], strides = [1, 1]} : vector<8x512xf32> to vector<8x128xf32>
    %cst_92 = arith.constant 5.000000e-01 : f32
    %212 = vector.broadcast %cst_92 : f32 to vector<8x128xf32>
    %213 = arith.mulf %212, %211 : vector<8x128xf32>
    %214 = math.tanh %213 : vector<8x128xf32>
    %cst_93 = arith.constant 5.000000e-01 : f32
    %215 = vector.broadcast %cst_93 : f32 to vector<8x128xf32>
    %216 = arith.mulf %215, %214 : vector<8x128xf32>
    %cst_94 = arith.constant 5.000000e-01 : f32
    %217 = vector.broadcast %cst_94 : f32 to vector<8x128xf32>
    %218 = arith.addf %216, %217 : vector<8x128xf32>
    %219 = vector.extract_strided_slice %202 {offsets = [0, 256], sizes = [8, 128], strides = [1, 1]} : vector<8x512xf32> to vector<8x128xf32>
    %220 = math.tanh %219 : vector<8x128xf32>
    %221 = vector.extract_strided_slice %202 {offsets = [0, 384], sizes = [8, 128], strides = [1, 1]} : vector<8x512xf32> to vector<8x128xf32>
    %cst_95 = arith.constant 5.000000e-01 : f32
    %222 = vector.broadcast %cst_95 : f32 to vector<8x128xf32>
    %223 = arith.mulf %222, %221 : vector<8x128xf32>
    %224 = math.tanh %223 : vector<8x128xf32>
    %cst_96 = arith.constant 5.000000e-01 : f32
    %225 = vector.broadcast %cst_96 : f32 to vector<8x128xf32>
    %226 = arith.mulf %225, %224 : vector<8x128xf32>
    %cst_97 = arith.constant 5.000000e-01 : f32
    %227 = vector.broadcast %cst_97 : f32 to vector<8x128xf32>
    %228 = arith.addf %226, %227 : vector<8x128xf32>
    %229 = arith.mulf %218, %155 : vector<8x128xf32>
    %230 = arith.mulf %210, %220 : vector<8x128xf32>
    %231 = arith.addf %229, %230 : vector<8x128xf32>
    %232 = math.tanh %231 : vector<8x128xf32>
    %233 = arith.mulf %228, %232 : vector<8x128xf32>
    %c1_i32_98 = arith.constant 1 : i32
    %234 = arith.addi %c2_i32, %c1_i32_98 : i32
    %c8_i32_99 = arith.constant 8 : i32
    %235 = arith.muli %234, %c8_i32_99 : i32
    %236 = tpu.assume_multiple %235, 8 : i32
    %237 = arith.index_cast %236 : i32 to index
    %c0_100 = arith.constant 0 : index
    %238 = vector.load %arg7[%237, %c0_100] : memref<64x512xf32, #tpu.memory_space<vmem>>, vector<8x512xf32>
    %239 = vector.extract_strided_slice %200 {offsets = [0, 0], sizes = [8, 512], strides = [1, 1]} : vector<8x1024xf32> to vector<8x512xf32>
    %240 = arith.addf %238, %239 : vector<8x512xf32>
    %241 = vector.extract_strided_slice %240 {offsets = [0, 0], sizes = [8, 128], strides = [1, 1]} : vector<8x512xf32> to vector<8x128xf32>
    %cst_101 = arith.constant 5.000000e-01 : f32
    %242 = vector.broadcast %cst_101 : f32 to vector<8x128xf32>
    %243 = arith.mulf %242, %241 : vector<8x128xf32>
    %244 = math.tanh %243 : vector<8x128xf32>
    %cst_102 = arith.constant 5.000000e-01 : f32
    %245 = vector.broadcast %cst_102 : f32 to vector<8x128xf32>
    %246 = arith.mulf %245, %244 : vector<8x128xf32>
    %cst_103 = arith.constant 5.000000e-01 : f32
    %247 = vector.broadcast %cst_103 : f32 to vector<8x128xf32>
    %248 = arith.addf %246, %247 : vector<8x128xf32>
    %249 = vector.extract_strided_slice %240 {offsets = [0, 128], sizes = [8, 128], strides = [1, 1]} : vector<8x512xf32> to vector<8x128xf32>
    %cst_104 = arith.constant 5.000000e-01 : f32
    %250 = vector.broadcast %cst_104 : f32 to vector<8x128xf32>
    %251 = arith.mulf %250, %249 : vector<8x128xf32>
    %252 = math.tanh %251 : vector<8x128xf32>
    %cst_105 = arith.constant 5.000000e-01 : f32
    %253 = vector.broadcast %cst_105 : f32 to vector<8x128xf32>
    %254 = arith.mulf %253, %252 : vector<8x128xf32>
    %cst_106 = arith.constant 5.000000e-01 : f32
    %255 = vector.broadcast %cst_106 : f32 to vector<8x128xf32>
    %256 = arith.addf %254, %255 : vector<8x128xf32>
    %257 = vector.extract_strided_slice %240 {offsets = [0, 256], sizes = [8, 128], strides = [1, 1]} : vector<8x512xf32> to vector<8x128xf32>
    %258 = math.tanh %257 : vector<8x128xf32>
    %259 = vector.extract_strided_slice %240 {offsets = [0, 384], sizes = [8, 128], strides = [1, 1]} : vector<8x512xf32> to vector<8x128xf32>
    %cst_107 = arith.constant 5.000000e-01 : f32
    %260 = vector.broadcast %cst_107 : f32 to vector<8x128xf32>
    %261 = arith.mulf %260, %259 : vector<8x128xf32>
    %262 = math.tanh %261 : vector<8x128xf32>
    %cst_108 = arith.constant 5.000000e-01 : f32
    %263 = vector.broadcast %cst_108 : f32 to vector<8x128xf32>
    %264 = arith.mulf %263, %262 : vector<8x128xf32>
    %cst_109 = arith.constant 5.000000e-01 : f32
    %265 = vector.broadcast %cst_109 : f32 to vector<8x128xf32>
    %266 = arith.addf %264, %265 : vector<8x128xf32>
    %267 = arith.mulf %256, %193 : vector<8x128xf32>
    %268 = arith.mulf %248, %258 : vector<8x128xf32>
    %269 = arith.addf %267, %268 : vector<8x128xf32>
    %270 = math.tanh %269 : vector<8x128xf32>
    %271 = arith.mulf %266, %270 : vector<8x128xf32>
    %c0_110 = arith.constant 0 : index
    %c0_111 = arith.constant 0 : index
    %272 = vector.load %arg8[%c0_110, %c0_111] : memref<8x256xf32, #tpu.memory_space<vmem>>, vector<8x128xf32>
    tpu.vector_store %arg8[%c0_110, %c0_111], %271 {strides = array<i32>} : memref<8x256xf32, #tpu.memory_space<vmem>>, vector<8x128xf32>,
    %c0_112 = arith.constant 0 : index
    %c128_113 = arith.constant 128 : index
    %273 = vector.load %arg8[%c0_112, %c128_113] : memref<8x256xf32, #tpu.memory_space<vmem>>, vector<8x128xf32>
    tpu.vector_store %arg8[%c0_112, %c128_113], %233 {strides = array<i32>} : memref<8x256xf32, #tpu.memory_space<vmem>>, vector<8x128xf32>,
    %c3_i32 = arith.constant 3 : i32
    %c0_114 = arith.constant 0 : index
    %c0_115 = arith.constant 0 : index
    %274 = vector.load %arg8[%c0_114, %c0_115] : memref<8x256xf32, #tpu.memory_space<vmem>>, vector<8x256xf32>
    %c0_116 = arith.constant 0 : index
    %c0_117 = arith.constant 0 : index
    %275 = vector.load %arg3[%c0_116, %c0_117] : memref<256x1024xf32, #tpu.memory_space<vmem>>, vector<256x1024xf32>
    %cst_118 = arith.constant dense<0.000000e+00> : vector<8x1024xf32>
    %276 = tpu.matmul %274, %275, %cst_118 {dimension_numbers = #tpu.dot_dimension_numbers<[1], [0], [0], [1], [0, 0, 1, 1], [], []>} : vector<8x256xf32>, vector<256x1024xf32>, vector<8x1024xf32> -> vector<8x1024xf32>
    %277 = vector.extract_strided_slice %276 {offsets = [0, 512], sizes = [8, 512], strides = [1, 1]} : vector<8x1024xf32> to vector<8x512xf32>
    %278 = arith.addf %277, %9 : vector<8x512xf32>
    %279 = vector.extract_strided_slice %278 {offsets = [0, 0], sizes = [8, 128], strides = [1, 1]} : vector<8x512xf32> to vector<8x128xf32>
    %cst_119 = arith.constant 5.000000e-01 : f32
    %280 = vector.broadcast %cst_119 : f32 to vector<8x128xf32>
    %281 = arith.mulf %280, %279 : vector<8x128xf32>
    %282 = math.tanh %281 : vector<8x128xf32>
    %cst_120 = arith.constant 5.000000e-01 : f32
    %283 = vector.broadcast %cst_120 : f32 to vector<8x128xf32>
    %284 = arith.mulf %283, %282 : vector<8x128xf32>
    %cst_121 = arith.constant 5.000000e-01 : f32
    %285 = vector.broadcast %cst_121 : f32 to vector<8x128xf32>
    %286 = arith.addf %284, %285 : vector<8x128xf32>
    %287 = vector.extract_strided_slice %278 {offsets = [0, 128], sizes = [8, 128], strides = [1, 1]} : vector<8x512xf32> to vector<8x128xf32>
    %cst_122 = arith.constant 5.000000e-01 : f32
    %288 = vector.broadcast %cst_122 : f32 to vector<8x128xf32>
    %289 = arith.mulf %288, %287 : vector<8x128xf32>
    %290 = math.tanh %289 : vector<8x128xf32>
    %cst_123 = arith.constant 5.000000e-01 : f32
    %291 = vector.broadcast %cst_123 : f32 to vector<8x128xf32>
    %292 = arith.mulf %291, %290 : vector<8x128xf32>
    %cst_124 = arith.constant 5.000000e-01 : f32
    %293 = vector.broadcast %cst_124 : f32 to vector<8x128xf32>
    %294 = arith.addf %292, %293 : vector<8x128xf32>
    %295 = vector.extract_strided_slice %278 {offsets = [0, 256], sizes = [8, 128], strides = [1, 1]} : vector<8x512xf32> to vector<8x128xf32>
    %296 = math.tanh %295 : vector<8x128xf32>
    %297 = vector.extract_strided_slice %278 {offsets = [0, 384], sizes = [8, 128], strides = [1, 1]} : vector<8x512xf32> to vector<8x128xf32>
    %cst_125 = arith.constant 5.000000e-01 : f32
    %298 = vector.broadcast %cst_125 : f32 to vector<8x128xf32>
    %299 = arith.mulf %298, %297 : vector<8x128xf32>
    %300 = math.tanh %299 : vector<8x128xf32>
    %cst_126 = arith.constant 5.000000e-01 : f32
    %301 = vector.broadcast %cst_126 : f32 to vector<8x128xf32>
    %302 = arith.mulf %301, %300 : vector<8x128xf32>
    %cst_127 = arith.constant 5.000000e-01 : f32
    %303 = vector.broadcast %cst_127 : f32 to vector<8x128xf32>
    %304 = arith.addf %302, %303 : vector<8x128xf32>
    %305 = arith.mulf %294, %231 : vector<8x128xf32>
    %306 = arith.mulf %286, %296 : vector<8x128xf32>
    %307 = arith.addf %305, %306 : vector<8x128xf32>
    %308 = math.tanh %307 : vector<8x128xf32>
    %309 = arith.mulf %304, %308 : vector<8x128xf32>
    %c1_i32_128 = arith.constant 1 : i32
    %310 = arith.addi %c3_i32, %c1_i32_128 : i32
    %c8_i32_129 = arith.constant 8 : i32
    %311 = arith.muli %310, %c8_i32_129 : i32
    %312 = tpu.assume_multiple %311, 8 : i32
    %313 = arith.index_cast %312 : i32 to index
    %c0_130 = arith.constant 0 : index
    %314 = vector.load %arg7[%313, %c0_130] : memref<64x512xf32, #tpu.memory_space<vmem>>, vector<8x512xf32>
    %315 = vector.extract_strided_slice %276 {offsets = [0, 0], sizes = [8, 512], strides = [1, 1]} : vector<8x1024xf32> to vector<8x512xf32>
    %316 = arith.addf %314, %315 : vector<8x512xf32>
    %317 = vector.extract_strided_slice %316 {offsets = [0, 0], sizes = [8, 128], strides = [1, 1]} : vector<8x512xf32> to vector<8x128xf32>
    %cst_131 = arith.constant 5.000000e-01 : f32
    %318 = vector.broadcast %cst_131 : f32 to vector<8x128xf32>
    %319 = arith.mulf %318, %317 : vector<8x128xf32>
    %320 = math.tanh %319 : vector<8x128xf32>
    %cst_132 = arith.constant 5.000000e-01 : f32
    %321 = vector.broadcast %cst_132 : f32 to vector<8x128xf32>
    %322 = arith.mulf %321, %320 : vector<8x128xf32>
    %cst_133 = arith.constant 5.000000e-01 : f32
    %323 = vector.broadcast %cst_133 : f32 to vector<8x128xf32>
    %324 = arith.addf %322, %323 : vector<8x128xf32>
    %325 = vector.extract_strided_slice %316 {offsets = [0, 128], sizes = [8, 128], strides = [1, 1]} : vector<8x512xf32> to vector<8x128xf32>
    %cst_134 = arith.constant 5.000000e-01 : f32
    %326 = vector.broadcast %cst_134 : f32 to vector<8x128xf32>
    %327 = arith.mulf %326, %325 : vector<8x128xf32>
    %328 = math.tanh %327 : vector<8x128xf32>
    %cst_135 = arith.constant 5.000000e-01 : f32
    %329 = vector.broadcast %cst_135 : f32 to vector<8x128xf32>
    %330 = arith.mulf %329, %328 : vector<8x128xf32>
    %cst_136 = arith.constant 5.000000e-01 : f32
    %331 = vector.broadcast %cst_136 : f32 to vector<8x128xf32>
    %332 = arith.addf %330, %331 : vector<8x128xf32>
    %333 = vector.extract_strided_slice %316 {offsets = [0, 256], sizes = [8, 128], strides = [1, 1]} : vector<8x512xf32> to vector<8x128xf32>
    %334 = math.tanh %333 : vector<8x128xf32>
    %335 = vector.extract_strided_slice %316 {offsets = [0, 384], sizes = [8, 128], strides = [1, 1]} : vector<8x512xf32> to vector<8x128xf32>
    %cst_137 = arith.constant 5.000000e-01 : f32
    %336 = vector.broadcast %cst_137 : f32 to vector<8x128xf32>
    %337 = arith.mulf %336, %335 : vector<8x128xf32>
    %338 = math.tanh %337 : vector<8x128xf32>
    %cst_138 = arith.constant 5.000000e-01 : f32
    %339 = vector.broadcast %cst_138 : f32 to vector<8x128xf32>
    %340 = arith.mulf %339, %338 : vector<8x128xf32>
    %cst_139 = arith.constant 5.000000e-01 : f32
    %341 = vector.broadcast %cst_139 : f32 to vector<8x128xf32>
    %342 = arith.addf %340, %341 : vector<8x128xf32>
    %343 = arith.mulf %332, %269 : vector<8x128xf32>
    %344 = arith.mulf %324, %334 : vector<8x128xf32>
    %345 = arith.addf %343, %344 : vector<8x128xf32>
    %346 = math.tanh %345 : vector<8x128xf32>
    %347 = arith.mulf %342, %346 : vector<8x128xf32>
    %c0_140 = arith.constant 0 : index
    %c0_141 = arith.constant 0 : index
    %348 = vector.load %arg8[%c0_140, %c0_141] : memref<8x256xf32, #tpu.memory_space<vmem>>, vector<8x128xf32>
    tpu.vector_store %arg8[%c0_140, %c0_141], %347 {strides = array<i32>} : memref<8x256xf32, #tpu.memory_space<vmem>>, vector<8x128xf32>,
    %c0_142 = arith.constant 0 : index
    %c128_143 = arith.constant 128 : index
    %349 = vector.load %arg8[%c0_142, %c128_143] : memref<8x256xf32, #tpu.memory_space<vmem>>, vector<8x128xf32>
    tpu.vector_store %arg8[%c0_142, %c128_143], %309 {strides = array<i32>} : memref<8x256xf32, #tpu.memory_space<vmem>>, vector<8x128xf32>,
    %c4_i32 = arith.constant 4 : i32
    %c0_144 = arith.constant 0 : index
    %c0_145 = arith.constant 0 : index
    %350 = vector.load %arg8[%c0_144, %c0_145] : memref<8x256xf32, #tpu.memory_space<vmem>>, vector<8x256xf32>
    %c0_146 = arith.constant 0 : index
    %c0_147 = arith.constant 0 : index
    %351 = vector.load %arg3[%c0_146, %c0_147] : memref<256x1024xf32, #tpu.memory_space<vmem>>, vector<256x1024xf32>
    %cst_148 = arith.constant dense<0.000000e+00> : vector<8x1024xf32>
    %352 = tpu.matmul %350, %351, %cst_148 {dimension_numbers = #tpu.dot_dimension_numbers<[1], [0], [0], [1], [0, 0, 1, 1], [], []>} : vector<8x256xf32>, vector<256x1024xf32>, vector<8x1024xf32> -> vector<8x1024xf32>
    %353 = vector.extract_strided_slice %352 {offsets = [0, 512], sizes = [8, 512], strides = [1, 1]} : vector<8x1024xf32> to vector<8x512xf32>
    %354 = arith.addf %353, %9 : vector<8x512xf32>
    %355 = vector.extract_strided_slice %354 {offsets = [0, 0], sizes = [8, 128], strides = [1, 1]} : vector<8x512xf32> to vector<8x128xf32>
    %cst_149 = arith.constant 5.000000e-01 : f32
    %356 = vector.broadcast %cst_149 : f32 to vector<8x128xf32>
    %357 = arith.mulf %356, %355 : vector<8x128xf32>
    %358 = math.tanh %357 : vector<8x128xf32>
    %cst_150 = arith.constant 5.000000e-01 : f32
    %359 = vector.broadcast %cst_150 : f32 to vector<8x128xf32>
    %360 = arith.mulf %359, %358 : vector<8x128xf32>
    %cst_151 = arith.constant 5.000000e-01 : f32
    %361 = vector.broadcast %cst_151 : f32 to vector<8x128xf32>
    %362 = arith.addf %360, %361 : vector<8x128xf32>
    %363 = vector.extract_strided_slice %354 {offsets = [0, 128], sizes = [8, 128], strides = [1, 1]} : vector<8x512xf32> to vector<8x128xf32>
    %cst_152 = arith.constant 5.000000e-01 : f32
    %364 = vector.broadcast %cst_152 : f32 to vector<8x128xf32>
    %365 = arith.mulf %364, %363 : vector<8x128xf32>
    %366 = math.tanh %365 : vector<8x128xf32>
    %cst_153 = arith.constant 5.000000e-01 : f32
    %367 = vector.broadcast %cst_153 : f32 to vector<8x128xf32>
    %368 = arith.mulf %367, %366 : vector<8x128xf32>
    %cst_154 = arith.constant 5.000000e-01 : f32
    %369 = vector.broadcast %cst_154 : f32 to vector<8x128xf32>
    %370 = arith.addf %368, %369 : vector<8x128xf32>
    %371 = vector.extract_strided_slice %354 {offsets = [0, 256], sizes = [8, 128], strides = [1, 1]} : vector<8x512xf32> to vector<8x128xf32>
    %372 = math.tanh %371 : vector<8x128xf32>
    %373 = vector.extract_strided_slice %354 {offsets = [0, 384], sizes = [8, 128], strides = [1, 1]} : vector<8x512xf32> to vector<8x128xf32>
    %cst_155 = arith.constant 5.000000e-01 : f32
    %374 = vector.broadcast %cst_155 : f32 to vector<8x128xf32>
    %375 = arith.mulf %374, %373 : vector<8x128xf32>
    %376 = math.tanh %375 : vector<8x128xf32>
    %cst_156 = arith.constant 5.000000e-01 : f32
    %377 = vector.broadcast %cst_156 : f32 to vector<8x128xf32>
    %378 = arith.mulf %377, %376 : vector<8x128xf32>
    %cst_157 = arith.constant 5.000000e-01 : f32
    %379 = vector.broadcast %cst_157 : f32 to vector<8x128xf32>
    %380 = arith.addf %378, %379 : vector<8x128xf32>
    %381 = arith.mulf %370, %307 : vector<8x128xf32>
    %382 = arith.mulf %362, %372 : vector<8x128xf32>
    %383 = arith.addf %381, %382 : vector<8x128xf32>
    %384 = math.tanh %383 : vector<8x128xf32>
    %385 = arith.mulf %380, %384 : vector<8x128xf32>
    %c1_i32_158 = arith.constant 1 : i32
    %386 = arith.addi %c4_i32, %c1_i32_158 : i32
    %c8_i32_159 = arith.constant 8 : i32
    %387 = arith.muli %386, %c8_i32_159 : i32
    %388 = tpu.assume_multiple %387, 8 : i32
    %389 = arith.index_cast %388 : i32 to index
    %c0_160 = arith.constant 0 : index
    %390 = vector.load %arg7[%389, %c0_160] : memref<64x512xf32, #tpu.memory_space<vmem>>, vector<8x512xf32>
    %391 = vector.extract_strided_slice %352 {offsets = [0, 0], sizes = [8, 512], strides = [1, 1]} : vector<8x1024xf32> to vector<8x512xf32>
    %392 = arith.addf %390, %391 : vector<8x512xf32>
    %393 = vector.extract_strided_slice %392 {offsets = [0, 0], sizes = [8, 128], strides = [1, 1]} : vector<8x512xf32> to vector<8x128xf32>
    %cst_161 = arith.constant 5.000000e-01 : f32
    %394 = vector.broadcast %cst_161 : f32 to vector<8x128xf32>
    %395 = arith.mulf %394, %393 : vector<8x128xf32>
    %396 = math.tanh %395 : vector<8x128xf32>
    %cst_162 = arith.constant 5.000000e-01 : f32
    %397 = vector.broadcast %cst_162 : f32 to vector<8x128xf32>
    %398 = arith.mulf %397, %396 : vector<8x128xf32>
    %cst_163 = arith.constant 5.000000e-01 : f32
    %399 = vector.broadcast %cst_163 : f32 to vector<8x128xf32>
    %400 = arith.addf %398, %399 : vector<8x128xf32>
    %401 = vector.extract_strided_slice %392 {offsets = [0, 128], sizes = [8, 128], strides = [1, 1]} : vector<8x512xf32> to vector<8x128xf32>
    %cst_164 = arith.constant 5.000000e-01 : f32
    %402 = vector.broadcast %cst_164 : f32 to vector<8x128xf32>
    %403 = arith.mulf %402, %401 : vector<8x128xf32>
    %404 = math.tanh %403 : vector<8x128xf32>
    %cst_165 = arith.constant 5.000000e-01 : f32
    %405 = vector.broadcast %cst_165 : f32 to vector<8x128xf32>
    %406 = arith.mulf %405, %404 : vector<8x128xf32>
    %cst_166 = arith.constant 5.000000e-01 : f32
    %407 = vector.broadcast %cst_166 : f32 to vector<8x128xf32>
    %408 = arith.addf %406, %407 : vector<8x128xf32>
    %409 = vector.extract_strided_slice %392 {offsets = [0, 256], sizes = [8, 128], strides = [1, 1]} : vector<8x512xf32> to vector<8x128xf32>
    %410 = math.tanh %409 : vector<8x128xf32>
    %411 = vector.extract_strided_slice %392 {offsets = [0, 384], sizes = [8, 128], strides = [1, 1]} : vector<8x512xf32> to vector<8x128xf32>
    %cst_167 = arith.constant 5.000000e-01 : f32
    %412 = vector.broadcast %cst_167 : f32 to vector<8x128xf32>
    %413 = arith.mulf %412, %411 : vector<8x128xf32>
    %414 = math.tanh %413 : vector<8x128xf32>
    %cst_168 = arith.constant 5.000000e-01 : f32
    %415 = vector.broadcast %cst_168 : f32 to vector<8x128xf32>
    %416 = arith.mulf %415, %414 : vector<8x128xf32>
    %cst_169 = arith.constant 5.000000e-01 : f32
    %417 = vector.broadcast %cst_169 : f32 to vector<8x128xf32>
    %418 = arith.addf %416, %417 : vector<8x128xf32>
    %419 = arith.mulf %408, %345 : vector<8x128xf32>
    %420 = arith.mulf %400, %410 : vector<8x128xf32>
    %421 = arith.addf %419, %420 : vector<8x128xf32>
    %422 = math.tanh %421 : vector<8x128xf32>
    %423 = arith.mulf %418, %422 : vector<8x128xf32>
    %c0_170 = arith.constant 0 : index
    %c0_171 = arith.constant 0 : index
    %424 = vector.load %arg8[%c0_170, %c0_171] : memref<8x256xf32, #tpu.memory_space<vmem>>, vector<8x128xf32>
    tpu.vector_store %arg8[%c0_170, %c0_171], %423 {strides = array<i32>} : memref<8x256xf32, #tpu.memory_space<vmem>>, vector<8x128xf32>,
    %c0_172 = arith.constant 0 : index
    %c128_173 = arith.constant 128 : index
    %425 = vector.load %arg8[%c0_172, %c128_173] : memref<8x256xf32, #tpu.memory_space<vmem>>, vector<8x128xf32>
    tpu.vector_store %arg8[%c0_172, %c128_173], %385 {strides = array<i32>} : memref<8x256xf32, #tpu.memory_space<vmem>>, vector<8x128xf32>,
    %c5_i32 = arith.constant 5 : i32
    %c0_174 = arith.constant 0 : index
    %c0_175 = arith.constant 0 : index
    %426 = vector.load %arg8[%c0_174, %c0_175] : memref<8x256xf32, #tpu.memory_space<vmem>>, vector<8x256xf32>
    %c0_176 = arith.constant 0 : index
    %c0_177 = arith.constant 0 : index
    %427 = vector.load %arg3[%c0_176, %c0_177] : memref<256x1024xf32, #tpu.memory_space<vmem>>, vector<256x1024xf32>
    %cst_178 = arith.constant dense<0.000000e+00> : vector<8x1024xf32>
    %428 = tpu.matmul %426, %427, %cst_178 {dimension_numbers = #tpu.dot_dimension_numbers<[1], [0], [0], [1], [0, 0, 1, 1], [], []>} : vector<8x256xf32>, vector<256x1024xf32>, vector<8x1024xf32> -> vector<8x1024xf32>
    %429 = vector.extract_strided_slice %428 {offsets = [0, 512], sizes = [8, 512], strides = [1, 1]} : vector<8x1024xf32> to vector<8x512xf32>
    %430 = arith.addf %429, %9 : vector<8x512xf32>
    %431 = vector.extract_strided_slice %430 {offsets = [0, 0], sizes = [8, 128], strides = [1, 1]} : vector<8x512xf32> to vector<8x128xf32>
    %cst_179 = arith.constant 5.000000e-01 : f32
    %432 = vector.broadcast %cst_179 : f32 to vector<8x128xf32>
    %433 = arith.mulf %432, %431 : vector<8x128xf32>
    %434 = math.tanh %433 : vector<8x128xf32>
    %cst_180 = arith.constant 5.000000e-01 : f32
    %435 = vector.broadcast %cst_180 : f32 to vector<8x128xf32>
    %436 = arith.mulf %435, %434 : vector<8x128xf32>
    %cst_181 = arith.constant 5.000000e-01 : f32
    %437 = vector.broadcast %cst_181 : f32 to vector<8x128xf32>
    %438 = arith.addf %436, %437 : vector<8x128xf32>
    %439 = vector.extract_strided_slice %430 {offsets = [0, 128], sizes = [8, 128], strides = [1, 1]} : vector<8x512xf32> to vector<8x128xf32>
    %cst_182 = arith.constant 5.000000e-01 : f32
    %440 = vector.broadcast %cst_182 : f32 to vector<8x128xf32>
    %441 = arith.mulf %440, %439 : vector<8x128xf32>
    %442 = math.tanh %441 : vector<8x128xf32>
    %cst_183 = arith.constant 5.000000e-01 : f32
    %443 = vector.broadcast %cst_183 : f32 to vector<8x128xf32>
    %444 = arith.mulf %443, %442 : vector<8x128xf32>
    %cst_184 = arith.constant 5.000000e-01 : f32
    %445 = vector.broadcast %cst_184 : f32 to vector<8x128xf32>
    %446 = arith.addf %444, %445 : vector<8x128xf32>
    %447 = vector.extract_strided_slice %430 {offsets = [0, 256], sizes = [8, 128], strides = [1, 1]} : vector<8x512xf32> to vector<8x128xf32>
    %448 = math.tanh %447 : vector<8x128xf32>
    %449 = vector.extract_strided_slice %430 {offsets = [0, 384], sizes = [8, 128], strides = [1, 1]} : vector<8x512xf32> to vector<8x128xf32>
    %cst_185 = arith.constant 5.000000e-01 : f32
    %450 = vector.broadcast %cst_185 : f32 to vector<8x128xf32>
    %451 = arith.mulf %450, %449 : vector<8x128xf32>
    %452 = math.tanh %451 : vector<8x128xf32>
    %cst_186 = arith.constant 5.000000e-01 : f32
    %453 = vector.broadcast %cst_186 : f32 to vector<8x128xf32>
    %454 = arith.mulf %453, %452 : vector<8x128xf32>
    %cst_187 = arith.constant 5.000000e-01 : f32
    %455 = vector.broadcast %cst_187 : f32 to vector<8x128xf32>
    %456 = arith.addf %454, %455 : vector<8x128xf32>
    %457 = arith.mulf %446, %383 : vector<8x128xf32>
    %458 = arith.mulf %438, %448 : vector<8x128xf32>
    %459 = arith.addf %457, %458 : vector<8x128xf32>
    %460 = math.tanh %459 : vector<8x128xf32>
    %461 = arith.mulf %456, %460 : vector<8x128xf32>
    %c1_i32_188 = arith.constant 1 : i32
    %462 = arith.addi %c5_i32, %c1_i32_188 : i32
    %c8_i32_189 = arith.constant 8 : i32
    %463 = arith.muli %462, %c8_i32_189 : i32
    %464 = tpu.assume_multiple %463, 8 : i32
    %465 = arith.index_cast %464 : i32 to index
    %c0_190 = arith.constant 0 : index
    %466 = vector.load %arg7[%465, %c0_190] : memref<64x512xf32, #tpu.memory_space<vmem>>, vector<8x512xf32>
    %467 = vector.extract_strided_slice %428 {offsets = [0, 0], sizes = [8, 512], strides = [1, 1]} : vector<8x1024xf32> to vector<8x512xf32>
    %468 = arith.addf %466, %467 : vector<8x512xf32>
    %469 = vector.extract_strided_slice %468 {offsets = [0, 0], sizes = [8, 128], strides = [1, 1]} : vector<8x512xf32> to vector<8x128xf32>
    %cst_191 = arith.constant 5.000000e-01 : f32
    %470 = vector.broadcast %cst_191 : f32 to vector<8x128xf32>
    %471 = arith.mulf %470, %469 : vector<8x128xf32>
    %472 = math.tanh %471 : vector<8x128xf32>
    %cst_192 = arith.constant 5.000000e-01 : f32
    %473 = vector.broadcast %cst_192 : f32 to vector<8x128xf32>
    %474 = arith.mulf %473, %472 : vector<8x128xf32>
    %cst_193 = arith.constant 5.000000e-01 : f32
    %475 = vector.broadcast %cst_193 : f32 to vector<8x128xf32>
    %476 = arith.addf %474, %475 : vector<8x128xf32>
    %477 = vector.extract_strided_slice %468 {offsets = [0, 128], sizes = [8, 128], strides = [1, 1]} : vector<8x512xf32> to vector<8x128xf32>
    %cst_194 = arith.constant 5.000000e-01 : f32
    %478 = vector.broadcast %cst_194 : f32 to vector<8x128xf32>
    %479 = arith.mulf %478, %477 : vector<8x128xf32>
    %480 = math.tanh %479 : vector<8x128xf32>
    %cst_195 = arith.constant 5.000000e-01 : f32
    %481 = vector.broadcast %cst_195 : f32 to vector<8x128xf32>
    %482 = arith.mulf %481, %480 : vector<8x128xf32>
    %cst_196 = arith.constant 5.000000e-01 : f32
    %483 = vector.broadcast %cst_196 : f32 to vector<8x128xf32>
    %484 = arith.addf %482, %483 : vector<8x128xf32>
    %485 = vector.extract_strided_slice %468 {offsets = [0, 256], sizes = [8, 128], strides = [1, 1]} : vector<8x512xf32> to vector<8x128xf32>
    %486 = math.tanh %485 : vector<8x128xf32>
    %487 = vector.extract_strided_slice %468 {offsets = [0, 384], sizes = [8, 128], strides = [1, 1]} : vector<8x512xf32> to vector<8x128xf32>
    %cst_197 = arith.constant 5.000000e-01 : f32
    %488 = vector.broadcast %cst_197 : f32 to vector<8x128xf32>
    %489 = arith.mulf %488, %487 : vector<8x128xf32>
    %490 = math.tanh %489 : vector<8x128xf32>
    %cst_198 = arith.constant 5.000000e-01 : f32
    %491 = vector.broadcast %cst_198 : f32 to vector<8x128xf32>
    %492 = arith.mulf %491, %490 : vector<8x128xf32>
    %cst_199 = arith.constant 5.000000e-01 : f32
    %493 = vector.broadcast %cst_199 : f32 to vector<8x128xf32>
    %494 = arith.addf %492, %493 : vector<8x128xf32>
    %495 = arith.mulf %484, %421 : vector<8x128xf32>
    %496 = arith.mulf %476, %486 : vector<8x128xf32>
    %497 = arith.addf %495, %496 : vector<8x128xf32>
    %498 = math.tanh %497 : vector<8x128xf32>
    %499 = arith.mulf %494, %498 : vector<8x128xf32>
    %c0_200 = arith.constant 0 : index
    %c0_201 = arith.constant 0 : index
    %500 = vector.load %arg8[%c0_200, %c0_201] : memref<8x256xf32, #tpu.memory_space<vmem>>, vector<8x128xf32>
    tpu.vector_store %arg8[%c0_200, %c0_201], %499 {strides = array<i32>} : memref<8x256xf32, #tpu.memory_space<vmem>>, vector<8x128xf32>,
    %c0_202 = arith.constant 0 : index
    %c128_203 = arith.constant 128 : index
    %501 = vector.load %arg8[%c0_202, %c128_203] : memref<8x256xf32, #tpu.memory_space<vmem>>, vector<8x128xf32>
    tpu.vector_store %arg8[%c0_202, %c128_203], %461 {strides = array<i32>} : memref<8x256xf32, #tpu.memory_space<vmem>>, vector<8x128xf32>,
    %c6_i32 = arith.constant 6 : i32
    %c0_204 = arith.constant 0 : index
    %c0_205 = arith.constant 0 : index
    %502 = vector.load %arg8[%c0_204, %c0_205] : memref<8x256xf32, #tpu.memory_space<vmem>>, vector<8x256xf32>
    %c0_206 = arith.constant 0 : index
    %c0_207 = arith.constant 0 : index
    %503 = vector.load %arg3[%c0_206, %c0_207] : memref<256x1024xf32, #tpu.memory_space<vmem>>, vector<256x1024xf32>
    %cst_208 = arith.constant dense<0.000000e+00> : vector<8x1024xf32>
    %504 = tpu.matmul %502, %503, %cst_208 {dimension_numbers = #tpu.dot_dimension_numbers<[1], [0], [0], [1], [0, 0, 1, 1], [], []>} : vector<8x256xf32>, vector<256x1024xf32>, vector<8x1024xf32> -> vector<8x1024xf32>
    %505 = vector.extract_strided_slice %504 {offsets = [0, 512], sizes = [8, 512], strides = [1, 1]} : vector<8x1024xf32> to vector<8x512xf32>
    %506 = arith.addf %505, %9 : vector<8x512xf32>
    %507 = vector.extract_strided_slice %506 {offsets = [0, 0], sizes = [8, 128], strides = [1, 1]} : vector<8x512xf32> to vector<8x128xf32>
    %cst_209 = arith.constant 5.000000e-01 : f32
    %508 = vector.broadcast %cst_209 : f32 to vector<8x128xf32>
    %509 = arith.mulf %508, %507 : vector<8x128xf32>
    %510 = math.tanh %509 : vector<8x128xf32>
    %cst_210 = arith.constant 5.000000e-01 : f32
    %511 = vector.broadcast %cst_210 : f32 to vector<8x128xf32>
    %512 = arith.mulf %511, %510 : vector<8x128xf32>
    %cst_211 = arith.constant 5.000000e-01 : f32
    %513 = vector.broadcast %cst_211 : f32 to vector<8x128xf32>
    %514 = arith.addf %512, %513 : vector<8x128xf32>
    %515 = vector.extract_strided_slice %506 {offsets = [0, 128], sizes = [8, 128], strides = [1, 1]} : vector<8x512xf32> to vector<8x128xf32>
    %cst_212 = arith.constant 5.000000e-01 : f32
    %516 = vector.broadcast %cst_212 : f32 to vector<8x128xf32>
    %517 = arith.mulf %516, %515 : vector<8x128xf32>
    %518 = math.tanh %517 : vector<8x128xf32>
    %cst_213 = arith.constant 5.000000e-01 : f32
    %519 = vector.broadcast %cst_213 : f32 to vector<8x128xf32>
    %520 = arith.mulf %519, %518 : vector<8x128xf32>
    %cst_214 = arith.constant 5.000000e-01 : f32
    %521 = vector.broadcast %cst_214 : f32 to vector<8x128xf32>
    %522 = arith.addf %520, %521 : vector<8x128xf32>
    %523 = vector.extract_strided_slice %506 {offsets = [0, 256], sizes = [8, 128], strides = [1, 1]} : vector<8x512xf32> to vector<8x128xf32>
    %524 = math.tanh %523 : vector<8x128xf32>
    %525 = vector.extract_strided_slice %506 {offsets = [0, 384], sizes = [8, 128], strides = [1, 1]} : vector<8x512xf32> to vector<8x128xf32>
    %cst_215 = arith.constant 5.000000e-01 : f32
    %526 = vector.broadcast %cst_215 : f32 to vector<8x128xf32>
    %527 = arith.mulf %526, %525 : vector<8x128xf32>
    %528 = math.tanh %527 : vector<8x128xf32>
    %cst_216 = arith.constant 5.000000e-01 : f32
    %529 = vector.broadcast %cst_216 : f32 to vector<8x128xf32>
    %530 = arith.mulf %529, %528 : vector<8x128xf32>
    %cst_217 = arith.constant 5.000000e-01 : f32
    %531 = vector.broadcast %cst_217 : f32 to vector<8x128xf32>
    %532 = arith.addf %530, %531 : vector<8x128xf32>
    %533 = arith.mulf %522, %459 : vector<8x128xf32>
    %534 = arith.mulf %514, %524 : vector<8x128xf32>
    %535 = arith.addf %533, %534 : vector<8x128xf32>
    %536 = math.tanh %535 : vector<8x128xf32>
    %537 = arith.mulf %532, %536 : vector<8x128xf32>
    %c1_i32_218 = arith.constant 1 : i32
    %538 = arith.addi %c6_i32, %c1_i32_218 : i32
    %c8_i32_219 = arith.constant 8 : i32
    %539 = arith.muli %538, %c8_i32_219 : i32
    %540 = tpu.assume_multiple %539, 8 : i32
    %541 = arith.index_cast %540 : i32 to index
    %c0_220 = arith.constant 0 : index
    %542 = vector.load %arg7[%541, %c0_220] : memref<64x512xf32, #tpu.memory_space<vmem>>, vector<8x512xf32>
    %543 = vector.extract_strided_slice %504 {offsets = [0, 0], sizes = [8, 512], strides = [1, 1]} : vector<8x1024xf32> to vector<8x512xf32>
    %544 = arith.addf %542, %543 : vector<8x512xf32>
    %545 = vector.extract_strided_slice %544 {offsets = [0, 0], sizes = [8, 128], strides = [1, 1]} : vector<8x512xf32> to vector<8x128xf32>
    %cst_221 = arith.constant 5.000000e-01 : f32
    %546 = vector.broadcast %cst_221 : f32 to vector<8x128xf32>
    %547 = arith.mulf %546, %545 : vector<8x128xf32>
    %548 = math.tanh %547 : vector<8x128xf32>
    %cst_222 = arith.constant 5.000000e-01 : f32
    %549 = vector.broadcast %cst_222 : f32 to vector<8x128xf32>
    %550 = arith.mulf %549, %548 : vector<8x128xf32>
    %cst_223 = arith.constant 5.000000e-01 : f32
    %551 = vector.broadcast %cst_223 : f32 to vector<8x128xf32>
    %552 = arith.addf %550, %551 : vector<8x128xf32>
    %553 = vector.extract_strided_slice %544 {offsets = [0, 128], sizes = [8, 128], strides = [1, 1]} : vector<8x512xf32> to vector<8x128xf32>
    %cst_224 = arith.constant 5.000000e-01 : f32
    %554 = vector.broadcast %cst_224 : f32 to vector<8x128xf32>
    %555 = arith.mulf %554, %553 : vector<8x128xf32>
    %556 = math.tanh %555 : vector<8x128xf32>
    %cst_225 = arith.constant 5.000000e-01 : f32
    %557 = vector.broadcast %cst_225 : f32 to vector<8x128xf32>
    %558 = arith.mulf %557, %556 : vector<8x128xf32>
    %cst_226 = arith.constant 5.000000e-01 : f32
    %559 = vector.broadcast %cst_226 : f32 to vector<8x128xf32>
    %560 = arith.addf %558, %559 : vector<8x128xf32>
    %561 = vector.extract_strided_slice %544 {offsets = [0, 256], sizes = [8, 128], strides = [1, 1]} : vector<8x512xf32> to vector<8x128xf32>
    %562 = math.tanh %561 : vector<8x128xf32>
    %563 = vector.extract_strided_slice %544 {offsets = [0, 384], sizes = [8, 128], strides = [1, 1]} : vector<8x512xf32> to vector<8x128xf32>
    %cst_227 = arith.constant 5.000000e-01 : f32
    %564 = vector.broadcast %cst_227 : f32 to vector<8x128xf32>
    %565 = arith.mulf %564, %563 : vector<8x128xf32>
    %566 = math.tanh %565 : vector<8x128xf32>
    %cst_228 = arith.constant 5.000000e-01 : f32
    %567 = vector.broadcast %cst_228 : f32 to vector<8x128xf32>
    %568 = arith.mulf %567, %566 : vector<8x128xf32>
    %cst_229 = arith.constant 5.000000e-01 : f32
    %569 = vector.broadcast %cst_229 : f32 to vector<8x128xf32>
    %570 = arith.addf %568, %569 : vector<8x128xf32>
    %571 = arith.mulf %560, %497 : vector<8x128xf32>
    %572 = arith.mulf %552, %562 : vector<8x128xf32>
    %573 = arith.addf %571, %572 : vector<8x128xf32>
    %574 = math.tanh %573 : vector<8x128xf32>
    %575 = arith.mulf %570, %574 : vector<8x128xf32>
    %c0_230 = arith.constant 0 : index
    %c0_231 = arith.constant 0 : index
    %576 = vector.load %arg8[%c0_230, %c0_231] : memref<8x256xf32, #tpu.memory_space<vmem>>, vector<8x128xf32>
    tpu.vector_store %arg8[%c0_230, %c0_231], %575 {strides = array<i32>} : memref<8x256xf32, #tpu.memory_space<vmem>>, vector<8x128xf32>,
    %c0_232 = arith.constant 0 : index
    %c128_233 = arith.constant 128 : index
    %577 = vector.load %arg8[%c0_232, %c128_233] : memref<8x256xf32, #tpu.memory_space<vmem>>, vector<8x128xf32>
    tpu.vector_store %arg8[%c0_232, %c128_233], %537 {strides = array<i32>} : memref<8x256xf32, #tpu.memory_space<vmem>>, vector<8x128xf32>,
    %c7_i32 = arith.constant 7 : i32
    %c0_234 = arith.constant 0 : index
    %c0_235 = arith.constant 0 : index
    %578 = vector.load %arg8[%c0_234, %c0_235] : memref<8x256xf32, #tpu.memory_space<vmem>>, vector<8x256xf32>
    %c0_236 = arith.constant 0 : index
    %c0_237 = arith.constant 0 : index
    %579 = vector.load %arg3[%c0_236, %c0_237] : memref<256x1024xf32, #tpu.memory_space<vmem>>, vector<256x1024xf32>
    %cst_238 = arith.constant dense<0.000000e+00> : vector<8x1024xf32>
    %580 = tpu.matmul %578, %579, %cst_238 {dimension_numbers = #tpu.dot_dimension_numbers<[1], [0], [0], [1], [0, 0, 1, 1], [], []>} : vector<8x256xf32>, vector<256x1024xf32>, vector<8x1024xf32> -> vector<8x1024xf32>
    %581 = vector.extract_strided_slice %580 {offsets = [0, 512], sizes = [8, 512], strides = [1, 1]} : vector<8x1024xf32> to vector<8x512xf32>
    %582 = arith.addf %581, %9 : vector<8x512xf32>
    %583 = vector.extract_strided_slice %582 {offsets = [0, 0], sizes = [8, 128], strides = [1, 1]} : vector<8x512xf32> to vector<8x128xf32>
    %cst_239 = arith.constant 5.000000e-01 : f32
    %584 = vector.broadcast %cst_239 : f32 to vector<8x128xf32>
    %585 = arith.mulf %584, %583 : vector<8x128xf32>
    %586 = math.tanh %585 : vector<8x128xf32>
    %cst_240 = arith.constant 5.000000e-01 : f32
    %587 = vector.broadcast %cst_240 : f32 to vector<8x128xf32>
    %588 = arith.mulf %587, %586 : vector<8x128xf32>
    %cst_241 = arith.constant 5.000000e-01 : f32
    %589 = vector.broadcast %cst_241 : f32 to vector<8x128xf32>
    %590 = arith.addf %588, %589 : vector<8x128xf32>
    %591 = vector.extract_strided_slice %582 {offsets = [0, 128], sizes = [8, 128], strides = [1, 1]} : vector<8x512xf32> to vector<8x128xf32>
    %cst_242 = arith.constant 5.000000e-01 : f32
    %592 = vector.broadcast %cst_242 : f32 to vector<8x128xf32>
    %593 = arith.mulf %592, %591 : vector<8x128xf32>
    %594 = math.tanh %593 : vector<8x128xf32>
    %cst_243 = arith.constant 5.000000e-01 : f32
    %595 = vector.broadcast %cst_243 : f32 to vector<8x128xf32>
    %596 = arith.mulf %595, %594 : vector<8x128xf32>
    %cst_244 = arith.constant 5.000000e-01 : f32
    %597 = vector.broadcast %cst_244 : f32 to vector<8x128xf32>
    %598 = arith.addf %596, %597 : vector<8x128xf32>
    %599 = vector.extract_strided_slice %582 {offsets = [0, 256], sizes = [8, 128], strides = [1, 1]} : vector<8x512xf32> to vector<8x128xf32>
    %600 = math.tanh %599 : vector<8x128xf32>
    %601 = vector.extract_strided_slice %582 {offsets = [0, 384], sizes = [8, 128], strides = [1, 1]} : vector<8x512xf32> to vector<8x128xf32>
    %cst_245 = arith.constant 5.000000e-01 : f32
    %602 = vector.broadcast %cst_245 : f32 to vector<8x128xf32>
    %603 = arith.mulf %602, %601 : vector<8x128xf32>
    %604 = math.tanh %603 : vector<8x128xf32>
    %cst_246 = arith.constant 5.000000e-01 : f32
    %605 = vector.broadcast %cst_246 : f32 to vector<8x128xf32>
    %606 = arith.mulf %605, %604 : vector<8x128xf32>
    %cst_247 = arith.constant 5.000000e-01 : f32
    %607 = vector.broadcast %cst_247 : f32 to vector<8x128xf32>
    %608 = arith.addf %606, %607 : vector<8x128xf32>
    %609 = arith.mulf %598, %535 : vector<8x128xf32>
    %610 = arith.mulf %590, %600 : vector<8x128xf32>
    %611 = arith.addf %609, %610 : vector<8x128xf32>
    %612 = math.tanh %611 : vector<8x128xf32>
    %613 = arith.mulf %608, %612 : vector<8x128xf32>
    %c0_248 = arith.constant 0 : index
    %c0_249 = arith.constant 0 : index
    %614 = vector.load %arg5[%c0_248, %c0_249] : memref<2x8xf32, #tpu.memory_space<vmem>>, vector<2x8xf32>
    %cst_250 = arith.constant dense<0.000000e+00> : vector<2x128xf32>
    %615 = tpu.matmul %614, %613, %cst_250 {dimension_numbers = #tpu.dot_dimension_numbers<[1], [0], [0], [1], [0, 0, 1, 1], [], []>} : vector<2x8xf32>, vector<8x128xf32>, vector<2x128xf32> -> vector<2x128xf32>
    %c0_251 = arith.constant 0 : index
    %c0_252 = arith.constant 0 : index
    %616 = vector.load %arg6[%c0_251, %c0_252] : memref<2x128xf32, #tpu.memory_space<vmem>>, vector<2x128xf32>
    tpu.vector_store %arg6[%c0_251, %c0_252], %615 {strides = array<i32>} : memref<2x128xf32, #tpu.memory_space<vmem>>, vector<2x128xf32>,
    return
  }
}

</mosaic_0001>

<llo_original>
// kernel: tpu_custom_call.1
$region0: #{tpu_custom_call.1}
  #allocation0 [shape = 'u32[]', space=smem, size = 0x4, offset = 0x4, fixed_abs, tag = 'smem constant byte address 0x4 - core index']
  #allocation1 [shape = 'u32[72,128]{1,0:T(1,128)}', space=vmem, size = 0x9000, scoped, tag = 'internal scratch']
  #allocation2 [shape = 'f32[64,512]{1,0:T(8,128)}', space=vmem, size = 0x20000, scoped, tag = 'scratch operand']
  #allocation3 [shape = 'f32[8,256]{1,0:T(8,128)}', space=vmem, size = 0x2000, scoped, tag = 'scratch operand']
  %s0 = inlined_call_operand.vmem [shape: f32[64,8], index: 0, kind: input, shape index: {}]
  %s1 = inlined_call_operand.vmem [shape: f32[8,512], index: 1, kind: input, shape index: {}]
  %s2 = inlined_call_operand.vmem [shape: f32[1,512], index: 2, kind: input, shape index: {}]
  %s3 = inlined_call_operand.hbm [shape: f32[256,1024], index: 3, kind: input, shape index: {}]
  %s4 = inlined_call_operand.vmem [shape: f32[1,512], index: 4, kind: input, shape index: {}]
  %s5 = inlined_call_operand.vmem [shape: f32[2,8], index: 5, kind: input, shape index: {}]
  %s6 = inlined_call_operand.hbm [shape: f32[2,128], index: 6, kind: output, shape index: {}]
  %s7 = sld [smem:[#allocation0]]
  $region38: #{tpu_custom_call.1} parent=0
    _
  %s9 = ssub.s32 1, %s7
  %s10 = scalar_select 0, %s9, %s7
  $region1: #{tpu_custom_call.1} parent=0
    #allocation4 [shape = 'u8[1048576]{0}', space=vmem, size = 0x100000, scoped, tag = 'input window, operand 3, single buffered']
    #allocation5 [shape = 's32[1]{0}', space=sflag, size = 0x4, scoped, tag = 'scoped memory for tpu_custom_call.1']
    #allocation6 [shape = 's32[1]{0}', space=sflag, size = 0x4, scoped, tag = 'scoped memory for tpu_custom_call.1']
    #allocation7 [shape = 'u8[1024]{0}', space=vmem, size = 0x400, scoped, tag = 'output window, operand 0, single buffered']
    %11 = vsyncpa [#allocation5], 0
    %12 = vsyncpa [#allocation6], 0
    // Predicated region
    $region2: #{tpu_custom_call.1} parent=1 // pred_check
      _
    $region3: #{tpu_custom_call.1} parent=1 // pred_check_branch
      %14 = sbr.rel (0) target = $region5
    $region4: #{tpu_custom_call.1} parent=1 // pred_region
      _
    $region5: #{tpu_custom_call.1} parent=1 // pred_fallthru
      _
    // Predicated region
    $region6: #{tpu_custom_call.1} parent=1 // pred_check
      _
    $region7: #{tpu_custom_call.1} parent=1 // pred_check_branch
      %16 = sbr.rel (0) target = $region9
    $region8: #{tpu_custom_call.1} parent=1 // pred_region
      _
    $region9: #{tpu_custom_call.1} parent=1 // pred_fallthru
      _
    // Predicated region
    $region10: #{tpu_custom_call.1} parent=1 // pred_check
      _
    $region11: #{tpu_custom_call.1} parent=1 // pred_check_branch
      %18 = sbr.rel (0) target = $region13
    $region12: #{tpu_custom_call.1} parent=1 // pred_region
      _
    $region13: #{tpu_custom_call.1} parent=1 // pred_fallthru
      _
    // Predicated region
    $region14: #{tpu_custom_call.1} parent=1 // pred_check
      _
    $region15: #{tpu_custom_call.1} parent=1 // pred_check_branch
      %20 = sbr.rel (0) target = $region17
    $region16: #{tpu_custom_call.1} parent=1 // pred_region
      %22 = vsyncadd [#allocation5], 0
      %s23 = sshll.u32 %s3, 4
      %s24 = int_to_ptr.hbm [resolvable:$true] %s23
      %s25 = sshll.u32 [#allocation4], 4
      %s26 = int_to_ptr.vmem [resolvable:$true] %s25
      %31 = dma.hbm_to_vmem [thread:$0]  %s24, 32768, %s26, [#allocation5], 1024, 1024, 64
    $region17: #{tpu_custom_call.1} parent=1 // pred_fallthru
      _
    // Predicated region
    $region18: #{tpu_custom_call.1} parent=1 // pred_check
      _
    $region19: #{tpu_custom_call.1} parent=1 // pred_check_branch
      %33 = sbr.rel (0) target = $region21
    $region20: #{tpu_custom_call.1} parent=1 // pred_region
      _
    $region21: #{tpu_custom_call.1} parent=1 // pred_fallthru
      _
    // Predicated region
    $region22: #{tpu_custom_call.1} parent=1 // pred_check
      _
    $region23: #{tpu_custom_call.1} parent=1 // pred_check_branch
      %35 = sbr.rel (0) target = $region25
    $region24: #{tpu_custom_call.1} parent=1 // pred_region
      _
    $region25: #{tpu_custom_call.1} parent=1 // pred_fallthru
      _
    // Predicated region
    $region26: #{tpu_custom_call.1} parent=1 // pred_check
      _
    $region27: #{tpu_custom_call.1} parent=1 // pred_check_branch
      %37 = sbr.rel (0) target = $region29
    $region28: #{tpu_custom_call.1} parent=1 // pred_region
      %39 = dma.done [#allocation5], 32768
    $region29: #{tpu_custom_call.1} parent=1 // pred_fallthru
      _
    %v40 = vld [vmem:[%s0] sm:$0xff]
    %v41 = vld [vmem:[%s0 + $0x8] sm:$0xff]
    %v42 = vld [vmem:[%s0 + $0x10] sm:$0xff]
    %v43 = vld [vmem:[%s0 + $0x18] sm:$0xff]
    %v44 = vld [vmem:[%s0 + $0x20] sm:$0xff]
    %v45 = vld [vmem:[%s0 + $0x28] sm:$0xff]
    %v46 = vld [vmem:[%s0 + $0x30] sm:$0xff]
    %v47 = vld [vmem:[%s0 + $0x38] sm:$0xff]
    %v48 = vld [vmem:[%s1] sm:$0xff]
    %v49 = vld [vmem:[%s1 + $0x8] sm:$0xff]
    %v50 = vld [vmem:[%s1 + $0x10] sm:$0xff]
    %v51 = vld [vmem:[%s1 + $0x18] sm:$0xff]
    %v52 = vld [vmem:[%s2] sm:$0xf]
    %v54 = vperm.slane %v52, 0
    %v55 = vperm.slane %v52, 1
    %v56 = vperm.slane %v52, 2
    %v57 = vperm.slane %v52, 3
    %vm62 = vcmask 64512
    %v64 = vsel %vm62, %v40, 0
    %v67 = vsel %vm62, %v41, 0
    %v70 = vsel %vm62, %v42, 0
    %v73 = vsel %vm62, %v43, 0
    %v76 = vsel %vm62, %v44, 0
    %v79 = vsel %vm62, %v45, 0
    %v82 = vsel %vm62, %v46, 0
    %v85 = vsel %vm62, %v47, 0
    %87 = vmatpush.msra.mxu0 0.0
    %88 = vmatpush.msra.mxu0 0.0
    %89 = vmatpush.msra.mxu0 0.0
    %90 = vmatpush.msra.mxu0 0.0
    %91 = vmatpush.msra.mxu0 0.0
    %92 = vmatpush.msra.mxu0 0.0
    %93 = vmatpush.msra.mxu0 0.0
    %94 = vmatpush.msra.mxu0 0.0
    %95 = vmatpush.msra.mxu0 0.0
    %96 = vmatpush.msra.mxu0 0.0
    %97 = vmatpush.msra.mxu0 0.0
    %98 = vmatpush.msra.mxu0 0.0
    %99 = vmatpush.msra.mxu0 0.0
    %100 = vmatpush.msra.mxu0 0.0
    %101 = vmatpush.msra.mxu0 0.0
    %102 = vmatpush.msra.mxu0 %v48
    %103 = vmatmul.f32.gmra.mxu0 %v64
    %v104 = vpop.f32.mrf.mxu0
    %v105 = vadd.f32 %v54, %v104
    %106 = vmatmul.f32.gmra.mxu0 %v67
    %v107 = vpop.f32.mrf.mxu0
    %v108 = vadd.f32 %v54, %v107
    %109 = vmatmul.f32.gmra.mxu0 %v70
    %v110 = vpop.f32.mrf.mxu0
    %v111 = vadd.f32 %v54, %v110
    %112 = vmatmul.f32.gmra.mxu0 %v73
    %v113 = vpop.f32.mrf.mxu0
    %v114 = vadd.f32 %v54, %v113
    %115 = vmatmul.f32.gmra.mxu0 %v76
    %v116 = vpop.f32.mrf.mxu0
    %v117 = vadd.f32 %v54, %v116
    %118 = vmatmul.f32.gmra.mxu0 %v79
    %v119 = vpop.f32.mrf.mxu0
    %v120 = vadd.f32 %v54, %v119
    %121 = vmatmul.f32.gmra.mxu0 %v82
    %v122 = vpop.f32.mrf.mxu0
    %v123 = vadd.f32 %v54, %v122
    %124 = vmatmul.f32.gmra.mxu0 %v85
    %v125 = vpop.f32.mrf.mxu0
    %v126 = vadd.f32 %v54, %v125
    %127 = vdwg.mxu0
    %128 = vmatpush.msra.mxu0 0.0
    %129 = vmatpush.msra.mxu0 0.0
    %130 = vmatpush.msra.mxu0 0.0
    %131 = vmatpush.msra.mxu0 0.0
    %132 = vmatpush.msra.mxu0 0.0
    %133 = vmatpush.msra.mxu0 0.0
    %134 = vmatpush.msra.mxu0 0.0
    %135 = vmatpush.msra.mxu0 0.0
    %136 = vmatpush.msra.mxu0 0.0
    %137 = vmatpush.msra.mxu0 0.0
    %138 = vmatpush.msra.mxu0 0.0
    %139 = vmatpush.msra.mxu0 0.0
    %140 = vmatpush.msra.mxu0 0.0
    %141 = vmatpush.msra.mxu0 0.0
    %142 = vmatpush.msra.mxu0 0.0
    %143 = vmatpush.msra.mxu0 %v49
    %144 = vmatmul.f32.gmra.mxu0 %v64
    %v145 = vpop.f32.mrf.mxu0
    %v146 = vadd.f32 %v55, %v145
    %147 = vmatmul.f32.gmra.mxu0 %v67
    %v148 = vpop.f32.mrf.mxu0
    %v149 = vadd.f32 %v55, %v148
    %150 = vmatmul.f32.gmra.mxu0 %v70
    %v151 = vpop.f32.mrf.mxu0
    %v152 = vadd.f32 %v55, %v151
    %153 = vmatmul.f32.gmra.mxu0 %v73
    %v154 = vpop.f32.mrf.mxu0
    %v155 = vadd.f32 %v55, %v154
    %156 = vmatmul.f32.gmra.mxu0 %v76
    %v157 = vpop.f32.mrf.mxu0
    %v158 = vadd.f32 %v55, %v157
    %159 = vmatmul.f32.gmra.mxu0 %v79
    %v160 = vpop.f32.mrf.mxu0
    %v161 = vadd.f32 %v55, %v160
    %162 = vmatmul.f32.gmra.mxu0 %v82
    %v163 = vpop.f32.mrf.mxu0
    %v164 = vadd.f32 %v55, %v163
    %165 = vmatmul.f32.gmra.mxu0 %v85
    %v166 = vpop.f32.mrf.mxu0
    %v167 = vadd.f32 %v55, %v166
    %168 = vdwg.mxu0
    %169 = vmatpush.msra.mxu0 0.0
    %170 = vmatpush.msra.mxu0 0.0
    %171 = vmatpush.msra.mxu0 0.0
    %172 = vmatpush.msra.mxu0 0.0
    %173 = vmatpush.msra.mxu0 0.0
    %174 = vmatpush.msra.mxu0 0.0
    %175 = vmatpush.msra.mxu0 0.0
    %176 = vmatpush.msra.mxu0 0.0
    %177 = vmatpush.msra.mxu0 0.0
    %178 = vmatpush.msra.mxu0 0.0
    %179 = vmatpush.msra.mxu0 0.0
    %180 = vmatpush.msra.mxu0 0.0
    %181 = vmatpush.msra.mxu0 0.0
    %182 = vmatpush.msra.mxu0 0.0
    %183 = vmatpush.msra.mxu0 0.0
    %184 = vmatpush.msra.mxu0 %v50
    %185 = vmatmul.f32.gmra.mxu0 %v64
    %v186 = vpop.f32.mrf.mxu0
    %v187 = vadd.f32 %v56, %v186
    %188 = vmatmul.f32.gmra.mxu0 %v67
    %v189 = vpop.f32.mrf.mxu0
    %v190 = vadd.f32 %v56, %v189
    %191 = vmatmul.f32.gmra.mxu0 %v70
    %v192 = vpop.f32.mrf.mxu0
    %v193 = vadd.f32 %v56, %v192
    %194 = vmatmul.f32.gmra.mxu0 %v73
    %v195 = vpop.f32.mrf.mxu0
    %v196 = vadd.f32 %v56, %v195
    %197 = vmatmul.f32.gmra.mxu0 %v76
    %v198 = vpop.f32.mrf.mxu0
    %v199 = vadd.f32 %v56, %v198
    %200 = vmatmul.f32.gmra.mxu0 %v79
    %v201 = vpop.f32.mrf.mxu0
    %v202 = vadd.f32 %v56, %v201
    %203 = vmatmul.f32.gmra.mxu0 %v82
    %v204 = vpop.f32.mrf.mxu0
    %v205 = vadd.f32 %v56, %v204
    %206 = vmatmul.f32.gmra.mxu0 %v85
    %v207 = vpop.f32.mrf.mxu0
    %v208 = vadd.f32 %v56, %v207
    %209 = vdwg.mxu0
    %210 = vmatpush.msra.mxu0 0.0
    %211 = vmatpush.msra.mxu0 0.0
    %212 = vmatpush.msra.mxu0 0.0
    %213 = vmatpush.msra.mxu0 0.0
    %214 = vmatpush.msra.mxu0 0.0
    %215 = vmatpush.msra.mxu0 0.0
    %216 = vmatpush.msra.mxu0 0.0
    %217 = vmatpush.msra.mxu0 0.0
    %218 = vmatpush.msra.mxu0 0.0
    %219 = vmatpush.msra.mxu0 0.0
    %220 = vmatpush.msra.mxu0 0.0
    %221 = vmatpush.msra.mxu0 0.0
    %222 = vmatpush.msra.mxu0 0.0
    %223 = vmatpush.msra.mxu0 0.0
    %224 = vmatpush.msra.mxu0 0.0
    %225 = vmatpush.msra.mxu0 %v51
    %226 = vmatmul.f32.gmra.mxu0 %v64
    %v227 = vpop.f32.mrf.mxu0
    %v228 = vadd.f32 %v57, %v227
    %229 = vmatmul.f32.gmra.mxu0 %v67
    %v230 = vpop.f32.mrf.mxu0
    %v231 = vadd.f32 %v57, %v230
    %232 = vmatmul.f32.gmra.mxu0 %v70
    %v233 = vpop.f32.mrf.mxu0
    %v234 = vadd.f32 %v57, %v233
    %235 = vmatmul.f32.gmra.mxu0 %v73
    %v236 = vpop.f32.mrf.mxu0
    %v237 = vadd.f32 %v57, %v236
    %238 = vmatmul.f32.gmra.mxu0 %v76
    %v239 = vpop.f32.mrf.mxu0
    %v240 = vadd.f32 %v57, %v239
    %241 = vmatmul.f32.gmra.mxu0 %v79
    %v242 = vpop.f32.mrf.mxu0
    %v243 = vadd.f32 %v57, %v242
    %244 = vmatmul.f32.gmra.mxu0 %v82
    %v245 = vpop.f32.mrf.mxu0
    %v246 = vadd.f32 %v57, %v245
    %247 = vmatmul.f32.gmra.mxu0 %v85
    %v248 = vpop.f32.mrf.mxu0
    %v249 = vadd.f32 %v57, %v248
    %250 = vdwg.mxu0
    %251 = vst [vmem:[#allocation2] sm:$0xff] %v105
    %252 = vst [vmem:[#allocation2 + $0x8] sm:$0xff] %v146
    %253 = vst [vmem:[#allocation2 + $0x10] sm:$0xff] %v187
    %254 = vst [vmem:[#allocation2 + $0x18] sm:$0xff] %v228
    %255 = vst [vmem:[#allocation2 + $0x20] sm:$0xff] %v108
    %256 = vst [vmem:[#allocation2 + $0x28] sm:$0xff] %v149
    %257 = vst [vmem:[#allocation2 + $0x30] sm:$0xff] %v190
    %258 = vst [vmem:[#allocation2 + $0x38] sm:$0xff] %v231
    %259 = vst [vmem:[#allocation2 + $0x40] sm:$0xff] %v111
    %260 = vst [vmem:[#allocation2 + $0x48] sm:$0xff] %v152
    %261 = vst [vmem:[#allocation2 + $0x50] sm:$0xff] %v193
    %262 = vst [vmem:[#allocation2 + $0x58] sm:$0xff] %v234
    %263 = vst [vmem:[#allocation2 + $0x60] sm:$0xff] %v114
    %264 = vst [vmem:[#allocation2 + $0x68] sm:$0xff] %v155
    %265 = vst [vmem:[#allocation2 + $0x70] sm:$0xff] %v196
    %266 = vst [vmem:[#allocation2 + $0x78] sm:$0xff] %v237
    %267 = vst [vmem:[#allocation2 + $0x80] sm:$0xff] %v117
    %268 = vst [vmem:[#allocation2 + $0x88] sm:$0xff] %v158
    %269 = vst [vmem:[#allocation2 + $0x90] sm:$0xff] %v199
    %270 = vst [vmem:[#allocation2 + $0x98] sm:$0xff] %v240
    %271 = vst [vmem:[#allocation2 + $0xa0] sm:$0xff] %v120
    %272 = vst [vmem:[#allocation2 + $0xa8] sm:$0xff] %v161
    %273 = vst [vmem:[#allocation2 + $0xb0] sm:$0xff] %v202
    %274 = vst [vmem:[#allocation2 + $0xb8] sm:$0xff] %v243
    %275 = vst [vmem:[#allocation2 + $0xc0] sm:$0xff] %v123
    %276 = vst [vmem:[#allocation2 + $0xc8] sm:$0xff] %v164
    %277 = vst [vmem:[#allocation2 + $0xd0] sm:$0xff] %v205
    %278 = vst [vmem:[#allocation2 + $0xd8] sm:$0xff] %v246
    %279 = vst [vmem:[#allocation2 + $0xe0] sm:$0xff] %v126
    %280 = vst [vmem:[#allocation2 + $0xe8] sm:$0xff] %v167
    %281 = vst [vmem:[#allocation2 + $0xf0] sm:$0xff] %v208
    %282 = vst [vmem:[#allocation2 + $0xf8] sm:$0xff] %v249
    %v283 = vld [vmem:[%s4] sm:$0xf]
    %v285 = vperm.slane %v283, 0
    %v286 = vperm.slane %v283, 1
    %v287 = vperm.slane %v283, 2
    %v288 = vperm.slane %v283, 3
    %v293 = vld [vmem:[#allocation2] sm:$0xff]
    %v294 = vld [vmem:[#allocation2 + $0x8] sm:$0xff]
    %v295 = vld [vmem:[#allocation2 + $0x10] sm:$0xff]
    %v296 = vld [vmem:[#allocation2 + $0x18] sm:$0xff]
    %v297 = vmul.f32 %v293, 0.5
    %v298 = vtanh.pop %v297
    %v299 = vmul.f32 %v298, 0.5
    %v300 = vadd.f32 %v299, 0.5
    %v301 = vmul.f32 %v294, 0.5
    %v302 = vtanh.pop %v301
    %v303 = vmul.f32 %v302, 0.5
    %v304 = vadd.f32 %v303, 0.5
    %v305 = vtanh.pop %v295
    %v306 = vmul.f32 %v296, 0.5
    %v307 = vtanh.pop %v306
    %v308 = vmul.f32 %v307, 0.5
    %v309 = vadd.f32 %v308, 0.5
    %v310 = vmul.f32 %v304, 0.0
    %v311 = vmul.f32 %v300, %v305
    %v312 = vadd.f32 %v310, %v311
    %v313 = vtanh.pop %v312
    %v314 = vmul.f32 %v309, %v313
    %315 = vst [vmem:[#allocation3] sm:$0xff] %v314
    %316 = vst [vmem:[#allocation3 + $0x8] sm:$0xff] 0.0
    %v317 = vld [vmem:[#allocation3] sm:$0xff]
    %v318 = vld [vmem:[#allocation3 + $0x8] sm:$0xff]
    %v319 = vld [vmem:[#allocation4] sm:$0xff]
    %v320 = vld [vmem:[#allocation4 + $0x8] sm:$0xff]
    %v321 = vld [vmem:[#allocation4 + $0x10] sm:$0xff]
    %v322 = vld [vmem:[#allocation4 + $0x18] sm:$0xff]
    %v323 = vld [vmem:[#allocation4 + $0x20] sm:$0xff]
    %v324 = vld [vmem:[#allocation4 + $0x28] sm:$0xff]
    %v325 = vld [vmem:[#allocation4 + $0x30] sm:$0xff]
    %v326 = vld [vmem:[#allocation4 + $0x38] sm:$0xff]
    %v327 = vld [vmem:[#allocation4 + $0x40] sm:$0xff]
    %v328 = vld [vmem:[#allocation4 + $0x48] sm:$0xff]
    %v329 = vld [vmem:[#allocation4 + $0x50] sm:$0xff]
    %v330 = vld [vmem:[#allocation4 + $0x58] sm:$0xff]
    %v331 = vld [vmem:[#allocation4 + $0x60] sm:$0xff]
    %v332 = vld [vmem:[#allocation4 + $0x68] sm:$0xff]
    %v333 = vld [vmem:[#allocation4 + $0x70] sm:$0xff]
    %v334 = vld [vmem:[#allocation4 + $0x78] sm:$0xff]
    %v335 = vld [vmem:[#allocation4 + $0x80] sm:$0xff]
    %v336 = vld [vmem:[#allocation4 + $0x88] sm:$0xff]
    %v337 = vld [vmem:[#allocation4 + $0x90] sm:$0xff]
    %v338 = vld [vmem:[#allocation4 + $0x98] sm:$0xff]
    %v339 = vld [vmem:[#allocation4 + $0xa0] sm:$0xff]
    %v340 = vld [vmem:[#allocation4 + $0xa8] sm:$0xff]
    %v341 = vld [vmem:[#allocation4 + $0xb0] sm:$0xff]
    %v342 = vld [vmem:[#allocation4 + $0xb8] sm:$0xff]
    %v343 = vld [vmem:[#allocation4 + $0xc0] sm:$0xff]
    %v344 = vld [vmem:[#allocation4 + $0xc8] sm:$0xff]
    %v345 = vld [vmem:[#allocation4 + $0xd0] sm:$0xff]
    %v346 = vld [vmem:[#allocation4 + $0xd8] sm:$0xff]
    %v347 = vld [vmem:[#allocation4 + $0xe0] sm:$0xff]
    %v348 = vld [vmem:[#allocation4 + $0xe8] sm:$0xff]
    %v349 = vld [vmem:[#allocation4 + $0xf0] sm:$0xff]
    %v350 = vld [vmem:[#allocation4 + $0xf8] sm:$0xff]
    %v351 = vld [vmem:[#allocation4 + $0x100] sm:$0xff]
    %v352 = vld [vmem:[#allocation4 + $0x108] sm:$0xff]
    %v353 = vld [vmem:[#allocation4 + $0x110] sm:$0xff]
    %v354 = vld [vmem:[#allocation4 + $0x118] sm:$0xff]
    %v355 = vld [vmem:[#allocation4 + $0x120] sm:$0xff]
    %v356 = vld [vmem:[#allocation4 + $0x128] sm:$0xff]
    %v357 = vld [vmem:[#allocation4 + $0x130] sm:$0xff]
    %v358 = vld [vmem:[#allocation4 + $0x138] sm:$0xff]
    %v359 = vld [vmem:[#allocation4 + $0x140] sm:$0xff]
    %v360 = vld [vmem:[#allocation4 + $0x148] sm:$0xff]
    %v361 = vld [vmem:[#allocation4 + $0x150] sm:$0xff]
    %v362 = vld [vmem:[#allocation4 + $0x158] sm:$0xff]
    %v363 = vld [vmem:[#allocation4 + $0x160] sm:$0xff]
    %v364 = vld [vmem:[#allocation4 + $0x168] sm:$0xff]
    %v365 = vld [vmem:[#allocation4 + $0x170] sm:$0xff]
    %v366 = vld [vmem:[#allocation4 + $0x178] sm:$0xff]
    %v367 = vld [vmem:[#allocation4 + $0x180] sm:$0xff]
    %v368 = vld [vmem:[#allocation4 + $0x188] sm:$0xff]
    %v369 = vld [vmem:[#allocation4 + $0x190] sm:$0xff]
    %v370 = vld [vmem:[#allocation4 + $0x198] sm:$0xff]
    %v371 = vld [vmem:[#allocation4 + $0x1a0] sm:$0xff]
    %v372 = vld [vmem:[#allocation4 + $0x1a8] sm:$0xff]
    %v373 = vld [vmem:[#allocation4 + $0x1b0] sm:$0xff]
    %v374 = vld [vmem:[#allocation4 + $0x1b8] sm:$0xff]
    %v375 = vld [vmem:[#allocation4 + $0x1c0] sm:$0xff]
    %v376 = vld [vmem:[#allocation4 + $0x1c8] sm:$0xff]
    %v377 = vld [vmem:[#allocation4 + $0x1d0] sm:$0xff]
    %v378 = vld [vmem:[#allocation4 + $0x1d8] sm:$0xff]
    %v379 = vld [vmem:[#allocation4 + $0x1e0] sm:$0xff]
    %v380 = vld [vmem:[#allocation4 + $0x1e8] sm:$0xff]
    %v381 = vld [vmem:[#allocation4 + $0x1f0] sm:$0xff]
    %v382 = vld [vmem:[#allocation4 + $0x1f8] sm:$0xff]
    %v383 = vld [vmem:[#allocation4 + $0x200] sm:$0xff]
    %v384 = vld [vmem:[#allocation4 + $0x208] sm:$0xff]
    %v385 = vld [vmem:[#allocation4 + $0x210] sm:$0xff]
    %v386 = vld [vmem:[#allocation4 + $0x218] sm:$0xff]
    %v387 = vld [vmem:[#allocation4 + $0x220] sm:$0xff]
    %v388 = vld [vmem:[#allocation4 + $0x228] sm:$0xff]
    %v389 = vld [vmem:[#allocation4 + $0x230] sm:$0xff]
    %v390 = vld [vmem:[#allocation4 + $0x238] sm:$0xff]
    %v391 = vld [vmem:[#allocation4 + $0x240] sm:$0xff]
    %v392 = vld [vmem:[#allocation4 + $0x248] sm:$0xff]
    %v393 = vld [vmem:[#allocation4 + $0x250] sm:$0xff]
    %v394 = vld [vmem:[#allocation4 + $0x258] sm:$0xff]
    %v395 = vld [vmem:[#allocation4 + $0x260] sm:$0xff]
    %v396 = vld [vmem:[#allocation4 + $0x268] sm:$0xff]
    %v397 = vld [vmem:[#allocation4 + $0x270] sm:$0xff]
    %v398 = vld [vmem:[#allocation4 + $0x278] sm:$0xff]
    %v399 = vld [vmem:[#allocation4 + $0x280] sm:$0xff]
    %v400 = vld [vmem:[#allocation4 + $0x288] sm:$0xff]
    %v401 = vld [vmem:[#allocation4 + $0x290] sm:$0xff]
    %v402 = vld [vmem:[#allocation4 + $0x298] sm:$0xff]
    %v403 = vld [vmem:[#allocation4 + $0x2a0] sm:$0xff]
    %v404 = vld [vmem:[#allocation4 + $0x2a8] sm:$0xff]
    %v405 = vld [vmem:[#allocation4 + $0x2b0] sm:$0xff]
    %v406 = vld [vmem:[#allocation4 + $0x2b8] sm:$0xff]
    %v407 = vld [vmem:[#allocation4 + $0x2c0] sm:$0xff]
    %v408 = vld [vmem:[#allocation4 + $0x2c8] sm:$0xff]
    %v409 = vld [vmem:[#allocation4 + $0x2d0] sm:$0xff]
    %v410 = vld [vmem:[#allocation4 + $0x2d8] sm:$0xff]
    %v411 = vld [vmem:[#allocation4 + $0x2e0] sm:$0xff]
    %v412 = vld [vmem:[#allocation4 + $0x2e8] sm:$0xff]
    %v413 = vld [vmem:[#allocation4 + $0x2f0] sm:$0xff]
    %v414 = vld [vmem:[#allocation4 + $0x2f8] sm:$0xff]
    %v415 = vld [vmem:[#allocation4 + $0x300] sm:$0xff]
    %v416 = vld [vmem:[#allocation4 + $0x308] sm:$0xff]
    %v417 = vld [vmem:[#allocation4 + $0x310] sm:$0xff]
    %v418 = vld [vmem:[#allocation4 + $0x318] sm:$0xff]
    %v419 = vld [vmem:[#allocation4 + $0x320] sm:$0xff]
    %v420 = vld [vmem:[#allocation4 + $0x328] sm:$0xff]
    %v421 = vld [vmem:[#allocation4 + $0x330] sm:$0xff]
    %v422 = vld [vmem:[#allocation4 + $0x338] sm:$0xff]
    %v423 = vld [vmem:[#allocation4 + $0x340] sm:$0xff]
    %v424 = vld [vmem:[#allocation4 + $0x348] sm:$0xff]
    %v425 = vld [vmem:[#allocation4 + $0x350] sm:$0xff]
    %v426 = vld [vmem:[#allocation4 + $0x358] sm:$0xff]
    %v427 = vld [vmem:[#allocation4 + $0x360] sm:$0xff]
    %v428 = vld [vmem:[#allocation4 + $0x368] sm:$0xff]
    %v429 = vld [vmem:[#allocation4 + $0x370] sm:$0xff]
    %v430 = vld [vmem:[#allocation4 + $0x378] sm:$0xff]
    %v431 = vld [vmem:[#allocation4 + $0x380] sm:$0xff]
    %v432 = vld [vmem:[#allocation4 + $0x388] sm:$0xff]
    %v433 = vld [vmem:[#allocation4 + $0x390] sm:$0xff]
    %v434 = vld [vmem:[#allocation4 + $0x398] sm:$0xff]
    %v435 = vld [vmem:[#allocation4 + $0x3a0] sm:$0xff]
    %v436 = vld [vmem:[#allocation4 + $0x3a8] sm:$0xff]
    %v437 = vld [vmem:[#allocation4 + $0x3b0] sm:$0xff]
    %v438 = vld [vmem:[#allocation4 + $0x3b8] sm:$0xff]
    %v439 = vld [vmem:[#allocation4 + $0x3c0] sm:$0xff]
    %v440 = vld [vmem:[#allocation4 + $0x3c8] sm:$0xff]
    %v441 = vld [vmem:[#allocation4 + $0x3d0] sm:$0xff]
    %v442 = vld [vmem:[#allocation4 + $0x3d8] sm:$0xff]
    %v443 = vld [vmem:[#allocation4 + $0x3e0] sm:$0xff]
    %v444 = vld [vmem:[#allocation4 + $0x3e8] sm:$0xff]
    %v445 = vld [vmem:[#allocation4 + $0x3f0] sm:$0xff]
    %v446 = vld [vmem:[#allocation4 + $0x3f8] sm:$0xff]
    %v447 = vld [vmem:[#allocation4 + $0x400] sm:$0xff]
    %v448 = vld [vmem:[#allocation4 + $0x408] sm:$0xff]
    %v449 = vld [vmem:[#allocation4 + $0x410] sm:$0xff]
    %v450 = vld [vmem:[#allocation4 + $0x418] sm:$0xff]
    %v451 = vld [vmem:[#allocation4 + $0x420] sm:$0xff]
    %v452 = vld [vmem:[#allocation4 + $0x428] sm:$0xff]
    %v453 = vld [vmem:[#allocation4 + $0x430] sm:$0xff]
    %v454 = vld [vmem:[#allocation4 + $0x438] sm:$0xff]
    %v455 = vld [vmem:[#allocation4 + $0x440] sm:$0xff]
    %v456 = vld [vmem:[#allocation4 + $0x448] sm:$0xff]
    %v457 = vld [vmem:[#allocation4 + $0x450] sm:$0xff]
    %v458 = vld [vmem:[#allocation4 + $0x458] sm:$0xff]
    %v459 = vld [vmem:[#allocation4 + $0x460] sm:$0xff]
    %v460 = vld [vmem:[#allocation4 + $0x468] sm:$0xff]
    %v461 = vld [vmem:[#allocation4 + $0x470] sm:$0xff]
    %v462 = vld [vmem:[#allocation4 + $0x478] sm:$0xff]
    %v463 = vld [vmem:[#allocation4 + $0x480] sm:$0xff]
    %v464 = vld [vmem:[#allocation4 + $0x488] sm:$0xff]
    %v465 = vld [vmem:[#allocation4 + $0x490] sm:$0xff]
    %v466 = vld [vmem:[#allocation4 + $0x498] sm:$0xff]
    %v467 = vld [vmem:[#allocation4 + $0x4a0] sm:$0xff]
    %v468 = vld [vmem:[#allocation4 + $0x4a8] sm:$0xff]
    %v469 = vld [vmem:[#allocation4 + $0x4b0] sm:$0xff]
    %v470 = vld [vmem:[#allocation4 + $0x4b8] sm:$0xff]
    %v471 = vld [vmem:[#allocation4 + $0x4c0] sm:$0xff]
    %v472 = vld [vmem:[#allocation4 + $0x4c8] sm:$0xff]
    %v473 = vld [vmem:[#allocation4 + $0x4d0] sm:$0xff]
    %v474 = vld [vmem:[#allocation4 + $0x4d8] sm:$0xff]
    %v475 = vld [vmem:[#allocation4 + $0x4e0] sm:$0xff]
    %v476 = vld [vmem:[#allocation4 + $0x4e8] sm:$0xff]
    %v477 = vld [vmem:[#allocation4 + $0x4f0] sm:$0xff]
    %v478 = vld [vmem:[#allocation4 + $0x4f8] sm:$0xff]
    %v479 = vld [vmem:[#allocation4 + $0x500] sm:$0xff]
    %v480 = vld [vmem:[#allocation4 + $0x508] sm:$0xff]
    %v481 = vld [vmem:[#allocation4 + $0x510] sm:$0xff]
    %v482 = vld [vmem:[#allocation4 + $0x518] sm:$0xff]
    %v483 = vld [vmem:[#allocation4 + $0x520] sm:$0xff]
    %v484 = vld [vmem:[#allocation4 + $0x528] sm:$0xff]
    %v485 = vld [vmem:[#allocation4 + $0x530] sm:$0xff]
    %v486 = vld [vmem:[#allocation4 + $0x538] sm:$0xff]
    %v487 = vld [vmem:[#allocation4 + $0x540] sm:$0xff]
    %v488 = vld [vmem:[#allocation4 + $0x548] sm:$0xff]
    %v489 = vld [vmem:[#allocation4 + $0x550] sm:$0xff]
    %v490 = vld [vmem:[#allocation4 + $0x558] sm:$0xff]
    %v491 = vld [vmem:[#allocation4 + $0x560] sm:$0xff]
    %v492 = vld [vmem:[#allocation4 + $0x568] sm:$0xff]
    %v493 = vld [vmem:[#allocation4 + $0x570] sm:$0xff]
    %v494 = vld [vmem:[#allocation4 + $0x578] sm:$0xff]
    %v495 = vld [vmem:[#allocation4 + $0x580] sm:$0xff]
    %v496 = vld [vmem:[#allocation4 + $0x588] sm:$0xff]
    %v497 = vld [vmem:[#allocation4 + $0x590] sm:$0xff]
    %v498 = vld [vmem:[#allocation4 + $0x598] sm:$0xff]
    %v499 = vld [vmem:[#allocation4 + $0x5a0] sm:$0xff]
    %v500 = vld [vmem:[#allocation4 + $0x5a8] sm:$0xff]
    %v501 = vld [vmem:[#allocation4 + $0x5b0] sm:$0xff]
    %v502 = vld [vmem:[#allocation4 + $0x5b8] sm:$0xff]
    %v503 = vld [vmem:[#allocation4 + $0x5c0] sm:$0xff]
    %v504 = vld [vmem:[#allocation4 + $0x5c8] sm:$0xff]
    %v505 = vld [vmem:[#allocation4 + $0x5d0] sm:$0xff]
    %v506 = vld [vmem:[#allocation4 + $0x5d8] sm:$0xff]
    %v507 = vld [vmem:[#allocation4 + $0x5e0] sm:$0xff]
    %v508 = vld [vmem:[#allocation4 + $0x5e8] sm:$0xff]
    %v509 = vld [vmem:[#allocation4 + $0x5f0] sm:$0xff]
    %v510 = vld [vmem:[#allocation4 + $0x5f8] sm:$0xff]
    %v511 = vld [vmem:[#allocation4 + $0x600] sm:$0xff]
    %v512 = vld [vmem:[#allocation4 + $0x608] sm:$0xff]
    %v513 = vld [vmem:[#allocation4 + $0x610] sm:$0xff]
    %v514 = vld [vmem:[#allocation4 + $0x618] sm:$0xff]
    %v515 = vld [vmem:[#allocation4 + $0x620] sm:$0xff]
    %v516 = vld [vmem:[#allocation4 + $0x628] sm:$0xff]
    %v517 = vld [vmem:[#allocation4 + $0x630] sm:$0xff]
    %v518 = vld [vmem:[#allocation4 + $0x638] sm:$0xff]
    %v519 = vld [vmem:[#allocation4 + $0x640] sm:$0xff]
    %v520 = vld [vmem:[#allocation4 + $0x648] sm:$0xff]
    %v521 = vld [vmem:[#allocation4 + $0x650] sm:$0xff]
    %v522 = vld [vmem:[#allocation4 + $0x658] sm:$0xff]
    %v523 = vld [vmem:[#allocation4 + $0x660] sm:$0xff]
    %v524 = vld [vmem:[#allocation4 + $0x668] sm:$0xff]
    %v525 = vld [vmem:[#allocation4 + $0x670] sm:$0xff]
    %v526 = vld [vmem:[#allocation4 + $0x678] sm:$0xff]
    %v527 = vld [vmem:[#allocation4 + $0x680] sm:$0xff]
    %v528 = vld [vmem:[#allocation4 + $0x688] sm:$0xff]
    %v529 = vld [vmem:[#allocation4 + $0x690] sm:$0xff]
    %v530 = vld [vmem:[#allocation4 + $0x698] sm:$0xff]
    %v531 = vld [vmem:[#allocation4 + $0x6a0] sm:$0xff]
    %v532 = vld [vmem:[#allocation4 + $0x6a8] sm:$0xff]
    %v533 = vld [vmem:[#allocation4 + $0x6b0] sm:$0xff]
    %v534 = vld [vmem:[#allocation4 + $0x6b8] sm:$0xff]
    %v535 = vld [vmem:[#allocation4 + $0x6c0] sm:$0xff]
    %v536 = vld [vmem:[#allocation4 + $0x6c8] sm:$0xff]
    %v537 = vld [vmem:[#allocation4 + $0x6d0] sm:$0xff]
    %v538 = vld [vmem:[#allocation4 + $0x6d8] sm:$0xff]
    %v539 = vld [vmem:[#allocation4 + $0x6e0] sm:$0xff]
    %v540 = vld [vmem:[#allocation4 + $0x6e8] sm:$0xff]
    %v541 = vld [vmem:[#allocation4 + $0x6f0] sm:$0xff]
    %v542 = vld [vmem:[#allocation4 + $0x6f8] sm:$0xff]
    %v543 = vld [vmem:[#allocation4 + $0x700] sm:$0xff]
    %v544 = vld [vmem:[#allocation4 + $0x708] sm:$0xff]
    %v545 = vld [vmem:[#allocation4 + $0x710] sm:$0xff]
    %v546 = vld [vmem:[#allocation4 + $0x718] sm:$0xff]
    %v547 = vld [vmem:[#allocation4 + $0x720] sm:$0xff]
    %v548 = vld [vmem:[#allocation4 + $0x728] sm:$0xff]
    %v549 = vld [vmem:[#allocation4 + $0x730] sm:$0xff]
    %v550 = vld [vmem:[#allocation4 + $0x738] sm:$0xff]
    %v551 = vld [vmem:[#allocation4 + $0x740] sm:$0xff]
    %v552 = vld [vmem:[#allocation4 + $0x748] sm:$0xff]
    %v553 = vld [vmem:[#allocation4 + $0x750] sm:$0xff]
    %v554 = vld [vmem:[#allocation4 + $0x758] sm:$0xff]
    %v555 = vld [vmem:[#allocation4 + $0x760] sm:$0xff]
    %v556 = vld [vmem:[#allocation4 + $0x768] sm:$0xff]
    %v557 = vld [vmem:[#allocation4 + $0x770] sm:$0xff]
    %v558 = vld [vmem:[#allocation4 + $0x778] sm:$0xff]
    %v559 = vld [vmem:[#allocation4 + $0x780] sm:$0xff]
    %v560 = vld [vmem:[#allocation4 + $0x788] sm:$0xff]
    %v561 = vld [vmem:[#allocation4 + $0x790] sm:$0xff]
    %v562 = vld [vmem:[#allocation4 + $0x798] sm:$0xff]
    %v563 = vld [vmem:[#allocation4 + $0x7a0] sm:$0xff]
    %v564 = vld [vmem:[#allocation4 + $0x7a8] sm:$0xff]
    %v565 = vld [vmem:[#allocation4 + $0x7b0] sm:$0xff]
    %v566 = vld [vmem:[#allocation4 + $0x7b8] sm:$0xff]
    %v567 = vld [vmem:[#allocation4 + $0x7c0] sm:$0xff]
    %v568 = vld [vmem:[#allocation4 + $0x7c8] sm:$0xff]
    %v569 = vld [vmem:[#allocation4 + $0x7d0] sm:$0xff]
    %v570 = vld [vmem:[#allocation4 + $0x7d8] sm:$0xff]
    %v571 = vld [vmem:[#allocation4 + $0x7e0] sm:$0xff]
    %v572 = vld [vmem:[#allocation4 + $0x7e8] sm:$0xff]
    %v573 = vld [vmem:[#allocation4 + $0x7f0] sm:$0xff]
    %v574 = vld [vmem:[#allocation4 + $0x7f8] sm:$0xff]
    %575 = vmatpush.msra.mxu0 %v439
    %576 = vmatpush.msra.mxu0 %v431
    %577 = vmatpush.msra.mxu0 %v423
    %578 = vmatpush.msra.mxu0 %v415
    %579 = vmatpush.msra.mxu0 %v407
    %580 = vmatpush.msra.mxu0 %v399
    %581 = vmatpush.msra.mxu0 %v391
    %582 = vmatpush.msra.mxu0 %v383
    %583 = vmatpush.msra.mxu0 %v375
    %584 = vmatpush.msra.mxu0 %v367
    %585 = vmatpush.msra.mxu0 %v359
    %586 = vmatpush.msra.mxu0 %v351
    %587 = vmatpush.msra.mxu0 %v343
    %588 = vmatpush.msra.mxu0 %v335
    %589 = vmatpush.msra.mxu0 %v327
    %590 = vmatpush.msra.mxu0 %v319
    %591 = vmatmul.f32.gmra.mxu0 %v317
    %v592 = vpop.f32.mrf.mxu0
    %v593 = vadd.f32 0.0, %v592
    %594 = vdwg.mxu0
    %595 = vmatpush.msra.mxu0 %v567
    %596 = vmatpush.msra.mxu0 %v559
    %597 = vmatpush.msra.mxu0 %v551
    %598 = vmatpush.msra.mxu0 %v543
    %599 = vmatpush.msra.mxu0 %v535
    %600 = vmatpush.msra.mxu0 %v527
    %601 = vmatpush.msra.mxu0 %v519
    %602 = vmatpush.msra.mxu0 %v511
    %603 = vmatpush.msra.mxu0 %v503
    %604 = vmatpush.msra.mxu0 %v495
    %605 = vmatpush.msra.mxu0 %v487
    %606 = vmatpush.msra.mxu0 %v479
    %607 = vmatpush.msra.mxu0 %v471
    %608 = vmatpush.msra.mxu0 %v463
    %609 = vmatpush.msra.mxu0 %v455
    %610 = vmatpush.msra.mxu0 %v447
    %611 = vmatmul.f32.gmra.mxu0 %v318
    %v612 = vpop.f32.mrf.mxu0
    %v613 = vadd.f32 %v593, %v612
    %614 = vdwg.mxu0
    %615 = vmatpush.msra.mxu0 %v440
    %616 = vmatpush.msra.mxu0 %v432
    %617 = vmatpush.msra.mxu0 %v424
    %618 = vmatpush.msra.mxu0 %v416
    %619 = vmatpush.msra.mxu0 %v408
    %620 = vmatpush.msra.mxu0 %v400
    %621 = vmatpush.msra.mxu0 %v392
    %622 = vmatpush.msra.mxu0 %v384
    %623 = vmatpush.msra.mxu0 %v376
    %624 = vmatpush.msra.mxu0 %v368
    %625 = vmatpush.msra.mxu0 %v360
    %626 = vmatpush.msra.mxu0 %v352
    %627 = vmatpush.msra.mxu0 %v344
    %628 = vmatpush.msra.mxu0 %v336
    %629 = vmatpush.msra.mxu0 %v328
    %630 = vmatpush.msra.mxu0 %v320
    %631 = vmatmul.f32.gmra.mxu0 %v317
    %v632 = vpop.f32.mrf.mxu0
    %v633 = vadd.f32 0.0, %v632
    %634 = vdwg.mxu0
    %635 = vmatpush.msra.mxu0 %v568
    %636 = vmatpush.msra.mxu0 %v560
    %637 = vmatpush.msra.mxu0 %v552
    %638 = vmatpush.msra.mxu0 %v544
    %639 = vmatpush.msra.mxu0 %v536
    %640 = vmatpush.msra.mxu0 %v528
    %641 = vmatpush.msra.mxu0 %v520
    %642 = vmatpush.msra.mxu0 %v512
    %643 = vmatpush.msra.mxu0 %v504
    %644 = vmatpush.msra.mxu0 %v496
    %645 = vmatpush.msra.mxu0 %v488
    %646 = vmatpush.msra.mxu0 %v480
    %647 = vmatpush.msra.mxu0 %v472
    %648 = vmatpush.msra.mxu0 %v464
    %649 = vmatpush.msra.mxu0 %v456
    %650 = vmatpush.msra.mxu0 %v448
    %651 = vmatmul.f32.gmra.mxu0 %v318
    %v652 = vpop.f32.mrf.mxu0
    %v653 = vadd.f32 %v633, %v652
    %654 = vdwg.mxu0
    %655 = vmatpush.msra.mxu0 %v441
    %656 = vmatpush.msra.mxu0 %v433
    %657 = vmatpush.msra.mxu0 %v425
    %658 = vmatpush.msra.mxu0 %v417
    %659 = vmatpush.msra.mxu0 %v409
    %660 = vmatpush.msra.mxu0 %v401
    %661 = vmatpush.msra.mxu0 %v393
    %662 = vmatpush.msra.mxu0 %v385
    %663 = vmatpush.msra.mxu0 %v377
    %664 = vmatpush.msra.mxu0 %v369
    %665 = vmatpush.msra.mxu0 %v361
    %666 = vmatpush.msra.mxu0 %v353
    %667 = vmatpush.msra.mxu0 %v345
    %668 = vmatpush.msra.mxu0 %v337
    %669 = vmatpush.msra.mxu0 %v329
    %670 = vmatpush.msra.mxu0 %v321
    %671 = vmatmul.f32.gmra.mxu0 %v317
    %v672 = vpop.f32.mrf.mxu0
    %v673 = vadd.f32 0.0, %v672
    %674 = vdwg.mxu0
    %675 = vmatpush.msra.mxu0 %v569
    %676 = vmatpush.msra.mxu0 %v561
    %677 = vmatpush.msra.mxu0 %v553
    %678 = vmatpush.msra.mxu0 %v545
    %679 = vmatpush.msra.mxu0 %v537
    %680 = vmatpush.msra.mxu0 %v529
    %681 = vmatpush.msra.mxu0 %v521
    %682 = vmatpush.msra.mxu0 %v513
    %683 = vmatpush.msra.mxu0 %v505
    %684 = vmatpush.msra.mxu0 %v497
    %685 = vmatpush.msra.mxu0 %v489
    %686 = vmatpush.msra.mxu0 %v481
    %687 = vmatpush.msra.mxu0 %v473
    %688 = vmatpush.msra.mxu0 %v465
    %689 = vmatpush.msra.mxu0 %v457
    %690 = vmatpush.msra.mxu0 %v449
    %691 = vmatmul.f32.gmra.mxu0 %v318
    %v692 = vpop.f32.mrf.mxu0
    %v693 = vadd.f32 %v673, %v692
    %694 = vdwg.mxu0
    %695 = vmatpush.msra.mxu0 %v442
    %696 = vmatpush.msra.mxu0 %v434
    %697 = vmatpush.msra.mxu0 %v426
    %698 = vmatpush.msra.mxu0 %v418
    %699 = vmatpush.msra.mxu0 %v410
    %700 = vmatpush.msra.mxu0 %v402
    %701 = vmatpush.msra.mxu0 %v394
    %702 = vmatpush.msra.mxu0 %v386
    %703 = vmatpush.msra.mxu0 %v378
    %704 = vmatpush.msra.mxu0 %v370
    %705 = vmatpush.msra.mxu0 %v362
    %706 = vmatpush.msra.mxu0 %v354
    %707 = vmatpush.msra.mxu0 %v346
    %708 = vmatpush.msra.mxu0 %v338
    %709 = vmatpush.msra.mxu0 %v330
    %710 = vmatpush.msra.mxu0 %v322
    %711 = vmatmul.f32.gmra.mxu0 %v317
    %v712 = vpop.f32.mrf.mxu0
    %v713 = vadd.f32 0.0, %v712
    %714 = vdwg.mxu0
    %715 = vmatpush.msra.mxu0 %v570
    %716 = vmatpush.msra.mxu0 %v562
    %717 = vmatpush.msra.mxu0 %v554
    %718 = vmatpush.msra.mxu0 %v546
    %719 = vmatpush.msra.mxu0 %v538
    %720 = vmatpush.msra.mxu0 %v530
    %721 = vmatpush.msra.mxu0 %v522
    %722 = vmatpush.msra.mxu0 %v514
    %723 = vmatpush.msra.mxu0 %v506
    %724 = vmatpush.msra.mxu0 %v498
    %725 = vmatpush.msra.mxu0 %v490
    %726 = vmatpush.msra.mxu0 %v482
    %727 = vmatpush.msra.mxu0 %v474
    %728 = vmatpush.msra.mxu0 %v466
    %729 = vmatpush.msra.mxu0 %v458
    %730 = vmatpush.msra.mxu0 %v450
    %731 = vmatmul.f32.gmra.mxu0 %v318
    %v732 = vpop.f32.mrf.mxu0
    %v733 = vadd.f32 %v713, %v732
    %734 = vdwg.mxu0
    %735 = vmatpush.msra.mxu0 %v443
    %736 = vmatpush.msra.mxu0 %v435
    %737 = vmatpush.msra.mxu0 %v427
    %738 = vmatpush.msra.mxu0 %v419
    %739 = vmatpush.msra.mxu0 %v411
    %740 = vmatpush.msra.mxu0 %v403
    %741 = vmatpush.msra.mxu0 %v395
    %742 = vmatpush.msra.mxu0 %v387
    %743 = vmatpush.msra.mxu0 %v379
    %744 = vmatpush.msra.mxu0 %v371
    %745 = vmatpush.msra.mxu0 %v363
    %746 = vmatpush.msra.mxu0 %v355
    %747 = vmatpush.msra.mxu0 %v347
    %748 = vmatpush.msra.mxu0 %v339
    %749 = vmatpush.msra.mxu0 %v331
    %750 = vmatpush.msra.mxu0 %v323
    %751 = vmatmul.f32.gmra.mxu0 %v317
    %v752 = vpop.f32.mrf.mxu0
    %v753 = vadd.f32 0.0, %v752
    %754 = vdwg.mxu0
    %755 = vmatpush.msra.mxu0 %v571
    %756 = vmatpush.msra.mxu0 %v563
    %757 = vmatpush.msra.mxu0 %v555
    %758 = vmatpush.msra.mxu0 %v547
    %759 = vmatpush.msra.mxu0 %v539
    %760 = vmatpush.msra.mxu0 %v531
    %761 = vmatpush.msra.mxu0 %v523
    %762 = vmatpush.msra.mxu0 %v515
    %763 = vmatpush.msra.mxu0 %v507
    %764 = vmatpush.msra.mxu0 %v499
    %765 = vmatpush.msra.mxu0 %v491
    %766 = vmatpush.msra.mxu0 %v483
    %767 = vmatpush.msra.mxu0 %v475
    %768 = vmatpush.msra.mxu0 %v467
    %769 = vmatpush.msra.mxu0 %v459
    %770 = vmatpush.msra.mxu0 %v451
    %771 = vmatmul.f32.gmra.mxu0 %v318
    %v772 = vpop.f32.mrf.mxu0
    %v773 = vadd.f32 %v753, %v772
    %774 = vdwg.mxu0
    %775 = vmatpush.msra.mxu0 %v444
    %776 = vmatpush.msra.mxu0 %v436
    %777 = vmatpush.msra.mxu0 %v428
    %778 = vmatpush.msra.mxu0 %v420
    %779 = vmatpush.msra.mxu0 %v412
    %780 = vmatpush.msra.mxu0 %v404
    %781 = vmatpush.msra.mxu0 %v396
    %782 = vmatpush.msra.mxu0 %v388
    %783 = vmatpush.msra.mxu0 %v380
    %784 = vmatpush.msra.mxu0 %v372
    %785 = vmatpush.msra.mxu0 %v364
    %786 = vmatpush.msra.mxu0 %v356
    %787 = vmatpush.msra.mxu0 %v348
    %788 = vmatpush.msra.mxu0 %v340
    %789 = vmatpush.msra.mxu0 %v332
    %790 = vmatpush.msra.mxu0 %v324
    %791 = vmatmul.f32.gmra.mxu0 %v317
    %v792 = vpop.f32.mrf.mxu0
    %v793 = vadd.f32 0.0, %v792
    %794 = vdwg.mxu0
    %795 = vmatpush.msra.mxu0 %v572
    %796 = vmatpush.msra.mxu0 %v564
    %797 = vmatpush.msra.mxu0 %v556
    %798 = vmatpush.msra.mxu0 %v548
    %799 = vmatpush.msra.mxu0 %v540
    %800 = vmatpush.msra.mxu0 %v532
    %801 = vmatpush.msra.mxu0 %v524
    %802 = vmatpush.msra.mxu0 %v516
    %803 = vmatpush.msra.mxu0 %v508
    %804 = vmatpush.msra.mxu0 %v500
    %805 = vmatpush.msra.mxu0 %v492
    %806 = vmatpush.msra.mxu0 %v484
    %807 = vmatpush.msra.mxu0 %v476
    %808 = vmatpush.msra.mxu0 %v468
    %809 = vmatpush.msra.mxu0 %v460
    %810 = vmatpush.msra.mxu0 %v452
    %811 = vmatmul.f32.gmra.mxu0 %v318
    %v812 = vpop.f32.mrf.mxu0
    %v813 = vadd.f32 %v793, %v812
    %814 = vdwg.mxu0
    %815 = vmatpush.msra.mxu0 %v445
    %816 = vmatpush.msra.mxu0 %v437
    %817 = vmatpush.msra.mxu0 %v429
    %818 = vmatpush.msra.mxu0 %v421
    %819 = vmatpush.msra.mxu0 %v413
    %820 = vmatpush.msra.mxu0 %v405
    %821 = vmatpush.msra.mxu0 %v397
    %822 = vmatpush.msra.mxu0 %v389
    %823 = vmatpush.msra.mxu0 %v381
    %824 = vmatpush.msra.mxu0 %v373
    %825 = vmatpush.msra.mxu0 %v365
    %826 = vmatpush.msra.mxu0 %v357
    %827 = vmatpush.msra.mxu0 %v349
    %828 = vmatpush.msra.mxu0 %v341
    %829 = vmatpush.msra.mxu0 %v333
    %830 = vmatpush.msra.mxu0 %v325
    %831 = vmatmul.f32.gmra.mxu0 %v317
    %v832 = vpop.f32.mrf.mxu0
    %v833 = vadd.f32 0.0, %v832
    %834 = vdwg.mxu0
    %835 = vmatpush.msra.mxu0 %v573
    %836 = vmatpush.msra.mxu0 %v565
    %837 = vmatpush.msra.mxu0 %v557
    %838 = vmatpush.msra.mxu0 %v549
    %839 = vmatpush.msra.mxu0 %v541
    %840 = vmatpush.msra.mxu0 %v533
    %841 = vmatpush.msra.mxu0 %v525
    %842 = vmatpush.msra.mxu0 %v517
    %843 = vmatpush.msra.mxu0 %v509
    %844 = vmatpush.msra.mxu0 %v501
    %845 = vmatpush.msra.mxu0 %v493
    %846 = vmatpush.msra.mxu0 %v485
    %847 = vmatpush.msra.mxu0 %v477
    %848 = vmatpush.msra.mxu0 %v469
    %849 = vmatpush.msra.mxu0 %v461
    %850 = vmatpush.msra.mxu0 %v453
    %851 = vmatmul.f32.gmra.mxu0 %v318
    %v852 = vpop.f32.mrf.mxu0
    %v853 = vadd.f32 %v833, %v852
    %854 = vdwg.mxu0
    %855 = vmatpush.msra.mxu0 %v446
    %856 = vmatpush.msra.mxu0 %v438
    %857 = vmatpush.msra.mxu0 %v430
    %858 = vmatpush.msra.mxu0 %v422
    %859 = vmatpush.msra.mxu0 %v414
    %860 = vmatpush.msra.mxu0 %v406
    %861 = vmatpush.msra.mxu0 %v398
    %862 = vmatpush.msra.mxu0 %v390
    %863 = vmatpush.msra.mxu0 %v382
    %864 = vmatpush.msra.mxu0 %v374
    %865 = vmatpush.msra.mxu0 %v366
    %866 = vmatpush.msra.mxu0 %v358
    %867 = vmatpush.msra.mxu0 %v350
    %868 = vmatpush.msra.mxu0 %v342
    %869 = vmatpush.msra.mxu0 %v334
    %870 = vmatpush.msra.mxu0 %v326
    %871 = vmatmul.f32.gmra.mxu0 %v317
    %v872 = vpop.f32.mrf.mxu0
    %v873 = vadd.f32 0.0, %v872
    %874 = vdwg.mxu0
    %875 = vmatpush.msra.mxu0 %v574
    %876 = vmatpush.msra.mxu0 %v566
    %877 = vmatpush.msra.mxu0 %v558
    %878 = vmatpush.msra.mxu0 %v550
    %879 = vmatpush.msra.mxu0 %v542
    %880 = vmatpush.msra.mxu0 %v534
    %881 = vmatpush.msra.mxu0 %v526
    %882 = vmatpush.msra.mxu0 %v518
    %883 = vmatpush.msra.mxu0 %v510
    %884 = vmatpush.msra.mxu0 %v502
    %885 = vmatpush.msra.mxu0 %v494
    %886 = vmatpush.msra.mxu0 %v486
    %887 = vmatpush.msra.mxu0 %v478
    %888 = vmatpush.msra.mxu0 %v470
    %889 = vmatpush.msra.mxu0 %v462
    %890 = vmatpush.msra.mxu0 %v454
    %891 = vmatmul.f32.gmra.mxu0 %v318
    %v892 = vpop.f32.mrf.mxu0
    %v893 = vadd.f32 %v873, %v892
    %894 = vdwg.mxu0
    %v895 = vadd.f32 %v773, %v285
    %v896 = vadd.f32 %v813, %v286
    %v897 = vadd.f32 %v853, %v287
    %v898 = vadd.f32 %v893, %v288
    %v899 = vmul.f32 %v895, 0.5
    %v900 = vtanh.pop %v899
    %v901 = vmul.f32 %v900, 0.5
    %v902 = vadd.f32 %v901, 0.5
    %v903 = vmul.f32 %v896, 0.5
    %v904 = vtanh.pop %v903
    %v905 = vmul.f32 %v904, 0.5
    %v906 = vadd.f32 %v905, 0.5
    %v907 = vtanh.pop %v897
    %v908 = vmul.f32 %v898, 0.5
    %v909 = vtanh.pop %v908
    %v910 = vmul.f32 %v909, 0.5
    %v911 = vadd.f32 %v910, 0.5
    %v912 = vmul.f32 %v906, 0.0
    %v913 = vmul.f32 %v902, %v907
    %v914 = vadd.f32 %v912, %v913
    %v915 = vtanh.pop %v914
    %v916 = vmul.f32 %v911, %v915
    %s917 = smul.u32 1, 4
    %s918 = smul.addr %s917, 8
    %s919 = scalar_lea.vmem [#allocation2], %s918
    %v920 = vld [vmem:[%s919] sm:$0xff]
    %v921 = vld [vmem:[%s919 + $0x8] sm:$0xff]
    %v922 = vld [vmem:[%s919 + $0x10] sm:$0xff]
    %v923 = vld [vmem:[%s919 + $0x18] sm:$0xff]
    %v924 = vadd.f32 %v920, %v613
    %v925 = vadd.f32 %v921, %v653
    %v926 = vadd.f32 %v922, %v693
    %v927 = vadd.f32 %v923, %v733
    %v928 = vmul.f32 %v924, 0.5
    %v929 = vtanh.pop %v928
    %v930 = vmul.f32 %v929, 0.5
    %v931 = vadd.f32 %v930, 0.5
    %v932 = vmul.f32 %v925, 0.5
    %v933 = vtanh.pop %v932
    %v934 = vmul.f32 %v933, 0.5
    %v935 = vadd.f32 %v934, 0.5
    %v936 = vtanh.pop %v926
    %v937 = vmul.f32 %v927, 0.5
    %v938 = vtanh.pop %v937
    %v939 = vmul.f32 %v938, 0.5
    %v940 = vadd.f32 %v939, 0.5
    %v941 = vmul.f32 %v935, %v312
    %v942 = vmul.f32 %v931, %v936
    %v943 = vadd.f32 %v941, %v942
    %v944 = vtanh.pop %v943
    %v945 = vmul.f32 %v940, %v944
    %946 = vst [vmem:[#allocation3] sm:$0xff] %v945
    %947 = vst [vmem:[#allocation3 + $0x8] sm:$0xff] %v916
    %v948 = vld [vmem:[#allocation3] sm:$0xff]
    %v949 = vld [vmem:[#allocation3 + $0x8] sm:$0xff]
    %v950 = vld [vmem:[#allocation4] sm:$0xff]
    %v951 = vld [vmem:[#allocation4 + $0x8] sm:$0xff]
    %v952 = vld [vmem:[#allocation4 + $0x10] sm:$0xff]
    %v953 = vld [vmem:[#allocation4 + $0x18] sm:$0xff]
    %v954 = vld [vmem:[#allocation4 + $0x20] sm:$0xff]
    %v955 = vld [vmem:[#allocation4 + $0x28] sm:$0xff]
    %v956 = vld [vmem:[#allocation4 + $0x30] sm:$0xff]
    %v957 = vld [vmem:[#allocation4 + $0x38] sm:$0xff]
    %v958 = vld [vmem:[#allocation4 + $0x40] sm:$0xff]
    %v959 = vld [vmem:[#allocation4 + $0x48] sm:$0xff]
    %v960 = vld [vmem:[#allocation4 + $0x50] sm:$0xff]
    %v961 = vld [vmem:[#allocation4 + $0x58] sm:$0xff]
    %v962 = vld [vmem:[#allocation4 + $0x60] sm:$0xff]
    %v963 = vld [vmem:[#allocation4 + $0x68] sm:$0xff]
    %v964 = vld [vmem:[#allocation4 + $0x70] sm:$0xff]
    %v965 = vld [vmem:[#allocation4 + $0x78] sm:$0xff]
    %v966 = vld [vmem:[#allocation4 + $0x80] sm:$0xff]
    %v967 = vld [vmem:[#allocation4 + $0x88] sm:$0xff]
    %v968 = vld [vmem:[#allocation4 + $0x90] sm:$0xff]
    %v969 = vld [vmem:[#allocation4 + $0x98] sm:$0xff]
    %v970 = vld [vmem:[#allocation4 + $0xa0] sm:$0xff]
    %v971 = vld [vmem:[#allocation4 + $0xa8] sm:$0xff]
    %v972 = vld [vmem:[#allocation4 + $0xb0] sm:$0xff]
    %v973 = vld [vmem:[#allocation4 + $0xb8] sm:$0xff]
    %v974 = vld [vmem:[#allocation4 + $0xc0] sm:$0xff]
    %v975 = vld [vmem:[#allocation4 + $0xc8] sm:$0xff]
    %v976 = vld [vmem:[#allocation4 + $0xd0] sm:$0xff]
    %v977 = vld [vmem:[#allocation4 + $0xd8] sm:$0xff]
    %v978 = vld [vmem:[#allocation4 + $0xe0] sm:$0xff]
    %v979 = vld [vmem:[#allocation4 + $0xe8] sm:$0xff]
    %v980 = vld [vmem:[#allocation4 + $0xf0] sm:$0xff]
    %v981 = vld [vmem:[#allocation4 + $0xf8] sm:$0xff]
    %v982 = vld [vmem:[#allocation4 + $0x100] sm:$0xff]
    %v983 = vld [vmem:[#allocation4 + $0x108] sm:$0xff]
    %v984 = vld [vmem:[#allocation4 + $0x110] sm:$0xff]
    %v985 = vld [vmem:[#allocation4 + $0x118] sm:$0xff]
    %v986 = vld [vmem:[#allocation4 + $0x120] sm:$0xff]
    %v987 = vld [vmem:[#allocation4 + $0x128] sm:$0xff]
    %v988 = vld [vmem:[#allocation4 + $0x130] sm:$0xff]
    %v989 = vld [vmem:[#allocation4 + $0x138] sm:$0xff]
    %v990 = vld [vmem:[#allocation4 + $0x140] sm:$0xff]
    %v991 = vld [vmem:[#allocation4 + $0x148] sm:$0xff]
    %v992 = vld [vmem:[#allocation4 + $0x150] sm:$0xff]
    %v993 = vld [vmem:[#allocation4 + $0x158] sm:$0xff]
    %v994 = vld [vmem:[#allocation4 + $0x160] sm:$0xff]
    %v995 = vld [vmem:[#allocation4 + $0x168] sm:$0xff]
    %v996 = vld [vmem:[#allocation4 + $0x170] sm:$0xff]
    %v997 = vld [vmem:[#allocation4 + $0x178] sm:$0xff]
    %v998 = vld [vmem:[#allocation4 + $0x180] sm:$0xff]
    %v999 = vld [vmem:[#allocation4 + $0x188] sm:$0xff]
    %v1000 = vld [vmem:[#allocation4 + $0x190] sm:$0xff]
    %v1001 = vld [vmem:[#allocation4 + $0x198] sm:$0xff]
    %v1002 = vld [vmem:[#allocation4 + $0x1a0] sm:$0xff]
    %v1003 = vld [vmem:[#allocation4 + $0x1a8] sm:$0xff]
    %v1004 = vld [vmem:[#allocation4 + $0x1b0] sm:$0xff]
    %v1005 = vld [vmem:[#allocation4 + $0x1b8] sm:$0xff]
    %v1006 = vld [vmem:[#allocation4 + $0x1c0] sm:$0xff]
    %v1007 = vld [vmem:[#allocation4 + $0x1c8] sm:$0xff]
    %v1008 = vld [vmem:[#allocation4 + $0x1d0] sm:$0xff]
    %v1009 = vld [vmem:[#allocation4 + $0x1d8] sm:$0xff]
    %v1010 = vld [vmem:[#allocation4 + $0x1e0] sm:$0xff]
    %v1011 = vld [vmem:[#allocation4 + $0x1e8] sm:$0xff]
    %v1012 = vld [vmem:[#allocation4 + $0x1f0] sm:$0xff]
    %v1013 = vld [vmem:[#allocation4 + $0x1f8] sm:$0xff]
    %v1014 = vld [vmem:[#allocation4 + $0x200] sm:$0xff]
    %v1015 = vld [vmem:[#allocation4 + $0x208] sm:$0xff]
    %v1016 = vld [vmem:[#allocation4 + $0x210] sm:$0xff]
    %v1017 = vld [vmem:[#allocation4 + $0x218] sm:$0xff]
    %v1018 = vld [vmem:[#allocation4 + $0x220] sm:$0xff]
    %v1019 = vld [vmem:[#allocation4 + $0x228] sm:$0xff]
    %v1020 = vld [vmem:[#allocation4 + $0x230] sm:$0xff]
    %v1021 = vld [vmem:[#allocation4 + $0x238] sm:$0xff]
    %v1022 = vld [vmem:[#allocation4 + $0x240] sm:$0xff]
    %v1023 = vld [vmem:[#allocation4 + $0x248] sm:$0xff]
    %v1024 = vld [vmem:[#allocation4 + $0x250] sm:$0xff]
    %v1025 = vld [vmem:[#allocation4 + $0x258] sm:$0xff]
    %v1026 = vld [vmem:[#allocation4 + $0x260] sm:$0xff]
    %v1027 = vld [vmem:[#allocation4 + $0x268] sm:$0xff]
    %v1028 = vld [vmem:[#allocation4 + $0x270] sm:$0xff]
    %v1029 = vld [vmem:[#allocation4 + $0x278] sm:$0xff]
    %v1030 = vld [vmem:[#allocation4 + $0x280] sm:$0xff]
    %v1031 = vld [vmem:[#allocation4 + $0x288] sm:$0xff]
    %v1032 = vld [vmem:[#allocation4 + $0x290] sm:$0xff]
    %v1033 = vld [vmem:[#allocation4 + $0x298] sm:$0xff]
    %v1034 = vld [vmem:[#allocation4 + $0x2a0] sm:$0xff]
    %v1035 = vld [vmem:[#allocation4 + $0x2a8] sm:$0xff]
    %v1036 = vld [vmem:[#allocation4 + $0x2b0] sm:$0xff]
    %v1037 = vld [vmem:[#allocation4 + $0x2b8] sm:$0xff]
    %v1038 = vld [vmem:[#allocation4 + $0x2c0] sm:$0xff]
    %v1039 = vld [vmem:[#allocation4 + $0x2c8] sm:$0xff]
    %v1040 = vld [vmem:[#allocation4 + $0x2d0] sm:$0xff]
    %v1041 = vld [vmem:[#allocation4 + $0x2d8] sm:$0xff]
    %v1042 = vld [vmem:[#allocation4 + $0x2e0] sm:$0xff]
    %v1043 = vld [vmem:[#allocation4 + $0x2e8] sm:$0xff]
    %v1044 = vld [vmem:[#allocation4 + $0x2f0] sm:$0xff]
    %v1045 = vld [vmem:[#allocation4 + $0x2f8] sm:$0xff]
    %v1046 = vld [vmem:[#allocation4 + $0x300] sm:$0xff]
    %v1047 = vld [vmem:[#allocation4 + $0x308] sm:$0xff]
    %v1048 = vld [vmem:[#allocation4 + $0x310] sm:$0xff]
    %v1049 = vld [vmem:[#allocation4 + $0x318] sm:$0xff]
    %v1050 = vld [vmem:[#allocation4 + $0x320] sm:$0xff]
    %v1051 = vld [vmem:[#allocation4 + $0x328] sm:$0xff]
    %v1052 = vld [vmem:[#allocation4 + $0x330] sm:$0xff]
    %v1053 = vld [vmem:[#allocation4 + $0x338] sm:$0xff]
    %v1054 = vld [vmem:[#allocation4 + $0x340] sm:$0xff]
    %v1055 = vld [vmem:[#allocation4 + $0x348] sm:$0xff]
    %v1056 = vld [vmem:[#allocation4 + $0x350] sm:$0xff]
    %v1057 = vld [vmem:[#allocation4 + $0x358] sm:$0xff]
    %v1058 = vld [vmem:[#allocation4 + $0x360] sm:$0xff]
    %v1059 = vld [vmem:[#allocation4 + $0x368] sm:$0xff]
    %v1060 = vld [vmem:[#allocation4 + $0x370] sm:$0xff]
    %v1061 = vld [vmem:[#allocation4 + $0x378] sm:$0xff]
    %v1062 = vld [vmem:[#allocation4 + $0x380] sm:$0xff]
    %v1063 = vld [vmem:[#allocation4 + $0x388] sm:$0xff]
    %v1064 = vld [vmem:[#allocation4 + $0x390] sm:$0xff]
    %v1065 = vld [vmem:[#allocation4 + $0x398] sm:$0xff]
    %v1066 = vld [vmem:[#allocation4 + $0x3a0] sm:$0xff]
    %v1067 = vld [vmem:[#allocation4 + $0x3a8] sm:$0xff]
    %v1068 = vld [vmem:[#allocation4 + $0x3b0] sm:$0xff]
    %v1069 = vld [vmem:[#allocation4 + $0x3b8] sm:$0xff]
    %v1070 = vld [vmem:[#allocation4 + $0x3c0] sm:$0xff]
    %v1071 = vld [vmem:[#allocation4 + $0x3c8] sm:$0xff]
    %v1072 = vld [vmem:[#allocation4 + $0x3d0] sm:$0xff]
    %v1073 = vld [vmem:[#allocation4 + $0x3d8] sm:$0xff]
    %v1074 = vld [vmem:[#allocation4 + $0x3e0] sm:$0xff]
    %v1075 = vld [vmem:[#allocation4 + $0x3e8] sm:$0xff]
    %v1076 = vld [vmem:[#allocation4 + $0x3f0] sm:$0xff]
    %v1077 = vld [vmem:[#allocation4 + $0x3f8] sm:$0xff]
    %v1078 = vld [vmem:[#allocation4 + $0x400] sm:$0xff]
    %v1079 = vld [vmem:[#allocation4 + $0x408] sm:$0xff]
    %v1080 = vld [vmem:[#allocation4 + $0x410] sm:$0xff]
    %v1081 = vld [vmem:[#allocation4 + $0x418] sm:$0xff]
    %v1082 = vld [vmem:[#allocation4 + $0x420] sm:$0xff]
    %v1083 = vld [vmem:[#allocation4 + $0x428] sm:$0xff]
    %v1084 = vld [vmem:[#allocation4 + $0x430] sm:$0xff]
    %v1085 = vld [vmem:[#allocation4 + $0x438] sm:$0xff]
    %v1086 = vld [vmem:[#allocation4 + $0x440] sm:$0xff]
    %v1087 = vld [vmem:[#allocation4 + $0x448] sm:$0xff]
    %v1088 = vld [vmem:[#allocation4 + $0x450] sm:$0xff]
    %v1089 = vld [vmem:[#allocation4 + $0x458] sm:$0xff]
    %v1090 = vld [vmem:[#allocation4 + $0x460] sm:$0xff]
    %v1091 = vld [vmem:[#allocation4 + $0x468] sm:$0xff]
    %v1092 = vld [vmem:[#allocation4 + $0x470] sm:$0xff]
    %v1093 = vld [vmem:[#allocation4 + $0x478] sm:$0xff]
    %v1094 = vld [vmem:[#allocation4 + $0x480] sm:$0xff]
    %v1095 = vld [vmem:[#allocation4 + $0x488] sm:$0xff]
    %v1096 = vld [vmem:[#allocation4 + $0x490] sm:$0xff]
    %v1097 = vld [vmem:[#allocation4 + $0x498] sm:$0xff]
    %v1098 = vld [vmem:[#allocation4 + $0x4a0] sm:$0xff]
    %v1099 = vld [vmem:[#allocation4 + $0x4a8] sm:$0xff]
    %v1100 = vld [vmem:[#allocation4 + $0x4b0] sm:$0xff]
    %v1101 = vld [vmem:[#allocation4 + $0x4b8] sm:$0xff]
    %v1102 = vld [vmem:[#allocation4 + $0x4c0] sm:$0xff]
    %v1103 = vld [vmem:[#allocation4 + $0x4c8] sm:$0xff]
    %v1104 = vld [vmem:[#allocation4 + $0x4d0] sm:$0xff]
    %v1105 = vld [vmem:[#allocation4 + $0x4d8] sm:$0xff]
    %v1106 = vld [vmem:[#allocation4 + $0x4e0] sm:$0xff]
    %v1107 = vld [vmem:[#allocation4 + $0x4e8] sm:$0xff]
    %v1108 = vld [vmem:[#allocation4 + $0x4f0] sm:$0xff]
    %v1109 = vld [vmem:[#allocation4 + $0x4f8] sm:$0xff]
    %v1110 = vld [vmem:[#allocation4 + $0x500] sm:$0xff]
    %v1111 = vld [vmem:[#allocation4 + $0x508] sm:$0xff]
    %v1112 = vld [vmem:[#allocation4 + $0x510] sm:$0xff]
    %v1113 = vld [vmem:[#allocation4 + $0x518] sm:$0xff]
    %v1114 = vld [vmem:[#allocation4 + $0x520] sm:$0xff]
    %v1115 = vld [vmem:[#allocation4 + $0x528] sm:$0xff]
    %v1116 = vld [vmem:[#allocation4 + $0x530] sm:$0xff]
    %v1117 = vld [vmem:[#allocation4 + $0x538] sm:$0xff]
    %v1118 = vld [vmem:[#allocation4 + $0x540] sm:$0xff]
    %v1119 = vld [vmem:[#allocation4 + $0x548] sm:$0xff]
    %v1120 = vld [vmem:[#allocation4 + $0x550] sm:$0xff]
    %v1121 = vld [vmem:[#allocation4 + $0x558] sm:$0xff]
    %v1122 = vld [vmem:[#allocation4 + $0x560] sm:$0xff]
    %v1123 = vld [vmem:[#allocation4 + $0x568] sm:$0xff]
    %v1124 = vld [vmem:[#allocation4 + $0x570] sm:$0xff]
    %v1125 = vld [vmem:[#allocation4 + $0x578] sm:$0xff]
    %v1126 = vld [vmem:[#allocation4 + $0x580] sm:$0xff]
    %v1127 = vld [vmem:[#allocation4 + $0x588] sm:$0xff]
    %v1128 = vld [vmem:[#allocation4 + $0x590] sm:$0xff]
    %v1129 = vld [vmem:[#allocation4 + $0x598] sm:$0xff]
    %v1130 = vld [vmem:[#allocation4 + $0x5a0] sm:$0xff]
    %v1131 = vld [vmem:[#allocation4 + $0x5a8] sm:$0xff]
    %v1132 = vld [vmem:[#allocation4 + $0x5b0] sm:$0xff]
    %v1133 = vld [vmem:[#allocation4 + $0x5b8] sm:$0xff]
    %v1134 = vld [vmem:[#allocation4 + $0x5c0] sm:$0xff]
    %v1135 = vld [vmem:[#allocation4 + $0x5c8] sm:$0xff]
    %v1136 = vld [vmem:[#allocation4 + $0x5d0] sm:$0xff]
    %v1137 = vld [vmem:[#allocation4 + $0x5d8] sm:$0xff]
    %v1138 = vld [vmem:[#allocation4 + $0x5e0] sm:$0xff]
    %v1139 = vld [vmem:[#allocation4 + $0x5e8] sm:$0xff]
    %v1140 = vld [vmem:[#allocation4 + $0x5f0] sm:$0xff]
    %v1141 = vld [vmem:[#allocation4 + $0x5f8] sm:$0xff]
    %v1142 = vld [vmem:[#allocation4 + $0x600] sm:$0xff]
    %v1143 = vld [vmem:[#allocation4 + $0x608] sm:$0xff]
    %v1144 = vld [vmem:[#allocation4 + $0x610] sm:$0xff]
    %v1145 = vld [vmem:[#allocation4 + $0x618] sm:$0xff]
    %v1146 = vld [vmem:[#allocation4 + $0x620] sm:$0xff]
    %v1147 = vld [vmem:[#allocation4 + $0x628] sm:$0xff]
    %v1148 = vld [vmem:[#allocation4 + $0x630] sm:$0xff]
    %v1149 = vld [vmem:[#allocation4 + $0x638] sm:$0xff]
    %v1150 = vld [vmem:[#allocation4 + $0x640] sm:$0xff]
    %v1151 = vld [vmem:[#allocation4 + $0x648] sm:$0xff]
    %v1152 = vld [vmem:[#allocation4 + $0x650] sm:$0xff]
    %v1153 = vld [vmem:[#allocation4 + $0x658] sm:$0xff]
    %v1154 = vld [vmem:[#allocation4 + $0x660] sm:$0xff]
    %v1155 = vld [vmem:[#allocation4 + $0x668] sm:$0xff]
    %v1156 = vld [vmem:[#allocation4 + $0x670] sm:$0xff]
    %v1157 = vld [vmem:[#allocation4 + $0x678] sm:$0xff]
    %v1158 = vld [vmem:[#allocation4 + $0x680] sm:$0xff]
    %v1159 = vld [vmem:[#allocation4 + $0x688] sm:$0xff]
    %v1160 = vld [vmem:[#allocation4 + $0x690] sm:$0xff]
    %v1161 = vld [vmem:[#allocation4 + $0x698] sm:$0xff]
    %v1162 = vld [vmem:[#allocation4 + $0x6a0] sm:$0xff]
    %v1163 = vld [vmem:[#allocation4 + $0x6a8] sm:$0xff]
    %v1164 = vld [vmem:[#allocation4 + $0x6b0] sm:$0xff]
    %v1165 = vld [vmem:[#allocation4 + $0x6b8] sm:$0xff]
    %v1166 = vld [vmem:[#allocation4 + $0x6c0] sm:$0xff]
    %v1167 = vld [vmem:[#allocation4 + $0x6c8] sm:$0xff]
    %v1168 = vld [vmem:[#allocation4 + $0x6d0] sm:$0xff]
    %v1169 = vld [vmem:[#allocation4 + $0x6d8] sm:$0xff]
    %v1170 = vld [vmem:[#allocation4 + $0x6e0] sm:$0xff]
    %v1171 = vld [vmem:[#allocation4 + $0x6e8] sm:$0xff]
    %v1172 = vld [vmem:[#allocation4 + $0x6f0] sm:$0xff]
    %v1173 = vld [vmem:[#allocation4 + $0x6f8] sm:$0xff]
    %v1174 = vld [vmem:[#allocation4 + $0x700] sm:$0xff]
    %v1175 = vld [vmem:[#allocation4 + $0x708] sm:$0xff]
    %v1176 = vld [vmem:[#allocation4 + $0x710] sm:$0xff]
    %v1177 = vld [vmem:[#allocation4 + $0x718] sm:$0xff]
    %v1178 = vld [vmem:[#allocation4 + $0x720] sm:$0xff]
    %v1179 = vld [vmem:[#allocation4 + $0x728] sm:$0xff]
    %v1180 = vld [vmem:[#allocation4 + $0x730] sm:$0xff]
    %v1181 = vld [vmem:[#allocation4 + $0x738] sm:$0xff]
    %v1182 = vld [vmem:[#allocation4 + $0x740] sm:$0xff]
    %v1183 = vld [vmem:[#allocation4 + $0x748] sm:$0xff]
    %v1184 = vld [vmem:[#allocation4 + $0x750] sm:$0xff]
    %v1185 = vld [vmem:[#allocation4 + $0x758] sm:$0xff]
    %v1186 = vld [vmem:[#allocation4 + $0x760] sm:$0xff]
    %v1187 = vld [vmem:[#allocation4 + $0x768] sm:$0xff]
    %v1188 = vld [vmem:[#allocation4 + $0x770] sm:$0xff]
    %v1189 = vld [vmem:[#allocation4 + $0x778] sm:$0xff]
    %v1190 = vld [vmem:[#allocation4 + $0x780] sm:$0xff]
    %v1191 = vld [vmem:[#allocation4 + $0x788] sm:$0xff]
    %v1192 = vld [vmem:[#allocation4 + $0x790] sm:$0xff]
    %v1193 = vld [vmem:[#allocation4 + $0x798] sm:$0xff]
    %v1194 = vld [vmem:[#allocation4 + $0x7a0] sm:$0xff]
    %v1195 = vld [vmem:[#allocation4 + $0x7a8] sm:$0xff]
    %v1196 = vld [vmem:[#allocation4 + $0x7b0] sm:$0xff]
    %v1197 = vld [vmem:[#allocation4 + $0x7b8] sm:$0xff]
    %v1198 = vld [vmem:[#allocation4 + $0x7c0] sm:$0xff]
    %v1199 = vld [vmem:[#allocation4 + $0x7c8] sm:$0xff]
    %v1200 = vld [vmem:[#allocation4 + $0x7d0] sm:$0xff]
    %v1201 = vld [vmem:[#allocation4 + $0x7d8] sm:$0xff]
    %v1202 = vld [vmem:[#allocation4 + $0x7e0] sm:$0xff]
    %v1203 = vld [vmem:[#allocation4 + $0x7e8] sm:$0xff]
    %v1204 = vld [vmem:[#allocation4 + $0x7f0] sm:$0xff]
    %v1205 = vld [vmem:[#allocation4 + $0x7f8] sm:$0xff]
    %1206 = vmatpush.msra.mxu0 %v1070
    %1207 = vmatpush.msra.mxu0 %v1062
    %1208 = vmatpush.msra.mxu0 %v1054
    %1209 = vmatpush.msra.mxu0 %v1046
    %1210 = vmatpush.msra.mxu0 %v1038
    %1211 = vmatpush.msra.mxu0 %v1030
    %1212 = vmatpush.msra.mxu0 %v1022
    %1213 = vmatpush.msra.mxu0 %v1014
    %1214 = vmatpush.msra.mxu0 %v1006
    %1215 = vmatpush.msra.mxu0 %v998
    %1216 = vmatpush.msra.mxu0 %v990
    %1217 = vmatpush.msra.mxu0 %v982
    %1218 = vmatpush.msra.mxu0 %v974
    %1219 = vmatpush.msra.mxu0 %v966
    %1220 = vmatpush.msra.mxu0 %v958
    %1221 = vmatpush.msra.mxu0 %v950
    %1222 = vmatmul.f32.gmra.mxu0 %v948
    %v1223 = vpop.f32.mrf.mxu0
    %v1224 = vadd.f32 0.0, %v1223
    %1225 = vdwg.mxu0
    %1226 = vmatpush.msra.mxu0 %v1198
    %1227 = vmatpush.msra.mxu0 %v1190
    %1228 = vmatpush.msra.mxu0 %v1182
    %1229 = vmatpush.msra.mxu0 %v1174
    %1230 = vmatpush.msra.mxu0 %v1166
    %1231 = vmatpush.msra.mxu0 %v1158
    %1232 = vmatpush.msra.mxu0 %v1150
    %1233 = vmatpush.msra.mxu0 %v1142
    %1234 = vmatpush.msra.mxu0 %v1134
    %1235 = vmatpush.msra.mxu0 %v1126
    %1236 = vmatpush.msra.mxu0 %v1118
    %1237 = vmatpush.msra.mxu0 %v1110
    %1238 = vmatpush.msra.mxu0 %v1102
    %1239 = vmatpush.msra.mxu0 %v1094
    %1240 = vmatpush.msra.mxu0 %v1086
    %1241 = vmatpush.msra.mxu0 %v1078
    %1242 = vmatmul.f32.gmra.mxu0 %v949
    %v1243 = vpop.f32.mrf.mxu0
    %v1244 = vadd.f32 %v1224, %v1243
    %1245 = vdwg.mxu0
    %1246 = vmatpush.msra.mxu0 %v1071
    %1247 = vmatpush.msra.mxu0 %v1063
    %1248 = vmatpush.msra.mxu0 %v1055
    %1249 = vmatpush.msra.mxu0 %v1047
    %1250 = vmatpush.msra.mxu0 %v1039
    %1251 = vmatpush.msra.mxu0 %v1031
    %1252 = vmatpush.msra.mxu0 %v1023
    %1253 = vmatpush.msra.mxu0 %v1015
    %1254 = vmatpush.msra.mxu0 %v1007
    %1255 = vmatpush.msra.mxu0 %v999
    %1256 = vmatpush.msra.mxu0 %v991
    %1257 = vmatpush.msra.mxu0 %v983
    %1258 = vmatpush.msra.mxu0 %v975
    %1259 = vmatpush.msra.mxu0 %v967
    %1260 = vmatpush.msra.mxu0 %v959
    %1261 = vmatpush.msra.mxu0 %v951
    %1262 = vmatmul.f32.gmra.mxu0 %v948
    %v1263 = vpop.f32.mrf.mxu0
    %v1264 = vadd.f32 0.0, %v1263
    %1265 = vdwg.mxu0
    %1266 = vmatpush.msra.mxu0 %v1199
    %1267 = vmatpush.msra.mxu0 %v1191
    %1268 = vmatpush.msra.mxu0 %v1183
    %1269 = vmatpush.msra.mxu0 %v1175
    %1270 = vmatpush.msra.mxu0 %v1167
    %1271 = vmatpush.msra.mxu0 %v1159
    %1272 = vmatpush.msra.mxu0 %v1151
    %1273 = vmatpush.msra.mxu0 %v1143
    %1274 = vmatpush.msra.mxu0 %v1135
    %1275 = vmatpush.msra.mxu0 %v1127
    %1276 = vmatpush.msra.mxu0 %v1119
    %1277 = vmatpush.msra.mxu0 %v1111
    %1278 = vmatpush.msra.mxu0 %v1103
    %1279 = vmatpush.msra.mxu0 %v1095
    %1280 = vmatpush.msra.mxu0 %v1087
    %1281 = vmatpush.msra.mxu0 %v1079
    %1282 = vmatmul.f32.gmra.mxu0 %v949
    %v1283 = vpop.f32.mrf.mxu0
    %v1284 = vadd.f32 %v1264, %v1283
    %1285 = vdwg.mxu0
    %1286 = vmatpush.msra.mxu0 %v1072
    %1287 = vmatpush.msra.mxu0 %v1064
    %1288 = vmatpush.msra.mxu0 %v1056
    %1289 = vmatpush.msra.mxu0 %v1048
    %1290 = vmatpush.msra.mxu0 %v1040
    %1291 = vmatpush.msra.mxu0 %v1032
    %1292 = vmatpush.msra.mxu0 %v1024
    %1293 = vmatpush.msra.mxu0 %v1016
    %1294 = vmatpush.msra.mxu0 %v1008
    %1295 = vmatpush.msra.mxu0 %v1000
    %1296 = vmatpush.msra.mxu0 %v992
    %1297 = vmatpush.msra.mxu0 %v984
    %1298 = vmatpush.msra.mxu0 %v976
    %1299 = vmatpush.msra.mxu0 %v968
    %1300 = vmatpush.msra.mxu0 %v960
    %1301 = vmatpush.msra.mxu0 %v952
    %1302 = vmatmul.f32.gmra.mxu0 %v948
    %v1303 = vpop.f32.mrf.mxu0
    %v1304 = vadd.f32 0.0, %v1303
    %1305 = vdwg.mxu0
    %1306 = vmatpush.msra.mxu0 %v1200
    %1307 = vmatpush.msra.mxu0 %v1192
    %1308 = vmatpush.msra.mxu0 %v1184
    %1309 = vmatpush.msra.mxu0 %v1176
    %1310 = vmatpush.msra.mxu0 %v1168
    %1311 = vmatpush.msra.mxu0 %v1160
    %1312 = vmatpush.msra.mxu0 %v1152
    %1313 = vmatpush.msra.mxu0 %v1144
    %1314 = vmatpush.msra.mxu0 %v1136
    %1315 = vmatpush.msra.mxu0 %v1128
    %1316 = vmatpush.msra.mxu0 %v1120
    %1317 = vmatpush.msra.mxu0 %v1112
    %1318 = vmatpush.msra.mxu0 %v1104
    %1319 = vmatpush.msra.mxu0 %v1096
    %1320 = vmatpush.msra.mxu0 %v1088
    %1321 = vmatpush.msra.mxu0 %v1080
    %1322 = vmatmul.f32.gmra.mxu0 %v949
    %v1323 = vpop.f32.mrf.mxu0
    %v1324 = vadd.f32 %v1304, %v1323
    %1325 = vdwg.mxu0
    %1326 = vmatpush.msra.mxu0 %v1073
    %1327 = vmatpush.msra.mxu0 %v1065
    %1328 = vmatpush.msra.mxu0 %v1057
    %1329 = vmatpush.msra.mxu0 %v1049
    %1330 = vmatpush.msra.mxu0 %v1041
    %1331 = vmatpush.msra.mxu0 %v1033
    %1332 = vmatpush.msra.mxu0 %v1025
    %1333 = vmatpush.msra.mxu0 %v1017
    %1334 = vmatpush.msra.mxu0 %v1009
    %1335 = vmatpush.msra.mxu0 %v1001
    %1336 = vmatpush.msra.mxu0 %v993
    %1337 = vmatpush.msra.mxu0 %v985
    %1338 = vmatpush.msra.mxu0 %v977
    %1339 = vmatpush.msra.mxu0 %v969
    %1340 = vmatpush.msra.mxu0 %v961
    %1341 = vmatpush.msra.mxu0 %v953
    %1342 = vmatmul.f32.gmra.mxu0 %v948
    %v1343 = vpop.f32.mrf.mxu0
    %v1344 = vadd.f32 0.0, %v1343
    %1345 = vdwg.mxu0
    %1346 = vmatpush.msra.mxu0 %v1201
    %1347 = vmatpush.msra.mxu0 %v1193
    %1348 = vmatpush.msra.mxu0 %v1185
    %1349 = vmatpush.msra.mxu0 %v1177
    %1350 = vmatpush.msra.mxu0 %v1169
    %1351 = vmatpush.msra.mxu0 %v1161
    %1352 = vmatpush.msra.mxu0 %v1153
    %1353 = vmatpush.msra.mxu0 %v1145
    %1354 = vmatpush.msra.mxu0 %v1137
    %1355 = vmatpush.msra.mxu0 %v1129
    %1356 = vmatpush.msra.mxu0 %v1121
    %1357 = vmatpush.msra.mxu0 %v1113
    %1358 = vmatpush.msra.mxu0 %v1105
    %1359 = vmatpush.msra.mxu0 %v1097
    %1360 = vmatpush.msra.mxu0 %v1089
    %1361 = vmatpush.msra.mxu0 %v1081
    %1362 = vmatmul.f32.gmra.mxu0 %v949
    %v1363 = vpop.f32.mrf.mxu0
    %v1364 = vadd.f32 %v1344, %v1363
    %1365 = vdwg.mxu0
    %1366 = vmatpush.msra.mxu0 %v1074
    %1367 = vmatpush.msra.mxu0 %v1066
    %1368 = vmatpush.msra.mxu0 %v1058
    %1369 = vmatpush.msra.mxu0 %v1050
    %1370 = vmatpush.msra.mxu0 %v1042
    %1371 = vmatpush.msra.mxu0 %v1034
    %1372 = vmatpush.msra.mxu0 %v1026
    %1373 = vmatpush.msra.mxu0 %v1018
    %1374 = vmatpush.msra.mxu0 %v1010
    %1375 = vmatpush.msra.mxu0 %v1002
    %1376 = vmatpush.msra.mxu0 %v994
    %1377 = vmatpush.msra.mxu0 %v986
    %1378 = vmatpush.msra.mxu0 %v978
    %1379 = vmatpush.msra.mxu0 %v970
    %1380 = vmatpush.msra.mxu0 %v962
    %1381 = vmatpush.msra.mxu0 %v954
    %1382 = vmatmul.f32.gmra.mxu0 %v948
    %v1383 = vpop.f32.mrf.mxu0
    %v1384 = vadd.f32 0.0, %v1383
    %1385 = vdwg.mxu0
    %1386 = vmatpush.msra.mxu0 %v1202
    %1387 = vmatpush.msra.mxu0 %v1194
    %1388 = vmatpush.msra.mxu0 %v1186
    %1389 = vmatpush.msra.mxu0 %v1178
    %1390 = vmatpush.msra.mxu0 %v1170
    %1391 = vmatpush.msra.mxu0 %v1162
    %1392 = vmatpush.msra.mxu0 %v1154
    %1393 = vmatpush.msra.mxu0 %v1146
    %1394 = vmatpush.msra.mxu0 %v1138
    %1395 = vmatpush.msra.mxu0 %v1130
    %1396 = vmatpush.msra.mxu0 %v1122
    %1397 = vmatpush.msra.mxu0 %v1114
    %1398 = vmatpush.msra.mxu0 %v1106
    %1399 = vmatpush.msra.mxu0 %v1098
    %1400 = vmatpush.msra.mxu0 %v1090
    %1401 = vmatpush.msra.mxu0 %v1082
    %1402 = vmatmul.f32.gmra.mxu0 %v949
    %v1403 = vpop.f32.mrf.mxu0
    %v1404 = vadd.f32 %v1384, %v1403
    %1405 = vdwg.mxu0
    %1406 = vmatpush.msra.mxu0 %v1075
    %1407 = vmatpush.msra.mxu0 %v1067
    %1408 = vmatpush.msra.mxu0 %v1059
    %1409 = vmatpush.msra.mxu0 %v1051
    %1410 = vmatpush.msra.mxu0 %v1043
    %1411 = vmatpush.msra.mxu0 %v1035
    %1412 = vmatpush.msra.mxu0 %v1027
    %1413 = vmatpush.msra.mxu0 %v1019
    %1414 = vmatpush.msra.mxu0 %v1011
    %1415 = vmatpush.msra.mxu0 %v1003
    %1416 = vmatpush.msra.mxu0 %v995
    %1417 = vmatpush.msra.mxu0 %v987
    %1418 = vmatpush.msra.mxu0 %v979
    %1419 = vmatpush.msra.mxu0 %v971
    %1420 = vmatpush.msra.mxu0 %v963
    %1421 = vmatpush.msra.mxu0 %v955
    %1422 = vmatmul.f32.gmra.mxu0 %v948
    %v1423 = vpop.f32.mrf.mxu0
    %v1424 = vadd.f32 0.0, %v1423
    %1425 = vdwg.mxu0
    %1426 = vmatpush.msra.mxu0 %v1203
    %1427 = vmatpush.msra.mxu0 %v1195
    %1428 = vmatpush.msra.mxu0 %v1187
    %1429 = vmatpush.msra.mxu0 %v1179
    %1430 = vmatpush.msra.mxu0 %v1171
    %1431 = vmatpush.msra.mxu0 %v1163
    %1432 = vmatpush.msra.mxu0 %v1155
    %1433 = vmatpush.msra.mxu0 %v1147
    %1434 = vmatpush.msra.mxu0 %v1139
    %1435 = vmatpush.msra.mxu0 %v1131
    %1436 = vmatpush.msra.mxu0 %v1123
    %1437 = vmatpush.msra.mxu0 %v1115
    %1438 = vmatpush.msra.mxu0 %v1107
    %1439 = vmatpush.msra.mxu0 %v1099
    %1440 = vmatpush.msra.mxu0 %v1091
    %1441 = vmatpush.msra.mxu0 %v1083
    %1442 = vmatmul.f32.gmra.mxu0 %v949
    %v1443 = vpop.f32.mrf.mxu0
    %v1444 = vadd.f32 %v1424, %v1443
    %1445 = vdwg.mxu0
    %1446 = vmatpush.msra.mxu0 %v1076
    %1447 = vmatpush.msra.mxu0 %v1068
    %1448 = vmatpush.msra.mxu0 %v1060
    %1449 = vmatpush.msra.mxu0 %v1052
    %1450 = vmatpush.msra.mxu0 %v1044
    %1451 = vmatpush.msra.mxu0 %v1036
    %1452 = vmatpush.msra.mxu0 %v1028
    %1453 = vmatpush.msra.mxu0 %v1020
    %1454 = vmatpush.msra.mxu0 %v1012
    %1455 = vmatpush.msra.mxu0 %v1004
    %1456 = vmatpush.msra.mxu0 %v996
    %1457 = vmatpush.msra.mxu0 %v988
    %1458 = vmatpush.msra.mxu0 %v980
    %1459 = vmatpush.msra.mxu0 %v972
    %1460 = vmatpush.msra.mxu0 %v964
    %1461 = vmatpush.msra.mxu0 %v956
    %1462 = vmatmul.f32.gmra.mxu0 %v948
    %v1463 = vpop.f32.mrf.mxu0
    %v1464 = vadd.f32 0.0, %v1463
    %1465 = vdwg.mxu0
    %1466 = vmatpush.msra.mxu0 %v1204
    %1467 = vmatpush.msra.mxu0 %v1196
    %1468 = vmatpush.msra.mxu0 %v1188
    %1469 = vmatpush.msra.mxu0 %v1180
    %1470 = vmatpush.msra.mxu0 %v1172
    %1471 = vmatpush.msra.mxu0 %v1164
    %1472 = vmatpush.msra.mxu0 %v1156
    %1473 = vmatpush.msra.mxu0 %v1148
    %1474 = vmatpush.msra.mxu0 %v1140
    %1475 = vmatpush.msra.mxu0 %v1132
    %1476 = vmatpush.msra.mxu0 %v1124
    %1477 = vmatpush.msra.mxu0 %v1116
    %1478 = vmatpush.msra.mxu0 %v1108
    %1479 = vmatpush.msra.mxu0 %v1100
    %1480 = vmatpush.msra.mxu0 %v1092
    %1481 = vmatpush.msra.mxu0 %v1084
    %1482 = vmatmul.f32.gmra.mxu0 %v949
    %v1483 = vpop.f32.mrf.mxu0
    %v1484 = vadd.f32 %v1464, %v1483
    %1485 = vdwg.mxu0
    %1486 = vmatpush.msra.mxu0 %v1077
    %1487 = vmatpush.msra.mxu0 %v1069
    %1488 = vmatpush.msra.mxu0 %v1061
    %1489 = vmatpush.msra.mxu0 %v1053
    %1490 = vmatpush.msra.mxu0 %v1045
    %1491 = vmatpush.msra.mxu0 %v1037
    %1492 = vmatpush.msra.mxu0 %v1029
    %1493 = vmatpush.msra.mxu0 %v1021
    %1494 = vmatpush.msra.mxu0 %v1013
    %1495 = vmatpush.msra.mxu0 %v1005
    %1496 = vmatpush.msra.mxu0 %v997
    %1497 = vmatpush.msra.mxu0 %v989
    %1498 = vmatpush.msra.mxu0 %v981
    %1499 = vmatpush.msra.mxu0 %v973
    %1500 = vmatpush.msra.mxu0 %v965
    %1501 = vmatpush.msra.mxu0 %v957
    %1502 = vmatmul.f32.gmra.mxu0 %v948
    %v1503 = vpop.f32.mrf.mxu0
    %v1504 = vadd.f32 0.0, %v1503
    %1505 = vdwg.mxu0
    %1506 = vmatpush.msra.mxu0 %v1205
    %1507 = vmatpush.msra.mxu0 %v1197
    %1508 = vmatpush.msra.mxu0 %v1189
    %1509 = vmatpush.msra.mxu0 %v1181
    %1510 = vmatpush.msra.mxu0 %v1173
    %1511 = vmatpush.msra.mxu0 %v1165
    %1512 = vmatpush.msra.mxu0 %v1157
    %1513 = vmatpush.msra.mxu0 %v1149
    %1514 = vmatpush.msra.mxu0 %v1141
    %1515 = vmatpush.msra.mxu0 %v1133
    %1516 = vmatpush.msra.mxu0 %v1125
    %1517 = vmatpush.msra.mxu0 %v1117
    %1518 = vmatpush.msra.mxu0 %v1109
    %1519 = vmatpush.msra.mxu0 %v1101
    %1520 = vmatpush.msra.mxu0 %v1093
    %1521 = vmatpush.msra.mxu0 %v1085
    %1522 = vmatmul.f32.gmra.mxu0 %v949
    %v1523 = vpop.f32.mrf.mxu0
    %v1524 = vadd.f32 %v1504, %v1523
    %1525 = vdwg.mxu0
    %v1526 = vadd.f32 %v1404, %v285
    %v1527 = vadd.f32 %v1444, %v286
    %v1528 = vadd.f32 %v1484, %v287
    %v1529 = vadd.f32 %v1524, %v288
    %v1530 = vmul.f32 %v1526, 0.5
    %v1531 = vtanh.pop %v1530
    %v1532 = vmul.f32 %v1531, 0.5
    %v1533 = vadd.f32 %v1532, 0.5
    %v1534 = vmul.f32 %v1527, 0.5
    %v1535 = vtanh.pop %v1534
    %v1536 = vmul.f32 %v1535, 0.5
    %v1537 = vadd.f32 %v1536, 0.5
    %v1538 = vtanh.pop %v1528
    %v1539 = vmul.f32 %v1529, 0.5
    %v1540 = vtanh.pop %v1539
    %v1541 = vmul.f32 %v1540, 0.5
    %v1542 = vadd.f32 %v1541, 0.5
    %v1543 = vmul.f32 %v1537, %v914
    %v1544 = vmul.f32 %v1533, %v1538
    %v1545 = vadd.f32 %v1543, %v1544
    %v1546 = vtanh.pop %v1545
    %v1547 = vmul.f32 %v1542, %v1546
    %s1548 = smul.u32 2, 4
    %s1549 = smul.addr %s1548, 8
    %s1550 = scalar_lea.vmem [#allocation2], %s1549
    %v1551 = vld [vmem:[%s1550] sm:$0xff]
    %v1552 = vld [vmem:[%s1550 + $0x8] sm:$0xff]
    %v1553 = vld [vmem:[%s1550 + $0x10] sm:$0xff]
    %v1554 = vld [vmem:[%s1550 + $0x18] sm:$0xff]
    %v1555 = vadd.f32 %v1551, %v1244
    %v1556 = vadd.f32 %v1552, %v1284
    %v1557 = vadd.f32 %v1553, %v1324
    %v1558 = vadd.f32 %v1554, %v1364
    %v1559 = vmul.f32 %v1555, 0.5
    %v1560 = vtanh.pop %v1559
    %v1561 = vmul.f32 %v1560, 0.5
    %v1562 = vadd.f32 %v1561, 0.5
    %v1563 = vmul.f32 %v1556, 0.5
    %v1564 = vtanh.pop %v1563
    %v1565 = vmul.f32 %v1564, 0.5
    %v1566 = vadd.f32 %v1565, 0.5
    %v1567 = vtanh.pop %v1557
    %v1568 = vmul.f32 %v1558, 0.5
    %v1569 = vtanh.pop %v1568
    %v1570 = vmul.f32 %v1569, 0.5
    %v1571 = vadd.f32 %v1570, 0.5
    %v1572 = vmul.f32 %v1566, %v943
    %v1573 = vmul.f32 %v1562, %v1567
    %v1574 = vadd.f32 %v1572, %v1573
    %v1575 = vtanh.pop %v1574
    %v1576 = vmul.f32 %v1571, %v1575
    %1577 = vst [vmem:[#allocation3] sm:$0xff] %v1576
    %1578 = vst [vmem:[#allocation3 + $0x8] sm:$0xff] %v1547
    %v1579 = vld [vmem:[#allocation3] sm:$0xff]
    %v1580 = vld [vmem:[#allocation3 + $0x8] sm:$0xff]
    %v1581 = vld [vmem:[#allocation4] sm:$0xff]
    %v1582 = vld [vmem:[#allocation4 + $0x8] sm:$0xff]
    %v1583 = vld [vmem:[#allocation4 + $0x10] sm:$0xff]
    %v1584 = vld [vmem:[#allocation4 + $0x18] sm:$0xff]
    %v1585 = vld [vmem:[#allocation4 + $0x20] sm:$0xff]
    %v1586 = vld [vmem:[#allocation4 + $0x28] sm:$0xff]
    %v1587 = vld [vmem:[#allocation4 + $0x30] sm:$0xff]
    %v1588 = vld [vmem:[#allocation4 + $0x38] sm:$0xff]
    %v1589 = vld [vmem:[#allocation4 + $0x40] sm:$0xff]
    %v1590 = vld [vmem:[#allocation4 + $0x48] sm:$0xff]
    %v1591 = vld [vmem:[#allocation4 + $0x50] sm:$0xff]
    %v1592 = vld [vmem:[#allocation4 + $0x58] sm:$0xff]
    %v1593 = vld [vmem:[#allocation4 + $0x60] sm:$0xff]
    %v1594 = vld [vmem:[#allocation4 + $0x68] sm:$0xff]
    %v1595 = vld [vmem:[#allocation4 + $0x70] sm:$0xff]
    %v1596 = vld [vmem:[#allocation4 + $0x78] sm:$0xff]
    %v1597 = vld [vmem:[#allocation4 + $0x80] sm:$0xff]
    %v1598 = vld [vmem:[#allocation4 + $0x88] sm:$0xff]
    %v1599 = vld [vmem:[#allocation4 + $0x90] sm:$0xff]
    %v1600 = vld [vmem:[#allocation4 + $0x98] sm:$0xff]
    %v1601 = vld [vmem:[#allocation4 + $0xa0] sm:$0xff]
    %v1602 = vld [vmem:[#allocation4 + $0xa8] sm:$0xff]
    %v1603 = vld [vmem:[#allocation4 + $0xb0] sm:$0xff]
    %v1604 = vld [vmem:[#allocation4 + $0xb8] sm:$0xff]
    %v1605 = vld [vmem:[#allocation4 + $0xc0] sm:$0xff]
    %v1606 = vld [vmem:[#allocation4 + $0xc8] sm:$0xff]
    %v1607 = vld [vmem:[#allocation4 + $0xd0] sm:$0xff]
    %v1608 = vld [vmem:[#allocation4 + $0xd8] sm:$0xff]
    %v1609 = vld [vmem:[#allocation4 + $0xe0] sm:$0xff]
    %v1610 = vld [vmem:[#allocation4 + $0xe8] sm:$0xff]
    %v1611 = vld [vmem:[#allocation4 + $0xf0] sm:$0xff]
    %v1612 = vld [vmem:[#allocation4 + $0xf8] sm:$0xff]
    %v1613 = vld [vmem:[#allocation4 + $0x100] sm:$0xff]
    %v1614 = vld [vmem:[#allocation4 + $0x108] sm:$0xff]
    %v1615 = vld [vmem:[#allocation4 + $0x110] sm:$0xff]
    %v1616 = vld [vmem:[#allocation4 + $0x118] sm:$0xff]
    %v1617 = vld [vmem:[#allocation4 + $0x120] sm:$0xff]
    %v1618 = vld [vmem:[#allocation4 + $0x128] sm:$0xff]
    %v1619 = vld [vmem:[#allocation4 + $0x130] sm:$0xff]
    %v1620 = vld [vmem:[#allocation4 + $0x138] sm:$0xff]
    %v1621 = vld [vmem:[#allocation4 + $0x140] sm:$0xff]
    %v1622 = vld [vmem:[#allocation4 + $0x148] sm:$0xff]
    %v1623 = vld [vmem:[#allocation4 + $0x150] sm:$0xff]
    %v1624 = vld [vmem:[#allocation4 + $0x158] sm:$0xff]
    %v1625 = vld [vmem:[#allocation4 + $0x160] sm:$0xff]
    %v1626 = vld [vmem:[#allocation4 + $0x168] sm:$0xff]
    %v1627 = vld [vmem:[#allocation4 + $0x170] sm:$0xff]
    %v1628 = vld [vmem:[#allocation4 + $0x178] sm:$0xff]
    %v1629 = vld [vmem:[#allocation4 + $0x180] sm:$0xff]
    %v1630 = vld [vmem:[#allocation4 + $0x188] sm:$0xff]
    %v1631 = vld [vmem:[#allocation4 + $0x190] sm:$0xff]
    %v1632 = vld [vmem:[#allocation4 + $0x198] sm:$0xff]
    %v1633 = vld [vmem:[#allocation4 + $0x1a0] sm:$0xff]
    %v1634 = vld [vmem:[#allocation4 + $0x1a8] sm:$0xff]
    %v1635 = vld [vmem:[#allocation4 + $0x1b0] sm:$0xff]
    %v1636 = vld [vmem:[#allocation4 + $0x1b8] sm:$0xff]
    %v1637 = vld [vmem:[#allocation4 + $0x1c0] sm:$0xff]
    %v1638 = vld [vmem:[#allocation4 + $0x1c8] sm:$0xff]
    %v1639 = vld [vmem:[#allocation4 + $0x1d0] sm:$0xff]
    %v1640 = vld [vmem:[#allocation4 + $0x1d8] sm:$0xff]
    %v1641 = vld [vmem:[#allocation4 + $0x1e0] sm:$0xff]
    %v1642 = vld [vmem:[#allocation4 + $0x1e8] sm:$0xff]
    %v1643 = vld [vmem:[#allocation4 + $0x1f0] sm:$0xff]
    %v1644 = vld [vmem:[#allocation4 + $0x1f8] sm:$0xff]
    %v1645 = vld [vmem:[#allocation4 + $0x200] sm:$0xff]
    %v1646 = vld [vmem:[#allocation4 + $0x208] sm:$0xff]
    %v1647 = vld [vmem:[#allocation4 + $0x210] sm:$0xff]
    %v1648 = vld [vmem:[#allocation4 + $0x218] sm:$0xff]
    %v1649 = vld [vmem:[#allocation4 + $0x220] sm:$0xff]
    %v1650 = vld [vmem:[#allocation4 + $0x228] sm:$0xff]
    %v1651 = vld [vmem:[#allocation4 + $0x230] sm:$0xff]
    %v1652 = vld [vmem:[#allocation4 + $0x238] sm:$0xff]
    %v1653 = vld [vmem:[#allocation4 + $0x240] sm:$0xff]
    %v1654 = vld [vmem:[#allocation4 + $0x248] sm:$0xff]
    %v1655 = vld [vmem:[#allocation4 + $0x250] sm:$0xff]
    %v1656 = vld [vmem:[#allocation4 + $0x258] sm:$0xff]
    %v1657 = vld [vmem:[#allocation4 + $0x260] sm:$0xff]
    %v1658 = vld [vmem:[#allocation4 + $0x268] sm:$0xff]
    %v1659 = vld [vmem:[#allocation4 + $0x270] sm:$0xff]
    %v1660 = vld [vmem:[#allocation4 + $0x278] sm:$0xff]
    %v1661 = vld [vmem:[#allocation4 + $0x280] sm:$0xff]
    %v1662 = vld [vmem:[#allocation4 + $0x288] sm:$0xff]
    %v1663 = vld [vmem:[#allocation4 + $0x290] sm:$0xff]
    %v1664 = vld [vmem:[#allocation4 + $0x298] sm:$0xff]
    %v1665 = vld [vmem:[#allocation4 + $0x2a0] sm:$0xff]
    %v1666 = vld [vmem:[#allocation4 + $0x2a8] sm:$0xff]
    %v1667 = vld [vmem:[#allocation4 + $0x2b0] sm:$0xff]
    %v1668 = vld [vmem:[#allocation4 + $0x2b8] sm:$0xff]
    %v1669 = vld [vmem:[#allocation4 + $0x2c0] sm:$0xff]
    %v1670 = vld [vmem:[#allocation4 + $0x2c8] sm:$0xff]
    %v1671 = vld [vmem:[#allocation4 + $0x2d0] sm:$0xff]
    %v1672 = vld [vmem:[#allocation4 + $0x2d8] sm:$0xff]
    %v1673 = vld [vmem:[#allocation4 + $0x2e0] sm:$0xff]
    %v1674 = vld [vmem:[#allocation4 + $0x2e8] sm:$0xff]
    %v1675 = vld [vmem:[#allocation4 + $0x2f0] sm:$0xff]
    %v1676 = vld [vmem:[#allocation4 + $0x2f8] sm:$0xff]
    %v1677 = vld [vmem:[#allocation4 + $0x300] sm:$0xff]
    %v1678 = vld [vmem:[#allocation4 + $0x308] sm:$0xff]
    %v1679 = vld [vmem:[#allocation4 + $0x310] sm:$0xff]
    %v1680 = vld [vmem:[#allocation4 + $0x318] sm:$0xff]
    %v1681 = vld [vmem:[#allocation4 + $0x320] sm:$0xff]
    %v1682 = vld [vmem:[#allocation4 + $0x328] sm:$0xff]
    %v1683 = vld [vmem:[#allocation4 + $0x330] sm:$0xff]
    %v1684 = vld [vmem:[#allocation4 + $0x338] sm:$0xff]
    %v1685 = vld [vmem:[#allocation4 + $0x340] sm:$0xff]
    %v1686 = vld [vmem:[#allocation4 + $0x348] sm:$0xff]
    %v1687 = vld [vmem:[#allocation4 + $0x350] sm:$0xff]
    %v1688 = vld [vmem:[#allocation4 + $0x358] sm:$0xff]
    %v1689 = vld [vmem:[#allocation4 + $0x360] sm:$0xff]
    %v1690 = vld [vmem:[#allocation4 + $0x368] sm:$0xff]
    %v1691 = vld [vmem:[#allocation4 + $0x370] sm:$0xff]
    %v1692 = vld [vmem:[#allocation4 + $0x378] sm:$0xff]
    %v1693 = vld [vmem:[#allocation4 + $0x380] sm:$0xff]
    %v1694 = vld [vmem:[#allocation4 + $0x388] sm:$0xff]
    %v1695 = vld [vmem:[#allocation4 + $0x390] sm:$0xff]
    %v1696 = vld [vmem:[#allocation4 + $0x398] sm:$0xff]
    %v1697 = vld [vmem:[#allocation4 + $0x3a0] sm:$0xff]
    %v1698 = vld [vmem:[#allocation4 + $0x3a8] sm:$0xff]
    %v1699 = vld [vmem:[#allocation4 + $0x3b0] sm:$0xff]
    %v1700 = vld [vmem:[#allocation4 + $0x3b8] sm:$0xff]
    %v1701 = vld [vmem:[#allocation4 + $0x3c0] sm:$0xff]
    %v1702 = vld [vmem:[#allocation4 + $0x3c8] sm:$0xff]
    %v1703 = vld [vmem:[#allocation4 + $0x3d0] sm:$0xff]
    %v1704 = vld [vmem:[#allocation4 + $0x3d8] sm:$0xff]
    %v1705 = vld [vmem:[#allocation4 + $0x3e0] sm:$0xff]
    %v1706 = vld [vmem:[#allocation4 + $0x3e8] sm:$0xff]
    %v1707 = vld [vmem:[#allocation4 + $0x3f0] sm:$0xff]
    %v1708 = vld [vmem:[#allocation4 + $0x3f8] sm:$0xff]
    %v1709 = vld [vmem:[#allocation4 + $0x400] sm:$0xff]
    %v1710 = vld [vmem:[#allocation4 + $0x408] sm:$0xff]
    %v1711 = vld [vmem:[#allocation4 + $0x410] sm:$0xff]
    %v1712 = vld [vmem:[#allocation4 + $0x418] sm:$0xff]
    %v1713 = vld [vmem:[#allocation4 + $0x420] sm:$0xff]
    %v1714 = vld [vmem:[#allocation4 + $0x428] sm:$0xff]
    %v1715 = vld [vmem:[#allocation4 + $0x430] sm:$0xff]
    %v1716 = vld [vmem:[#allocation4 + $0x438] sm:$0xff]
    %v1717 = vld [vmem:[#allocation4 + $0x440] sm:$0xff]
    %v1718 = vld [vmem:[#allocation4 + $0x448] sm:$0xff]
    %v1719 = vld [vmem:[#allocation4 + $0x450] sm:$0xff]
    %v1720 = vld [vmem:[#allocation4 + $0x458] sm:$0xff]
    %v1721 = vld [vmem:[#allocation4 + $0x460] sm:$0xff]
    %v1722 = vld [vmem:[#allocation4 + $0x468] sm:$0xff]
    %v1723 = vld [vmem:[#allocation4 + $0x470] sm:$0xff]
    %v1724 = vld [vmem:[#allocation4 + $0x478] sm:$0xff]
    %v1725 = vld [vmem:[#allocation4 + $0x480] sm:$0xff]
    %v1726 = vld [vmem:[#allocation4 + $0x488] sm:$0xff]
    %v1727 = vld [vmem:[#allocation4 + $0x490] sm:$0xff]
    %v1728 = vld [vmem:[#allocation4 + $0x498] sm:$0xff]
    %v1729 = vld [vmem:[#allocation4 + $0x4a0] sm:$0xff]
    %v1730 = vld [vmem:[#allocation4 + $0x4a8] sm:$0xff]
    %v1731 = vld [vmem:[#allocation4 + $0x4b0] sm:$0xff]
    %v1732 = vld [vmem:[#allocation4 + $0x4b8] sm:$0xff]
    %v1733 = vld [vmem:[#allocation4 + $0x4c0] sm:$0xff]
    %v1734 = vld [vmem:[#allocation4 + $0x4c8] sm:$0xff]
    %v1735 = vld [vmem:[#allocation4 + $0x4d0] sm:$0xff]
    %v1736 = vld [vmem:[#allocation4 + $0x4d8] sm:$0xff]
    %v1737 = vld [vmem:[#allocation4 + $0x4e0] sm:$0xff]
    %v1738 = vld [vmem:[#allocation4 + $0x4e8] sm:$0xff]
    %v1739 = vld [vmem:[#allocation4 + $0x4f0] sm:$0xff]
    %v1740 = vld [vmem:[#allocation4 + $0x4f8] sm:$0xff]
    %v1741 = vld [vmem:[#allocation4 + $0x500] sm:$0xff]
    %v1742 = vld [vmem:[#allocation4 + $0x508] sm:$0xff]
    %v1743 = vld [vmem:[#allocation4 + $0x510] sm:$0xff]
    %v1744 = vld [vmem:[#allocation4 + $0x518] sm:$0xff]
    %v1745 = vld [vmem:[#allocation4 + $0x520] sm:$0xff]
    %v1746 = vld [vmem:[#allocation4 + $0x528] sm:$0xff]
    %v1747 = vld [vmem:[#allocation4 + $0x530] sm:$0xff]
    %v1748 = vld [vmem:[#allocation4 + $0x538] sm:$0xff]
    %v1749 = vld [vmem:[#allocation4 + $0x540] sm:$0xff]
    %v1750 = vld [vmem:[#allocation4 + $0x548] sm:$0xff]
    %v1751 = vld [vmem:[#allocation4 + $0x550] sm:$0xff]
    %v1752 = vld [vmem:[#allocation4 + $0x558] sm:$0xff]
    %v1753 = vld [vmem:[#allocation4 + $0x560] sm:$0xff]
    %v1754 = vld [vmem:[#allocation4 + $0x568] sm:$0xff]
    %v1755 = vld [vmem:[#allocation4 + $0x570] sm:$0xff]
    %v1756 = vld [vmem:[#allocation4 + $0x578] sm:$0xff]
    %v1757 = vld [vmem:[#allocation4 + $0x580] sm:$0xff]
    %v1758 = vld [vmem:[#allocation4 + $0x588] sm:$0xff]
    %v1759 = vld [vmem:[#allocation4 + $0x590] sm:$0xff]
    %v1760 = vld [vmem:[#allocation4 + $0x598] sm:$0xff]
    %v1761 = vld [vmem:[#allocation4 + $0x5a0] sm:$0xff]
    %v1762 = vld [vmem:[#allocation4 + $0x5a8] sm:$0xff]
    %v1763 = vld [vmem:[#allocation4 + $0x5b0] sm:$0xff]
    %v1764 = vld [vmem:[#allocation4 + $0x5b8] sm:$0xff]
    %v1765 = vld [vmem:[#allocation4 + $0x5c0] sm:$0xff]
    %v1766 = vld [vmem:[#allocation4 + $0x5c8] sm:$0xff]
    %v1767 = vld [vmem:[#allocation4 + $0x5d0] sm:$0xff]
    %v1768 = vld [vmem:[#allocation4 + $0x5d8] sm:$0xff]
    %v1769 = vld [vmem:[#allocation4 + $0x5e0] sm:$0xff]
    %v1770 = vld [vmem:[#allocation4 + $0x5e8] sm:$0xff]
    %v1771 = vld [vmem:[#allocation4 + $0x5f0] sm:$0xff]
    %v1772 = vld [vmem:[#allocation4 + $0x5f8] sm:$0xff]
    %v1773 = vld [vmem:[#allocation4 + $0x600] sm:$0xff]
    %v1774 = vld [vmem:[#allocation4 + $0x608] sm:$0xff]
    %v1775 = vld [vmem:[#allocation4 + $0x610] sm:$0xff]
    %v1776 = vld [vmem:[#allocation4 + $0x618] sm:$0xff]
    %v1777 = vld [vmem:[#allocation4 + $0x620] sm:$0xff]
    %v1778 = vld [vmem:[#allocation4 + $0x628] sm:$0xff]
    %v1779 = vld [vmem:[#allocation4 + $0x630] sm:$0xff]
    %v1780 = vld [vmem:[#allocation4 + $0x638] sm:$0xff]
    %v1781 = vld [vmem:[#allocation4 + $0x640] sm:$0xff]
    %v1782 = vld [vmem:[#allocation4 + $0x648] sm:$0xff]
    %v1783 = vld [vmem:[#allocation4 + $0x650] sm:$0xff]
    %v1784 = vld [vmem:[#allocation4 + $0x658] sm:$0xff]
    %v1785 = vld [vmem:[#allocation4 + $0x660] sm:$0xff]
    %v1786 = vld [vmem:[#allocation4 + $0x668] sm:$0xff]
    %v1787 = vld [vmem:[#allocation4 + $0x670] sm:$0xff]
    %v1788 = vld [vmem:[#allocation4 + $0x678] sm:$0xff]
    %v1789 = vld [vmem:[#allocation4 + $0x680] sm:$0xff]
    %v1790 = vld [vmem:[#allocation4 + $0x688] sm:$0xff]
    %v1791 = vld [vmem:[#allocation4 + $0x690] sm:$0xff]
    %v1792 = vld [vmem:[#allocation4 + $0x698] sm:$0xff]
    %v1793 = vld [vmem:[#allocation4 + $0x6a0] sm:$0xff]
    %v1794 = vld [vmem:[#allocation4 + $0x6a8] sm:$0xff]
    %v1795 = vld [vmem:[#allocation4 + $0x6b0] sm:$0xff]
    %v1796 = vld [vmem:[#allocation4 + $0x6b8] sm:$0xff]
    %v1797 = vld [vmem:[#allocation4 + $0x6c0] sm:$0xff]
    %v1798 = vld [vmem:[#allocation4 + $0x6c8] sm:$0xff]
    %v1799 = vld [vmem:[#allocation4 + $0x6d0] sm:$0xff]
    %v1800 = vld [vmem:[#allocation4 + $0x6d8] sm:$0xff]
    %v1801 = vld [vmem:[#allocation4 + $0x6e0] sm:$0xff]
    %v1802 = vld [vmem:[#allocation4 + $0x6e8] sm:$0xff]
    %v1803 = vld [vmem:[#allocation4 + $0x6f0] sm:$0xff]
    %v1804 = vld [vmem:[#allocation4 + $0x6f8] sm:$0xff]
    %v1805 = vld [vmem:[#allocation4 + $0x700] sm:$0xff]
    %v1806 = vld [vmem:[#allocation4 + $0x708] sm:$0xff]
    %v1807 = vld [vmem:[#allocation4 + $0x710] sm:$0xff]
    %v1808 = vld [vmem:[#allocation4 + $0x718] sm:$0xff]
    %v1809 = vld [vmem:[#allocation4 + $0x720] sm:$0xff]
    %v1810 = vld [vmem:[#allocation4 + $0x728] sm:$0xff]
    %v1811 = vld [vmem:[#allocation4 + $0x730] sm:$0xff]
    %v1812 = vld [vmem:[#allocation4 + $0x738] sm:$0xff]
    %v1813 = vld [vmem:[#allocation4 + $0x740] sm:$0xff]
    %v1814 = vld [vmem:[#allocation4 + $0x748] sm:$0xff]
    %v1815 = vld [vmem:[#allocation4 + $0x750] sm:$0xff]
    %v1816 = vld [vmem:[#allocation4 + $0x758] sm:$0xff]
    %v1817 = vld [vmem:[#allocation4 + $0x760] sm:$0xff]
    %v1818 = vld [vmem:[#allocation4 + $0x768] sm:$0xff]
    %v1819 = vld [vmem:[#allocation4 + $0x770] sm:$0xff]
    %v1820 = vld [vmem:[#allocation4 + $0x778] sm:$0xff]
    %v1821 = vld [vmem:[#allocation4 + $0x780] sm:$0xff]
    %v1822 = vld [vmem:[#allocation4 + $0x788] sm:$0xff]
    %v1823 = vld [vmem:[#allocation4 + $0x790] sm:$0xff]
    %v1824 = vld [vmem:[#allocation4 + $0x798] sm:$0xff]
    %v1825 = vld [vmem:[#allocation4 + $0x7a0] sm:$0xff]
    %v1826 = vld [vmem:[#allocation4 + $0x7a8] sm:$0xff]
    %v1827 = vld [vmem:[#allocation4 + $0x7b0] sm:$0xff]
    %v1828 = vld [vmem:[#allocation4 + $0x7b8] sm:$0xff]
    %v1829 = vld [vmem:[#allocation4 + $0x7c0] sm:$0xff]
    %v1830 = vld [vmem:[#allocation4 + $0x7c8] sm:$0xff]
    %v1831 = vld [vmem:[#allocation4 + $0x7d0] sm:$0xff]
    %v1832 = vld [vmem:[#allocation4 + $0x7d8] sm:$0xff]
    %v1833 = vld [vmem:[#allocation4 + $0x7e0] sm:$0xff]
    %v1834 = vld [vmem:[#allocation4 + $0x7e8] sm:$0xff]
    %v1835 = vld [vmem:[#allocation4 + $0x7f0] sm:$0xff]
    %v1836 = vld [vmem:[#allocation4 + $0x7f8] sm:$0xff]
    %1837 = vmatpush.msra.mxu0 %v1701
    %1838 = vmatpush.msra.mxu0 %v1693
    %1839 = vmatpush.msra.mxu0 %v1685
    %1840 = vmatpush.msra.mxu0 %v1677
    %1841 = vmatpush.msra.mxu0 %v1669
    %1842 = vmatpush.msra.mxu0 %v1661
    %1843 = vmatpush.msra.mxu0 %v1653
    %1844 = vmatpush.msra.mxu0 %v1645
    %1845 = vmatpush.msra.mxu0 %v1637
    %1846 = vmatpush.msra.mxu0 %v1629
    %1847 = vmatpush.msra.mxu0 %v1621
    %1848 = vmatpush.msra.mxu0 %v1613
    %1849 = vmatpush.msra.mxu0 %v1605
    %1850 = vmatpush.msra.mxu0 %v1597
    %1851 = vmatpush.msra.mxu0 %v1589
    %1852 = vmatpush.msra.mxu0 %v1581
    %1853 = vmatmul.f32.gmra.mxu0 %v1579
    %v1854 = vpop.f32.mrf.mxu0
    %v1855 = vadd.f32 0.0, %v1854
    %1856 = vdwg.mxu0
    %1857 = vmatpush.msra.mxu0 %v1829
    %1858 = vmatpush.msra.mxu0 %v1821
    %1859 = vmatpush.msra.mxu0 %v1813
    %1860 = vmatpush.msra.mxu0 %v1805
    %1861 = vmatpush.msra.mxu0 %v1797
    %1862 = vmatpush.msra.mxu0 %v1789
    %1863 = vmatpush.msra.mxu0 %v1781
    %1864 = vmatpush.msra.mxu0 %v1773
    %1865 = vmatpush.msra.mxu0 %v1765
    %1866 = vmatpush.msra.mxu0 %v1757
    %1867 = vmatpush.msra.mxu0 %v1749
    %1868 = vmatpush.msra.mxu0 %v1741
    %1869 = vmatpush.msra.mxu0 %v1733
    %1870 = vmatpush.msra.mxu0 %v1725
    %1871 = vmatpush.msra.mxu0 %v1717
    %1872 = vmatpush.msra.mxu0 %v1709
    %1873 = vmatmul.f32.gmra.mxu0 %v1580
    %v1874 = vpop.f32.mrf.mxu0
    %v1875 = vadd.f32 %v1855, %v1874
    %1876 = vdwg.mxu0
    %1877 = vmatpush.msra.mxu0 %v1702
    %1878 = vmatpush.msra.mxu0 %v1694
    %1879 = vmatpush.msra.mxu0 %v1686
    %1880 = vmatpush.msra.mxu0 %v1678
    %1881 = vmatpush.msra.mxu0 %v1670
    %1882 = vmatpush.msra.mxu0 %v1662
    %1883 = vmatpush.msra.mxu0 %v1654
    %1884 = vmatpush.msra.mxu0 %v1646
    %1885 = vmatpush.msra.mxu0 %v1638
    %1886 = vmatpush.msra.mxu0 %v1630
    %1887 = vmatpush.msra.mxu0 %v1622
    %1888 = vmatpush.msra.mxu0 %v1614
    %1889 = vmatpush.msra.mxu0 %v1606
    %1890 = vmatpush.msra.mxu0 %v1598
    %1891 = vmatpush.msra.mxu0 %v1590
    %1892 = vmatpush.msra.mxu0 %v1582
    %1893 = vmatmul.f32.gmra.mxu0 %v1579
    %v1894 = vpop.f32.mrf.mxu0
    %v1895 = vadd.f32 0.0, %v1894
    %1896 = vdwg.mxu0
    %1897 = vmatpush.msra.mxu0 %v1830
    %1898 = vmatpush.msra.mxu0 %v1822
    %1899 = vmatpush.msra.mxu0 %v1814
    %1900 = vmatpush.msra.mxu0 %v1806
    %1901 = vmatpush.msra.mxu0 %v1798
    %1902 = vmatpush.msra.mxu0 %v1790
    %1903 = vmatpush.msra.mxu0 %v1782
    %1904 = vmatpush.msra.mxu0 %v1774
    %1905 = vmatpush.msra.mxu0 %v1766
    %1906 = vmatpush.msra.mxu0 %v1758
    %1907 = vmatpush.msra.mxu0 %v1750
    %1908 = vmatpush.msra.mxu0 %v1742
    %1909 = vmatpush.msra.mxu0 %v1734
    %1910 = vmatpush.msra.mxu0 %v1726
    %1911 = vmatpush.msra.mxu0 %v1718
    %1912 = vmatpush.msra.mxu0 %v1710
    %1913 = vmatmul.f32.gmra.mxu0 %v1580
    %v1914 = vpop.f32.mrf.mxu0
    %v1915 = vadd.f32 %v1895, %v1914
    %1916 = vdwg.mxu0
    %1917 = vmatpush.msra.mxu0 %v1703
    %1918 = vmatpush.msra.mxu0 %v1695
    %1919 = vmatpush.msra.mxu0 %v1687
    %1920 = vmatpush.msra.mxu0 %v1679
    %1921 = vmatpush.msra.mxu0 %v1671
    %1922 = vmatpush.msra.mxu0 %v1663
    %1923 = vmatpush.msra.mxu0 %v1655
    %1924 = vmatpush.msra.mxu0 %v1647
    %1925 = vmatpush.msra.mxu0 %v1639
    %1926 = vmatpush.msra.mxu0 %v1631
    %1927 = vmatpush.msra.mxu0 %v1623
    %1928 = vmatpush.msra.mxu0 %v1615
    %1929 = vmatpush.msra.mxu0 %v1607
    %1930 = vmatpush.msra.mxu0 %v1599
    %1931 = vmatpush.msra.mxu0 %v1591
    %1932 = vmatpush.msra.mxu0 %v1583
    %1933 = vmatmul.f32.gmra.mxu0 %v1579
    %v1934 = vpop.f32.mrf.mxu0
    %v1935 = vadd.f32 0.0, %v1934
    %1936 = vdwg.mxu0
    %1937 = vmatpush.msra.mxu0 %v1831
    %1938 = vmatpush.msra.mxu0 %v1823
    %1939 = vmatpush.msra.mxu0 %v1815
    %1940 = vmatpush.msra.mxu0 %v1807
    %1941 = vmatpush.msra.mxu0 %v1799
    %1942 = vmatpush.msra.mxu0 %v1791
    %1943 = vmatpush.msra.mxu0 %v1783
    %1944 = vmatpush.msra.mxu0 %v1775
    %1945 = vmatpush.msra.mxu0 %v1767
    %1946 = vmatpush.msra.mxu0 %v1759
    %1947 = vmatpush.msra.mxu0 %v1751
    %1948 = vmatpush.msra.mxu0 %v1743
    %1949 = vmatpush.msra.mxu0 %v1735
    %1950 = vmatpush.msra.mxu0 %v1727
    %1951 = vmatpush.msra.mxu0 %v1719
    %1952 = vmatpush.msra.mxu0 %v1711
    %1953 = vmatmul.f32.gmra.mxu0 %v1580
    %v1954 = vpop.f32.mrf.mxu0
    %v1955 = vadd.f32 %v1935, %v1954
    %1956 = vdwg.mxu0
    %1957 = vmatpush.msra.mxu0 %v1704
    %1958 = vmatpush.msra.mxu0 %v1696
    %1959 = vmatpush.msra.mxu0 %v1688
    %1960 = vmatpush.msra.mxu0 %v1680
    %1961 = vmatpush.msra.mxu0 %v1672
    %1962 = vmatpush.msra.mxu0 %v1664
    %1963 = vmatpush.msra.mxu0 %v1656
    %1964 = vmatpush.msra.mxu0 %v1648
    %1965 = vmatpush.msra.mxu0 %v1640
    %1966 = vmatpush.msra.mxu0 %v1632
    %1967 = vmatpush.msra.mxu0 %v1624
    %1968 = vmatpush.msra.mxu0 %v1616
    %1969 = vmatpush.msra.mxu0 %v1608
    %1970 = vmatpush.msra.mxu0 %v1600
    %1971 = vmatpush.msra.mxu0 %v1592
    %1972 = vmatpush.msra.mxu0 %v1584
    %1973 = vmatmul.f32.gmra.mxu0 %v1579
    %v1974 = vpop.f32.mrf.mxu0
    %v1975 = vadd.f32 0.0, %v1974
    %1976 = vdwg.mxu0
    %1977 = vmatpush.msra.mxu0 %v1832
    %1978 = vmatpush.msra.mxu0 %v1824
    %1979 = vmatpush.msra.mxu0 %v1816
    %1980 = vmatpush.msra.mxu0 %v1808
    %1981 = vmatpush.msra.mxu0 %v1800
    %1982 = vmatpush.msra.mxu0 %v1792
    %1983 = vmatpush.msra.mxu0 %v1784
    %1984 = vmatpush.msra.mxu0 %v1776
    %1985 = vmatpush.msra.mxu0 %v1768
    %1986 = vmatpush.msra.mxu0 %v1760
    %1987 = vmatpush.msra.mxu0 %v1752
    %1988 = vmatpush.msra.mxu0 %v1744
    %1989 = vmatpush.msra.mxu0 %v1736
    %1990 = vmatpush.msra.mxu0 %v1728
    %1991 = vmatpush.msra.mxu0 %v1720
    %1992 = vmatpush.msra.mxu0 %v1712
    %1993 = vmatmul.f32.gmra.mxu0 %v1580
    %v1994 = vpop.f32.mrf.mxu0
    %v1995 = vadd.f32 %v1975, %v1994
    %1996 = vdwg.mxu0
    %1997 = vmatpush.msra.mxu0 %v1705
    %1998 = vmatpush.msra.mxu0 %v1697
    %1999 = vmatpush.msra.mxu0 %v1689
    %2000 = vmatpush.msra.mxu0 %v1681
    %2001 = vmatpush.msra.mxu0 %v1673
    %2002 = vmatpush.msra.mxu0 %v1665
    %2003 = vmatpush.msra.mxu0 %v1657
    %2004 = vmatpush.msra.mxu0 %v1649
    %2005 = vmatpush.msra.mxu0 %v1641
    %2006 = vmatpush.msra.mxu0 %v1633
    %2007 = vmatpush.msra.mxu0 %v1625
    %2008 = vmatpush.msra.mxu0 %v1617
    %2009 = vmatpush.msra.mxu0 %v1609
    %2010 = vmatpush.msra.mxu0 %v1601
    %2011 = vmatpush.msra.mxu0 %v1593
    %2012 = vmatpush.msra.mxu0 %v1585
    %2013 = vmatmul.f32.gmra.mxu0 %v1579
    %v2014 = vpop.f32.mrf.mxu0
    %v2015 = vadd.f32 0.0, %v2014
    %2016 = vdwg.mxu0
    %2017 = vmatpush.msra.mxu0 %v1833
    %2018 = vmatpush.msra.mxu0 %v1825
    %2019 = vmatpush.msra.mxu0 %v1817
    %2020 = vmatpush.msra.mxu0 %v1809
    %2021 = vmatpush.msra.mxu0 %v1801
    %2022 = vmatpush.msra.mxu0 %v1793
    %2023 = vmatpush.msra.mxu0 %v1785
    %2024 = vmatpush.msra.mxu0 %v1777
    %2025 = vmatpush.msra.mxu0 %v1769
    %2026 = vmatpush.msra.mxu0 %v1761
    %2027 = vmatpush.msra.mxu0 %v1753
    %2028 = vmatpush.msra.mxu0 %v1745
    %2029 = vmatpush.msra.mxu0 %v1737
    %2030 = vmatpush.msra.mxu0 %v1729
    %2031 = vmatpush.msra.mxu0 %v1721
    %2032 = vmatpush.msra.mxu0 %v1713
    %2033 = vmatmul.f32.gmra.mxu0 %v1580
    %v2034 = vpop.f32.mrf.mxu0
    %v2035 = vadd.f32 %v2015, %v2034
    %2036 = vdwg.mxu0
    %2037 = vmatpush.msra.mxu0 %v1706
    %2038 = vmatpush.msra.mxu0 %v1698
    %2039 = vmatpush.msra.mxu0 %v1690
    %2040 = vmatpush.msra.mxu0 %v1682
    %2041 = vmatpush.msra.mxu0 %v1674
    %2042 = vmatpush.msra.mxu0 %v1666
    %2043 = vmatpush.msra.mxu0 %v1658
    %2044 = vmatpush.msra.mxu0 %v1650
    %2045 = vmatpush.msra.mxu0 %v1642
    %2046 = vmatpush.msra.mxu0 %v1634
    %2047 = vmatpush.msra.mxu0 %v1626
    %2048 = vmatpush.msra.mxu0 %v1618
    %2049 = vmatpush.msra.mxu0 %v1610
    %2050 = vmatpush.msra.mxu0 %v1602
    %2051 = vmatpush.msra.mxu0 %v1594
    %2052 = vmatpush.msra.mxu0 %v1586
    %2053 = vmatmul.f32.gmra.mxu0 %v1579
    %v2054 = vpop.f32.mrf.mxu0
    %v2055 = vadd.f32 0.0, %v2054
    %2056 = vdwg.mxu0
    %2057 = vmatpush.msra.mxu0 %v1834
    %2058 = vmatpush.msra.mxu0 %v1826
    %2059 = vmatpush.msra.mxu0 %v1818
    %2060 = vmatpush.msra.mxu0 %v1810
    %2061 = vmatpush.msra.mxu0 %v1802
    %2062 = vmatpush.msra.mxu0 %v1794
    %2063 = vmatpush.msra.mxu0 %v1786
    %2064 = vmatpush.msra.mxu0 %v1778
    %2065 = vmatpush.msra.mxu0 %v1770
    %2066 = vmatpush.msra.mxu0 %v1762
    %2067 = vmatpush.msra.mxu0 %v1754
    %2068 = vmatpush.msra.mxu0 %v1746
    %2069 = vmatpush.msra.mxu0 %v1738
    %2070 = vmatpush.msra.mxu0 %v1730
    %2071 = vmatpush.msra.mxu0 %v1722
    %2072 = vmatpush.msra.mxu0 %v1714
    %2073 = vmatmul.f32.gmra.mxu0 %v1580
    %v2074 = vpop.f32.mrf.mxu0
    %v2075 = vadd.f32 %v2055, %v2074
    %2076 = vdwg.mxu0
    %2077 = vmatpush.msra.mxu0 %v1707
    %2078 = vmatpush.msra.mxu0 %v1699
    %2079 = vmatpush.msra.mxu0 %v1691
    %2080 = vmatpush.msra.mxu0 %v1683
    %2081 = vmatpush.msra.mxu0 %v1675
    %2082 = vmatpush.msra.mxu0 %v1667
    %2083 = vmatpush.msra.mxu0 %v1659
    %2084 = vmatpush.msra.mxu0 %v1651
    %2085 = vmatpush.msra.mxu0 %v1643
    %2086 = vmatpush.msra.mxu0 %v1635
    %2087 = vmatpush.msra.mxu0 %v1627
    %2088 = vmatpush.msra.mxu0 %v1619
    %2089 = vmatpush.msra.mxu0 %v1611
    %2090 = vmatpush.msra.mxu0 %v1603
    %2091 = vmatpush.msra.mxu0 %v1595
    %2092 = vmatpush.msra.mxu0 %v1587
    %2093 = vmatmul.f32.gmra.mxu0 %v1579
    %v2094 = vpop.f32.mrf.mxu0
    %v2095 = vadd.f32 0.0, %v2094
    %2096 = vdwg.mxu0
    %2097 = vmatpush.msra.mxu0 %v1835
    %2098 = vmatpush.msra.mxu0 %v1827
    %2099 = vmatpush.msra.mxu0 %v1819
    %2100 = vmatpush.msra.mxu0 %v1811
    %2101 = vmatpush.msra.mxu0 %v1803
    %2102 = vmatpush.msra.mxu0 %v1795
    %2103 = vmatpush.msra.mxu0 %v1787
    %2104 = vmatpush.msra.mxu0 %v1779
    %2105 = vmatpush.msra.mxu0 %v1771
    %2106 = vmatpush.msra.mxu0 %v1763
    %2107 = vmatpush.msra.mxu0 %v1755
    %2108 = vmatpush.msra.mxu0 %v1747
    %2109 = vmatpush.msra.mxu0 %v1739
    %2110 = vmatpush.msra.mxu0 %v1731
    %2111 = vmatpush.msra.mxu0 %v1723
    %2112 = vmatpush.msra.mxu0 %v1715
    %2113 = vmatmul.f32.gmra.mxu0 %v1580
    %v2114 = vpop.f32.mrf.mxu0
    %v2115 = vadd.f32 %v2095, %v2114
    %2116 = vdwg.mxu0
    %2117 = vmatpush.msra.mxu0 %v1708
    %2118 = vmatpush.msra.mxu0 %v1700
    %2119 = vmatpush.msra.mxu0 %v1692
    %2120 = vmatpush.msra.mxu0 %v1684
    %2121 = vmatpush.msra.mxu0 %v1676
    %2122 = vmatpush.msra.mxu0 %v1668
    %2123 = vmatpush.msra.mxu0 %v1660
    %2124 = vmatpush.msra.mxu0 %v1652
    %2125 = vmatpush.msra.mxu0 %v1644
    %2126 = vmatpush.msra.mxu0 %v1636
    %2127 = vmatpush.msra.mxu0 %v1628
    %2128 = vmatpush.msra.mxu0 %v1620
    %2129 = vmatpush.msra.mxu0 %v1612
    %2130 = vmatpush.msra.mxu0 %v1604
    %2131 = vmatpush.msra.mxu0 %v1596
    %2132 = vmatpush.msra.mxu0 %v1588
    %2133 = vmatmul.f32.gmra.mxu0 %v1579
    %v2134 = vpop.f32.mrf.mxu0
    %v2135 = vadd.f32 0.0, %v2134
    %2136 = vdwg.mxu0
    %2137 = vmatpush.msra.mxu0 %v1836
    %2138 = vmatpush.msra.mxu0 %v1828
    %2139 = vmatpush.msra.mxu0 %v1820
    %2140 = vmatpush.msra.mxu0 %v1812
    %2141 = vmatpush.msra.mxu0 %v1804
    %2142 = vmatpush.msra.mxu0 %v1796
    %2143 = vmatpush.msra.mxu0 %v1788
    %2144 = vmatpush.msra.mxu0 %v1780
    %2145 = vmatpush.msra.mxu0 %v1772
    %2146 = vmatpush.msra.mxu0 %v1764
    %2147 = vmatpush.msra.mxu0 %v1756
    %2148 = vmatpush.msra.mxu0 %v1748
    %2149 = vmatpush.msra.mxu0 %v1740
    %2150 = vmatpush.msra.mxu0 %v1732
    %2151 = vmatpush.msra.mxu0 %v1724
    %2152 = vmatpush.msra.mxu0 %v1716
    %2153 = vmatmul.f32.gmra.mxu0 %v1580
    %v2154 = vpop.f32.mrf.mxu0
    %v2155 = vadd.f32 %v2135, %v2154
    %2156 = vdwg.mxu0
    %v2157 = vadd.f32 %v2035, %v285
    %v2158 = vadd.f32 %v2075, %v286
    %v2159 = vadd.f32 %v2115, %v287
    %v2160 = vadd.f32 %v2155, %v288
    %v2161 = vmul.f32 %v2157, 0.5
    %v2162 = vtanh.pop %v2161
    %v2163 = vmul.f32 %v2162, 0.5
    %v2164 = vadd.f32 %v2163, 0.5
    %v2165 = vmul.f32 %v2158, 0.5
    %v2166 = vtanh.pop %v2165
    %v2167 = vmul.f32 %v2166, 0.5
    %v2168 = vadd.f32 %v2167, 0.5
    %v2169 = vtanh.pop %v2159
    %v2170 = vmul.f32 %v2160, 0.5
    %v2171 = vtanh.pop %v2170
    %v2172 = vmul.f32 %v2171, 0.5
    %v2173 = vadd.f32 %v2172, 0.5
    %v2174 = vmul.f32 %v2168, %v1545
    %v2175 = vmul.f32 %v2164, %v2169
    %v2176 = vadd.f32 %v2174, %v2175
    %v2177 = vtanh.pop %v2176
    %v2178 = vmul.f32 %v2173, %v2177
    %s2179 = smul.u32 3, 4
    %s2180 = smul.addr %s2179, 8
    %s2181 = scalar_lea.vmem [#allocation2], %s2180
    %v2182 = vld [vmem:[%s2181] sm:$0xff]
    %v2183 = vld [vmem:[%s2181 + $0x8] sm:$0xff]
    %v2184 = vld [vmem:[%s2181 + $0x10] sm:$0xff]
    %v2185 = vld [vmem:[%s2181 + $0x18] sm:$0xff]
    %v2186 = vadd.f32 %v2182, %v1875
    %v2187 = vadd.f32 %v2183, %v1915
    %v2188 = vadd.f32 %v2184, %v1955
    %v2189 = vadd.f32 %v2185, %v1995
    %v2190 = vmul.f32 %v2186, 0.5
    %v2191 = vtanh.pop %v2190
    %v2192 = vmul.f32 %v2191, 0.5
    %v2193 = vadd.f32 %v2192, 0.5
    %v2194 = vmul.f32 %v2187, 0.5
    %v2195 = vtanh.pop %v2194
    %v2196 = vmul.f32 %v2195, 0.5
    %v2197 = vadd.f32 %v2196, 0.5
    %v2198 = vtanh.pop %v2188
    %v2199 = vmul.f32 %v2189, 0.5
    %v2200 = vtanh.pop %v2199
    %v2201 = vmul.f32 %v2200, 0.5
    %v2202 = vadd.f32 %v2201, 0.5
    %v2203 = vmul.f32 %v2197, %v1574
    %v2204 = vmul.f32 %v2193, %v2198
    %v2205 = vadd.f32 %v2203, %v2204
    %v2206 = vtanh.pop %v2205
    %v2207 = vmul.f32 %v2202, %v2206
    %2208 = vst [vmem:[#allocation3] sm:$0xff] %v2207
    %2209 = vst [vmem:[#allocation3 + $0x8] sm:$0xff] %v2178
    %v2210 = vld [vmem:[#allocation3] sm:$0xff]
    %v2211 = vld [vmem:[#allocation3 + $0x8] sm:$0xff]
    %v2212 = vld [vmem:[#allocation4] sm:$0xff]
    %v2213 = vld [vmem:[#allocation4 + $0x8] sm:$0xff]
    %v2214 = vld [vmem:[#allocation4 + $0x10] sm:$0xff]
    %v2215 = vld [vmem:[#allocation4 + $0x18] sm:$0xff]
    %v2216 = vld [vmem:[#allocation4 + $0x20] sm:$0xff]
    %v2217 = vld [vmem:[#allocation4 + $0x28] sm:$0xff]
    %v2218 = vld [vmem:[#allocation4 + $0x30] sm:$0xff]
    %v2219 = vld [vmem:[#allocation4 + $0x38] sm:$0xff]
    %v2220 = vld [vmem:[#allocation4 + $0x40] sm:$0xff]
    %v2221 = vld [vmem:[#allocation4 + $0x48] sm:$0xff]
    %v2222 = vld [vmem:[#allocation4 + $0x50] sm:$0xff]
    %v2223 = vld [vmem:[#allocation4 + $0x58] sm:$0xff]
    %v2224 = vld [vmem:[#allocation4 + $0x60] sm:$0xff]
    %v2225 = vld [vmem:[#allocation4 + $0x68] sm:$0xff]
    %v2226 = vld [vmem:[#allocation4 + $0x70] sm:$0xff]
    %v2227 = vld [vmem:[#allocation4 + $0x78] sm:$0xff]
    %v2228 = vld [vmem:[#allocation4 + $0x80] sm:$0xff]
    %v2229 = vld [vmem:[#allocation4 + $0x88] sm:$0xff]
    %v2230 = vld [vmem:[#allocation4 + $0x90] sm:$0xff]
    %v2231 = vld [vmem:[#allocation4 + $0x98] sm:$0xff]
    %v2232 = vld [vmem:[#allocation4 + $0xa0] sm:$0xff]
    %v2233 = vld [vmem:[#allocation4 + $0xa8] sm:$0xff]
    %v2234 = vld [vmem:[#allocation4 + $0xb0] sm:$0xff]
    %v2235 = vld [vmem:[#allocation4 + $0xb8] sm:$0xff]
    %v2236 = vld [vmem:[#allocation4 + $0xc0] sm:$0xff]
    %v2237 = vld [vmem:[#allocation4 + $0xc8] sm:$0xff]
    %v2238 = vld [vmem:[#allocation4 + $0xd0] sm:$0xff]
    %v2239 = vld [vmem:[#allocation4 + $0xd8] sm:$0xff]
    %v2240 = vld [vmem:[#allocation4 + $0xe0] sm:$0xff]
    %v2241 = vld [vmem:[#allocation4 + $0xe8] sm:$0xff]
    %v2242 = vld [vmem:[#allocation4 + $0xf0] sm:$0xff]
    %v2243 = vld [vmem:[#allocation4 + $0xf8] sm:$0xff]
    %v2244 = vld [vmem:[#allocation4 + $0x100] sm:$0xff]
    %v2245 = vld [vmem:[#allocation4 + $0x108] sm:$0xff]
    %v2246 = vld [vmem:[#allocation4 + $0x110] sm:$0xff]
    %v2247 = vld [vmem:[#allocation4 + $0x118] sm:$0xff]
    %v2248 = vld [vmem:[#allocation4 + $0x120] sm:$0xff]
    %v2249 = vld [vmem:[#allocation4 + $0x128] sm:$0xff]
    %v2250 = vld [vmem:[#allocation4 + $0x130] sm:$0xff]
    %v2251 = vld [vmem:[#allocation4 + $0x138] sm:$0xff]
    %v2252 = vld [vmem:[#allocation4 + $0x140] sm:$0xff]
    %v2253 = vld [vmem:[#allocation4 + $0x148] sm:$0xff]
    %v2254 = vld [vmem:[#allocation4 + $0x150] sm:$0xff]
    %v2255 = vld [vmem:[#allocation4 + $0x158] sm:$0xff]
    %v2256 = vld [vmem:[#allocation4 + $0x160] sm:$0xff]
    %v2257 = vld [vmem:[#allocation4 + $0x168] sm:$0xff]
    %v2258 = vld [vmem:[#allocation4 + $0x170] sm:$0xff]
    %v2259 = vld [vmem:[#allocation4 + $0x178] sm:$0xff]
    %v2260 = vld [vmem:[#allocation4 + $0x180] sm:$0xff]
    %v2261 = vld [vmem:[#allocation4 + $0x188] sm:$0xff]
    %v2262 = vld [vmem:[#allocation4 + $0x190] sm:$0xff]
    %v2263 = vld [vmem:[#allocation4 + $0x198] sm:$0xff]
    %v2264 = vld [vmem:[#allocation4 + $0x1a0] sm:$0xff]
    %v2265 = vld [vmem:[#allocation4 + $0x1a8] sm:$0xff]
    %v2266 = vld [vmem:[#allocation4 + $0x1b0] sm:$0xff]
    %v2267 = vld [vmem:[#allocation4 + $0x1b8] sm:$0xff]
    %v2268 = vld [vmem:[#allocation4 + $0x1c0] sm:$0xff]
    %v2269 = vld [vmem:[#allocation4 + $0x1c8] sm:$0xff]
    %v2270 = vld [vmem:[#allocation4 + $0x1d0] sm:$0xff]
    %v2271 = vld [vmem:[#allocation4 + $0x1d8] sm:$0xff]
    %v2272 = vld [vmem:[#allocation4 + $0x1e0] sm:$0xff]
    %v2273 = vld [vmem:[#allocation4 + $0x1e8] sm:$0xff]
    %v2274 = vld [vmem:[#allocation4 + $0x1f0] sm:$0xff]
    %v2275 = vld [vmem:[#allocation4 + $0x1f8] sm:$0xff]
    %v2276 = vld [vmem:[#allocation4 + $0x200] sm:$0xff]
    %v2277 = vld [vmem:[#allocation4 + $0x208] sm:$0xff]
    %v2278 = vld [vmem:[#allocation4 + $0x210] sm:$0xff]
    %v2279 = vld [vmem:[#allocation4 + $0x218] sm:$0xff]
    %v2280 = vld [vmem:[#allocation4 + $0x220] sm:$0xff]
    %v2281 = vld [vmem:[#allocation4 + $0x228] sm:$0xff]
    %v2282 = vld [vmem:[#allocation4 + $0x230] sm:$0xff]
    %v2283 = vld [vmem:[#allocation4 + $0x238] sm:$0xff]
    %v2284 = vld [vmem:[#allocation4 + $0x240] sm:$0xff]
    %v2285 = vld [vmem:[#allocation4 + $0x248] sm:$0xff]
    %v2286 = vld [vmem:[#allocation4 + $0x250] sm:$0xff]
    %v2287 = vld [vmem:[#allocation4 + $0x258] sm:$0xff]
    %v2288 = vld [vmem:[#allocation4 + $0x260] sm:$0xff]
    %v2289 = vld [vmem:[#allocation4 + $0x268] sm:$0xff]
    %v2290 = vld [vmem:[#allocation4 + $0x270] sm:$0xff]
    %v2291 = vld [vmem:[#allocation4 + $0x278] sm:$0xff]
    %v2292 = vld [vmem:[#allocation4 + $0x280] sm:$0xff]
    %v2293 = vld [vmem:[#allocation4 + $0x288] sm:$0xff]
    %v2294 = vld [vmem:[#allocation4 + $0x290] sm:$0xff]
    %v2295 = vld [vmem:[#allocation4 + $0x298] sm:$0xff]
    %v2296 = vld [vmem:[#allocation4 + $0x2a0] sm:$0xff]
    %v2297 = vld [vmem:[#allocation4 + $0x2a8] sm:$0xff]
    %v2298 = vld [vmem:[#allocation4 + $0x2b0] sm:$0xff]
    %v2299 = vld [vmem:[#allocation4 + $0x2b8] sm:$0xff]
    %v2300 = vld [vmem:[#allocation4 + $0x2c0] sm:$0xff]
    %v2301 = vld [vmem:[#allocation4 + $0x2c8] sm:$0xff]
    %v2302 = vld [vmem:[#allocation4 + $0x2d0] sm:$0xff]
    %v2303 = vld [vmem:[#allocation4 + $0x2d8] sm:$0xff]
    %v2304 = vld [vmem:[#allocation4 + $0x2e0] sm:$0xff]
    %v2305 = vld [vmem:[#allocation4 + $0x2e8] sm:$0xff]
    %v2306 = vld [vmem:[#allocation4 + $0x2f0] sm:$0xff]
    %v2307 = vld [vmem:[#allocation4 + $0x2f8] sm:$0xff]
    %v2308 = vld [vmem:[#allocation4 + $0x300] sm:$0xff]
    %v2309 = vld [vmem:[#allocation4 + $0x308] sm:$0xff]
    %v2310 = vld [vmem:[#allocation4 + $0x310] sm:$0xff]
    %v2311 = vld [vmem:[#allocation4 + $0x318] sm:$0xff]
    %v2312 = vld [vmem:[#allocation4 + $0x320] sm:$0xff]
    %v2313 = vld [vmem:[#allocation4 + $0x328] sm:$0xff]
    %v2314 = vld [vmem:[#allocation4 + $0x330] sm:$0xff]
    %v2315 = vld [vmem:[#allocation4 + $0x338] sm:$0xff]
    %v2316 = vld [vmem:[#allocation4 + $0x340] sm:$0xff]
    %v2317 = vld [vmem:[#allocation4 + $0x348] sm:$0xff]
    %v2318 = vld [vmem:[#allocation4 + $0x350] sm:$0xff]
    %v2319 = vld [vmem:[#allocation4 + $0x358] sm:$0xff]
    %v2320 = vld [vmem:[#allocation4 + $0x360] sm:$0xff]
    %v2321 = vld [vmem:[#allocation4 + $0x368] sm:$0xff]
    %v2322 = vld [vmem:[#allocation4 + $0x370] sm:$0xff]
    %v2323 = vld [vmem:[#allocation4 + $0x378] sm:$0xff]
    %v2324 = vld [vmem:[#allocation4 + $0x380] sm:$0xff]
    %v2325 = vld [vmem:[#allocation4 + $0x388] sm:$0xff]
    %v2326 = vld [vmem:[#allocation4 + $0x390] sm:$0xff]
    %v2327 = vld [vmem:[#allocation4 + $0x398] sm:$0xff]
    %v2328 = vld [vmem:[#allocation4 + $0x3a0] sm:$0xff]
    %v2329 = vld [vmem:[#allocation4 + $0x3a8] sm:$0xff]
    %v2330 = vld [vmem:[#allocation4 + $0x3b0] sm:$0xff]
    %v2331 = vld [vmem:[#allocation4 + $0x3b8] sm:$0xff]
    %v2332 = vld [vmem:[#allocation4 + $0x3c0] sm:$0xff]
    %v2333 = vld [vmem:[#allocation4 + $0x3c8] sm:$0xff]
    %v2334 = vld [vmem:[#allocation4 + $0x3d0] sm:$0xff]
    %v2335 = vld [vmem:[#allocation4 + $0x3d8] sm:$0xff]
    %v2336 = vld [vmem:[#allocation4 + $0x3e0] sm:$0xff]
    %v2337 = vld [vmem:[#allocation4 + $0x3e8] sm:$0xff]
    %v2338 = vld [vmem:[#allocation4 + $0x3f0] sm:$0xff]
    %v2339 = vld [vmem:[#allocation4 + $0x3f8] sm:$0xff]
    %v2340 = vld [vmem:[#allocation4 + $0x400] sm:$0xff]
    %v2341 = vld [vmem:[#allocation4 + $0x408] sm:$0xff]
    %v2342 = vld [vmem:[#allocation4 + $0x410] sm:$0xff]
    %v2343 = vld [vmem:[#allocation4 + $0x418] sm:$0xff]
    %v2344 = vld [vmem:[#allocation4 + $0x420] sm:$0xff]
    %v2345 = vld [vmem:[#allocation4 + $0x428] sm:$0xff]
    %v2346 = vld [vmem:[#allocation4 + $0x430] sm:$0xff]
    %v2347 = vld [vmem:[#allocation4 + $0x438] sm:$0xff]
    %v2348 = vld [vmem:[#allocation4 + $0x440] sm:$0xff]
    %v2349 = vld [vmem:[#allocation4 + $0x448] sm:$0xff]
    %v2350 = vld [vmem:[#allocation4 + $0x450] sm:$0xff]
    %v2351 = vld [vmem:[#allocation4 + $0x458] sm:$0xff]
    %v2352 = vld [vmem:[#allocation4 + $0x460] sm:$0xff]
    %v2353 = vld [vmem:[#allocation4 + $0x468] sm:$0xff]
    %v2354 = vld [vmem:[#allocation4 + $0x470] sm:$0xff]
    %v2355 = vld [vmem:[#allocation4 + $0x478] sm:$0xff]
    %v2356 = vld [vmem:[#allocation4 + $0x480] sm:$0xff]
    %v2357 = vld [vmem:[#allocation4 + $0x488] sm:$0xff]
    %v2358 = vld [vmem:[#allocation4 + $0x490] sm:$0xff]
    %v2359 = vld [vmem:[#allocation4 + $0x498] sm:$0xff]
    %v2360 = vld [vmem:[#allocation4 + $0x4a0] sm:$0xff]
    %v2361 = vld [vmem:[#allocation4 + $0x4a8] sm:$0xff]
    %v2362 = vld [vmem:[#allocation4 + $0x4b0] sm:$0xff]
    %v2363 = vld [vmem:[#allocation4 + $0x4b8] sm:$0xff]
    %v2364 = vld [vmem:[#allocation4 + $0x4c0] sm:$0xff]
    %v2365 = vld [vmem:[#allocation4 + $0x4c8] sm:$0xff]
    %v2366 = vld [vmem:[#allocation4 + $0x4d0] sm:$0xff]
    %v2367 = vld [vmem:[#allocation4 + $0x4d8] sm:$0xff]
    %v2368 = vld [vmem:[#allocation4 + $0x4e0] sm:$0xff]
    %v2369 = vld [vmem:[#allocation4 + $0x4e8] sm:$0xff]
    %v2370 = vld [vmem:[#allocation4 + $0x4f0] sm:$0xff]
    %v2371 = vld [vmem:[#allocation4 + $0x4f8] sm:$0xff]
    %v2372 = vld [vmem:[#allocation4 + $0x500] sm:$0xff]
    %v2373 = vld [vmem:[#allocation4 + $0x508] sm:$0xff]
    %v2374 = vld [vmem:[#allocation4 + $0x510] sm:$0xff]
    %v2375 = vld [vmem:[#allocation4 + $0x518] sm:$0xff]
    %v2376 = vld [vmem:[#allocation4 + $0x520] sm:$0xff]
    %v2377 = vld [vmem:[#allocation4 + $0x528] sm:$0xff]
    %v2378 = vld [vmem:[#allocation4 + $0x530] sm:$0xff]
    %v2379 = vld [vmem:[#allocation4 + $0x538] sm:$0xff]
    %v2380 = vld [vmem:[#allocation4 + $0x540] sm:$0xff]
    %v2381 = vld [vmem:[#allocation4 + $0x548] sm:$0xff]
    %v2382 = vld [vmem:[#allocation4 + $0x550] sm:$0xff]
    %v2383 = vld [vmem:[#allocation4 + $0x558] sm:$0xff]
    %v2384 = vld [vmem:[#allocation4 + $0x560] sm:$0xff]
    %v2385 = vld [vmem:[#allocation4 + $0x568] sm:$0xff]
    %v2386 = vld [vmem:[#allocation4 + $0x570] sm:$0xff]
    %v2387 = vld [vmem:[#allocation4 + $0x578] sm:$0xff]
    %v2388 = vld [vmem:[#allocation4 + $0x580] sm:$0xff]
    %v2389 = vld [vmem:[#allocation4 + $0x588] sm:$0xff]
    %v2390 = vld [vmem:[#allocation4 + $0x590] sm:$0xff]
    %v2391 = vld [vmem:[#allocation4 + $0x598] sm:$0xff]
    %v2392 = vld [vmem:[#allocation4 + $0x5a0] sm:$0xff]
    %v2393 = vld [vmem:[#allocation4 + $0x5a8] sm:$0xff]
    %v2394 = vld [vmem:[#allocation4 + $0x5b0] sm:$0xff]
    %v2395 = vld [vmem:[#allocation4 + $0x5b8] sm:$0xff]
    %v2396 = vld [vmem:[#allocation4 + $0x5c0] sm:$0xff]
    %v2397 = vld [vmem:[#allocation4 + $0x5c8] sm:$0xff]
    %v2398 = vld [vmem:[#allocation4 + $0x5d0] sm:$0xff]
    %v2399 = vld [vmem:[#allocation4 + $0x5d8] sm:$0xff]
    %v2400 = vld [vmem:[#allocation4 + $0x5e0] sm:$0xff]
    %v2401 = vld [vmem:[#allocation4 + $0x5e8] sm:$0xff]
    %v2402 = vld [vmem:[#allocation4 + $0x5f0] sm:$0xff]
    %v2403 = vld [vmem:[#allocation4 + $0x5f8] sm:$0xff]
    %v2404 = vld [vmem:[#allocation4 + $0x600] sm:$0xff]
    %v2405 = vld [vmem:[#allocation4 + $0x608] sm:$0xff]
    %v2406 = vld [vmem:[#allocation4 + $0x610] sm:$0xff]
    %v2407 = vld [vmem:[#allocation4 + $0x618] sm:$0xff]
    %v2408 = vld [vmem:[#allocation4 + $0x620] sm:$0xff]
    %v2409 = vld [vmem:[#allocation4 + $0x628] sm:$0xff]
    %v2410 = vld [vmem:[#allocation4 + $0x630] sm:$0xff]
    %v2411 = vld [vmem:[#allocation4 + $0x638] sm:$0xff]
    %v2412 = vld [vmem:[#allocation4 + $0x640] sm:$0xff]
    %v2413 = vld [vmem:[#allocation4 + $0x648] sm:$0xff]
    %v2414 = vld [vmem:[#allocation4 + $0x650] sm:$0xff]
    %v2415 = vld [vmem:[#allocation4 + $0x658] sm:$0xff]
    %v2416 = vld [vmem:[#allocation4 + $0x660] sm:$0xff]
    %v2417 = vld [vmem:[#allocation4 + $0x668] sm:$0xff]
    %v2418 = vld [vmem:[#allocation4 + $0x670] sm:$0xff]
    %v2419 = vld [vmem:[#allocation4 + $0x678] sm:$0xff]
    %v2420 = vld [vmem:[#allocation4 + $0x680] sm:$0xff]
    %v2421 = vld [vmem:[#allocation4 + $0x688] sm:$0xff]
    %v2422 = vld [vmem:[#allocation4 + $0x690] sm:$0xff]
    %v2423 = vld [vmem:[#allocation4 + $0x698] sm:$0xff]
    %v2424 = vld [vmem:[#allocation4 + $0x6a0] sm:$0xff]
    %v2425 = vld [vmem:[#allocation4 + $0x6a8] sm:$0xff]
    %v2426 = vld [vmem:[#allocation4 + $0x6b0] sm:$0xff]
    %v2427 = vld [vmem:[#allocation4 + $0x6b8] sm:$0xff]
    %v2428 = vld [vmem:[#allocation4 + $0x6c0] sm:$0xff]
    %v2429 = vld [vmem:[#allocation4 + $0x6c8] sm:$0xff]
    %v2430 = vld [vmem:[#allocation4 + $0x6d0] sm:$0xff]
    %v2431 = vld [vmem:[#allocation4 + $0x6d8] sm:$0xff]
    %v2432 = vld [vmem:[#allocation4 + $0x6e0] sm:$0xff]
    %v2433 = vld [vmem:[#allocation4 + $0x6e8] sm:$0xff]
    %v2434 = vld [vmem:[#allocation4 + $0x6f0] sm:$0xff]
    %v2435 = vld [vmem:[#allocation4 + $0x6f8] sm:$0xff]
    %v2436 = vld [vmem:[#allocation4 + $0x700] sm:$0xff]
    %v2437 = vld [vmem:[#allocation4 + $0x708] sm:$0xff]
    %v2438 = vld [vmem:[#allocation4 + $0x710] sm:$0xff]
    %v2439 = vld [vmem:[#allocation4 + $0x718] sm:$0xff]
    %v2440 = vld [vmem:[#allocation4 + $0x720] sm:$0xff]
    %v2441 = vld [vmem:[#allocation4 + $0x728] sm:$0xff]
    %v2442 = vld [vmem:[#allocation4 + $0x730] sm:$0xff]
    %v2443 = vld [vmem:[#allocation4 + $0x738] sm:$0xff]
    %v2444 = vld [vmem:[#allocation4 + $0x740] sm:$0xff]
    %v2445 = vld [vmem:[#allocation4 + $0x748] sm:$0xff]
    %v2446 = vld [vmem:[#allocation4 + $0x750] sm:$0xff]
    %v2447 = vld [vmem:[#allocation4 + $0x758] sm:$0xff]
    %v2448 = vld [vmem:[#allocation4 + $0x760] sm:$0xff]
    %v2449 = vld [vmem:[#allocation4 + $0x768] sm:$0xff]
    %v2450 = vld [vmem:[#allocation4 + $0x770] sm:$0xff]
    %v2451 = vld [vmem:[#allocation4 + $0x778] sm:$0xff]
    %v2452 = vld [vmem:[#allocation4 + $0x780] sm:$0xff]
    %v2453 = vld [vmem:[#allocation4 + $0x788] sm:$0xff]
    %v2454 = vld [vmem:[#allocation4 + $0x790] sm:$0xff]
    %v2455 = vld [vmem:[#allocation4 + $0x798] sm:$0xff]
    %v2456 = vld [vmem:[#allocation4 + $0x7a0] sm:$0xff]
    %v2457 = vld [vmem:[#allocation4 + $0x7a8] sm:$0xff]
    %v2458 = vld [vmem:[#allocation4 + $0x7b0] sm:$0xff]
    %v2459 = vld [vmem:[#allocation4 + $0x7b8] sm:$0xff]
    %v2460 = vld [vmem:[#allocation4 + $0x7c0] sm:$0xff]
    %v2461 = vld [vmem:[#allocation4 + $0x7c8] sm:$0xff]
    %v2462 = vld [vmem:[#allocation4 + $0x7d0] sm:$0xff]
    %v2463 = vld [vmem:[#allocation4 + $0x7d8] sm:$0xff]
    %v2464 = vld [vmem:[#allocation4 + $0x7e0] sm:$0xff]
    %v2465 = vld [vmem:[#allocation4 + $0x7e8] sm:$0xff]
    %v2466 = vld [vmem:[#allocation4 + $0x7f0] sm:$0xff]
    %v2467 = vld [vmem:[#allocation4 + $0x7f8] sm:$0xff]
    %2468 = vmatpush.msra.mxu0 %v2332
    %2469 = vmatpush.msra.mxu0 %v2324
    %2470 = vmatpush.msra.mxu0 %v2316
    %2471 = vmatpush.msra.mxu0 %v2308
    %2472 = vmatpush.msra.mxu0 %v2300
    %2473 = vmatpush.msra.mxu0 %v2292
    %2474 = vmatpush.msra.mxu0 %v2284
    %2475 = vmatpush.msra.mxu0 %v2276
    %2476 = vmatpush.msra.mxu0 %v2268
    %2477 = vmatpush.msra.mxu0 %v2260
    %2478 = vmatpush.msra.mxu0 %v2252
    %2479 = vmatpush.msra.mxu0 %v2244
    %2480 = vmatpush.msra.mxu0 %v2236
    %2481 = vmatpush.msra.mxu0 %v2228
    %2482 = vmatpush.msra.mxu0 %v2220
    %2483 = vmatpush.msra.mxu0 %v2212
    %2484 = vmatmul.f32.gmra.mxu0 %v2210
    %v2485 = vpop.f32.mrf.mxu0
    %v2486 = vadd.f32 0.0, %v2485
    %2487 = vdwg.mxu0
    %2488 = vmatpush.msra.mxu0 %v2460
    %2489 = vmatpush.msra.mxu0 %v2452
    %2490 = vmatpush.msra.mxu0 %v2444
    %2491 = vmatpush.msra.mxu0 %v2436
    %2492 = vmatpush.msra.mxu0 %v2428
    %2493 = vmatpush.msra.mxu0 %v2420
    %2494 = vmatpush.msra.mxu0 %v2412
    %2495 = vmatpush.msra.mxu0 %v2404
    %2496 = vmatpush.msra.mxu0 %v2396
    %2497 = vmatpush.msra.mxu0 %v2388
    %2498 = vmatpush.msra.mxu0 %v2380
    %2499 = vmatpush.msra.mxu0 %v2372
    %2500 = vmatpush.msra.mxu0 %v2364
    %2501 = vmatpush.msra.mxu0 %v2356
    %2502 = vmatpush.msra.mxu0 %v2348
    %2503 = vmatpush.msra.mxu0 %v2340
    %2504 = vmatmul.f32.gmra.mxu0 %v2211
    %v2505 = vpop.f32.mrf.mxu0
    %v2506 = vadd.f32 %v2486, %v2505
    %2507 = vdwg.mxu0
    %2508 = vmatpush.msra.mxu0 %v2333
    %2509 = vmatpush.msra.mxu0 %v2325
    %2510 = vmatpush.msra.mxu0 %v2317
    %2511 = vmatpush.msra.mxu0 %v2309
    %2512 = vmatpush.msra.mxu0 %v2301
    %2513 = vmatpush.msra.mxu0 %v2293
    %2514 = vmatpush.msra.mxu0 %v2285
    %2515 = vmatpush.msra.mxu0 %v2277
    %2516 = vmatpush.msra.mxu0 %v2269
    %2517 = vmatpush.msra.mxu0 %v2261
    %2518 = vmatpush.msra.mxu0 %v2253
    %2519 = vmatpush.msra.mxu0 %v2245
    %2520 = vmatpush.msra.mxu0 %v2237
    %2521 = vmatpush.msra.mxu0 %v2229
    %2522 = vmatpush.msra.mxu0 %v2221
    %2523 = vmatpush.msra.mxu0 %v2213
    %2524 = vmatmul.f32.gmra.mxu0 %v2210
    %v2525 = vpop.f32.mrf.mxu0
    %v2526 = vadd.f32 0.0, %v2525
    %2527 = vdwg.mxu0
    %2528 = vmatpush.msra.mxu0 %v2461
    %2529 = vmatpush.msra.mxu0 %v2453
    %2530 = vmatpush.msra.mxu0 %v2445
    %2531 = vmatpush.msra.mxu0 %v2437
    %2532 = vmatpush.msra.mxu0 %v2429
    %2533 = vmatpush.msra.mxu0 %v2421
    %2534 = vmatpush.msra.mxu0 %v2413
    %2535 = vmatpush.msra.mxu0 %v2405
    %2536 = vmatpush.msra.mxu0 %v2397
    %2537 = vmatpush.msra.mxu0 %v2389
    %2538 = vmatpush.msra.mxu0 %v2381
    %2539 = vmatpush.msra.mxu0 %v2373
    %2540 = vmatpush.msra.mxu0 %v2365
    %2541 = vmatpush.msra.mxu0 %v2357
    %2542 = vmatpush.msra.mxu0 %v2349
    %2543 = vmatpush.msra.mxu0 %v2341
    %2544 = vmatmul.f32.gmra.mxu0 %v2211
    %v2545 = vpop.f32.mrf.mxu0
    %v2546 = vadd.f32 %v2526, %v2545
    %2547 = vdwg.mxu0
    %2548 = vmatpush.msra.mxu0 %v2334
    %2549 = vmatpush.msra.mxu0 %v2326
    %2550 = vmatpush.msra.mxu0 %v2318
    %2551 = vmatpush.msra.mxu0 %v2310
    %2552 = vmatpush.msra.mxu0 %v2302
    %2553 = vmatpush.msra.mxu0 %v2294
    %2554 = vmatpush.msra.mxu0 %v2286
    %2555 = vmatpush.msra.mxu0 %v2278
    %2556 = vmatpush.msra.mxu0 %v2270
    %2557 = vmatpush.msra.mxu0 %v2262
    %2558 = vmatpush.msra.mxu0 %v2254
    %2559 = vmatpush.msra.mxu0 %v2246
    %2560 = vmatpush.msra.mxu0 %v2238
    %2561 = vmatpush.msra.mxu0 %v2230
    %2562 = vmatpush.msra.mxu0 %v2222
    %2563 = vmatpush.msra.mxu0 %v2214
    %2564 = vmatmul.f32.gmra.mxu0 %v2210
    %v2565 = vpop.f32.mrf.mxu0
    %v2566 = vadd.f32 0.0, %v2565
    %2567 = vdwg.mxu0
    %2568 = vmatpush.msra.mxu0 %v2462
    %2569 = vmatpush.msra.mxu0 %v2454
    %2570 = vmatpush.msra.mxu0 %v2446
    %2571 = vmatpush.msra.mxu0 %v2438
    %2572 = vmatpush.msra.mxu0 %v2430
    %2573 = vmatpush.msra.mxu0 %v2422
    %2574 = vmatpush.msra.mxu0 %v2414
    %2575 = vmatpush.msra.mxu0 %v2406
    %2576 = vmatpush.msra.mxu0 %v2398
    %2577 = vmatpush.msra.mxu0 %v2390
    %2578 = vmatpush.msra.mxu0 %v2382
    %2579 = vmatpush.msra.mxu0 %v2374
    %2580 = vmatpush.msra.mxu0 %v2366
    %2581 = vmatpush.msra.mxu0 %v2358
    %2582 = vmatpush.msra.mxu0 %v2350
    %2583 = vmatpush.msra.mxu0 %v2342
    %2584 = vmatmul.f32.gmra.mxu0 %v2211
    %v2585 = vpop.f32.mrf.mxu0
    %v2586 = vadd.f32 %v2566, %v2585
    %2587 = vdwg.mxu0
    %2588 = vmatpush.msra.mxu0 %v2335
    %2589 = vmatpush.msra.mxu0 %v2327
    %2590 = vmatpush.msra.mxu0 %v2319
    %2591 = vmatpush.msra.mxu0 %v2311
    %2592 = vmatpush.msra.mxu0 %v2303
    %2593 = vmatpush.msra.mxu0 %v2295
    %2594 = vmatpush.msra.mxu0 %v2287
    %2595 = vmatpush.msra.mxu0 %v2279
    %2596 = vmatpush.msra.mxu0 %v2271
    %2597 = vmatpush.msra.mxu0 %v2263
    %2598 = vmatpush.msra.mxu0 %v2255
    %2599 = vmatpush.msra.mxu0 %v2247
    %2600 = vmatpush.msra.mxu0 %v2239
    %2601 = vmatpush.msra.mxu0 %v2231
    %2602 = vmatpush.msra.mxu0 %v2223
    %2603 = vmatpush.msra.mxu0 %v2215
    %2604 = vmatmul.f32.gmra.mxu0 %v2210
    %v2605 = vpop.f32.mrf.mxu0
    %v2606 = vadd.f32 0.0, %v2605
    %2607 = vdwg.mxu0
    %2608 = vmatpush.msra.mxu0 %v2463
    %2609 = vmatpush.msra.mxu0 %v2455
    %2610 = vmatpush.msra.mxu0 %v2447
    %2611 = vmatpush.msra.mxu0 %v2439
    %2612 = vmatpush.msra.mxu0 %v2431
    %2613 = vmatpush.msra.mxu0 %v2423
    %2614 = vmatpush.msra.mxu0 %v2415
    %2615 = vmatpush.msra.mxu0 %v2407
    %2616 = vmatpush.msra.mxu0 %v2399
    %2617 = vmatpush.msra.mxu0 %v2391
    %2618 = vmatpush.msra.mxu0 %v2383
    %2619 = vmatpush.msra.mxu0 %v2375
    %2620 = vmatpush.msra.mxu0 %v2367
    %2621 = vmatpush.msra.mxu0 %v2359
    %2622 = vmatpush.msra.mxu0 %v2351
    %2623 = vmatpush.msra.mxu0 %v2343
    %2624 = vmatmul.f32.gmra.mxu0 %v2211
    %v2625 = vpop.f32.mrf.mxu0
    %v2626 = vadd.f32 %v2606, %v2625
    %2627 = vdwg.mxu0
    %2628 = vmatpush.msra.mxu0 %v2336
    %2629 = vmatpush.msra.mxu0 %v2328
    %2630 = vmatpush.msra.mxu0 %v2320
    %2631 = vmatpush.msra.mxu0 %v2312
    %2632 = vmatpush.msra.mxu0 %v2304
    %2633 = vmatpush.msra.mxu0 %v2296
    %2634 = vmatpush.msra.mxu0 %v2288
    %2635 = vmatpush.msra.mxu0 %v2280
    %2636 = vmatpush.msra.mxu0 %v2272
    %2637 = vmatpush.msra.mxu0 %v2264
    %2638 = vmatpush.msra.mxu0 %v2256
    %2639 = vmatpush.msra.mxu0 %v2248
    %2640 = vmatpush.msra.mxu0 %v2240
    %2641 = vmatpush.msra.mxu0 %v2232
    %2642 = vmatpush.msra.mxu0 %v2224
    %2643 = vmatpush.msra.mxu0 %v2216
    %2644 = vmatmul.f32.gmra.mxu0 %v2210
    %v2645 = vpop.f32.mrf.mxu0
    %v2646 = vadd.f32 0.0, %v2645
    %2647 = vdwg.mxu0
    %2648 = vmatpush.msra.mxu0 %v2464
    %2649 = vmatpush.msra.mxu0 %v2456
    %2650 = vmatpush.msra.mxu0 %v2448
    %2651 = vmatpush.msra.mxu0 %v2440
    %2652 = vmatpush.msra.mxu0 %v2432
    %2653 = vmatpush.msra.mxu0 %v2424
    %2654 = vmatpush.msra.mxu0 %v2416
    %2655 = vmatpush.msra.mxu0 %v2408
    %2656 = vmatpush.msra.mxu0 %v2400
    %2657 = vmatpush.msra.mxu0 %v2392
    %2658 = vmatpush.msra.mxu0 %v2384
    %2659 = vmatpush.msra.mxu0 %v2376
    %2660 = vmatpush.msra.mxu0 %v2368
    %2661 = vmatpush.msra.mxu0 %v2360
    %2662 = vmatpush.msra.mxu0 %v2352
    %2663 = vmatpush.msra.mxu0 %v2344
    %2664 = vmatmul.f32.gmra.mxu0 %v2211
    %v2665 = vpop.f32.mrf.mxu0
    %v2666 = vadd.f32 %v2646, %v2665
    %2667 = vdwg.mxu0
    %2668 = vmatpush.msra.mxu0 %v2337
    %2669 = vmatpush.msra.mxu0 %v2329
    %2670 = vmatpush.msra.mxu0 %v2321
    %2671 = vmatpush.msra.mxu0 %v2313
    %2672 = vmatpush.msra.mxu0 %v2305
    %2673 = vmatpush.msra.mxu0 %v2297
    %2674 = vmatpush.msra.mxu0 %v2289
    %2675 = vmatpush.msra.mxu0 %v2281
    %2676 = vmatpush.msra.mxu0 %v2273
    %2677 = vmatpush.msra.mxu0 %v2265
    %2678 = vmatpush.msra.mxu0 %v2257
    %2679 = vmatpush.msra.mxu0 %v2249
    %2680 = vmatpush.msra.mxu0 %v2241
    %2681 = vmatpush.msra.mxu0 %v2233
    %2682 = vmatpush.msra.mxu0 %v2225
    %2683 = vmatpush.msra.mxu0 %v2217
    %2684 = vmatmul.f32.gmra.mxu0 %v2210
    %v2685 = vpop.f32.mrf.mxu0
    %v2686 = vadd.f32 0.0, %v2685
    %2687 = vdwg.mxu0
    %2688 = vmatpush.msra.mxu0 %v2465
    %2689 = vmatpush.msra.mxu0 %v2457
    %2690 = vmatpush.msra.mxu0 %v2449
    %2691 = vmatpush.msra.mxu0 %v2441
    %2692 = vmatpush.msra.mxu0 %v2433
    %2693 = vmatpush.msra.mxu0 %v2425
    %2694 = vmatpush.msra.mxu0 %v2417
    %2695 = vmatpush.msra.mxu0 %v2409
    %2696 = vmatpush.msra.mxu0 %v2401
    %2697 = vmatpush.msra.mxu0 %v2393
    %2698 = vmatpush.msra.mxu0 %v2385
    %2699 = vmatpush.msra.mxu0 %v2377
    %2700 = vmatpush.msra.mxu0 %v2369
    %2701 = vmatpush.msra.mxu0 %v2361
    %2702 = vmatpush.msra.mxu0 %v2353
    %2703 = vmatpush.msra.mxu0 %v2345
    %2704 = vmatmul.f32.gmra.mxu0 %v2211
    %v2705 = vpop.f32.mrf.mxu0
    %v2706 = vadd.f32 %v2686, %v2705
    %2707 = vdwg.mxu0
    %2708 = vmatpush.msra.mxu0 %v2338
    %2709 = vmatpush.msra.mxu0 %v2330
    %2710 = vmatpush.msra.mxu0 %v2322
    %2711 = vmatpush.msra.mxu0 %v2314
    %2712 = vmatpush.msra.mxu0 %v2306
    %2713 = vmatpush.msra.mxu0 %v2298
    %2714 = vmatpush.msra.mxu0 %v2290
    %2715 = vmatpush.msra.mxu0 %v2282
    %2716 = vmatpush.msra.mxu0 %v2274
    %2717 = vmatpush.msra.mxu0 %v2266
    %2718 = vmatpush.msra.mxu0 %v2258
    %2719 = vmatpush.msra.mxu0 %v2250
    %2720 = vmatpush.msra.mxu0 %v2242
    %2721 = vmatpush.msra.mxu0 %v2234
    %2722 = vmatpush.msra.mxu0 %v2226
    %2723 = vmatpush.msra.mxu0 %v2218
    %2724 = vmatmul.f32.gmra.mxu0 %v2210
    %v2725 = vpop.f32.mrf.mxu0
    %v2726 = vadd.f32 0.0, %v2725
    %2727 = vdwg.mxu0
    %2728 = vmatpush.msra.mxu0 %v2466
    %2729 = vmatpush.msra.mxu0 %v2458
    %2730 = vmatpush.msra.mxu0 %v2450
    %2731 = vmatpush.msra.mxu0 %v2442
    %2732 = vmatpush.msra.mxu0 %v2434
    %2733 = vmatpush.msra.mxu0 %v2426
    %2734 = vmatpush.msra.mxu0 %v2418
    %2735 = vmatpush.msra.mxu0 %v2410
    %2736 = vmatpush.msra.mxu0 %v2402
    %2737 = vmatpush.msra.mxu0 %v2394
    %2738 = vmatpush.msra.mxu0 %v2386
    %2739 = vmatpush.msra.mxu0 %v2378
    %2740 = vmatpush.msra.mxu0 %v2370
    %2741 = vmatpush.msra.mxu0 %v2362
    %2742 = vmatpush.msra.mxu0 %v2354
    %2743 = vmatpush.msra.mxu0 %v2346
    %2744 = vmatmul.f32.gmra.mxu0 %v2211
    %v2745 = vpop.f32.mrf.mxu0
    %v2746 = vadd.f32 %v2726, %v2745
    %2747 = vdwg.mxu0
    %2748 = vmatpush.msra.mxu0 %v2339
    %2749 = vmatpush.msra.mxu0 %v2331
    %2750 = vmatpush.msra.mxu0 %v2323
    %2751 = vmatpush.msra.mxu0 %v2315
    %2752 = vmatpush.msra.mxu0 %v2307
    %2753 = vmatpush.msra.mxu0 %v2299
    %2754 = vmatpush.msra.mxu0 %v2291
    %2755 = vmatpush.msra.mxu0 %v2283
    %2756 = vmatpush.msra.mxu0 %v2275
    %2757 = vmatpush.msra.mxu0 %v2267
    %2758 = vmatpush.msra.mxu0 %v2259
    %2759 = vmatpush.msra.mxu0 %v2251
    %2760 = vmatpush.msra.mxu0 %v2243
    %2761 = vmatpush.msra.mxu0 %v2235
    %2762 = vmatpush.msra.mxu0 %v2227
    %2763 = vmatpush.msra.mxu0 %v2219
    %2764 = vmatmul.f32.gmra.mxu0 %v2210
    %v2765 = vpop.f32.mrf.mxu0
    %v2766 = vadd.f32 0.0, %v2765
    %2767 = vdwg.mxu0
    %2768 = vmatpush.msra.mxu0 %v2467
    %2769 = vmatpush.msra.mxu0 %v2459
    %2770 = vmatpush.msra.mxu0 %v2451
    %2771 = vmatpush.msra.mxu0 %v2443
    %2772 = vmatpush.msra.mxu0 %v2435
    %2773 = vmatpush.msra.mxu0 %v2427
    %2774 = vmatpush.msra.mxu0 %v2419
    %2775 = vmatpush.msra.mxu0 %v2411
    %2776 = vmatpush.msra.mxu0 %v2403
    %2777 = vmatpush.msra.mxu0 %v2395
    %2778 = vmatpush.msra.mxu0 %v2387
    %2779 = vmatpush.msra.mxu0 %v2379
    %2780 = vmatpush.msra.mxu0 %v2371
    %2781 = vmatpush.msra.mxu0 %v2363
    %2782 = vmatpush.msra.mxu0 %v2355
    %2783 = vmatpush.msra.mxu0 %v2347
    %2784 = vmatmul.f32.gmra.mxu0 %v2211
    %v2785 = vpop.f32.mrf.mxu0
    %v2786 = vadd.f32 %v2766, %v2785
    %2787 = vdwg.mxu0
    %v2788 = vadd.f32 %v2666, %v285
    %v2789 = vadd.f32 %v2706, %v286
    %v2790 = vadd.f32 %v2746, %v287
    %v2791 = vadd.f32 %v2786, %v288
    %v2792 = vmul.f32 %v2788, 0.5
    %v2793 = vtanh.pop %v2792
    %v2794 = vmul.f32 %v2793, 0.5
    %v2795 = vadd.f32 %v2794, 0.5
    %v2796 = vmul.f32 %v2789, 0.5
    %v2797 = vtanh.pop %v2796
    %v2798 = vmul.f32 %v2797, 0.5
    %v2799 = vadd.f32 %v2798, 0.5
    %v2800 = vtanh.pop %v2790
    %v2801 = vmul.f32 %v2791, 0.5
    %v2802 = vtanh.pop %v2801
    %v2803 = vmul.f32 %v2802, 0.5
    %v2804 = vadd.f32 %v2803, 0.5
    %v2805 = vmul.f32 %v2799, %v2176
    %v2806 = vmul.f32 %v2795, %v2800
    %v2807 = vadd.f32 %v2805, %v2806
    %v2808 = vtanh.pop %v2807
    %v2809 = vmul.f32 %v2804, %v2808
    %s2810 = smul.u32 4, 4
    %s2811 = smul.addr %s2810, 8
    %s2812 = scalar_lea.vmem [#allocation2], %s2811
    %v2813 = vld [vmem:[%s2812] sm:$0xff]
    %v2814 = vld [vmem:[%s2812 + $0x8] sm:$0xff]
    %v2815 = vld [vmem:[%s2812 + $0x10] sm:$0xff]
    %v2816 = vld [vmem:[%s2812 + $0x18] sm:$0xff]
    %v2817 = vadd.f32 %v2813, %v2506
    %v2818 = vadd.f32 %v2814, %v2546
    %v2819 = vadd.f32 %v2815, %v2586
    %v2820 = vadd.f32 %v2816, %v2626
    %v2821 = vmul.f32 %v2817, 0.5
    %v2822 = vtanh.pop %v2821
    %v2823 = vmul.f32 %v2822, 0.5
    %v2824 = vadd.f32 %v2823, 0.5
    %v2825 = vmul.f32 %v2818, 0.5
    %v2826 = vtanh.pop %v2825
    %v2827 = vmul.f32 %v2826, 0.5
    %v2828 = vadd.f32 %v2827, 0.5
    %v2829 = vtanh.pop %v2819
    %v2830 = vmul.f32 %v2820, 0.5
    %v2831 = vtanh.pop %v2830
    %v2832 = vmul.f32 %v2831, 0.5
    %v2833 = vadd.f32 %v2832, 0.5
    %v2834 = vmul.f32 %v2828, %v2205
    %v2835 = vmul.f32 %v2824, %v2829
    %v2836 = vadd.f32 %v2834, %v2835
    %v2837 = vtanh.pop %v2836
    %v2838 = vmul.f32 %v2833, %v2837
    %2839 = vst [vmem:[#allocation3] sm:$0xff] %v2838
    %2840 = vst [vmem:[#allocation3 + $0x8] sm:$0xff] %v2809
    %v2841 = vld [vmem:[#allocation3] sm:$0xff]
    %v2842 = vld [vmem:[#allocation3 + $0x8] sm:$0xff]
    %v2843 = vld [vmem:[#allocation4] sm:$0xff]
    %v2844 = vld [vmem:[#allocation4 + $0x8] sm:$0xff]
    %v2845 = vld [vmem:[#allocation4 + $0x10] sm:$0xff]
    %v2846 = vld [vmem:[#allocation4 + $0x18] sm:$0xff]
    %v2847 = vld [vmem:[#allocation4 + $0x20] sm:$0xff]
    %v2848 = vld [vmem:[#allocation4 + $0x28] sm:$0xff]
    %v2849 = vld [vmem:[#allocation4 + $0x30] sm:$0xff]
    %v2850 = vld [vmem:[#allocation4 + $0x38] sm:$0xff]
    %v2851 = vld [vmem:[#allocation4 + $0x40] sm:$0xff]
    %v2852 = vld [vmem:[#allocation4 + $0x48] sm:$0xff]
    %v2853 = vld [vmem:[#allocation4 + $0x50] sm:$0xff]
    %v2854 = vld [vmem:[#allocation4 + $0x58] sm:$0xff]
    %v2855 = vld [vmem:[#allocation4 + $0x60] sm:$0xff]
    %v2856 = vld [vmem:[#allocation4 + $0x68] sm:$0xff]
    %v2857 = vld [vmem:[#allocation4 + $0x70] sm:$0xff]
    %v2858 = vld [vmem:[#allocation4 + $0x78] sm:$0xff]
    %v2859 = vld [vmem:[#allocation4 + $0x80] sm:$0xff]
    %v2860 = vld [vmem:[#allocation4 + $0x88] sm:$0xff]
    %v2861 = vld [vmem:[#allocation4 + $0x90] sm:$0xff]
    %v2862 = vld [vmem:[#allocation4 + $0x98] sm:$0xff]
    %v2863 = vld [vmem:[#allocation4 + $0xa0] sm:$0xff]
    %v2864 = vld [vmem:[#allocation4 + $0xa8] sm:$0xff]
    %v2865 = vld [vmem:[#allocation4 + $0xb0] sm:$0xff]
    %v2866 = vld [vmem:[#allocation4 + $0xb8] sm:$0xff]
    %v2867 = vld [vmem:[#allocation4 + $0xc0] sm:$0xff]
    %v2868 = vld [vmem:[#allocation4 + $0xc8] sm:$0xff]
    %v2869 = vld [vmem:[#allocation4 + $0xd0] sm:$0xff]
    %v2870 = vld [vmem:[#allocation4 + $0xd8] sm:$0xff]
    %v2871 = vld [vmem:[#allocation4 + $0xe0] sm:$0xff]
    %v2872 = vld [vmem:[#allocation4 + $0xe8] sm:$0xff]
    %v2873 = vld [vmem:[#allocation4 + $0xf0] sm:$0xff]
    %v2874 = vld [vmem:[#allocation4 + $0xf8] sm:$0xff]
    %v2875 = vld [vmem:[#allocation4 + $0x100] sm:$0xff]
    %v2876 = vld [vmem:[#allocation4 + $0x108] sm:$0xff]
    %v2877 = vld [vmem:[#allocation4 + $0x110] sm:$0xff]
    %v2878 = vld [vmem:[#allocation4 + $0x118] sm:$0xff]
    %v2879 = vld [vmem:[#allocation4 + $0x120] sm:$0xff]
    %v2880 = vld [vmem:[#allocation4 + $0x128] sm:$0xff]
    %v2881 = vld [vmem:[#allocation4 + $0x130] sm:$0xff]
    %v2882 = vld [vmem:[#allocation4 + $0x138] sm:$0xff]
    %v2883 = vld [vmem:[#allocation4 + $0x140] sm:$0xff]
    %v2884 = vld [vmem:[#allocation4 + $0x148] sm:$0xff]
    %v2885 = vld [vmem:[#allocation4 + $0x150] sm:$0xff]
    %v2886 = vld [vmem:[#allocation4 + $0x158] sm:$0xff]
    %v2887 = vld [vmem:[#allocation4 + $0x160] sm:$0xff]
    %v2888 = vld [vmem:[#allocation4 + $0x168] sm:$0xff]
    %v2889 = vld [vmem:[#allocation4 + $0x170] sm:$0xff]
    %v2890 = vld [vmem:[#allocation4 + $0x178] sm:$0xff]
    %v2891 = vld [vmem:[#allocation4 + $0x180] sm:$0xff]
    %v2892 = vld [vmem:[#allocation4 + $0x188] sm:$0xff]
    %v2893 = vld [vmem:[#allocation4 + $0x190] sm:$0xff]
    %v2894 = vld [vmem:[#allocation4 + $0x198] sm:$0xff]
    %v2895 = vld [vmem:[#allocation4 + $0x1a0] sm:$0xff]
    %v2896 = vld [vmem:[#allocation4 + $0x1a8] sm:$0xff]
    %v2897 = vld [vmem:[#allocation4 + $0x1b0] sm:$0xff]
    %v2898 = vld [vmem:[#allocation4 + $0x1b8] sm:$0xff]
    %v2899 = vld [vmem:[#allocation4 + $0x1c0] sm:$0xff]
    %v2900 = vld [vmem:[#allocation4 + $0x1c8] sm:$0xff]
    %v2901 = vld [vmem:[#allocation4 + $0x1d0] sm:$0xff]
    %v2902 = vld [vmem:[#allocation4 + $0x1d8] sm:$0xff]
    %v2903 = vld [vmem:[#allocation4 + $0x1e0] sm:$0xff]
    %v2904 = vld [vmem:[#allocation4 + $0x1e8] sm:$0xff]
    %v2905 = vld [vmem:[#allocation4 + $0x1f0] sm:$0xff]
    %v2906 = vld [vmem:[#allocation4 + $0x1f8] sm:$0xff]
    %v2907 = vld [vmem:[#allocation4 + $0x200] sm:$0xff]
    %v2908 = vld [vmem:[#allocation4 + $0x208] sm:$0xff]
    %v2909 = vld [vmem:[#allocation4 + $0x210] sm:$0xff]
    %v2910 = vld [vmem:[#allocation4 + $0x218] sm:$0xff]
    %v2911 = vld [vmem:[#allocation4 + $0x220] sm:$0xff]
    %v2912 = vld [vmem:[#allocation4 + $0x228] sm:$0xff]
    %v2913 = vld [vmem:[#allocation4 + $0x230] sm:$0xff]
    %v2914 = vld [vmem:[#allocation4 + $0x238] sm:$0xff]
    %v2915 = vld [vmem:[#allocation4 + $0x240] sm:$0xff]
    %v2916 = vld [vmem:[#allocation4 + $0x248] sm:$0xff]
    %v2917 = vld [vmem:[#allocation4 + $0x250] sm:$0xff]
    %v2918 = vld [vmem:[#allocation4 + $0x258] sm:$0xff]
    %v2919 = vld [vmem:[#allocation4 + $0x260] sm:$0xff]
    %v2920 = vld [vmem:[#allocation4 + $0x268] sm:$0xff]
    %v2921 = vld [vmem:[#allocation4 + $0x270] sm:$0xff]
    %v2922 = vld [vmem:[#allocation4 + $0x278] sm:$0xff]
    %v2923 = vld [vmem:[#allocation4 + $0x280] sm:$0xff]
    %v2924 = vld [vmem:[#allocation4 + $0x288] sm:$0xff]
    %v2925 = vld [vmem:[#allocation4 + $0x290] sm:$0xff]
    %v2926 = vld [vmem:[#allocation4 + $0x298] sm:$0xff]
    %v2927 = vld [vmem:[#allocation4 + $0x2a0] sm:$0xff]
    %v2928 = vld [vmem:[#allocation4 + $0x2a8] sm:$0xff]
    %v2929 = vld [vmem:[#allocation4 + $0x2b0] sm:$0xff]
    %v2930 = vld [vmem:[#allocation4 + $0x2b8] sm:$0xff]
    %v2931 = vld [vmem:[#allocation4 + $0x2c0] sm:$0xff]
    %v2932 = vld [vmem:[#allocation4 + $0x2c8] sm:$0xff]
    %v2933 = vld [vmem:[#allocation4 + $0x2d0] sm:$0xff]
    %v2934 = vld [vmem:[#allocation4 + $0x2d8] sm:$0xff]
    %v2935 = vld [vmem:[#allocation4 + $0x2e0] sm:$0xff]
    %v2936 = vld [vmem:[#allocation4 + $0x2e8] sm:$0xff]
    %v2937 = vld [vmem:[#allocation4 + $0x2f0] sm:$0xff]
    %v2938 = vld [vmem:[#allocation4 + $0x2f8] sm:$0xff]
    %v2939 = vld [vmem:[#allocation4 + $0x300] sm:$0xff]
    %v2940 = vld [vmem:[#allocation4 + $0x308] sm:$0xff]
    %v2941 = vld [vmem:[#allocation4 + $0x310] sm:$0xff]
    %v2942 = vld [vmem:[#allocation4 + $0x318] sm:$0xff]
    %v2943 = vld [vmem:[#allocation4 + $0x320] sm:$0xff]
    %v2944 = vld [vmem:[#allocation4 + $0x328] sm:$0xff]
    %v2945 = vld [vmem:[#allocation4 + $0x330] sm:$0xff]
    %v2946 = vld [vmem:[#allocation4 + $0x338] sm:$0xff]
    %v2947 = vld [vmem:[#allocation4 + $0x340] sm:$0xff]
    %v2948 = vld [vmem:[#allocation4 + $0x348] sm:$0xff]
    %v2949 = vld [vmem:[#allocation4 + $0x350] sm:$0xff]
    %v2950 = vld [vmem:[#allocation4 + $0x358] sm:$0xff]
    %v2951 = vld [vmem:[#allocation4 + $0x360] sm:$0xff]
    %v2952 = vld [vmem:[#allocation4 + $0x368] sm:$0xff]
    %v2953 = vld [vmem:[#allocation4 + $0x370] sm:$0xff]
    %v2954 = vld [vmem:[#allocation4 + $0x378] sm:$0xff]
    %v2955 = vld [vmem:[#allocation4 + $0x380] sm:$0xff]
    %v2956 = vld [vmem:[#allocation4 + $0x388] sm:$0xff]
    %v2957 = vld [vmem:[#allocation4 + $0x390] sm:$0xff]
    %v2958 = vld [vmem:[#allocation4 + $0x398] sm:$0xff]
    %v2959 = vld [vmem:[#allocation4 + $0x3a0] sm:$0xff]
    %v2960 = vld [vmem:[#allocation4 + $0x3a8] sm:$0xff]
    %v2961 = vld [vmem:[#allocation4 + $0x3b0] sm:$0xff]
    %v2962 = vld [vmem:[#allocation4 + $0x3b8] sm:$0xff]
    %v2963 = vld [vmem:[#allocation4 + $0x3c0] sm:$0xff]
    %v2964 = vld [vmem:[#allocation4 + $0x3c8] sm:$0xff]
    %v2965 = vld [vmem:[#allocation4 + $0x3d0] sm:$0xff]
    %v2966 = vld [vmem:[#allocation4 + $0x3d8] sm:$0xff]
    %v2967 = vld [vmem:[#allocation4 + $0x3e0] sm:$0xff]
    %v2968 = vld [vmem:[#allocation4 + $0x3e8] sm:$0xff]
    %v2969 = vld [vmem:[#allocation4 + $0x3f0] sm:$0xff]
    %v2970 = vld [vmem:[#allocation4 + $0x3f8] sm:$0xff]
    %v2971 = vld [vmem:[#allocation4 + $0x400] sm:$0xff]
    %v2972 = vld [vmem:[#allocation4 + $0x408] sm:$0xff]
    %v2973 = vld [vmem:[#allocation4 + $0x410] sm:$0xff]
    %v2974 = vld [vmem:[#allocation4 + $0x418] sm:$0xff]
    %v2975 = vld [vmem:[#allocation4 + $0x420] sm:$0xff]
    %v2976 = vld [vmem:[#allocation4 + $0x428] sm:$0xff]
    %v2977 = vld [vmem:[#allocation4 + $0x430] sm:$0xff]
    %v2978 = vld [vmem:[#allocation4 + $0x438] sm:$0xff]
    %v2979 = vld [vmem:[#allocation4 + $0x440] sm:$0xff]
    %v2980 = vld [vmem:[#allocation4 + $0x448] sm:$0xff]
    %v2981 = vld [vmem:[#allocation4 + $0x450] sm:$0xff]
    %v2982 = vld [vmem:[#allocation4 + $0x458] sm:$0xff]
    %v2983 = vld [vmem:[#allocation4 + $0x460] sm:$0xff]
    %v2984 = vld [vmem:[#allocation4 + $0x468] sm:$0xff]
    %v2985 = vld [vmem:[#allocation4 + $0x470] sm:$0xff]
    %v2986 = vld [vmem:[#allocation4 + $0x478] sm:$0xff]
    %v2987 = vld [vmem:[#allocation4 + $0x480] sm:$0xff]
    %v2988 = vld [vmem:[#allocation4 + $0x488] sm:$0xff]
    %v2989 = vld [vmem:[#allocation4 + $0x490] sm:$0xff]
    %v2990 = vld [vmem:[#allocation4 + $0x498] sm:$0xff]
    %v2991 = vld [vmem:[#allocation4 + $0x4a0] sm:$0xff]
    %v2992 = vld [vmem:[#allocation4 + $0x4a8] sm:$0xff]
    %v2993 = vld [vmem:[#allocation4 + $0x4b0] sm:$0xff]
    %v2994 = vld [vmem:[#allocation4 + $0x4b8] sm:$0xff]
    %v2995 = vld [vmem:[#allocation4 + $0x4c0] sm:$0xff]
    %v2996 = vld [vmem:[#allocation4 + $0x4c8] sm:$0xff]
    %v2997 = vld [vmem:[#allocation4 + $0x4d0] sm:$0xff]
    %v2998 = vld [vmem:[#allocation4 + $0x4d8] sm:$0xff]
    %v2999 = vld [vmem:[#allocation4 + $0x4e0] sm:$0xff]
    %v3000 = vld [vmem:[#allocation4 + $0x4e8] sm:$0xff]
    %v3001 = vld [vmem:[#allocation4 + $0x4f0] sm:$0xff]
    %v3002 = vld [vmem:[#allocation4 + $0x4f8] sm:$0xff]
    %v3003 = vld [vmem:[#allocation4 + $0x500] sm:$0xff]
    %v3004 = vld [vmem:[#allocation4 + $0x508] sm:$0xff]
    %v3005 = vld [vmem:[#allocation4 + $0x510] sm:$0xff]
    %v3006 = vld [vmem:[#allocation4 + $0x518] sm:$0xff]
    %v3007 = vld [vmem:[#allocation4 + $0x520] sm:$0xff]
    %v3008 = vld [vmem:[#allocation4 + $0x528] sm:$0xff]
    %v3009 = vld [vmem:[#allocation4 + $0x530] sm:$0xff]
    %v3010 = vld [vmem:[#allocation4 + $0x538] sm:$0xff]
    %v3011 = vld [vmem:[#allocation4 + $0x540] sm:$0xff]
    %v3012 = vld [vmem:[#allocation4 + $0x548] sm:$0xff]
    %v3013 = vld [vmem:[#allocation4 + $0x550] sm:$0xff]
    %v3014 = vld [vmem:[#allocation4 + $0x558] sm:$0xff]
    %v3015 = vld [vmem:[#allocation4 + $0x560] sm:$0xff]
    %v3016 = vld [vmem:[#allocation4 + $0x568] sm:$0xff]
    %v3017 = vld [vmem:[#allocation4 + $0x570] sm:$0xff]
    %v3018 = vld [vmem:[#allocation4 + $0x578] sm:$0xff]
    %v3019 = vld [vmem:[#allocation4 + $0x580] sm:$0xff]
    %v3020 = vld [vmem:[#allocation4 + $0x588] sm:$0xff]
    %v3021 = vld [vmem:[#allocation4 + $0x590] sm:$0xff]
    %v3022 = vld [vmem:[#allocation4 + $0x598] sm:$0xff]
    %v3023 = vld [vmem:[#allocation4 + $0x5a0] sm:$0xff]
    %v3024 = vld [vmem:[#allocation4 + $0x5a8] sm:$0xff]
    %v3025 = vld [vmem:[#allocation4 + $0x5b0] sm:$0xff]
    %v3026 = vld [vmem:[#allocation4 + $0x5b8] sm:$0xff]
    %v3027 = vld [vmem:[#allocation4 + $0x5c0] sm:$0xff]
    %v3028 = vld [vmem:[#allocation4 + $0x5c8] sm:$0xff]
    %v3029 = vld [vmem:[#allocation4 + $0x5d0] sm:$0xff]
    %v3030 = vld [vmem:[#allocation4 + $0x5d8] sm:$0xff]
    %v3031 = vld [vmem:[#allocation4 + $0x5e0] sm:$0xff]
    %v3032 = vld [vmem:[#allocation4 + $0x5e8] sm:$0xff]
    %v3033 = vld [vmem:[#allocation4 + $0x5f0] sm:$0xff]
    %v3034 = vld [vmem:[#allocation4 + $0x5f8] sm:$0xff]
    %v3035 = vld [vmem:[#allocation4 + $0x600] sm:$0xff]
    %v3036 = vld [vmem:[#allocation4 + $0x608] sm:$0xff]
    %v3037 = vld [vmem:[#allocation4 + $0x610] sm:$0xff]
    %v3038 = vld [vmem:[#allocation4 + $0x618] sm:$0xff]
    %v3039 = vld [vmem:[#allocation4 + $0x620] sm:$0xff]
    %v3040 = vld [vmem:[#allocation4 + $0x628] sm:$0xff]
    %v3041 = vld [vmem:[#allocation4 + $0x630] sm:$0xff]
    %v3042 = vld [vmem:[#allocation4 + $0x638] sm:$0xff]
    %v3043 = vld [vmem:[#allocation4 + $0x640] sm:$0xff]
    %v3044 = vld [vmem:[#allocation4 + $0x648] sm:$0xff]
    %v3045 = vld [vmem:[#allocation4 + $0x650] sm:$0xff]
    %v3046 = vld [vmem:[#allocation4 + $0x658] sm:$0xff]
    %v3047 = vld [vmem:[#allocation4 + $0x660] sm:$0xff]
    %v3048 = vld [vmem:[#allocation4 + $0x668] sm:$0xff]
    %v3049 = vld [vmem:[#allocation4 + $0x670] sm:$0xff]
    %v3050 = vld [vmem:[#allocation4 + $0x678] sm:$0xff]
    %v3051 = vld [vmem:[#allocation4 + $0x680] sm:$0xff]
    %v3052 = vld [vmem:[#allocation4 + $0x688] sm:$0xff]
    %v3053 = vld [vmem:[#allocation4 + $0x690] sm:$0xff]
    %v3054 = vld [vmem:[#allocation4 + $0x698] sm:$0xff]
    %v3055 = vld [vmem:[#allocation4 + $0x6a0] sm:$0xff]
    %v3056 = vld [vmem:[#allocation4 + $0x6a8] sm:$0xff]
    %v3057 = vld [vmem:[#allocation4 + $0x6b0] sm:$0xff]
    %v3058 = vld [vmem:[#allocation4 + $0x6b8] sm:$0xff]
    %v3059 = vld [vmem:[#allocation4 + $0x6c0] sm:$0xff]
    %v3060 = vld [vmem:[#allocation4 + $0x6c8] sm:$0xff]
    %v3061 = vld [vmem:[#allocation4 + $0x6d0] sm:$0xff]
    %v3062 = vld [vmem:[#allocation4 + $0x6d8] sm:$0xff]
    %v3063 = vld [vmem:[#allocation4 + $0x6e0] sm:$0xff]
    %v3064 = vld [vmem:[#allocation4 + $0x6e8] sm:$0xff]
    %v3065 = vld [vmem:[#allocation4 + $0x6f0] sm:$0xff]
    %v3066 = vld [vmem:[#allocation4 + $0x6f8] sm:$0xff]
    %v3067 = vld [vmem:[#allocation4 + $0x700] sm:$0xff]
    %v3068 = vld [vmem:[#allocation4 + $0x708] sm:$0xff]
    %v3069 = vld [vmem:[#allocation4 + $0x710] sm:$0xff]
    %v3070 = vld [vmem:[#allocation4 + $0x718] sm:$0xff]
    %v3071 = vld [vmem:[#allocation4 + $0x720] sm:$0xff]
    %v3072 = vld [vmem:[#allocation4 + $0x728] sm:$0xff]
    %v3073 = vld [vmem:[#allocation4 + $0x730] sm:$0xff]
    %v3074 = vld [vmem:[#allocation4 + $0x738] sm:$0xff]
    %v3075 = vld [vmem:[#allocation4 + $0x740] sm:$0xff]
    %v3076 = vld [vmem:[#allocation4 + $0x748] sm:$0xff]
    %v3077 = vld [vmem:[#allocation4 + $0x750] sm:$0xff]
    %v3078 = vld [vmem:[#allocation4 + $0x758] sm:$0xff]
    %v3079 = vld [vmem:[#allocation4 + $0x760] sm:$0xff]
    %v3080 = vld [vmem:[#allocation4 + $0x768] sm:$0xff]
    %v3081 = vld [vmem:[#allocation4 + $0x770] sm:$0xff]
    %v3082 = vld [vmem:[#allocation4 + $0x778] sm:$0xff]
    %v3083 = vld [vmem:[#allocation4 + $0x780] sm:$0xff]
    %v3084 = vld [vmem:[#allocation4 + $0x788] sm:$0xff]
    %v3085 = vld [vmem:[#allocation4 + $0x790] sm:$0xff]
    %v3086 = vld [vmem:[#allocation4 + $0x798] sm:$0xff]
    %v3087 = vld [vmem:[#allocation4 + $0x7a0] sm:$0xff]
    %v3088 = vld [vmem:[#allocation4 + $0x7a8] sm:$0xff]
    %v3089 = vld [vmem:[#allocation4 + $0x7b0] sm:$0xff]
    %v3090 = vld [vmem:[#allocation4 + $0x7b8] sm:$0xff]
    %v3091 = vld [vmem:[#allocation4 + $0x7c0] sm:$0xff]
    %v3092 = vld [vmem:[#allocation4 + $0x7c8] sm:$0xff]
    %v3093 = vld [vmem:[#allocation4 + $0x7d0] sm:$0xff]
    %v3094 = vld [vmem:[#allocation4 + $0x7d8] sm:$0xff]
    %v3095 = vld [vmem:[#allocation4 + $0x7e0] sm:$0xff]
    %v3096 = vld [vmem:[#allocation4 + $0x7e8] sm:$0xff]
    %v3097 = vld [vmem:[#allocation4 + $0x7f0] sm:$0xff]
    %v3098 = vld [vmem:[#allocation4 + $0x7f8] sm:$0xff]
    %3099 = vmatpush.msra.mxu0 %v2963
    %3100 = vmatpush.msra.mxu0 %v2955
    %3101 = vmatpush.msra.mxu0 %v2947
    %3102 = vmatpush.msra.mxu0 %v2939
    %3103 = vmatpush.msra.mxu0 %v2931
    %3104 = vmatpush.msra.mxu0 %v2923
    %3105 = vmatpush.msra.mxu0 %v2915
    %3106 = vmatpush.msra.mxu0 %v2907
    %3107 = vmatpush.msra.mxu0 %v2899
    %3108 = vmatpush.msra.mxu0 %v2891
    %3109 = vmatpush.msra.mxu0 %v2883
    %3110 = vmatpush.msra.mxu0 %v2875
    %3111 = vmatpush.msra.mxu0 %v2867
    %3112 = vmatpush.msra.mxu0 %v2859
    %3113 = vmatpush.msra.mxu0 %v2851
    %3114 = vmatpush.msra.mxu0 %v2843
    %3115 = vmatmul.f32.gmra.mxu0 %v2841
    %v3116 = vpop.f32.mrf.mxu0
    %v3117 = vadd.f32 0.0, %v3116
    %3118 = vdwg.mxu0
    %3119 = vmatpush.msra.mxu0 %v3091
    %3120 = vmatpush.msra.mxu0 %v3083
    %3121 = vmatpush.msra.mxu0 %v3075
    %3122 = vmatpush.msra.mxu0 %v3067
    %3123 = vmatpush.msra.mxu0 %v3059
    %3124 = vmatpush.msra.mxu0 %v3051
    %3125 = vmatpush.msra.mxu0 %v3043
    %3126 = vmatpush.msra.mxu0 %v3035
    %3127 = vmatpush.msra.mxu0 %v3027
    %3128 = vmatpush.msra.mxu0 %v3019
    %3129 = vmatpush.msra.mxu0 %v3011
    %3130 = vmatpush.msra.mxu0 %v3003
    %3131 = vmatpush.msra.mxu0 %v2995
    %3132 = vmatpush.msra.mxu0 %v2987
    %3133 = vmatpush.msra.mxu0 %v2979
    %3134 = vmatpush.msra.mxu0 %v2971
    %3135 = vmatmul.f32.gmra.mxu0 %v2842
    %v3136 = vpop.f32.mrf.mxu0
    %v3137 = vadd.f32 %v3117, %v3136
    %3138 = vdwg.mxu0
    %3139 = vmatpush.msra.mxu0 %v2964
    %3140 = vmatpush.msra.mxu0 %v2956
    %3141 = vmatpush.msra.mxu0 %v2948
    %3142 = vmatpush.msra.mxu0 %v2940
    %3143 = vmatpush.msra.mxu0 %v2932
    %3144 = vmatpush.msra.mxu0 %v2924
    %3145 = vmatpush.msra.mxu0 %v2916
    %3146 = vmatpush.msra.mxu0 %v2908
    %3147 = vmatpush.msra.mxu0 %v2900
    %3148 = vmatpush.msra.mxu0 %v2892
    %3149 = vmatpush.msra.mxu0 %v2884
    %3150 = vmatpush.msra.mxu0 %v2876
    %3151 = vmatpush.msra.mxu0 %v2868
    %3152 = vmatpush.msra.mxu0 %v2860
    %3153 = vmatpush.msra.mxu0 %v2852
    %3154 = vmatpush.msra.mxu0 %v2844
    %3155 = vmatmul.f32.gmra.mxu0 %v2841
    %v3156 = vpop.f32.mrf.mxu0
    %v3157 = vadd.f32 0.0, %v3156
    %3158 = vdwg.mxu0
    %3159 = vmatpush.msra.mxu0 %v3092
    %3160 = vmatpush.msra.mxu0 %v3084
    %3161 = vmatpush.msra.mxu0 %v3076
    %3162 = vmatpush.msra.mxu0 %v3068
    %3163 = vmatpush.msra.mxu0 %v3060
    %3164 = vmatpush.msra.mxu0 %v3052
    %3165 = vmatpush.msra.mxu0 %v3044
    %3166 = vmatpush.msra.mxu0 %v3036
    %3167 = vmatpush.msra.mxu0 %v3028
    %3168 = vmatpush.msra.mxu0 %v3020
    %3169 = vmatpush.msra.mxu0 %v3012
    %3170 = vmatpush.msra.mxu0 %v3004
    %3171 = vmatpush.msra.mxu0 %v2996
    %3172 = vmatpush.msra.mxu0 %v2988
    %3173 = vmatpush.msra.mxu0 %v2980
    %3174 = vmatpush.msra.mxu0 %v2972
    %3175 = vmatmul.f32.gmra.mxu0 %v2842
    %v3176 = vpop.f32.mrf.mxu0
    %v3177 = vadd.f32 %v3157, %v3176
    %3178 = vdwg.mxu0
    %3179 = vmatpush.msra.mxu0 %v2965
    %3180 = vmatpush.msra.mxu0 %v2957
    %3181 = vmatpush.msra.mxu0 %v2949
    %3182 = vmatpush.msra.mxu0 %v2941
    %3183 = vmatpush.msra.mxu0 %v2933
    %3184 = vmatpush.msra.mxu0 %v2925
    %3185 = vmatpush.msra.mxu0 %v2917
    %3186 = vmatpush.msra.mxu0 %v2909
    %3187 = vmatpush.msra.mxu0 %v2901
    %3188 = vmatpush.msra.mxu0 %v2893
    %3189 = vmatpush.msra.mxu0 %v2885
    %3190 = vmatpush.msra.mxu0 %v2877
    %3191 = vmatpush.msra.mxu0 %v2869
    %3192 = vmatpush.msra.mxu0 %v2861
    %3193 = vmatpush.msra.mxu0 %v2853
    %3194 = vmatpush.msra.mxu0 %v2845
    %3195 = vmatmul.f32.gmra.mxu0 %v2841
    %v3196 = vpop.f32.mrf.mxu0
    %v3197 = vadd.f32 0.0, %v3196
    %3198 = vdwg.mxu0
    %3199 = vmatpush.msra.mxu0 %v3093
    %3200 = vmatpush.msra.mxu0 %v3085
    %3201 = vmatpush.msra.mxu0 %v3077
    %3202 = vmatpush.msra.mxu0 %v3069
    %3203 = vmatpush.msra.mxu0 %v3061
    %3204 = vmatpush.msra.mxu0 %v3053
    %3205 = vmatpush.msra.mxu0 %v3045
    %3206 = vmatpush.msra.mxu0 %v3037
    %3207 = vmatpush.msra.mxu0 %v3029
    %3208 = vmatpush.msra.mxu0 %v3021
    %3209 = vmatpush.msra.mxu0 %v3013
    %3210 = vmatpush.msra.mxu0 %v3005
    %3211 = vmatpush.msra.mxu0 %v2997
    %3212 = vmatpush.msra.mxu0 %v2989
    %3213 = vmatpush.msra.mxu0 %v2981
    %3214 = vmatpush.msra.mxu0 %v2973
    %3215 = vmatmul.f32.gmra.mxu0 %v2842
    %v3216 = vpop.f32.mrf.mxu0
    %v3217 = vadd.f32 %v3197, %v3216
    %3218 = vdwg.mxu0
    %3219 = vmatpush.msra.mxu0 %v2966
    %3220 = vmatpush.msra.mxu0 %v2958
    %3221 = vmatpush.msra.mxu0 %v2950
    %3222 = vmatpush.msra.mxu0 %v2942
    %3223 = vmatpush.msra.mxu0 %v2934
    %3224 = vmatpush.msra.mxu0 %v2926
    %3225 = vmatpush.msra.mxu0 %v2918
    %3226 = vmatpush.msra.mxu0 %v2910
    %3227 = vmatpush.msra.mxu0 %v2902
    %3228 = vmatpush.msra.mxu0 %v2894
    %3229 = vmatpush.msra.mxu0 %v2886
    %3230 = vmatpush.msra.mxu0 %v2878
    %3231 = vmatpush.msra.mxu0 %v2870
    %3232 = vmatpush.msra.mxu0 %v2862
    %3233 = vmatpush.msra.mxu0 %v2854
    %3234 = vmatpush.msra.mxu0 %v2846
    %3235 = vmatmul.f32.gmra.mxu0 %v2841
    %v3236 = vpop.f32.mrf.mxu0
    %v3237 = vadd.f32 0.0, %v3236
    %3238 = vdwg.mxu0
    %3239 = vmatpush.msra.mxu0 %v3094
    %3240 = vmatpush.msra.mxu0 %v3086
    %3241 = vmatpush.msra.mxu0 %v3078
    %3242 = vmatpush.msra.mxu0 %v3070
    %3243 = vmatpush.msra.mxu0 %v3062
    %3244 = vmatpush.msra.mxu0 %v3054
    %3245 = vmatpush.msra.mxu0 %v3046
    %3246 = vmatpush.msra.mxu0 %v3038
    %3247 = vmatpush.msra.mxu0 %v3030
    %3248 = vmatpush.msra.mxu0 %v3022
    %3249 = vmatpush.msra.mxu0 %v3014
    %3250 = vmatpush.msra.mxu0 %v3006
    %3251 = vmatpush.msra.mxu0 %v2998
    %3252 = vmatpush.msra.mxu0 %v2990
    %3253 = vmatpush.msra.mxu0 %v2982
    %3254 = vmatpush.msra.mxu0 %v2974
    %3255 = vmatmul.f32.gmra.mxu0 %v2842
    %v3256 = vpop.f32.mrf.mxu0
    %v3257 = vadd.f32 %v3237, %v3256
    %3258 = vdwg.mxu0
    %3259 = vmatpush.msra.mxu0 %v2967
    %3260 = vmatpush.msra.mxu0 %v2959
    %3261 = vmatpush.msra.mxu0 %v2951
    %3262 = vmatpush.msra.mxu0 %v2943
    %3263 = vmatpush.msra.mxu0 %v2935
    %3264 = vmatpush.msra.mxu0 %v2927
    %3265 = vmatpush.msra.mxu0 %v2919
    %3266 = vmatpush.msra.mxu0 %v2911
    %3267 = vmatpush.msra.mxu0 %v2903
    %3268 = vmatpush.msra.mxu0 %v2895
    %3269 = vmatpush.msra.mxu0 %v2887
    %3270 = vmatpush.msra.mxu0 %v2879
    %3271 = vmatpush.msra.mxu0 %v2871
    %3272 = vmatpush.msra.mxu0 %v2863
    %3273 = vmatpush.msra.mxu0 %v2855
    %3274 = vmatpush.msra.mxu0 %v2847
    %3275 = vmatmul.f32.gmra.mxu0 %v2841
    %v3276 = vpop.f32.mrf.mxu0
    %v3277 = vadd.f32 0.0, %v3276
    %3278 = vdwg.mxu0
    %3279 = vmatpush.msra.mxu0 %v3095
    %3280 = vmatpush.msra.mxu0 %v3087
    %3281 = vmatpush.msra.mxu0 %v3079
    %3282 = vmatpush.msra.mxu0 %v3071
    %3283 = vmatpush.msra.mxu0 %v3063
    %3284 = vmatpush.msra.mxu0 %v3055
    %3285 = vmatpush.msra.mxu0 %v3047
    %3286 = vmatpush.msra.mxu0 %v3039
    %3287 = vmatpush.msra.mxu0 %v3031
    %3288 = vmatpush.msra.mxu0 %v3023
    %3289 = vmatpush.msra.mxu0 %v3015
    %3290 = vmatpush.msra.mxu0 %v3007
    %3291 = vmatpush.msra.mxu0 %v2999
    %3292 = vmatpush.msra.mxu0 %v2991
    %3293 = vmatpush.msra.mxu0 %v2983
    %3294 = vmatpush.msra.mxu0 %v2975
    %3295 = vmatmul.f32.gmra.mxu0 %v2842
    %v3296 = vpop.f32.mrf.mxu0
    %v3297 = vadd.f32 %v3277, %v3296
    %3298 = vdwg.mxu0
    %3299 = vmatpush.msra.mxu0 %v2968
    %3300 = vmatpush.msra.mxu0 %v2960
    %3301 = vmatpush.msra.mxu0 %v2952
    %3302 = vmatpush.msra.mxu0 %v2944
    %3303 = vmatpush.msra.mxu0 %v2936
    %3304 = vmatpush.msra.mxu0 %v2928
    %3305 = vmatpush.msra.mxu0 %v2920
    %3306 = vmatpush.msra.mxu0 %v2912
    %3307 = vmatpush.msra.mxu0 %v2904
    %3308 = vmatpush.msra.mxu0 %v2896
    %3309 = vmatpush.msra.mxu0 %v2888
    %3310 = vmatpush.msra.mxu0 %v2880
    %3311 = vmatpush.msra.mxu0 %v2872
    %3312 = vmatpush.msra.mxu0 %v2864
    %3313 = vmatpush.msra.mxu0 %v2856
    %3314 = vmatpush.msra.mxu0 %v2848
    %3315 = vmatmul.f32.gmra.mxu0 %v2841
    %v3316 = vpop.f32.mrf.mxu0
    %v3317 = vadd.f32 0.0, %v3316
    %3318 = vdwg.mxu0
    %3319 = vmatpush.msra.mxu0 %v3096
    %3320 = vmatpush.msra.mxu0 %v3088
    %3321 = vmatpush.msra.mxu0 %v3080
    %3322 = vmatpush.msra.mxu0 %v3072
    %3323 = vmatpush.msra.mxu0 %v3064
    %3324 = vmatpush.msra.mxu0 %v3056
    %3325 = vmatpush.msra.mxu0 %v3048
    %3326 = vmatpush.msra.mxu0 %v3040
    %3327 = vmatpush.msra.mxu0 %v3032
    %3328 = vmatpush.msra.mxu0 %v3024
    %3329 = vmatpush.msra.mxu0 %v3016
    %3330 = vmatpush.msra.mxu0 %v3008
    %3331 = vmatpush.msra.mxu0 %v3000
    %3332 = vmatpush.msra.mxu0 %v2992
    %3333 = vmatpush.msra.mxu0 %v2984
    %3334 = vmatpush.msra.mxu0 %v2976
    %3335 = vmatmul.f32.gmra.mxu0 %v2842
    %v3336 = vpop.f32.mrf.mxu0
    %v3337 = vadd.f32 %v3317, %v3336
    %3338 = vdwg.mxu0
    %3339 = vmatpush.msra.mxu0 %v2969
    %3340 = vmatpush.msra.mxu0 %v2961
    %3341 = vmatpush.msra.mxu0 %v2953
    %3342 = vmatpush.msra.mxu0 %v2945
    %3343 = vmatpush.msra.mxu0 %v2937
    %3344 = vmatpush.msra.mxu0 %v2929
    %3345 = vmatpush.msra.mxu0 %v2921
    %3346 = vmatpush.msra.mxu0 %v2913
    %3347 = vmatpush.msra.mxu0 %v2905
    %3348 = vmatpush.msra.mxu0 %v2897
    %3349 = vmatpush.msra.mxu0 %v2889
    %3350 = vmatpush.msra.mxu0 %v2881
    %3351 = vmatpush.msra.mxu0 %v2873
    %3352 = vmatpush.msra.mxu0 %v2865
    %3353 = vmatpush.msra.mxu0 %v2857
    %3354 = vmatpush.msra.mxu0 %v2849
    %3355 = vmatmul.f32.gmra.mxu0 %v2841
    %v3356 = vpop.f32.mrf.mxu0
    %v3357 = vadd.f32 0.0, %v3356
    %3358 = vdwg.mxu0
    %3359 = vmatpush.msra.mxu0 %v3097
    %3360 = vmatpush.msra.mxu0 %v3089
    %3361 = vmatpush.msra.mxu0 %v3081
    %3362 = vmatpush.msra.mxu0 %v3073
    %3363 = vmatpush.msra.mxu0 %v3065
    %3364 = vmatpush.msra.mxu0 %v3057
    %3365 = vmatpush.msra.mxu0 %v3049
    %3366 = vmatpush.msra.mxu0 %v3041
    %3367 = vmatpush.msra.mxu0 %v3033
    %3368 = vmatpush.msra.mxu0 %v3025
    %3369 = vmatpush.msra.mxu0 %v3017
    %3370 = vmatpush.msra.mxu0 %v3009
    %3371 = vmatpush.msra.mxu0 %v3001
    %3372 = vmatpush.msra.mxu0 %v2993
    %3373 = vmatpush.msra.mxu0 %v2985
    %3374 = vmatpush.msra.mxu0 %v2977
    %3375 = vmatmul.f32.gmra.mxu0 %v2842
    %v3376 = vpop.f32.mrf.mxu0
    %v3377 = vadd.f32 %v3357, %v3376
    %3378 = vdwg.mxu0
    %3379 = vmatpush.msra.mxu0 %v2970
    %3380 = vmatpush.msra.mxu0 %v2962
    %3381 = vmatpush.msra.mxu0 %v2954
    %3382 = vmatpush.msra.mxu0 %v2946
    %3383 = vmatpush.msra.mxu0 %v2938
    %3384 = vmatpush.msra.mxu0 %v2930
    %3385 = vmatpush.msra.mxu0 %v2922
    %3386 = vmatpush.msra.mxu0 %v2914
    %3387 = vmatpush.msra.mxu0 %v2906
    %3388 = vmatpush.msra.mxu0 %v2898
    %3389 = vmatpush.msra.mxu0 %v2890
    %3390 = vmatpush.msra.mxu0 %v2882
    %3391 = vmatpush.msra.mxu0 %v2874
    %3392 = vmatpush.msra.mxu0 %v2866
    %3393 = vmatpush.msra.mxu0 %v2858
    %3394 = vmatpush.msra.mxu0 %v2850
    %3395 = vmatmul.f32.gmra.mxu0 %v2841
    %v3396 = vpop.f32.mrf.mxu0
    %v3397 = vadd.f32 0.0, %v3396
    %3398 = vdwg.mxu0
    %3399 = vmatpush.msra.mxu0 %v3098
    %3400 = vmatpush.msra.mxu0 %v3090
    %3401 = vmatpush.msra.mxu0 %v3082
    %3402 = vmatpush.msra.mxu0 %v3074
    %3403 = vmatpush.msra.mxu0 %v3066
    %3404 = vmatpush.msra.mxu0 %v3058
    %3405 = vmatpush.msra.mxu0 %v3050
    %3406 = vmatpush.msra.mxu0 %v3042
    %3407 = vmatpush.msra.mxu0 %v3034
    %3408 = vmatpush.msra.mxu0 %v3026
    %3409 = vmatpush.msra.mxu0 %v3018
    %3410 = vmatpush.msra.mxu0 %v3010
    %3411 = vmatpush.msra.mxu0 %v3002
    %3412 = vmatpush.msra.mxu0 %v2994
    %3413 = vmatpush.msra.mxu0 %v2986
    %3414 = vmatpush.msra.mxu0 %v2978
    %3415 = vmatmul.f32.gmra.mxu0 %v2842
    %v3416 = vpop.f32.mrf.mxu0
    %v3417 = vadd.f32 %v3397, %v3416
    %3418 = vdwg.mxu0
    %v3419 = vadd.f32 %v3297, %v285
    %v3420 = vadd.f32 %v3337, %v286
    %v3421 = vadd.f32 %v3377, %v287
    %v3422 = vadd.f32 %v3417, %v288
    %v3423 = vmul.f32 %v3419, 0.5
    %v3424 = vtanh.pop %v3423
    %v3425 = vmul.f32 %v3424, 0.5
    %v3426 = vadd.f32 %v3425, 0.5
    %v3427 = vmul.f32 %v3420, 0.5
    %v3428 = vtanh.pop %v3427
    %v3429 = vmul.f32 %v3428, 0.5
    %v3430 = vadd.f32 %v3429, 0.5
    %v3431 = vtanh.pop %v3421
    %v3432 = vmul.f32 %v3422, 0.5
    %v3433 = vtanh.pop %v3432
    %v3434 = vmul.f32 %v3433, 0.5
    %v3435 = vadd.f32 %v3434, 0.5
    %v3436 = vmul.f32 %v3430, %v2807
    %v3437 = vmul.f32 %v3426, %v3431
    %v3438 = vadd.f32 %v3436, %v3437
    %v3439 = vtanh.pop %v3438
    %v3440 = vmul.f32 %v3435, %v3439
    %s3441 = smul.u32 5, 4
    %s3442 = smul.addr %s3441, 8
    %s3443 = scalar_lea.vmem [#allocation2], %s3442
    %v3444 = vld [vmem:[%s3443] sm:$0xff]
    %v3445 = vld [vmem:[%s3443 + $0x8] sm:$0xff]
    %v3446 = vld [vmem:[%s3443 + $0x10] sm:$0xff]
    %v3447 = vld [vmem:[%s3443 + $0x18] sm:$0xff]
    %v3448 = vadd.f32 %v3444, %v3137
    %v3449 = vadd.f32 %v3445, %v3177
    %v3450 = vadd.f32 %v3446, %v3217
    %v3451 = vadd.f32 %v3447, %v3257
    %v3452 = vmul.f32 %v3448, 0.5
    %v3453 = vtanh.pop %v3452
    %v3454 = vmul.f32 %v3453, 0.5
    %v3455 = vadd.f32 %v3454, 0.5
    %v3456 = vmul.f32 %v3449, 0.5
    %v3457 = vtanh.pop %v3456
    %v3458 = vmul.f32 %v3457, 0.5
    %v3459 = vadd.f32 %v3458, 0.5
    %v3460 = vtanh.pop %v3450
    %v3461 = vmul.f32 %v3451, 0.5
    %v3462 = vtanh.pop %v3461
    %v3463 = vmul.f32 %v3462, 0.5
    %v3464 = vadd.f32 %v3463, 0.5
    %v3465 = vmul.f32 %v3459, %v2836
    %v3466 = vmul.f32 %v3455, %v3460
    %v3467 = vadd.f32 %v3465, %v3466
    %v3468 = vtanh.pop %v3467
    %v3469 = vmul.f32 %v3464, %v3468
    %3470 = vst [vmem:[#allocation3] sm:$0xff] %v3469
    %3471 = vst [vmem:[#allocation3 + $0x8] sm:$0xff] %v3440
    %v3472 = vld [vmem:[#allocation3] sm:$0xff]
    %v3473 = vld [vmem:[#allocation3 + $0x8] sm:$0xff]
    %v3474 = vld [vmem:[#allocation4] sm:$0xff]
    %v3475 = vld [vmem:[#allocation4 + $0x8] sm:$0xff]
    %v3476 = vld [vmem:[#allocation4 + $0x10] sm:$0xff]
    %v3477 = vld [vmem:[#allocation4 + $0x18] sm:$0xff]
    %v3478 = vld [vmem:[#allocation4 + $0x20] sm:$0xff]
    %v3479 = vld [vmem:[#allocation4 + $0x28] sm:$0xff]
    %v3480 = vld [vmem:[#allocation4 + $0x30] sm:$0xff]
    %v3481 = vld [vmem:[#allocation4 + $0x38] sm:$0xff]
    %v3482 = vld [vmem:[#allocation4 + $0x40] sm:$0xff]
    %v3483 = vld [vmem:[#allocation4 + $0x48] sm:$0xff]
    %v3484 = vld [vmem:[#allocation4 + $0x50] sm:$0xff]
    %v3485 = vld [vmem:[#allocation4 + $0x58] sm:$0xff]
    %v3486 = vld [vmem:[#allocation4 + $0x60] sm:$0xff]
    %v3487 = vld [vmem:[#allocation4 + $0x68] sm:$0xff]
    %v3488 = vld [vmem:[#allocation4 + $0x70] sm:$0xff]
    %v3489 = vld [vmem:[#allocation4 + $0x78] sm:$0xff]
    %v3490 = vld [vmem:[#allocation4 + $0x80] sm:$0xff]
    %v3491 = vld [vmem:[#allocation4 + $0x88] sm:$0xff]
    %v3492 = vld [vmem:[#allocation4 + $0x90] sm:$0xff]
    %v3493 = vld [vmem:[#allocation4 + $0x98] sm:$0xff]
    %v3494 = vld [vmem:[#allocation4 + $0xa0] sm:$0xff]
    %v3495 = vld [vmem:[#allocation4 + $0xa8] sm:$0xff]
    %v3496 = vld [vmem:[#allocation4 + $0xb0] sm:$0xff]
    %v3497 = vld [vmem:[#allocation4 + $0xb8] sm:$0xff]
    %v3498 = vld [vmem:[#allocation4 + $0xc0] sm:$0xff]
    %v3499 = vld [vmem:[#allocation4 + $0xc8] sm:$0xff]
    %v3500 = vld [vmem:[#allocation4 + $0xd0] sm:$0xff]
    %v3501 = vld [vmem:[#allocation4 + $0xd8] sm:$0xff]
    %v3502 = vld [vmem:[#allocation4 + $0xe0] sm:$0xff]
    %v3503 = vld [vmem:[#allocation4 + $0xe8] sm:$0xff]
    %v3504 = vld [vmem:[#allocation4 + $0xf0] sm:$0xff]
    %v3505 = vld [vmem:[#allocation4 + $0xf8] sm:$0xff]
    %v3506 = vld [vmem:[#allocation4 + $0x100] sm:$0xff]
    %v3507 = vld [vmem:[#allocation4 + $0x108] sm:$0xff]
    %v3508 = vld [vmem:[#allocation4 + $0x110] sm:$0xff]
    %v3509 = vld [vmem:[#allocation4 + $0x118] sm:$0xff]
    %v3510 = vld [vmem:[#allocation4 + $0x120] sm:$0xff]
    %v3511 = vld [vmem:[#allocation4 + $0x128] sm:$0xff]
    %v3512 = vld [vmem:[#allocation4 + $0x130] sm:$0xff]
    %v3513 = vld [vmem:[#allocation4 + $0x138] sm:$0xff]
    %v3514 = vld [vmem:[#allocation4 + $0x140] sm:$0xff]
    %v3515 = vld [vmem:[#allocation4 + $0x148] sm:$0xff]
    %v3516 = vld [vmem:[#allocation4 + $0x150] sm:$0xff]
    %v3517 = vld [vmem:[#allocation4 + $0x158] sm:$0xff]
    %v3518 = vld [vmem:[#allocation4 + $0x160] sm:$0xff]
    %v3519 = vld [vmem:[#allocation4 + $0x168] sm:$0xff]
    %v3520 = vld [vmem:[#allocation4 + $0x170] sm:$0xff]
    %v3521 = vld [vmem:[#allocation4 + $0x178] sm:$0xff]
    %v3522 = vld [vmem:[#allocation4 + $0x180] sm:$0xff]
    %v3523 = vld [vmem:[#allocation4 + $0x188] sm:$0xff]
    %v3524 = vld [vmem:[#allocation4 + $0x190] sm:$0xff]
    %v3525 = vld [vmem:[#allocation4 + $0x198] sm:$0xff]
    %v3526 = vld [vmem:[#allocation4 + $0x1a0] sm:$0xff]
    %v3527 = vld [vmem:[#allocation4 + $0x1a8] sm:$0xff]
    %v3528 = vld [vmem:[#allocation4 + $0x1b0] sm:$0xff]
    %v3529 = vld [vmem:[#allocation4 + $0x1b8] sm:$0xff]
    %v3530 = vld [vmem:[#allocation4 + $0x1c0] sm:$0xff]
    %v3531 = vld [vmem:[#allocation4 + $0x1c8] sm:$0xff]
    %v3532 = vld [vmem:[#allocation4 + $0x1d0] sm:$0xff]
    %v3533 = vld [vmem:[#allocation4 + $0x1d8] sm:$0xff]
    %v3534 = vld [vmem:[#allocation4 + $0x1e0] sm:$0xff]
    %v3535 = vld [vmem:[#allocation4 + $0x1e8] sm:$0xff]
    %v3536 = vld [vmem:[#allocation4 + $0x1f0] sm:$0xff]
    %v3537 = vld [vmem:[#allocation4 + $0x1f8] sm:$0xff]
    %v3538 = vld [vmem:[#allocation4 + $0x200] sm:$0xff]
    %v3539 = vld [vmem:[#allocation4 + $0x208] sm:$0xff]
    %v3540 = vld [vmem:[#allocation4 + $0x210] sm:$0xff]
    %v3541 = vld [vmem:[#allocation4 + $0x218] sm:$0xff]
    %v3542 = vld [vmem:[#allocation4 + $0x220] sm:$0xff]
    %v3543 = vld [vmem:[#allocation4 + $0x228] sm:$0xff]
    %v3544 = vld [vmem:[#allocation4 + $0x230] sm:$0xff]
    %v3545 = vld [vmem:[#allocation4 + $0x238] sm:$0xff]
    %v3546 = vld [vmem:[#allocation4 + $0x240] sm:$0xff]
    %v3547 = vld [vmem:[#allocation4 + $0x248] sm:$0xff]
    %v3548 = vld [vmem:[#allocation4 + $0x250] sm:$0xff]
    %v3549 = vld [vmem:[#allocation4 + $0x258] sm:$0xff]
    %v3550 = vld [vmem:[#allocation4 + $0x260] sm:$0xff]
    %v3551 = vld [vmem:[#allocation4 + $0x268] sm:$0xff]
    %v3552 = vld [vmem:[#allocation4 + $0x270] sm:$0xff]
    %v3553 = vld [vmem:[#allocation4 + $0x278] sm:$0xff]
    %v3554 = vld [vmem:[#allocation4 + $0x280] sm:$0xff]
    %v3555 = vld [vmem:[#allocation4 + $0x288] sm:$0xff]
    %v3556 = vld [vmem:[#allocation4 + $0x290] sm:$0xff]
    %v3557 = vld [vmem:[#allocation4 + $0x298] sm:$0xff]
    %v3558 = vld [vmem:[#allocation4 + $0x2a0] sm:$0xff]
    %v3559 = vld [vmem:[#allocation4 + $0x2a8] sm:$0xff]
    %v3560 = vld [vmem:[#allocation4 + $0x2b0] sm:$0xff]
    %v3561 = vld [vmem:[#allocation4 + $0x2b8] sm:$0xff]
    %v3562 = vld [vmem:[#allocation4 + $0x2c0] sm:$0xff]
    %v3563 = vld [vmem:[#allocation4 + $0x2c8] sm:$0xff]
    %v3564 = vld [vmem:[#allocation4 + $0x2d0] sm:$0xff]
    %v3565 = vld [vmem:[#allocation4 + $0x2d8] sm:$0xff]
    %v3566 = vld [vmem:[#allocation4 + $0x2e0] sm:$0xff]
    %v3567 = vld [vmem:[#allocation4 + $0x2e8] sm:$0xff]
    %v3568 = vld [vmem:[#allocation4 + $0x2f0] sm:$0xff]
    %v3569 = vld [vmem:[#allocation4 + $0x2f8] sm:$0xff]
    %v3570 = vld [vmem:[#allocation4 + $0x300] sm:$0xff]
    %v3571 = vld [vmem:[#allocation4 + $0x308] sm:$0xff]
    %v3572 = vld [vmem:[#allocation4 + $0x310] sm:$0xff]
    %v3573 = vld [vmem:[#allocation4 + $0x318] sm:$0xff]
    %v3574 = vld [vmem:[#allocation4 + $0x320] sm:$0xff]
    %v3575 = vld [vmem:[#allocation4 + $0x328] sm:$0xff]
    %v3576 = vld [vmem:[#allocation4 + $0x330] sm:$0xff]
    %v3577 = vld [vmem:[#allocation4 + $0x338] sm:$0xff]
    %v3578 = vld [vmem:[#allocation4 + $0x340] sm:$0xff]
    %v3579 = vld [vmem:[#allocation4 + $0x348] sm:$0xff]
    %v3580 = vld [vmem:[#allocation4 + $0x350] sm:$0xff]
    %v3581 = vld [vmem:[#allocation4 + $0x358] sm:$0xff]
    %v3582 = vld [vmem:[#allocation4 + $0x360] sm:$0xff]
    %v3583 = vld [vmem:[#allocation4 + $0x368] sm:$0xff]
    %v3584 = vld [vmem:[#allocation4 + $0x370] sm:$0xff]
    %v3585 = vld [vmem:[#allocation4 + $0x378] sm:$0xff]
    %v3586 = vld [vmem:[#allocation4 + $0x380] sm:$0xff]
    %v3587 = vld [vmem:[#allocation4 + $0x388] sm:$0xff]
    %v3588 = vld [vmem:[#allocation4 + $0x390] sm:$0xff]
    %v3589 = vld [vmem:[#allocation4 + $0x398] sm:$0xff]
    %v3590 = vld [vmem:[#allocation4 + $0x3a0] sm:$0xff]
    %v3591 = vld [vmem:[#allocation4 + $0x3a8] sm:$0xff]
    %v3592 = vld [vmem:[#allocation4 + $0x3b0] sm:$0xff]
    %v3593 = vld [vmem:[#allocation4 + $0x3b8] sm:$0xff]
    %v3594 = vld [vmem:[#allocation4 + $0x3c0] sm:$0xff]
    %v3595 = vld [vmem:[#allocation4 + $0x3c8] sm:$0xff]
    %v3596 = vld [vmem:[#allocation4 + $0x3d0] sm:$0xff]
    %v3597 = vld [vmem:[#allocation4 + $0x3d8] sm:$0xff]
    %v3598 = vld [vmem:[#allocation4 + $0x3e0] sm:$0xff]
    %v3599 = vld [vmem:[#allocation4 + $0x3e8] sm:$0xff]
    %v3600 = vld [vmem:[#allocation4 + $0x3f0] sm:$0xff]
    %v3601 = vld [vmem:[#allocation4 + $0x3f8] sm:$0xff]
    %v3602 = vld [vmem:[#allocation4 + $0x400] sm:$0xff]
    %v3603 = vld [vmem:[#allocation4 + $0x408] sm:$0xff]
    %v3604 = vld [vmem:[#allocation4 + $0x410] sm:$0xff]
    %v3605 = vld [vmem:[#allocation4 + $0x418] sm:$0xff]
    %v3606 = vld [vmem:[#allocation4 + $0x420] sm:$0xff]
    %v3607 = vld [vmem:[#allocation4 + $0x428] sm:$0xff]
    %v3608 = vld [vmem:[#allocation4 + $0x430] sm:$0xff]
    %v3609 = vld [vmem:[#allocation4 + $0x438] sm:$0xff]
    %v3610 = vld [vmem:[#allocation4 + $0x440] sm:$0xff]
    %v3611 = vld [vmem:[#allocation4 + $0x448] sm:$0xff]
    %v3612 = vld [vmem:[#allocation4 + $0x450] sm:$0xff]
    %v3613 = vld [vmem:[#allocation4 + $0x458] sm:$0xff]
    %v3614 = vld [vmem:[#allocation4 + $0x460] sm:$0xff]
    %v3615 = vld [vmem:[#allocation4 + $0x468] sm:$0xff]
    %v3616 = vld [vmem:[#allocation4 + $0x470] sm:$0xff]
    %v3617 = vld [vmem:[#allocation4 + $0x478] sm:$0xff]
    %v3618 = vld [vmem:[#allocation4 + $0x480] sm:$0xff]
    %v3619 = vld [vmem:[#allocation4 + $0x488] sm:$0xff]
    %v3620 = vld [vmem:[#allocation4 + $0x490] sm:$0xff]
    %v3621 = vld [vmem:[#allocation4 + $0x498] sm:$0xff]
    %v3622 = vld [vmem:[#allocation4 + $0x4a0] sm:$0xff]
    %v3623 = vld [vmem:[#allocation4 + $0x4a8] sm:$0xff]
    %v3624 = vld [vmem:[#allocation4 + $0x4b0] sm:$0xff]
    %v3625 = vld [vmem:[#allocation4 + $0x4b8] sm:$0xff]
    %v3626 = vld [vmem:[#allocation4 + $0x4c0] sm:$0xff]
    %v3627 = vld [vmem:[#allocation4 + $0x4c8] sm:$0xff]
    %v3628 = vld [vmem:[#allocation4 + $0x4d0] sm:$0xff]
    %v3629 = vld [vmem:[#allocation4 + $0x4d8] sm:$0xff]
    %v3630 = vld [vmem:[#allocation4 + $0x4e0] sm:$0xff]
    %v3631 = vld [vmem:[#allocation4 + $0x4e8] sm:$0xff]
    %v3632 = vld [vmem:[#allocation4 + $0x4f0] sm:$0xff]
    %v3633 = vld [vmem:[#allocation4 + $0x4f8] sm:$0xff]
    %v3634 = vld [vmem:[#allocation4 + $0x500] sm:$0xff]
    %v3635 = vld [vmem:[#allocation4 + $0x508] sm:$0xff]
    %v3636 = vld [vmem:[#allocation4 + $0x510] sm:$0xff]
    %v3637 = vld [vmem:[#allocation4 + $0x518] sm:$0xff]
    %v3638 = vld [vmem:[#allocation4 + $0x520] sm:$0xff]
    %v3639 = vld [vmem:[#allocation4 + $0x528] sm:$0xff]
    %v3640 = vld [vmem:[#allocation4 + $0x530] sm:$0xff]
    %v3641 = vld [vmem:[#allocation4 + $0x538] sm:$0xff]
    %v3642 = vld [vmem:[#allocation4 + $0x540] sm:$0xff]
    %v3643 = vld [vmem:[#allocation4 + $0x548] sm:$0xff]
    %v3644 = vld [vmem:[#allocation4 + $0x550] sm:$0xff]
    %v3645 = vld [vmem:[#allocation4 + $0x558] sm:$0xff]
    %v3646 = vld [vmem:[#allocation4 + $0x560] sm:$0xff]
    %v3647 = vld [vmem:[#allocation4 + $0x568] sm:$0xff]
    %v3648 = vld [vmem:[#allocation4 + $0x570] sm:$0xff]
    %v3649 = vld [vmem:[#allocation4 + $0x578] sm:$0xff]
    %v3650 = vld [vmem:[#allocation4 + $0x580] sm:$0xff]
    %v3651 = vld [vmem:[#allocation4 + $0x588] sm:$0xff]
    %v3652 = vld [vmem:[#allocation4 + $0x590] sm:$0xff]
    %v3653 = vld [vmem:[#allocation4 + $0x598] sm:$0xff]
    %v3654 = vld [vmem:[#allocation4 + $0x5a0] sm:$0xff]
    %v3655 = vld [vmem:[#allocation4 + $0x5a8] sm:$0xff]
    %v3656 = vld [vmem:[#allocation4 + $0x5b0] sm:$0xff]
    %v3657 = vld [vmem:[#allocation4 + $0x5b8] sm:$0xff]
    %v3658 = vld [vmem:[#allocation4 + $0x5c0] sm:$0xff]
    %v3659 = vld [vmem:[#allocation4 + $0x5c8] sm:$0xff]
    %v3660 = vld [vmem:[#allocation4 + $0x5d0] sm:$0xff]
    %v3661 = vld [vmem:[#allocation4 + $0x5d8] sm:$0xff]
    %v3662 = vld [vmem:[#allocation4 + $0x5e0] sm:$0xff]
    %v3663 = vld [vmem:[#allocation4 + $0x5e8] sm:$0xff]
    %v3664 = vld [vmem:[#allocation4 + $0x5f0] sm:$0xff]
    %v3665 = vld [vmem:[#allocation4 + $0x5f8] sm:$0xff]
    %v3666 = vld [vmem:[#allocation4 + $0x600] sm:$0xff]
    %v3667 = vld [vmem:[#allocation4 + $0x608] sm:$0xff]
    %v3668 = vld [vmem:[#allocation4 + $0x610] sm:$0xff]
    %v3669 = vld [vmem:[#allocation4 + $0x618] sm:$0xff]
    %v3670 = vld [vmem:[#allocation4 + $0x620] sm:$0xff]
    %v3671 = vld [vmem:[#allocation4 + $0x628] sm:$0xff]
    %v3672 = vld [vmem:[#allocation4 + $0x630] sm:$0xff]
    %v3673 = vld [vmem:[#allocation4 + $0x638] sm:$0xff]
    %v3674 = vld [vmem:[#allocation4 + $0x640] sm:$0xff]
    %v3675 = vld [vmem:[#allocation4 + $0x648] sm:$0xff]
    %v3676 = vld [vmem:[#allocation4 + $0x650] sm:$0xff]
    %v3677 = vld [vmem:[#allocation4 + $0x658] sm:$0xff]
    %v3678 = vld [vmem:[#allocation4 + $0x660] sm:$0xff]
    %v3679 = vld [vmem:[#allocation4 + $0x668] sm:$0xff]
    %v3680 = vld [vmem:[#allocation4 + $0x670] sm:$0xff]
    %v3681 = vld [vmem:[#allocation4 + $0x678] sm:$0xff]
    %v3682 = vld [vmem:[#allocation4 + $0x680] sm:$0xff]
    %v3683 = vld [vmem:[#allocation4 + $0x688] sm:$0xff]
    %v3684 = vld [vmem:[#allocation4 + $0x690] sm:$0xff]
    %v3685 = vld [vmem:[#allocation4 + $0x698] sm:$0xff]
    %v3686 = vld [vmem:[#allocation4 + $0x6a0] sm:$0xff]
    %v3687 = vld [vmem:[#allocation4 + $0x6a8] sm:$0xff]
    %v3688 = vld [vmem:[#allocation4 + $0x6b0] sm:$0xff]
    %v3689 = vld [vmem:[#allocation4 + $0x6b8] sm:$0xff]
    %v3690 = vld [vmem:[#allocation4 + $0x6c0] sm:$0xff]
    %v3691 = vld [vmem:[#allocation4 + $0x6c8] sm:$0xff]
    %v3692 = vld [vmem:[#allocation4 + $0x6d0] sm:$0xff]
    %v3693 = vld [vmem:[#allocation4 + $0x6d8] sm:$0xff]
    %v3694 = vld [vmem:[#allocation4 + $0x6e0] sm:$0xff]
    %v3695 = vld [vmem:[#allocation4 + $0x6e8] sm:$0xff]
    %v3696 = vld [vmem:[#allocation4 + $0x6f0] sm:$0xff]
    %v3697 = vld [vmem:[#allocation4 + $0x6f8] sm:$0xff]
    %v3698 = vld [vmem:[#allocation4 + $0x700] sm:$0xff]
    %v3699 = vld [vmem:[#allocation4 + $0x708] sm:$0xff]
    %v3700 = vld [vmem:[#allocation4 + $0x710] sm:$0xff]
    %v3701 = vld [vmem:[#allocation4 + $0x718] sm:$0xff]
    %v3702 = vld [vmem:[#allocation4 + $0x720] sm:$0xff]
    %v3703 = vld [vmem:[#allocation4 + $0x728] sm:$0xff]
    %v3704 = vld [vmem:[#allocation4 + $0x730] sm:$0xff]
    %v3705 = vld [vmem:[#allocation4 + $0x738] sm:$0xff]
    %v3706 = vld [vmem:[#allocation4 + $0x740] sm:$0xff]
    %v3707 = vld [vmem:[#allocation4 + $0x748] sm:$0xff]
    %v3708 = vld [vmem:[#allocation4 + $0x750] sm:$0xff]
    %v3709 = vld [vmem:[#allocation4 + $0x758] sm:$0xff]
    %v3710 = vld [vmem:[#allocation4 + $0x760] sm:$0xff]
    %v3711 = vld [vmem:[#allocation4 + $0x768] sm:$0xff]
    %v3712 = vld [vmem:[#allocation4 + $0x770] sm:$0xff]
    %v3713 = vld [vmem:[#allocation4 + $0x778] sm:$0xff]
    %v3714 = vld [vmem:[#allocation4 + $0x780] sm:$0xff]
    %v3715 = vld [vmem:[#allocation4 + $0x788] sm:$0xff]
    %v3716 = vld [vmem:[#allocation4 + $0x790] sm:$0xff]
    %v3717 = vld [vmem:[#allocation4 + $0x798] sm:$0xff]
    %v3718 = vld [vmem:[#allocation4 + $0x7a0] sm:$0xff]
    %v3719 = vld [vmem:[#allocation4 + $0x7a8] sm:$0xff]
    %v3720 = vld [vmem:[#allocation4 + $0x7b0] sm:$0xff]
    %v3721 = vld [vmem:[#allocation4 + $0x7b8] sm:$0xff]
    %v3722 = vld [vmem:[#allocation4 + $0x7c0] sm:$0xff]
    %v3723 = vld [vmem:[#allocation4 + $0x7c8] sm:$0xff]
    %v3724 = vld [vmem:[#allocation4 + $0x7d0] sm:$0xff]
    %v3725 = vld [vmem:[#allocation4 + $0x7d8] sm:$0xff]
    %v3726 = vld [vmem:[#allocation4 + $0x7e0] sm:$0xff]
    %v3727 = vld [vmem:[#allocation4 + $0x7e8] sm:$0xff]
    %v3728 = vld [vmem:[#allocation4 + $0x7f0] sm:$0xff]
    %v3729 = vld [vmem:[#allocation4 + $0x7f8] sm:$0xff]
    %3730 = vmatpush.msra.mxu0 %v3594
    %3731 = vmatpush.msra.mxu0 %v3586
    %3732 = vmatpush.msra.mxu0 %v3578
    %3733 = vmatpush.msra.mxu0 %v3570
    %3734 = vmatpush.msra.mxu0 %v3562
    %3735 = vmatpush.msra.mxu0 %v3554
    %3736 = vmatpush.msra.mxu0 %v3546
    %3737 = vmatpush.msra.mxu0 %v3538
    %3738 = vmatpush.msra.mxu0 %v3530
    %3739 = vmatpush.msra.mxu0 %v3522
    %3740 = vmatpush.msra.mxu0 %v3514
    %3741 = vmatpush.msra.mxu0 %v3506
    %3742 = vmatpush.msra.mxu0 %v3498
    %3743 = vmatpush.msra.mxu0 %v3490
    %3744 = vmatpush.msra.mxu0 %v3482
    %3745 = vmatpush.msra.mxu0 %v3474
    %3746 = vmatmul.f32.gmra.mxu0 %v3472
    %v3747 = vpop.f32.mrf.mxu0
    %v3748 = vadd.f32 0.0, %v3747
    %3749 = vdwg.mxu0
    %3750 = vmatpush.msra.mxu0 %v3722
    %3751 = vmatpush.msra.mxu0 %v3714
    %3752 = vmatpush.msra.mxu0 %v3706
    %3753 = vmatpush.msra.mxu0 %v3698
    %3754 = vmatpush.msra.mxu0 %v3690
    %3755 = vmatpush.msra.mxu0 %v3682
    %3756 = vmatpush.msra.mxu0 %v3674
    %3757 = vmatpush.msra.mxu0 %v3666
    %3758 = vmatpush.msra.mxu0 %v3658
    %3759 = vmatpush.msra.mxu0 %v3650
    %3760 = vmatpush.msra.mxu0 %v3642
    %3761 = vmatpush.msra.mxu0 %v3634
    %3762 = vmatpush.msra.mxu0 %v3626
    %3763 = vmatpush.msra.mxu0 %v3618
    %3764 = vmatpush.msra.mxu0 %v3610
    %3765 = vmatpush.msra.mxu0 %v3602
    %3766 = vmatmul.f32.gmra.mxu0 %v3473
    %v3767 = vpop.f32.mrf.mxu0
    %v3768 = vadd.f32 %v3748, %v3767
    %3769 = vdwg.mxu0
    %3770 = vmatpush.msra.mxu0 %v3595
    %3771 = vmatpush.msra.mxu0 %v3587
    %3772 = vmatpush.msra.mxu0 %v3579
    %3773 = vmatpush.msra.mxu0 %v3571
    %3774 = vmatpush.msra.mxu0 %v3563
    %3775 = vmatpush.msra.mxu0 %v3555
    %3776 = vmatpush.msra.mxu0 %v3547
    %3777 = vmatpush.msra.mxu0 %v3539
    %3778 = vmatpush.msra.mxu0 %v3531
    %3779 = vmatpush.msra.mxu0 %v3523
    %3780 = vmatpush.msra.mxu0 %v3515
    %3781 = vmatpush.msra.mxu0 %v3507
    %3782 = vmatpush.msra.mxu0 %v3499
    %3783 = vmatpush.msra.mxu0 %v3491
    %3784 = vmatpush.msra.mxu0 %v3483
    %3785 = vmatpush.msra.mxu0 %v3475
    %3786 = vmatmul.f32.gmra.mxu0 %v3472
    %v3787 = vpop.f32.mrf.mxu0
    %v3788 = vadd.f32 0.0, %v3787
    %3789 = vdwg.mxu0
    %3790 = vmatpush.msra.mxu0 %v3723
    %3791 = vmatpush.msra.mxu0 %v3715
    %3792 = vmatpush.msra.mxu0 %v3707
    %3793 = vmatpush.msra.mxu0 %v3699
    %3794 = vmatpush.msra.mxu0 %v3691
    %3795 = vmatpush.msra.mxu0 %v3683
    %3796 = vmatpush.msra.mxu0 %v3675
    %3797 = vmatpush.msra.mxu0 %v3667
    %3798 = vmatpush.msra.mxu0 %v3659
    %3799 = vmatpush.msra.mxu0 %v3651
    %3800 = vmatpush.msra.mxu0 %v3643
    %3801 = vmatpush.msra.mxu0 %v3635
    %3802 = vmatpush.msra.mxu0 %v3627
    %3803 = vmatpush.msra.mxu0 %v3619
    %3804 = vmatpush.msra.mxu0 %v3611
    %3805 = vmatpush.msra.mxu0 %v3603
    %3806 = vmatmul.f32.gmra.mxu0 %v3473
    %v3807 = vpop.f32.mrf.mxu0
    %v3808 = vadd.f32 %v3788, %v3807
    %3809 = vdwg.mxu0
    %3810 = vmatpush.msra.mxu0 %v3596
    %3811 = vmatpush.msra.mxu0 %v3588
    %3812 = vmatpush.msra.mxu0 %v3580
    %3813 = vmatpush.msra.mxu0 %v3572
    %3814 = vmatpush.msra.mxu0 %v3564
    %3815 = vmatpush.msra.mxu0 %v3556
    %3816 = vmatpush.msra.mxu0 %v3548
    %3817 = vmatpush.msra.mxu0 %v3540
    %3818 = vmatpush.msra.mxu0 %v3532
    %3819 = vmatpush.msra.mxu0 %v3524
    %3820 = vmatpush.msra.mxu0 %v3516
    %3821 = vmatpush.msra.mxu0 %v3508
    %3822 = vmatpush.msra.mxu0 %v3500
    %3823 = vmatpush.msra.mxu0 %v3492
    %3824 = vmatpush.msra.mxu0 %v3484
    %3825 = vmatpush.msra.mxu0 %v3476
    %3826 = vmatmul.f32.gmra.mxu0 %v3472
    %v3827 = vpop.f32.mrf.mxu0
    %v3828 = vadd.f32 0.0, %v3827
    %3829 = vdwg.mxu0
    %3830 = vmatpush.msra.mxu0 %v3724
    %3831 = vmatpush.msra.mxu0 %v3716
    %3832 = vmatpush.msra.mxu0 %v3708
    %3833 = vmatpush.msra.mxu0 %v3700
    %3834 = vmatpush.msra.mxu0 %v3692
    %3835 = vmatpush.msra.mxu0 %v3684
    %3836 = vmatpush.msra.mxu0 %v3676
    %3837 = vmatpush.msra.mxu0 %v3668
    %3838 = vmatpush.msra.mxu0 %v3660
    %3839 = vmatpush.msra.mxu0 %v3652
    %3840 = vmatpush.msra.mxu0 %v3644
    %3841 = vmatpush.msra.mxu0 %v3636
    %3842 = vmatpush.msra.mxu0 %v3628
    %3843 = vmatpush.msra.mxu0 %v3620
    %3844 = vmatpush.msra.mxu0 %v3612
    %3845 = vmatpush.msra.mxu0 %v3604
    %3846 = vmatmul.f32.gmra.mxu0 %v3473
    %v3847 = vpop.f32.mrf.mxu0
    %v3848 = vadd.f32 %v3828, %v3847
    %3849 = vdwg.mxu0
    %3850 = vmatpush.msra.mxu0 %v3597
    %3851 = vmatpush.msra.mxu0 %v3589
    %3852 = vmatpush.msra.mxu0 %v3581
    %3853 = vmatpush.msra.mxu0 %v3573
    %3854 = vmatpush.msra.mxu0 %v3565
    %3855 = vmatpush.msra.mxu0 %v3557
    %3856 = vmatpush.msra.mxu0 %v3549
    %3857 = vmatpush.msra.mxu0 %v3541
    %3858 = vmatpush.msra.mxu0 %v3533
    %3859 = vmatpush.msra.mxu0 %v3525
    %3860 = vmatpush.msra.mxu0 %v3517
    %3861 = vmatpush.msra.mxu0 %v3509
    %3862 = vmatpush.msra.mxu0 %v3501
    %3863 = vmatpush.msra.mxu0 %v3493
    %3864 = vmatpush.msra.mxu0 %v3485
    %3865 = vmatpush.msra.mxu0 %v3477
    %3866 = vmatmul.f32.gmra.mxu0 %v3472
    %v3867 = vpop.f32.mrf.mxu0
    %v3868 = vadd.f32 0.0, %v3867
    %3869 = vdwg.mxu0
    %3870 = vmatpush.msra.mxu0 %v3725
    %3871 = vmatpush.msra.mxu0 %v3717
    %3872 = vmatpush.msra.mxu0 %v3709
    %3873 = vmatpush.msra.mxu0 %v3701
    %3874 = vmatpush.msra.mxu0 %v3693
    %3875 = vmatpush.msra.mxu0 %v3685
    %3876 = vmatpush.msra.mxu0 %v3677
    %3877 = vmatpush.msra.mxu0 %v3669
    %3878 = vmatpush.msra.mxu0 %v3661
    %3879 = vmatpush.msra.mxu0 %v3653
    %3880 = vmatpush.msra.mxu0 %v3645
    %3881 = vmatpush.msra.mxu0 %v3637
    %3882 = vmatpush.msra.mxu0 %v3629
    %3883 = vmatpush.msra.mxu0 %v3621
    %3884 = vmatpush.msra.mxu0 %v3613
    %3885 = vmatpush.msra.mxu0 %v3605
    %3886 = vmatmul.f32.gmra.mxu0 %v3473
    %v3887 = vpop.f32.mrf.mxu0
    %v3888 = vadd.f32 %v3868, %v3887
    %3889 = vdwg.mxu0
    %3890 = vmatpush.msra.mxu0 %v3598
    %3891 = vmatpush.msra.mxu0 %v3590
    %3892 = vmatpush.msra.mxu0 %v3582
    %3893 = vmatpush.msra.mxu0 %v3574
    %3894 = vmatpush.msra.mxu0 %v3566
    %3895 = vmatpush.msra.mxu0 %v3558
    %3896 = vmatpush.msra.mxu0 %v3550
    %3897 = vmatpush.msra.mxu0 %v3542
    %3898 = vmatpush.msra.mxu0 %v3534
    %3899 = vmatpush.msra.mxu0 %v3526
    %3900 = vmatpush.msra.mxu0 %v3518
    %3901 = vmatpush.msra.mxu0 %v3510
    %3902 = vmatpush.msra.mxu0 %v3502
    %3903 = vmatpush.msra.mxu0 %v3494
    %3904 = vmatpush.msra.mxu0 %v3486
    %3905 = vmatpush.msra.mxu0 %v3478
    %3906 = vmatmul.f32.gmra.mxu0 %v3472
    %v3907 = vpop.f32.mrf.mxu0
    %v3908 = vadd.f32 0.0, %v3907
    %3909 = vdwg.mxu0
    %3910 = vmatpush.msra.mxu0 %v3726
    %3911 = vmatpush.msra.mxu0 %v3718
    %3912 = vmatpush.msra.mxu0 %v3710
    %3913 = vmatpush.msra.mxu0 %v3702
    %3914 = vmatpush.msra.mxu0 %v3694
    %3915 = vmatpush.msra.mxu0 %v3686
    %3916 = vmatpush.msra.mxu0 %v3678
    %3917 = vmatpush.msra.mxu0 %v3670
    %3918 = vmatpush.msra.mxu0 %v3662
    %3919 = vmatpush.msra.mxu0 %v3654
    %3920 = vmatpush.msra.mxu0 %v3646
    %3921 = vmatpush.msra.mxu0 %v3638
    %3922 = vmatpush.msra.mxu0 %v3630
    %3923 = vmatpush.msra.mxu0 %v3622
    %3924 = vmatpush.msra.mxu0 %v3614
    %3925 = vmatpush.msra.mxu0 %v3606
    %3926 = vmatmul.f32.gmra.mxu0 %v3473
    %v3927 = vpop.f32.mrf.mxu0
    %v3928 = vadd.f32 %v3908, %v3927
    %3929 = vdwg.mxu0
    %3930 = vmatpush.msra.mxu0 %v3599
    %3931 = vmatpush.msra.mxu0 %v3591
    %3932 = vmatpush.msra.mxu0 %v3583
    %3933 = vmatpush.msra.mxu0 %v3575
    %3934 = vmatpush.msra.mxu0 %v3567
    %3935 = vmatpush.msra.mxu0 %v3559
    %3936 = vmatpush.msra.mxu0 %v3551
    %3937 = vmatpush.msra.mxu0 %v3543
    %3938 = vmatpush.msra.mxu0 %v3535
    %3939 = vmatpush.msra.mxu0 %v3527
    %3940 = vmatpush.msra.mxu0 %v3519
    %3941 = vmatpush.msra.mxu0 %v3511
    %3942 = vmatpush.msra.mxu0 %v3503
    %3943 = vmatpush.msra.mxu0 %v3495
    %3944 = vmatpush.msra.mxu0 %v3487
    %3945 = vmatpush.msra.mxu0 %v3479
    %3946 = vmatmul.f32.gmra.mxu0 %v3472
    %v3947 = vpop.f32.mrf.mxu0
    %v3948 = vadd.f32 0.0, %v3947
    %3949 = vdwg.mxu0
    %3950 = vmatpush.msra.mxu0 %v3727
    %3951 = vmatpush.msra.mxu0 %v3719
    %3952 = vmatpush.msra.mxu0 %v3711
    %3953 = vmatpush.msra.mxu0 %v3703
    %3954 = vmatpush.msra.mxu0 %v3695
    %3955 = vmatpush.msra.mxu0 %v3687
    %3956 = vmatpush.msra.mxu0 %v3679
    %3957 = vmatpush.msra.mxu0 %v3671
    %3958 = vmatpush.msra.mxu0 %v3663
    %3959 = vmatpush.msra.mxu0 %v3655
    %3960 = vmatpush.msra.mxu0 %v3647
    %3961 = vmatpush.msra.mxu0 %v3639
    %3962 = vmatpush.msra.mxu0 %v3631
    %3963 = vmatpush.msra.mxu0 %v3623
    %3964 = vmatpush.msra.mxu0 %v3615
    %3965 = vmatpush.msra.mxu0 %v3607
    %3966 = vmatmul.f32.gmra.mxu0 %v3473
    %v3967 = vpop.f32.mrf.mxu0
    %v3968 = vadd.f32 %v3948, %v3967
    %3969 = vdwg.mxu0
    %3970 = vmatpush.msra.mxu0 %v3600
    %3971 = vmatpush.msra.mxu0 %v3592
    %3972 = vmatpush.msra.mxu0 %v3584
    %3973 = vmatpush.msra.mxu0 %v3576
    %3974 = vmatpush.msra.mxu0 %v3568
    %3975 = vmatpush.msra.mxu0 %v3560
    %3976 = vmatpush.msra.mxu0 %v3552
    %3977 = vmatpush.msra.mxu0 %v3544
    %3978 = vmatpush.msra.mxu0 %v3536
    %3979 = vmatpush.msra.mxu0 %v3528
    %3980 = vmatpush.msra.mxu0 %v3520
    %3981 = vmatpush.msra.mxu0 %v3512
    %3982 = vmatpush.msra.mxu0 %v3504
    %3983 = vmatpush.msra.mxu0 %v3496
    %3984 = vmatpush.msra.mxu0 %v3488
    %3985 = vmatpush.msra.mxu0 %v3480
    %3986 = vmatmul.f32.gmra.mxu0 %v3472
    %v3987 = vpop.f32.mrf.mxu0
    %v3988 = vadd.f32 0.0, %v3987
    %3989 = vdwg.mxu0
    %3990 = vmatpush.msra.mxu0 %v3728
    %3991 = vmatpush.msra.mxu0 %v3720
    %3992 = vmatpush.msra.mxu0 %v3712
    %3993 = vmatpush.msra.mxu0 %v3704
    %3994 = vmatpush.msra.mxu0 %v3696
    %3995 = vmatpush.msra.mxu0 %v3688
    %3996 = vmatpush.msra.mxu0 %v3680
    %3997 = vmatpush.msra.mxu0 %v3672
    %3998 = vmatpush.msra.mxu0 %v3664
    %3999 = vmatpush.msra.mxu0 %v3656
    %4000 = vmatpush.msra.mxu0 %v3648
    %4001 = vmatpush.msra.mxu0 %v3640
    %4002 = vmatpush.msra.mxu0 %v3632
    %4003 = vmatpush.msra.mxu0 %v3624
    %4004 = vmatpush.msra.mxu0 %v3616
    %4005 = vmatpush.msra.mxu0 %v3608
    %4006 = vmatmul.f32.gmra.mxu0 %v3473
    %v4007 = vpop.f32.mrf.mxu0
    %v4008 = vadd.f32 %v3988, %v4007
    %4009 = vdwg.mxu0
    %4010 = vmatpush.msra.mxu0 %v3601
    %4011 = vmatpush.msra.mxu0 %v3593
    %4012 = vmatpush.msra.mxu0 %v3585
    %4013 = vmatpush.msra.mxu0 %v3577
    %4014 = vmatpush.msra.mxu0 %v3569
    %4015 = vmatpush.msra.mxu0 %v3561
    %4016 = vmatpush.msra.mxu0 %v3553
    %4017 = vmatpush.msra.mxu0 %v3545
    %4018 = vmatpush.msra.mxu0 %v3537
    %4019 = vmatpush.msra.mxu0 %v3529
    %4020 = vmatpush.msra.mxu0 %v3521
    %4021 = vmatpush.msra.mxu0 %v3513
    %4022 = vmatpush.msra.mxu0 %v3505
    %4023 = vmatpush.msra.mxu0 %v3497
    %4024 = vmatpush.msra.mxu0 %v3489
    %4025 = vmatpush.msra.mxu0 %v3481
    %4026 = vmatmul.f32.gmra.mxu0 %v3472
    %v4027 = vpop.f32.mrf.mxu0
    %v4028 = vadd.f32 0.0, %v4027
    %4029 = vdwg.mxu0
    %4030 = vmatpush.msra.mxu0 %v3729
    %4031 = vmatpush.msra.mxu0 %v3721
    %4032 = vmatpush.msra.mxu0 %v3713
    %4033 = vmatpush.msra.mxu0 %v3705
    %4034 = vmatpush.msra.mxu0 %v3697
    %4035 = vmatpush.msra.mxu0 %v3689
    %4036 = vmatpush.msra.mxu0 %v3681
    %4037 = vmatpush.msra.mxu0 %v3673
    %4038 = vmatpush.msra.mxu0 %v3665
    %4039 = vmatpush.msra.mxu0 %v3657
    %4040 = vmatpush.msra.mxu0 %v3649
    %4041 = vmatpush.msra.mxu0 %v3641
    %4042 = vmatpush.msra.mxu0 %v3633
    %4043 = vmatpush.msra.mxu0 %v3625
    %4044 = vmatpush.msra.mxu0 %v3617
    %4045 = vmatpush.msra.mxu0 %v3609
    %4046 = vmatmul.f32.gmra.mxu0 %v3473
    %v4047 = vpop.f32.mrf.mxu0
    %v4048 = vadd.f32 %v4028, %v4047
    %4049 = vdwg.mxu0
    %v4050 = vadd.f32 %v3928, %v285
    %v4051 = vadd.f32 %v3968, %v286
    %v4052 = vadd.f32 %v4008, %v287
    %v4053 = vadd.f32 %v4048, %v288
    %v4054 = vmul.f32 %v4050, 0.5
    %v4055 = vtanh.pop %v4054
    %v4056 = vmul.f32 %v4055, 0.5
    %v4057 = vadd.f32 %v4056, 0.5
    %v4058 = vmul.f32 %v4051, 0.5
    %v4059 = vtanh.pop %v4058
    %v4060 = vmul.f32 %v4059, 0.5
    %v4061 = vadd.f32 %v4060, 0.5
    %v4062 = vtanh.pop %v4052
    %v4063 = vmul.f32 %v4053, 0.5
    %v4064 = vtanh.pop %v4063
    %v4065 = vmul.f32 %v4064, 0.5
    %v4066 = vadd.f32 %v4065, 0.5
    %v4067 = vmul.f32 %v4061, %v3438
    %v4068 = vmul.f32 %v4057, %v4062
    %v4069 = vadd.f32 %v4067, %v4068
    %v4070 = vtanh.pop %v4069
    %v4071 = vmul.f32 %v4066, %v4070
    %s4072 = smul.u32 6, 4
    %s4073 = smul.addr %s4072, 8
    %s4074 = scalar_lea.vmem [#allocation2], %s4073
    %v4075 = vld [vmem:[%s4074] sm:$0xff]
    %v4076 = vld [vmem:[%s4074 + $0x8] sm:$0xff]
    %v4077 = vld [vmem:[%s4074 + $0x10] sm:$0xff]
    %v4078 = vld [vmem:[%s4074 + $0x18] sm:$0xff]
    %v4079 = vadd.f32 %v4075, %v3768
    %v4080 = vadd.f32 %v4076, %v3808
    %v4081 = vadd.f32 %v4077, %v3848
    %v4082 = vadd.f32 %v4078, %v3888
    %v4083 = vmul.f32 %v4079, 0.5
    %v4084 = vtanh.pop %v4083
    %v4085 = vmul.f32 %v4084, 0.5
    %v4086 = vadd.f32 %v4085, 0.5
    %v4087 = vmul.f32 %v4080, 0.5
    %v4088 = vtanh.pop %v4087
    %v4089 = vmul.f32 %v4088, 0.5
    %v4090 = vadd.f32 %v4089, 0.5
    %v4091 = vtanh.pop %v4081
    %v4092 = vmul.f32 %v4082, 0.5
    %v4093 = vtanh.pop %v4092
    %v4094 = vmul.f32 %v4093, 0.5
    %v4095 = vadd.f32 %v4094, 0.5
    %v4096 = vmul.f32 %v4090, %v3467
    %v4097 = vmul.f32 %v4086, %v4091
    %v4098 = vadd.f32 %v4096, %v4097
    %v4099 = vtanh.pop %v4098
    %v4100 = vmul.f32 %v4095, %v4099
    %4101 = vst [vmem:[#allocation3] sm:$0xff] %v4100
    %4102 = vst [vmem:[#allocation3 + $0x8] sm:$0xff] %v4071
    %v4103 = vld [vmem:[#allocation3] sm:$0xff]
    %v4104 = vld [vmem:[#allocation3 + $0x8] sm:$0xff]
    %v4105 = vld [vmem:[#allocation4] sm:$0xff]
    %v4106 = vld [vmem:[#allocation4 + $0x8] sm:$0xff]
    %v4107 = vld [vmem:[#allocation4 + $0x10] sm:$0xff]
    %v4108 = vld [vmem:[#allocation4 + $0x18] sm:$0xff]
    %v4109 = vld [vmem:[#allocation4 + $0x20] sm:$0xff]
    %v4110 = vld [vmem:[#allocation4 + $0x28] sm:$0xff]
    %v4111 = vld [vmem:[#allocation4 + $0x30] sm:$0xff]
    %v4112 = vld [vmem:[#allocation4 + $0x38] sm:$0xff]
    %v4113 = vld [vmem:[#allocation4 + $0x40] sm:$0xff]
    %v4114 = vld [vmem:[#allocation4 + $0x48] sm:$0xff]
    %v4115 = vld [vmem:[#allocation4 + $0x50] sm:$0xff]
    %v4116 = vld [vmem:[#allocation4 + $0x58] sm:$0xff]
    %v4117 = vld [vmem:[#allocation4 + $0x60] sm:$0xff]
    %v4118 = vld [vmem:[#allocation4 + $0x68] sm:$0xff]
    %v4119 = vld [vmem:[#allocation4 + $0x70] sm:$0xff]
    %v4120 = vld [vmem:[#allocation4 + $0x78] sm:$0xff]
    %v4121 = vld [vmem:[#allocation4 + $0x80] sm:$0xff]
    %v4122 = vld [vmem:[#allocation4 + $0x88] sm:$0xff]
    %v4123 = vld [vmem:[#allocation4 + $0x90] sm:$0xff]
    %v4124 = vld [vmem:[#allocation4 + $0x98] sm:$0xff]
    %v4125 = vld [vmem:[#allocation4 + $0xa0] sm:$0xff]
    %v4126 = vld [vmem:[#allocation4 + $0xa8] sm:$0xff]
    %v4127 = vld [vmem:[#allocation4 + $0xb0] sm:$0xff]
    %v4128 = vld [vmem:[#allocation4 + $0xb8] sm:$0xff]
    %v4129 = vld [vmem:[#allocation4 + $0xc0] sm:$0xff]
    %v4130 = vld [vmem:[#allocation4 + $0xc8] sm:$0xff]
    %v4131 = vld [vmem:[#allocation4 + $0xd0] sm:$0xff]
    %v4132 = vld [vmem:[#allocation4 + $0xd8] sm:$0xff]
    %v4133 = vld [vmem:[#allocation4 + $0xe0] sm:$0xff]
    %v4134 = vld [vmem:[#allocation4 + $0xe8] sm:$0xff]
    %v4135 = vld [vmem:[#allocation4 + $0xf0] sm:$0xff]
    %v4136 = vld [vmem:[#allocation4 + $0xf8] sm:$0xff]
    %v4137 = vld [vmem:[#allocation4 + $0x100] sm:$0xff]
    %v4138 = vld [vmem:[#allocation4 + $0x108] sm:$0xff]
    %v4139 = vld [vmem:[#allocation4 + $0x110] sm:$0xff]
    %v4140 = vld [vmem:[#allocation4 + $0x118] sm:$0xff]
    %v4141 = vld [vmem:[#allocation4 + $0x120] sm:$0xff]
    %v4142 = vld [vmem:[#allocation4 + $0x128] sm:$0xff]
    %v4143 = vld [vmem:[#allocation4 + $0x130] sm:$0xff]
    %v4144 = vld [vmem:[#allocation4 + $0x138] sm:$0xff]
    %v4145 = vld [vmem:[#allocation4 + $0x140] sm:$0xff]
    %v4146 = vld [vmem:[#allocation4 + $0x148] sm:$0xff]
    %v4147 = vld [vmem:[#allocation4 + $0x150] sm:$0xff]
    %v4148 = vld [vmem:[#allocation4 + $0x158] sm:$0xff]
    %v4149 = vld [vmem:[#allocation4 + $0x160] sm:$0xff]
    %v4150 = vld [vmem:[#allocation4 + $0x168] sm:$0xff]
    %v4151 = vld [vmem:[#allocation4 + $0x170] sm:$0xff]
    %v4152 = vld [vmem:[#allocation4 + $0x178] sm:$0xff]
    %v4153 = vld [vmem:[#allocation4 + $0x180] sm:$0xff]
    %v4154 = vld [vmem:[#allocation4 + $0x188] sm:$0xff]
    %v4155 = vld [vmem:[#allocation4 + $0x190] sm:$0xff]
    %v4156 = vld [vmem:[#allocation4 + $0x198] sm:$0xff]
    %v4157 = vld [vmem:[#allocation4 + $0x1a0] sm:$0xff]
    %v4158 = vld [vmem:[#allocation4 + $0x1a8] sm:$0xff]
    %v4159 = vld [vmem:[#allocation4 + $0x1b0] sm:$0xff]
    %v4160 = vld [vmem:[#allocation4 + $0x1b8] sm:$0xff]
    %v4161 = vld [vmem:[#allocation4 + $0x1c0] sm:$0xff]
    %v4162 = vld [vmem:[#allocation4 + $0x1c8] sm:$0xff]
    %v4163 = vld [vmem:[#allocation4 + $0x1d0] sm:$0xff]
    %v4164 = vld [vmem:[#allocation4 + $0x1d8] sm:$0xff]
    %v4165 = vld [vmem:[#allocation4 + $0x1e0] sm:$0xff]
    %v4166 = vld [vmem:[#allocation4 + $0x1e8] sm:$0xff]
    %v4167 = vld [vmem:[#allocation4 + $0x1f0] sm:$0xff]
    %v4168 = vld [vmem:[#allocation4 + $0x1f8] sm:$0xff]
    %v4169 = vld [vmem:[#allocation4 + $0x200] sm:$0xff]
    %v4170 = vld [vmem:[#allocation4 + $0x208] sm:$0xff]
    %v4171 = vld [vmem:[#allocation4 + $0x210] sm:$0xff]
    %v4172 = vld [vmem:[#allocation4 + $0x218] sm:$0xff]
    %v4173 = vld [vmem:[#allocation4 + $0x220] sm:$0xff]
    %v4174 = vld [vmem:[#allocation4 + $0x228] sm:$0xff]
    %v4175 = vld [vmem:[#allocation4 + $0x230] sm:$0xff]
    %v4176 = vld [vmem:[#allocation4 + $0x238] sm:$0xff]
    %v4177 = vld [vmem:[#allocation4 + $0x240] sm:$0xff]
    %v4178 = vld [vmem:[#allocation4 + $0x248] sm:$0xff]
    %v4179 = vld [vmem:[#allocation4 + $0x250] sm:$0xff]
    %v4180 = vld [vmem:[#allocation4 + $0x258] sm:$0xff]
    %v4181 = vld [vmem:[#allocation4 + $0x260] sm:$0xff]
    %v4182 = vld [vmem:[#allocation4 + $0x268] sm:$0xff]
    %v4183 = vld [vmem:[#allocation4 + $0x270] sm:$0xff]
    %v4184 = vld [vmem:[#allocation4 + $0x278] sm:$0xff]
    %v4185 = vld [vmem:[#allocation4 + $0x280] sm:$0xff]
    %v4186 = vld [vmem:[#allocation4 + $0x288] sm:$0xff]
    %v4187 = vld [vmem:[#allocation4 + $0x290] sm:$0xff]
    %v4188 = vld [vmem:[#allocation4 + $0x298] sm:$0xff]
    %v4189 = vld [vmem:[#allocation4 + $0x2a0] sm:$0xff]
    %v4190 = vld [vmem:[#allocation4 + $0x2a8] sm:$0xff]
    %v4191 = vld [vmem:[#allocation4 + $0x2b0] sm:$0xff]
    %v4192 = vld [vmem:[#allocation4 + $0x2b8] sm:$0xff]
    %v4193 = vld [vmem:[#allocation4 + $0x2c0] sm:$0xff]
    %v4194 = vld [vmem:[#allocation4 + $0x2c8] sm:$0xff]
    %v4195 = vld [vmem:[#allocation4 + $0x2d0] sm:$0xff]
    %v4196 = vld [vmem:[#allocation4 + $0x2d8] sm:$0xff]
    %v4197 = vld [vmem:[#allocation4 + $0x2e0] sm:$0xff]
    %v4198 = vld [vmem:[#allocation4 + $0x2e8] sm:$0xff]
    %v4199 = vld [vmem:[#allocation4 + $0x2f0] sm:$0xff]
    %v4200 = vld [vmem:[#allocation4 + $0x2f8] sm:$0xff]
    %v4201 = vld [vmem:[#allocation4 + $0x300] sm:$0xff]
    %v4202 = vld [vmem:[#allocation4 + $0x308] sm:$0xff]
    %v4203 = vld [vmem:[#allocation4 + $0x310] sm:$0xff]
    %v4204 = vld [vmem:[#allocation4 + $0x318] sm:$0xff]
    %v4205 = vld [vmem:[#allocation4 + $0x320] sm:$0xff]
    %v4206 = vld [vmem:[#allocation4 + $0x328] sm:$0xff]
    %v4207 = vld [vmem:[#allocation4 + $0x330] sm:$0xff]
    %v4208 = vld [vmem:[#allocation4 + $0x338] sm:$0xff]
    %v4209 = vld [vmem:[#allocation4 + $0x340] sm:$0xff]
    %v4210 = vld [vmem:[#allocation4 + $0x348] sm:$0xff]
    %v4211 = vld [vmem:[#allocation4 + $0x350] sm:$0xff]
    %v4212 = vld [vmem:[#allocation4 + $0x358] sm:$0xff]
    %v4213 = vld [vmem:[#allocation4 + $0x360] sm:$0xff]
    %v4214 = vld [vmem:[#allocation4 + $0x368] sm:$0xff]
    %v4215 = vld [vmem:[#allocation4 + $0x370] sm:$0xff]
    %v4216 = vld [vmem:[#allocation4 + $0x378] sm:$0xff]
    %v4217 = vld [vmem:[#allocation4 + $0x380] sm:$0xff]
    %v4218 = vld [vmem:[#allocation4 + $0x388] sm:$0xff]
    %v4219 = vld [vmem:[#allocation4 + $0x390] sm:$0xff]
    %v4220 = vld [vmem:[#allocation4 + $0x398] sm:$0xff]
    %v4221 = vld [vmem:[#allocation4 + $0x3a0] sm:$0xff]
    %v4222 = vld [vmem:[#allocation4 + $0x3a8] sm:$0xff]
    %v4223 = vld [vmem:[#allocation4 + $0x3b0] sm:$0xff]
    %v4224 = vld [vmem:[#allocation4 + $0x3b8] sm:$0xff]
    %v4225 = vld [vmem:[#allocation4 + $0x3c0] sm:$0xff]
    %v4226 = vld [vmem:[#allocation4 + $0x3c8] sm:$0xff]
    %v4227 = vld [vmem:[#allocation4 + $0x3d0] sm:$0xff]
    %v4228 = vld [vmem:[#allocation4 + $0x3d8] sm:$0xff]
    %v4229 = vld [vmem:[#allocation4 + $0x3e0] sm:$0xff]
    %v4230 = vld [vmem:[#allocation4 + $0x3e8] sm:$0xff]
    %v4231 = vld [vmem:[#allocation4 + $0x3f0] sm:$0xff]
    %v4232 = vld [vmem:[#allocation4 + $0x3f8] sm:$0xff]
    %v4233 = vld [vmem:[#allocation4 + $0x400] sm:$0xff]
    %v4234 = vld [vmem:[#allocation4 + $0x408] sm:$0xff]
    %v4235 = vld [vmem:[#allocation4 + $0x410] sm:$0xff]
    %v4236 = vld [vmem:[#allocation4 + $0x418] sm:$0xff]
    %v4237 = vld [vmem:[#allocation4 + $0x420] sm:$0xff]
    %v4238 = vld [vmem:[#allocation4 + $0x428] sm:$0xff]
    %v4239 = vld [vmem:[#allocation4 + $0x430] sm:$0xff]
    %v4240 = vld [vmem:[#allocation4 + $0x438] sm:$0xff]
    %v4241 = vld [vmem:[#allocation4 + $0x440] sm:$0xff]
    %v4242 = vld [vmem:[#allocation4 + $0x448] sm:$0xff]
    %v4243 = vld [vmem:[#allocation4 + $0x450] sm:$0xff]
    %v4244 = vld [vmem:[#allocation4 + $0x458] sm:$0xff]
    %v4245 = vld [vmem:[#allocation4 + $0x460] sm:$0xff]
    %v4246 = vld [vmem:[#allocation4 + $0x468] sm:$0xff]
    %v4247 = vld [vmem:[#allocation4 + $0x470] sm:$0xff]
    %v4248 = vld [vmem:[#allocation4 + $0x478] sm:$0xff]
    %v4249 = vld [vmem:[#allocation4 + $0x480] sm:$0xff]
    %v4250 = vld [vmem:[#allocation4 + $0x488] sm:$0xff]
    %v4251 = vld [vmem:[#allocation4 + $0x490] sm:$0xff]
    %v4252 = vld [vmem:[#allocation4 + $0x498] sm:$0xff]
    %v4253 = vld [vmem:[#allocation4 + $0x4a0] sm:$0xff]
    %v4254 = vld [vmem:[#allocation4 + $0x4a8] sm:$0xff]
    %v4255 = vld [vmem:[#allocation4 + $0x4b0] sm:$0xff]
    %v4256 = vld [vmem:[#allocation4 + $0x4b8] sm:$0xff]
    %v4257 = vld [vmem:[#allocation4 + $0x4c0] sm:$0xff]
    %v4258 = vld [vmem:[#allocation4 + $0x4c8] sm:$0xff]
    %v4259 = vld [vmem:[#allocation4 + $0x4d0] sm:$0xff]
    %v4260 = vld [vmem:[#allocation4 + $0x4d8] sm:$0xff]
    %v4261 = vld [vmem:[#allocation4 + $0x4e0] sm:$0xff]
    %v4262 = vld [vmem:[#allocation4 + $0x4e8] sm:$0xff]
    %v4263 = vld [vmem:[#allocation4 + $0x4f0] sm:$0xff]
    %v4264 = vld [vmem:[#allocation4 + $0x4f8] sm:$0xff]
    %v4265 = vld [vmem:[#allocation4 + $0x500] sm:$0xff]
    %v4266 = vld [vmem:[#allocation4 + $0x508] sm:$0xff]
    %v4267 = vld [vmem:[#allocation4 + $0x510] sm:$0xff]
    %v4268 = vld [vmem:[#allocation4 + $0x518] sm:$0xff]
    %v4269 = vld [vmem:[#allocation4 + $0x520] sm:$0xff]
    %v4270 = vld [vmem:[#allocation4 + $0x528] sm:$0xff]
    %v4271 = vld [vmem:[#allocation4 + $0x530] sm:$0xff]
    %v4272 = vld [vmem:[#allocation4 + $0x538] sm:$0xff]
    %v4273 = vld [vmem:[#allocation4 + $0x540] sm:$0xff]
    %v4274 = vld [vmem:[#allocation4 + $0x548] sm:$0xff]
    %v4275 = vld [vmem:[#allocation4 + $0x550] sm:$0xff]
    %v4276 = vld [vmem:[#allocation4 + $0x558] sm:$0xff]
    %v4277 = vld [vmem:[#allocation4 + $0x560] sm:$0xff]
    %v4278 = vld [vmem:[#allocation4 + $0x568] sm:$0xff]
    %v4279 = vld [vmem:[#allocation4 + $0x570] sm:$0xff]
    %v4280 = vld [vmem:[#allocation4 + $0x578] sm:$0xff]
    %v4281 = vld [vmem:[#allocation4 + $0x580] sm:$0xff]
    %v4282 = vld [vmem:[#allocation4 + $0x588] sm:$0xff]
    %v4283 = vld [vmem:[#allocation4 + $0x590] sm:$0xff]
    %v4284 = vld [vmem:[#allocation4 + $0x598] sm:$0xff]
    %v4285 = vld [vmem:[#allocation4 + $0x5a0] sm:$0xff]
    %v4286 = vld [vmem:[#allocation4 + $0x5a8] sm:$0xff]
    %v4287 = vld [vmem:[#allocation4 + $0x5b0] sm:$0xff]
    %v4288 = vld [vmem:[#allocation4 + $0x5b8] sm:$0xff]
    %v4289 = vld [vmem:[#allocation4 + $0x5c0] sm:$0xff]
    %v4290 = vld [vmem:[#allocation4 + $0x5c8] sm:$0xff]
    %v4291 = vld [vmem:[#allocation4 + $0x5d0] sm:$0xff]
    %v4292 = vld [vmem:[#allocation4 + $0x5d8] sm:$0xff]
    %v4293 = vld [vmem:[#allocation4 + $0x5e0] sm:$0xff]
    %v4294 = vld [vmem:[#allocation4 + $0x5e8] sm:$0xff]
    %v4295 = vld [vmem:[#allocation4 + $0x5f0] sm:$0xff]
    %v4296 = vld [vmem:[#allocation4 + $0x5f8] sm:$0xff]
    %v4297 = vld [vmem:[#allocation4 + $0x600] sm:$0xff]
    %v4298 = vld [vmem:[#allocation4 + $0x608] sm:$0xff]
    %v4299 = vld [vmem:[#allocation4 + $0x610] sm:$0xff]
    %v4300 = vld [vmem:[#allocation4 + $0x618] sm:$0xff]
    %v4301 = vld [vmem:[#allocation4 + $0x620] sm:$0xff]
    %v4302 = vld [vmem:[#allocation4 + $0x628] sm:$0xff]
    %v4303 = vld [vmem:[#allocation4 + $0x630] sm:$0xff]
    %v4304 = vld [vmem:[#allocation4 + $0x638] sm:$0xff]
    %v4305 = vld [vmem:[#allocation4 + $0x640] sm:$0xff]
    %v4306 = vld [vmem:[#allocation4 + $0x648] sm:$0xff]
    %v4307 = vld [vmem:[#allocation4 + $0x650] sm:$0xff]
    %v4308 = vld [vmem:[#allocation4 + $0x658] sm:$0xff]
    %v4309 = vld [vmem:[#allocation4 + $0x660] sm:$0xff]
    %v4310 = vld [vmem:[#allocation4 + $0x668] sm:$0xff]
    %v4311 = vld [vmem:[#allocation4 + $0x670] sm:$0xff]
    %v4312 = vld [vmem:[#allocation4 + $0x678] sm:$0xff]
    %v4313 = vld [vmem:[#allocation4 + $0x680] sm:$0xff]
    %v4314 = vld [vmem:[#allocation4 + $0x688] sm:$0xff]
    %v4315 = vld [vmem:[#allocation4 + $0x690] sm:$0xff]
    %v4316 = vld [vmem:[#allocation4 + $0x698] sm:$0xff]
    %v4317 = vld [vmem:[#allocation4 + $0x6a0] sm:$0xff]
    %v4318 = vld [vmem:[#allocation4 + $0x6a8] sm:$0xff]
    %v4319 = vld [vmem:[#allocation4 + $0x6b0] sm:$0xff]
    %v4320 = vld [vmem:[#allocation4 + $0x6b8] sm:$0xff]
    %v4321 = vld [vmem:[#allocation4 + $0x6c0] sm:$0xff]
    %v4322 = vld [vmem:[#allocation4 + $0x6c8] sm:$0xff]
    %v4323 = vld [vmem:[#allocation4 + $0x6d0] sm:$0xff]
    %v4324 = vld [vmem:[#allocation4 + $0x6d8] sm:$0xff]
    %v4325 = vld [vmem:[#allocation4 + $0x6e0] sm:$0xff]
    %v4326 = vld [vmem:[#allocation4 + $0x6e8] sm:$0xff]
    %v4327 = vld [vmem:[#allocation4 + $0x6f0] sm:$0xff]
    %v4328 = vld [vmem:[#allocation4 + $0x6f8] sm:$0xff]
    %v4329 = vld [vmem:[#allocation4 + $0x700] sm:$0xff]
    %v4330 = vld [vmem:[#allocation4 + $0x708] sm:$0xff]
    %v4331 = vld [vmem:[#allocation4 + $0x710] sm:$0xff]
    %v4332 = vld [vmem:[#allocation4 + $0x718] sm:$0xff]
    %v4333 = vld [vmem:[#allocation4 + $0x720] sm:$0xff]
    %v4334 = vld [vmem:[#allocation4 + $0x728] sm:$0xff]
    %v4335 = vld [vmem:[#allocation4 + $0x730] sm:$0xff]
    %v4336 = vld [vmem:[#allocation4 + $0x738] sm:$0xff]
    %v4337 = vld [vmem:[#allocation4 + $0x740] sm:$0xff]
    %v4338 = vld [vmem:[#allocation4 + $0x748] sm:$0xff]
    %v4339 = vld [vmem:[#allocation4 + $0x750] sm:$0xff]
    %v4340 = vld [vmem:[#allocation4 + $0x758] sm:$0xff]
    %v4341 = vld [vmem:[#allocation4 + $0x760] sm:$0xff]
    %v4342 = vld [vmem:[#allocation4 + $0x768] sm:$0xff]
    %v4343 = vld [vmem:[#allocation4 + $0x770] sm:$0xff]
    %v4344 = vld [vmem:[#allocation4 + $0x778] sm:$0xff]
    %v4345 = vld [vmem:[#allocation4 + $0x780] sm:$0xff]
    %v4346 = vld [vmem:[#allocation4 + $0x788] sm:$0xff]
    %v4347 = vld [vmem:[#allocation4 + $0x790] sm:$0xff]
    %v4348 = vld [vmem:[#allocation4 + $0x798] sm:$0xff]
    %v4349 = vld [vmem:[#allocation4 + $0x7a0] sm:$0xff]
    %v4350 = vld [vmem:[#allocation4 + $0x7a8] sm:$0xff]
    %v4351 = vld [vmem:[#allocation4 + $0x7b0] sm:$0xff]
    %v4352 = vld [vmem:[#allocation4 + $0x7b8] sm:$0xff]
    %v4353 = vld [vmem:[#allocation4 + $0x7c0] sm:$0xff]
    %v4354 = vld [vmem:[#allocation4 + $0x7c8] sm:$0xff]
    %v4355 = vld [vmem:[#allocation4 + $0x7d0] sm:$0xff]
    %v4356 = vld [vmem:[#allocation4 + $0x7d8] sm:$0xff]
    %v4357 = vld [vmem:[#allocation4 + $0x7e0] sm:$0xff]
    %v4358 = vld [vmem:[#allocation4 + $0x7e8] sm:$0xff]
    %v4359 = vld [vmem:[#allocation4 + $0x7f0] sm:$0xff]
    %v4360 = vld [vmem:[#allocation4 + $0x7f8] sm:$0xff]
    %4361 = vmatpush.msra.mxu0 %v4225
    %4362 = vmatpush.msra.mxu0 %v4217
    %4363 = vmatpush.msra.mxu0 %v4209
    %4364 = vmatpush.msra.mxu0 %v4201
    %4365 = vmatpush.msra.mxu0 %v4193
    %4366 = vmatpush.msra.mxu0 %v4185
    %4367 = vmatpush.msra.mxu0 %v4177
    %4368 = vmatpush.msra.mxu0 %v4169
    %4369 = vmatpush.msra.mxu0 %v4161
    %4370 = vmatpush.msra.mxu0 %v4153
    %4371 = vmatpush.msra.mxu0 %v4145
    %4372 = vmatpush.msra.mxu0 %v4137
    %4373 = vmatpush.msra.mxu0 %v4129
    %4374 = vmatpush.msra.mxu0 %v4121
    %4375 = vmatpush.msra.mxu0 %v4113
    %4376 = vmatpush.msra.mxu0 %v4105
    %4377 = vmatmul.f32.gmra.mxu0 %v4103
    %v4378 = vpop.f32.mrf.mxu0
    %v4379 = vadd.f32 0.0, %v4378
    %4380 = vdwg.mxu0
    %4381 = vmatpush.msra.mxu0 %v4353
    %4382 = vmatpush.msra.mxu0 %v4345
    %4383 = vmatpush.msra.mxu0 %v4337
    %4384 = vmatpush.msra.mxu0 %v4329
    %4385 = vmatpush.msra.mxu0 %v4321
    %4386 = vmatpush.msra.mxu0 %v4313
    %4387 = vmatpush.msra.mxu0 %v4305
    %4388 = vmatpush.msra.mxu0 %v4297
    %4389 = vmatpush.msra.mxu0 %v4289
    %4390 = vmatpush.msra.mxu0 %v4281
    %4391 = vmatpush.msra.mxu0 %v4273
    %4392 = vmatpush.msra.mxu0 %v4265
    %4393 = vmatpush.msra.mxu0 %v4257
    %4394 = vmatpush.msra.mxu0 %v4249
    %4395 = vmatpush.msra.mxu0 %v4241
    %4396 = vmatpush.msra.mxu0 %v4233
    %4397 = vmatmul.f32.gmra.mxu0 %v4104
    %v4398 = vpop.f32.mrf.mxu0
    %v4399 = vadd.f32 %v4379, %v4398
    %4400 = vdwg.mxu0
    %4401 = vmatpush.msra.mxu0 %v4226
    %4402 = vmatpush.msra.mxu0 %v4218
    %4403 = vmatpush.msra.mxu0 %v4210
    %4404 = vmatpush.msra.mxu0 %v4202
    %4405 = vmatpush.msra.mxu0 %v4194
    %4406 = vmatpush.msra.mxu0 %v4186
    %4407 = vmatpush.msra.mxu0 %v4178
    %4408 = vmatpush.msra.mxu0 %v4170
    %4409 = vmatpush.msra.mxu0 %v4162
    %4410 = vmatpush.msra.mxu0 %v4154
    %4411 = vmatpush.msra.mxu0 %v4146
    %4412 = vmatpush.msra.mxu0 %v4138
    %4413 = vmatpush.msra.mxu0 %v4130
    %4414 = vmatpush.msra.mxu0 %v4122
    %4415 = vmatpush.msra.mxu0 %v4114
    %4416 = vmatpush.msra.mxu0 %v4106
    %4417 = vmatmul.f32.gmra.mxu0 %v4103
    %v4418 = vpop.f32.mrf.mxu0
    %v4419 = vadd.f32 0.0, %v4418
    %4420 = vdwg.mxu0
    %4421 = vmatpush.msra.mxu0 %v4354
    %4422 = vmatpush.msra.mxu0 %v4346
    %4423 = vmatpush.msra.mxu0 %v4338
    %4424 = vmatpush.msra.mxu0 %v4330
    %4425 = vmatpush.msra.mxu0 %v4322
    %4426 = vmatpush.msra.mxu0 %v4314
    %4427 = vmatpush.msra.mxu0 %v4306
    %4428 = vmatpush.msra.mxu0 %v4298
    %4429 = vmatpush.msra.mxu0 %v4290
    %4430 = vmatpush.msra.mxu0 %v4282
    %4431 = vmatpush.msra.mxu0 %v4274
    %4432 = vmatpush.msra.mxu0 %v4266
    %4433 = vmatpush.msra.mxu0 %v4258
    %4434 = vmatpush.msra.mxu0 %v4250
    %4435 = vmatpush.msra.mxu0 %v4242
    %4436 = vmatpush.msra.mxu0 %v4234
    %4437 = vmatmul.f32.gmra.mxu0 %v4104
    %v4438 = vpop.f32.mrf.mxu0
    %v4439 = vadd.f32 %v4419, %v4438
    %4440 = vdwg.mxu0
    %4441 = vmatpush.msra.mxu0 %v4227
    %4442 = vmatpush.msra.mxu0 %v4219
    %4443 = vmatpush.msra.mxu0 %v4211
    %4444 = vmatpush.msra.mxu0 %v4203
    %4445 = vmatpush.msra.mxu0 %v4195
    %4446 = vmatpush.msra.mxu0 %v4187
    %4447 = vmatpush.msra.mxu0 %v4179
    %4448 = vmatpush.msra.mxu0 %v4171
    %4449 = vmatpush.msra.mxu0 %v4163
    %4450 = vmatpush.msra.mxu0 %v4155
    %4451 = vmatpush.msra.mxu0 %v4147
    %4452 = vmatpush.msra.mxu0 %v4139
    %4453 = vmatpush.msra.mxu0 %v4131
    %4454 = vmatpush.msra.mxu0 %v4123
    %4455 = vmatpush.msra.mxu0 %v4115
    %4456 = vmatpush.msra.mxu0 %v4107
    %4457 = vmatmul.f32.gmra.mxu0 %v4103
    %v4458 = vpop.f32.mrf.mxu0
    %v4459 = vadd.f32 0.0, %v4458
    %4460 = vdwg.mxu0
    %4461 = vmatpush.msra.mxu0 %v4355
    %4462 = vmatpush.msra.mxu0 %v4347
    %4463 = vmatpush.msra.mxu0 %v4339
    %4464 = vmatpush.msra.mxu0 %v4331
    %4465 = vmatpush.msra.mxu0 %v4323
    %4466 = vmatpush.msra.mxu0 %v4315
    %4467 = vmatpush.msra.mxu0 %v4307
    %4468 = vmatpush.msra.mxu0 %v4299
    %4469 = vmatpush.msra.mxu0 %v4291
    %4470 = vmatpush.msra.mxu0 %v4283
    %4471 = vmatpush.msra.mxu0 %v4275
    %4472 = vmatpush.msra.mxu0 %v4267
    %4473 = vmatpush.msra.mxu0 %v4259
    %4474 = vmatpush.msra.mxu0 %v4251
    %4475 = vmatpush.msra.mxu0 %v4243
    %4476 = vmatpush.msra.mxu0 %v4235
    %4477 = vmatmul.f32.gmra.mxu0 %v4104
    %v4478 = vpop.f32.mrf.mxu0
    %v4479 = vadd.f32 %v4459, %v4478
    %4480 = vdwg.mxu0
    %4481 = vmatpush.msra.mxu0 %v4228
    %4482 = vmatpush.msra.mxu0 %v4220
    %4483 = vmatpush.msra.mxu0 %v4212
    %4484 = vmatpush.msra.mxu0 %v4204
    %4485 = vmatpush.msra.mxu0 %v4196
    %4486 = vmatpush.msra.mxu0 %v4188
    %4487 = vmatpush.msra.mxu0 %v4180
    %4488 = vmatpush.msra.mxu0 %v4172
    %4489 = vmatpush.msra.mxu0 %v4164
    %4490 = vmatpush.msra.mxu0 %v4156
    %4491 = vmatpush.msra.mxu0 %v4148
    %4492 = vmatpush.msra.mxu0 %v4140
    %4493 = vmatpush.msra.mxu0 %v4132
    %4494 = vmatpush.msra.mxu0 %v4124
    %4495 = vmatpush.msra.mxu0 %v4116
    %4496 = vmatpush.msra.mxu0 %v4108
    %4497 = vmatmul.f32.gmra.mxu0 %v4103
    %v4498 = vpop.f32.mrf.mxu0
    %v4499 = vadd.f32 0.0, %v4498
    %4500 = vdwg.mxu0
    %4501 = vmatpush.msra.mxu0 %v4356
    %4502 = vmatpush.msra.mxu0 %v4348
    %4503 = vmatpush.msra.mxu0 %v4340
    %4504 = vmatpush.msra.mxu0 %v4332
    %4505 = vmatpush.msra.mxu0 %v4324
    %4506 = vmatpush.msra.mxu0 %v4316
    %4507 = vmatpush.msra.mxu0 %v4308
    %4508 = vmatpush.msra.mxu0 %v4300
    %4509 = vmatpush.msra.mxu0 %v4292
    %4510 = vmatpush.msra.mxu0 %v4284
    %4511 = vmatpush.msra.mxu0 %v4276
    %4512 = vmatpush.msra.mxu0 %v4268
    %4513 = vmatpush.msra.mxu0 %v4260
    %4514 = vmatpush.msra.mxu0 %v4252
    %4515 = vmatpush.msra.mxu0 %v4244
    %4516 = vmatpush.msra.mxu0 %v4236
    %4517 = vmatmul.f32.gmra.mxu0 %v4104
    %v4518 = vpop.f32.mrf.mxu0
    %v4519 = vadd.f32 %v4499, %v4518
    %4520 = vdwg.mxu0
    %4521 = vmatpush.msra.mxu0 %v4229
    %4522 = vmatpush.msra.mxu0 %v4221
    %4523 = vmatpush.msra.mxu0 %v4213
    %4524 = vmatpush.msra.mxu0 %v4205
    %4525 = vmatpush.msra.mxu0 %v4197
    %4526 = vmatpush.msra.mxu0 %v4189
    %4527 = vmatpush.msra.mxu0 %v4181
    %4528 = vmatpush.msra.mxu0 %v4173
    %4529 = vmatpush.msra.mxu0 %v4165
    %4530 = vmatpush.msra.mxu0 %v4157
    %4531 = vmatpush.msra.mxu0 %v4149
    %4532 = vmatpush.msra.mxu0 %v4141
    %4533 = vmatpush.msra.mxu0 %v4133
    %4534 = vmatpush.msra.mxu0 %v4125
    %4535 = vmatpush.msra.mxu0 %v4117
    %4536 = vmatpush.msra.mxu0 %v4109
    %4537 = vmatmul.f32.gmra.mxu0 %v4103
    %v4538 = vpop.f32.mrf.mxu0
    %v4539 = vadd.f32 0.0, %v4538
    %4540 = vdwg.mxu0
    %4541 = vmatpush.msra.mxu0 %v4357
    %4542 = vmatpush.msra.mxu0 %v4349
    %4543 = vmatpush.msra.mxu0 %v4341
    %4544 = vmatpush.msra.mxu0 %v4333
    %4545 = vmatpush.msra.mxu0 %v4325
    %4546 = vmatpush.msra.mxu0 %v4317
    %4547 = vmatpush.msra.mxu0 %v4309
    %4548 = vmatpush.msra.mxu0 %v4301
    %4549 = vmatpush.msra.mxu0 %v4293
    %4550 = vmatpush.msra.mxu0 %v4285
    %4551 = vmatpush.msra.mxu0 %v4277
    %4552 = vmatpush.msra.mxu0 %v4269
    %4553 = vmatpush.msra.mxu0 %v4261
    %4554 = vmatpush.msra.mxu0 %v4253
    %4555 = vmatpush.msra.mxu0 %v4245
    %4556 = vmatpush.msra.mxu0 %v4237
    %4557 = vmatmul.f32.gmra.mxu0 %v4104
    %v4558 = vpop.f32.mrf.mxu0
    %v4559 = vadd.f32 %v4539, %v4558
    %4560 = vdwg.mxu0
    %4561 = vmatpush.msra.mxu0 %v4230
    %4562 = vmatpush.msra.mxu0 %v4222
    %4563 = vmatpush.msra.mxu0 %v4214
    %4564 = vmatpush.msra.mxu0 %v4206
    %4565 = vmatpush.msra.mxu0 %v4198
    %4566 = vmatpush.msra.mxu0 %v4190
    %4567 = vmatpush.msra.mxu0 %v4182
    %4568 = vmatpush.msra.mxu0 %v4174
    %4569 = vmatpush.msra.mxu0 %v4166
    %4570 = vmatpush.msra.mxu0 %v4158
    %4571 = vmatpush.msra.mxu0 %v4150
    %4572 = vmatpush.msra.mxu0 %v4142
    %4573 = vmatpush.msra.mxu0 %v4134
    %4574 = vmatpush.msra.mxu0 %v4126
    %4575 = vmatpush.msra.mxu0 %v4118
    %4576 = vmatpush.msra.mxu0 %v4110
    %4577 = vmatmul.f32.gmra.mxu0 %v4103
    %v4578 = vpop.f32.mrf.mxu0
    %v4579 = vadd.f32 0.0, %v4578
    %4580 = vdwg.mxu0
    %4581 = vmatpush.msra.mxu0 %v4358
    %4582 = vmatpush.msra.mxu0 %v4350
    %4583 = vmatpush.msra.mxu0 %v4342
    %4584 = vmatpush.msra.mxu0 %v4334
    %4585 = vmatpush.msra.mxu0 %v4326
    %4586 = vmatpush.msra.mxu0 %v4318
    %4587 = vmatpush.msra.mxu0 %v4310
    %4588 = vmatpush.msra.mxu0 %v4302
    %4589 = vmatpush.msra.mxu0 %v4294
    %4590 = vmatpush.msra.mxu0 %v4286
    %4591 = vmatpush.msra.mxu0 %v4278
    %4592 = vmatpush.msra.mxu0 %v4270
    %4593 = vmatpush.msra.mxu0 %v4262
    %4594 = vmatpush.msra.mxu0 %v4254
    %4595 = vmatpush.msra.mxu0 %v4246
    %4596 = vmatpush.msra.mxu0 %v4238
    %4597 = vmatmul.f32.gmra.mxu0 %v4104
    %v4598 = vpop.f32.mrf.mxu0
    %v4599 = vadd.f32 %v4579, %v4598
    %4600 = vdwg.mxu0
    %4601 = vmatpush.msra.mxu0 %v4231
    %4602 = vmatpush.msra.mxu0 %v4223
    %4603 = vmatpush.msra.mxu0 %v4215
    %4604 = vmatpush.msra.mxu0 %v4207
    %4605 = vmatpush.msra.mxu0 %v4199
    %4606 = vmatpush.msra.mxu0 %v4191
    %4607 = vmatpush.msra.mxu0 %v4183
    %4608 = vmatpush.msra.mxu0 %v4175
    %4609 = vmatpush.msra.mxu0 %v4167
    %4610 = vmatpush.msra.mxu0 %v4159
    %4611 = vmatpush.msra.mxu0 %v4151
    %4612 = vmatpush.msra.mxu0 %v4143
    %4613 = vmatpush.msra.mxu0 %v4135
    %4614 = vmatpush.msra.mxu0 %v4127
    %4615 = vmatpush.msra.mxu0 %v4119
    %4616 = vmatpush.msra.mxu0 %v4111
    %4617 = vmatmul.f32.gmra.mxu0 %v4103
    %v4618 = vpop.f32.mrf.mxu0
    %v4619 = vadd.f32 0.0, %v4618
    %4620 = vdwg.mxu0
    %4621 = vmatpush.msra.mxu0 %v4359
    %4622 = vmatpush.msra.mxu0 %v4351
    %4623 = vmatpush.msra.mxu0 %v4343
    %4624 = vmatpush.msra.mxu0 %v4335
    %4625 = vmatpush.msra.mxu0 %v4327
    %4626 = vmatpush.msra.mxu0 %v4319
    %4627 = vmatpush.msra.mxu0 %v4311
    %4628 = vmatpush.msra.mxu0 %v4303
    %4629 = vmatpush.msra.mxu0 %v4295
    %4630 = vmatpush.msra.mxu0 %v4287
    %4631 = vmatpush.msra.mxu0 %v4279
    %4632 = vmatpush.msra.mxu0 %v4271
    %4633 = vmatpush.msra.mxu0 %v4263
    %4634 = vmatpush.msra.mxu0 %v4255
    %4635 = vmatpush.msra.mxu0 %v4247
    %4636 = vmatpush.msra.mxu0 %v4239
    %4637 = vmatmul.f32.gmra.mxu0 %v4104
    %v4638 = vpop.f32.mrf.mxu0
    %v4639 = vadd.f32 %v4619, %v4638
    %4640 = vdwg.mxu0
    %4641 = vmatpush.msra.mxu0 %v4232
    %4642 = vmatpush.msra.mxu0 %v4224
    %4643 = vmatpush.msra.mxu0 %v4216
    %4644 = vmatpush.msra.mxu0 %v4208
    %4645 = vmatpush.msra.mxu0 %v4200
    %4646 = vmatpush.msra.mxu0 %v4192
    %4647 = vmatpush.msra.mxu0 %v4184
    %4648 = vmatpush.msra.mxu0 %v4176
    %4649 = vmatpush.msra.mxu0 %v4168
    %4650 = vmatpush.msra.mxu0 %v4160
    %4651 = vmatpush.msra.mxu0 %v4152
    %4652 = vmatpush.msra.mxu0 %v4144
    %4653 = vmatpush.msra.mxu0 %v4136
    %4654 = vmatpush.msra.mxu0 %v4128
    %4655 = vmatpush.msra.mxu0 %v4120
    %4656 = vmatpush.msra.mxu0 %v4112
    %4657 = vmatmul.f32.gmra.mxu0 %v4103
    %v4658 = vpop.f32.mrf.mxu0
    %v4659 = vadd.f32 0.0, %v4658
    %4660 = vdwg.mxu0
    %4661 = vmatpush.msra.mxu0 %v4360
    %4662 = vmatpush.msra.mxu0 %v4352
    %4663 = vmatpush.msra.mxu0 %v4344
    %4664 = vmatpush.msra.mxu0 %v4336
    %4665 = vmatpush.msra.mxu0 %v4328
    %4666 = vmatpush.msra.mxu0 %v4320
    %4667 = vmatpush.msra.mxu0 %v4312
    %4668 = vmatpush.msra.mxu0 %v4304
    %4669 = vmatpush.msra.mxu0 %v4296
    %4670 = vmatpush.msra.mxu0 %v4288
    %4671 = vmatpush.msra.mxu0 %v4280
    %4672 = vmatpush.msra.mxu0 %v4272
    %4673 = vmatpush.msra.mxu0 %v4264
    %4674 = vmatpush.msra.mxu0 %v4256
    %4675 = vmatpush.msra.mxu0 %v4248
    %4676 = vmatpush.msra.mxu0 %v4240
    %4677 = vmatmul.f32.gmra.mxu0 %v4104
    %v4678 = vpop.f32.mrf.mxu0
    %v4679 = vadd.f32 %v4659, %v4678
    %4680 = vdwg.mxu0
    %v4681 = vadd.f32 %v4559, %v285
    %v4682 = vadd.f32 %v4599, %v286
    %v4683 = vadd.f32 %v4639, %v287
    %v4684 = vadd.f32 %v4679, %v288
    %v4685 = vmul.f32 %v4681, 0.5
    %v4686 = vtanh.pop %v4685
    %v4687 = vmul.f32 %v4686, 0.5
    %v4688 = vadd.f32 %v4687, 0.5
    %v4689 = vmul.f32 %v4682, 0.5
    %v4690 = vtanh.pop %v4689
    %v4691 = vmul.f32 %v4690, 0.5
    %v4692 = vadd.f32 %v4691, 0.5
    %v4693 = vtanh.pop %v4683
    %v4694 = vmul.f32 %v4684, 0.5
    %v4695 = vtanh.pop %v4694
    %v4696 = vmul.f32 %v4695, 0.5
    %v4697 = vadd.f32 %v4696, 0.5
    %v4698 = vmul.f32 %v4692, %v4069
    %v4699 = vmul.f32 %v4688, %v4693
    %v4700 = vadd.f32 %v4698, %v4699
    %v4701 = vtanh.pop %v4700
    %v4702 = vmul.f32 %v4697, %v4701
    %s4703 = smul.u32 7, 4
    %s4704 = smul.addr %s4703, 8
    %s4705 = scalar_lea.vmem [#allocation2], %s4704
    %v4706 = vld [vmem:[%s4705] sm:$0xff]
    %v4707 = vld [vmem:[%s4705 + $0x8] sm:$0xff]
    %v4708 = vld [vmem:[%s4705 + $0x10] sm:$0xff]
    %v4709 = vld [vmem:[%s4705 + $0x18] sm:$0xff]
    %v4710 = vadd.f32 %v4706, %v4399
    %v4711 = vadd.f32 %v4707, %v4439
    %v4712 = vadd.f32 %v4708, %v4479
    %v4713 = vadd.f32 %v4709, %v4519
    %v4714 = vmul.f32 %v4710, 0.5
    %v4715 = vtanh.pop %v4714
    %v4716 = vmul.f32 %v4715, 0.5
    %v4717 = vadd.f32 %v4716, 0.5
    %v4718 = vmul.f32 %v4711, 0.5
    %v4719 = vtanh.pop %v4718
    %v4720 = vmul.f32 %v4719, 0.5
    %v4721 = vadd.f32 %v4720, 0.5
    %v4722 = vtanh.pop %v4712
    %v4723 = vmul.f32 %v4713, 0.5
    %v4724 = vtanh.pop %v4723
    %v4725 = vmul.f32 %v4724, 0.5
    %v4726 = vadd.f32 %v4725, 0.5
    %v4727 = vmul.f32 %v4721, %v4098
    %v4728 = vmul.f32 %v4717, %v4722
    %v4729 = vadd.f32 %v4727, %v4728
    %v4730 = vtanh.pop %v4729
    %v4731 = vmul.f32 %v4726, %v4730
    %4732 = vst [vmem:[#allocation3] sm:$0xff] %v4731
    %4733 = vst [vmem:[#allocation3 + $0x8] sm:$0xff] %v4702
    %v4734 = vld [vmem:[#allocation3] sm:$0xff]
    %v4735 = vld [vmem:[#allocation3 + $0x8] sm:$0xff]
    %v4736 = vld [vmem:[#allocation4 + $0x20] sm:$0xff]
    %v4737 = vld [vmem:[#allocation4 + $0x28] sm:$0xff]
    %v4738 = vld [vmem:[#allocation4 + $0x30] sm:$0xff]
    %v4739 = vld [vmem:[#allocation4 + $0x38] sm:$0xff]
    %v4740 = vld [vmem:[#allocation4 + $0x60] sm:$0xff]
    %v4741 = vld [vmem:[#allocation4 + $0x68] sm:$0xff]
    %v4742 = vld [vmem:[#allocation4 + $0x70] sm:$0xff]
    %v4743 = vld [vmem:[#allocation4 + $0x78] sm:$0xff]
    %v4744 = vld [vmem:[#allocation4 + $0xa0] sm:$0xff]
    %v4745 = vld [vmem:[#allocation4 + $0xa8] sm:$0xff]
    %v4746 = vld [vmem:[#allocation4 + $0xb0] sm:$0xff]
    %v4747 = vld [vmem:[#allocation4 + $0xb8] sm:$0xff]
    %v4748 = vld [vmem:[#allocation4 + $0xe0] sm:$0xff]
    %v4749 = vld [vmem:[#allocation4 + $0xe8] sm:$0xff]
    %v4750 = vld [vmem:[#allocation4 + $0xf0] sm:$0xff]
    %v4751 = vld [vmem:[#allocation4 + $0xf8] sm:$0xff]
    %v4752 = vld [vmem:[#allocation4 + $0x120] sm:$0xff]
    %v4753 = vld [vmem:[#allocation4 + $0x128] sm:$0xff]
    %v4754 = vld [vmem:[#allocation4 + $0x130] sm:$0xff]
    %v4755 = vld [vmem:[#allocation4 + $0x138] sm:$0xff]
    %v4756 = vld [vmem:[#allocation4 + $0x160] sm:$0xff]
    %v4757 = vld [vmem:[#allocation4 + $0x168] sm:$0xff]
    %v4758 = vld [vmem:[#allocation4 + $0x170] sm:$0xff]
    %v4759 = vld [vmem:[#allocation4 + $0x178] sm:$0xff]
    %v4760 = vld [vmem:[#allocation4 + $0x1a0] sm:$0xff]
    %v4761 = vld [vmem:[#allocation4 + $0x1a8] sm:$0xff]
    %v4762 = vld [vmem:[#allocation4 + $0x1b0] sm:$0xff]
    %v4763 = vld [vmem:[#allocation4 + $0x1b8] sm:$0xff]
    %v4764 = vld [vmem:[#allocation4 + $0x1e0] sm:$0xff]
    %v4765 = vld [vmem:[#allocation4 + $0x1e8] sm:$0xff]
    %v4766 = vld [vmem:[#allocation4 + $0x1f0] sm:$0xff]
    %v4767 = vld [vmem:[#allocation4 + $0x1f8] sm:$0xff]
    %v4768 = vld [vmem:[#allocation4 + $0x220] sm:$0xff]
    %v4769 = vld [vmem:[#allocation4 + $0x228] sm:$0xff]
    %v4770 = vld [vmem:[#allocation4 + $0x230] sm:$0xff]
    %v4771 = vld [vmem:[#allocation4 + $0x238] sm:$0xff]
    %v4772 = vld [vmem:[#allocation4 + $0x260] sm:$0xff]
    %v4773 = vld [vmem:[#allocation4 + $0x268] sm:$0xff]
    %v4774 = vld [vmem:[#allocation4 + $0x270] sm:$0xff]
    %v4775 = vld [vmem:[#allocation4 + $0x278] sm:$0xff]
    %v4776 = vld [vmem:[#allocation4 + $0x2a0] sm:$0xff]
    %v4777 = vld [vmem:[#allocation4 + $0x2a8] sm:$0xff]
    %v4778 = vld [vmem:[#allocation4 + $0x2b0] sm:$0xff]
    %v4779 = vld [vmem:[#allocation4 + $0x2b8] sm:$0xff]
    %v4780 = vld [vmem:[#allocation4 + $0x2e0] sm:$0xff]
    %v4781 = vld [vmem:[#allocation4 + $0x2e8] sm:$0xff]
    %v4782 = vld [vmem:[#allocation4 + $0x2f0] sm:$0xff]
    %v4783 = vld [vmem:[#allocation4 + $0x2f8] sm:$0xff]
    %v4784 = vld [vmem:[#allocation4 + $0x320] sm:$0xff]
    %v4785 = vld [vmem:[#allocation4 + $0x328] sm:$0xff]
    %v4786 = vld [vmem:[#allocation4 + $0x330] sm:$0xff]
    %v4787 = vld [vmem:[#allocation4 + $0x338] sm:$0xff]
    %v4788 = vld [vmem:[#allocation4 + $0x360] sm:$0xff]
    %v4789 = vld [vmem:[#allocation4 + $0x368] sm:$0xff]
    %v4790 = vld [vmem:[#allocation4 + $0x370] sm:$0xff]
    %v4791 = vld [vmem:[#allocation4 + $0x378] sm:$0xff]
    %v4792 = vld [vmem:[#allocation4 + $0x3a0] sm:$0xff]
    %v4793 = vld [vmem:[#allocation4 + $0x3a8] sm:$0xff]
    %v4794 = vld [vmem:[#allocation4 + $0x3b0] sm:$0xff]
    %v4795 = vld [vmem:[#allocation4 + $0x3b8] sm:$0xff]
    %v4796 = vld [vmem:[#allocation4 + $0x3e0] sm:$0xff]
    %v4797 = vld [vmem:[#allocation4 + $0x3e8] sm:$0xff]
    %v4798 = vld [vmem:[#allocation4 + $0x3f0] sm:$0xff]
    %v4799 = vld [vmem:[#allocation4 + $0x3f8] sm:$0xff]
    %v4800 = vld [vmem:[#allocation4 + $0x420] sm:$0xff]
    %v4801 = vld [vmem:[#allocation4 + $0x428] sm:$0xff]
    %v4802 = vld [vmem:[#allocation4 + $0x430] sm:$0xff]
    %v4803 = vld [vmem:[#allocation4 + $0x438] sm:$0xff]
    %v4804 = vld [vmem:[#allocation4 + $0x460] sm:$0xff]
    %v4805 = vld [vmem:[#allocation4 + $0x468] sm:$0xff]
    %v4806 = vld [vmem:[#allocation4 + $0x470] sm:$0xff]
    %v4807 = vld [vmem:[#allocation4 + $0x478] sm:$0xff]
    %v4808 = vld [vmem:[#allocation4 + $0x4a0] sm:$0xff]
    %v4809 = vld [vmem:[#allocation4 + $0x4a8] sm:$0xff]
    %v4810 = vld [vmem:[#allocation4 + $0x4b0] sm:$0xff]
    %v4811 = vld [vmem:[#allocation4 + $0x4b8] sm:$0xff]
    %v4812 = vld [vmem:[#allocation4 + $0x4e0] sm:$0xff]
    %v4813 = vld [vmem:[#allocation4 + $0x4e8] sm:$0xff]
    %v4814 = vld [vmem:[#allocation4 + $0x4f0] sm:$0xff]
    %v4815 = vld [vmem:[#allocation4 + $0x4f8] sm:$0xff]
    %v4816 = vld [vmem:[#allocation4 + $0x520] sm:$0xff]
    %v4817 = vld [vmem:[#allocation4 + $0x528] sm:$0xff]
    %v4818 = vld [vmem:[#allocation4 + $0x530] sm:$0xff]
    %v4819 = vld [vmem:[#allocation4 + $0x538] sm:$0xff]
    %v4820 = vld [vmem:[#allocation4 + $0x560] sm:$0xff]
    %v4821 = vld [vmem:[#allocation4 + $0x568] sm:$0xff]
    %v4822 = vld [vmem:[#allocation4 + $0x570] sm:$0xff]
    %v4823 = vld [vmem:[#allocation4 + $0x578] sm:$0xff]
    %v4824 = vld [vmem:[#allocation4 + $0x5a0] sm:$0xff]
    %v4825 = vld [vmem:[#allocation4 + $0x5a8] sm:$0xff]
    %v4826 = vld [vmem:[#allocation4 + $0x5b0] sm:$0xff]
    %v4827 = vld [vmem:[#allocation4 + $0x5b8] sm:$0xff]
    %v4828 = vld [vmem:[#allocation4 + $0x5e0] sm:$0xff]
    %v4829 = vld [vmem:[#allocation4 + $0x5e8] sm:$0xff]
    %v4830 = vld [vmem:[#allocation4 + $0x5f0] sm:$0xff]
    %v4831 = vld [vmem:[#allocation4 + $0x5f8] sm:$0xff]
    %v4832 = vld [vmem:[#allocation4 + $0x620] sm:$0xff]
    %v4833 = vld [vmem:[#allocation4 + $0x628] sm:$0xff]
    %v4834 = vld [vmem:[#allocation4 + $0x630] sm:$0xff]
    %v4835 = vld [vmem:[#allocation4 + $0x638] sm:$0xff]
    %v4836 = vld [vmem:[#allocation4 + $0x660] sm:$0xff]
    %v4837 = vld [vmem:[#allocation4 + $0x668] sm:$0xff]
    %v4838 = vld [vmem:[#allocation4 + $0x670] sm:$0xff]
    %v4839 = vld [vmem:[#allocation4 + $0x678] sm:$0xff]
    %v4840 = vld [vmem:[#allocation4 + $0x6a0] sm:$0xff]
    %v4841 = vld [vmem:[#allocation4 + $0x6a8] sm:$0xff]
    %v4842 = vld [vmem:[#allocation4 + $0x6b0] sm:$0xff]
    %v4843 = vld [vmem:[#allocation4 + $0x6b8] sm:$0xff]
    %v4844 = vld [vmem:[#allocation4 + $0x6e0] sm:$0xff]
    %v4845 = vld [vmem:[#allocation4 + $0x6e8] sm:$0xff]
    %v4846 = vld [vmem:[#allocation4 + $0x6f0] sm:$0xff]
    %v4847 = vld [vmem:[#allocation4 + $0x6f8] sm:$0xff]
    %v4848 = vld [vmem:[#allocation4 + $0x720] sm:$0xff]
    %v4849 = vld [vmem:[#allocation4 + $0x728] sm:$0xff]
    %v4850 = vld [vmem:[#allocation4 + $0x730] sm:$0xff]
    %v4851 = vld [vmem:[#allocation4 + $0x738] sm:$0xff]
    %v4852 = vld [vmem:[#allocation4 + $0x760] sm:$0xff]
    %v4853 = vld [vmem:[#allocation4 + $0x768] sm:$0xff]
    %v4854 = vld [vmem:[#allocation4 + $0x770] sm:$0xff]
    %v4855 = vld [vmem:[#allocation4 + $0x778] sm:$0xff]
    %v4856 = vld [vmem:[#allocation4 + $0x7a0] sm:$0xff]
    %v4857 = vld [vmem:[#allocation4 + $0x7a8] sm:$0xff]
    %v4858 = vld [vmem:[#allocation4 + $0x7b0] sm:$0xff]
    %v4859 = vld [vmem:[#allocation4 + $0x7b8] sm:$0xff]
    %v4860 = vld [vmem:[#allocation4 + $0x7e0] sm:$0xff]
    %v4861 = vld [vmem:[#allocation4 + $0x7e8] sm:$0xff]
    %v4862 = vld [vmem:[#allocation4 + $0x7f0] sm:$0xff]
    %v4863 = vld [vmem:[#allocation4 + $0x7f8] sm:$0xff]
    %4864 = vmatpush.msra.mxu0 %v4796
    %4865 = vmatpush.msra.mxu0 %v4792
    %4866 = vmatpush.msra.mxu0 %v4788
    %4867 = vmatpush.msra.mxu0 %v4784
    %4868 = vmatpush.msra.mxu0 %v4780
    %4869 = vmatpush.msra.mxu0 %v4776
    %4870 = vmatpush.msra.mxu0 %v4772
    %4871 = vmatpush.msra.mxu0 %v4768
    %4872 = vmatpush.msra.mxu0 %v4764
    %4873 = vmatpush.msra.mxu0 %v4760
    %4874 = vmatpush.msra.mxu0 %v4756
    %4875 = vmatpush.msra.mxu0 %v4752
    %4876 = vmatpush.msra.mxu0 %v4748
    %4877 = vmatpush.msra.mxu0 %v4744
    %4878 = vmatpush.msra.mxu0 %v4740
    %4879 = vmatpush.msra.mxu0 %v4736
    %4880 = vmatmul.f32.gmra.mxu0 %v4734
    %v4881 = vpop.f32.mrf.mxu0
    %v4882 = vadd.f32 0.0, %v4881
    %4883 = vdwg.mxu0
    %4884 = vmatpush.msra.mxu0 %v4860
    %4885 = vmatpush.msra.mxu0 %v4856
    %4886 = vmatpush.msra.mxu0 %v4852
    %4887 = vmatpush.msra.mxu0 %v4848
    %4888 = vmatpush.msra.mxu0 %v4844
    %4889 = vmatpush.msra.mxu0 %v4840
    %4890 = vmatpush.msra.mxu0 %v4836
    %4891 = vmatpush.msra.mxu0 %v4832
    %4892 = vmatpush.msra.mxu0 %v4828
    %4893 = vmatpush.msra.mxu0 %v4824
    %4894 = vmatpush.msra.mxu0 %v4820
    %4895 = vmatpush.msra.mxu0 %v4816
    %4896 = vmatpush.msra.mxu0 %v4812
    %4897 = vmatpush.msra.mxu0 %v4808
    %4898 = vmatpush.msra.mxu0 %v4804
    %4899 = vmatpush.msra.mxu0 %v4800
    %4900 = vmatmul.f32.gmra.mxu0 %v4735
    %v4901 = vpop.f32.mrf.mxu0
    %v4902 = vadd.f32 %v4882, %v4901
    %4903 = vdwg.mxu0
    %4904 = vmatpush.msra.mxu0 %v4797
    %4905 = vmatpush.msra.mxu0 %v4793
    %4906 = vmatpush.msra.mxu0 %v4789
    %4907 = vmatpush.msra.mxu0 %v4785
    %4908 = vmatpush.msra.mxu0 %v4781
    %4909 = vmatpush.msra.mxu0 %v4777
    %4910 = vmatpush.msra.mxu0 %v4773
    %4911 = vmatpush.msra.mxu0 %v4769
    %4912 = vmatpush.msra.mxu0 %v4765
    %4913 = vmatpush.msra.mxu0 %v4761
    %4914 = vmatpush.msra.mxu0 %v4757
    %4915 = vmatpush.msra.mxu0 %v4753
    %4916 = vmatpush.msra.mxu0 %v4749
    %4917 = vmatpush.msra.mxu0 %v4745
    %4918 = vmatpush.msra.mxu0 %v4741
    %4919 = vmatpush.msra.mxu0 %v4737
    %4920 = vmatmul.f32.gmra.mxu0 %v4734
    %v4921 = vpop.f32.mrf.mxu0
    %v4922 = vadd.f32 0.0, %v4921
    %4923 = vdwg.mxu0
    %4924 = vmatpush.msra.mxu0 %v4861
    %4925 = vmatpush.msra.mxu0 %v4857
    %4926 = vmatpush.msra.mxu0 %v4853
    %4927 = vmatpush.msra.mxu0 %v4849
    %4928 = vmatpush.msra.mxu0 %v4845
    %4929 = vmatpush.msra.mxu0 %v4841
    %4930 = vmatpush.msra.mxu0 %v4837
    %4931 = vmatpush.msra.mxu0 %v4833
    %4932 = vmatpush.msra.mxu0 %v4829
    %4933 = vmatpush.msra.mxu0 %v4825
    %4934 = vmatpush.msra.mxu0 %v4821
    %4935 = vmatpush.msra.mxu0 %v4817
    %4936 = vmatpush.msra.mxu0 %v4813
    %4937 = vmatpush.msra.mxu0 %v4809
    %4938 = vmatpush.msra.mxu0 %v4805
    %4939 = vmatpush.msra.mxu0 %v4801
    %4940 = vmatmul.f32.gmra.mxu0 %v4735
    %v4941 = vpop.f32.mrf.mxu0
    %v4942 = vadd.f32 %v4922, %v4941
    %4943 = vdwg.mxu0
    %4944 = vmatpush.msra.mxu0 %v4798
    %4945 = vmatpush.msra.mxu0 %v4794
    %4946 = vmatpush.msra.mxu0 %v4790
    %4947 = vmatpush.msra.mxu0 %v4786
    %4948 = vmatpush.msra.mxu0 %v4782
    %4949 = vmatpush.msra.mxu0 %v4778
    %4950 = vmatpush.msra.mxu0 %v4774
    %4951 = vmatpush.msra.mxu0 %v4770
    %4952 = vmatpush.msra.mxu0 %v4766
    %4953 = vmatpush.msra.mxu0 %v4762
    %4954 = vmatpush.msra.mxu0 %v4758
    %4955 = vmatpush.msra.mxu0 %v4754
    %4956 = vmatpush.msra.mxu0 %v4750
    %4957 = vmatpush.msra.mxu0 %v4746
    %4958 = vmatpush.msra.mxu0 %v4742
    %4959 = vmatpush.msra.mxu0 %v4738
    %4960 = vmatmul.f32.gmra.mxu0 %v4734
    %v4961 = vpop.f32.mrf.mxu0
    %v4962 = vadd.f32 0.0, %v4961
    %4963 = vdwg.mxu0
    %4964 = vmatpush.msra.mxu0 %v4862
    %4965 = vmatpush.msra.mxu0 %v4858
    %4966 = vmatpush.msra.mxu0 %v4854
    %4967 = vmatpush.msra.mxu0 %v4850
    %4968 = vmatpush.msra.mxu0 %v4846
    %4969 = vmatpush.msra.mxu0 %v4842
    %4970 = vmatpush.msra.mxu0 %v4838
    %4971 = vmatpush.msra.mxu0 %v4834
    %4972 = vmatpush.msra.mxu0 %v4830
    %4973 = vmatpush.msra.mxu0 %v4826
    %4974 = vmatpush.msra.mxu0 %v4822
    %4975 = vmatpush.msra.mxu0 %v4818
    %4976 = vmatpush.msra.mxu0 %v4814
    %4977 = vmatpush.msra.mxu0 %v4810
    %4978 = vmatpush.msra.mxu0 %v4806
    %4979 = vmatpush.msra.mxu0 %v4802
    %4980 = vmatmul.f32.gmra.mxu0 %v4735
    %v4981 = vpop.f32.mrf.mxu0
    %v4982 = vadd.f32 %v4962, %v4981
    %4983 = vdwg.mxu0
    %4984 = vmatpush.msra.mxu0 %v4799
    %4985 = vmatpush.msra.mxu0 %v4795
    %4986 = vmatpush.msra.mxu0 %v4791
    %4987 = vmatpush.msra.mxu0 %v4787
    %4988 = vmatpush.msra.mxu0 %v4783
    %4989 = vmatpush.msra.mxu0 %v4779
    %4990 = vmatpush.msra.mxu0 %v4775
    %4991 = vmatpush.msra.mxu0 %v4771
    %4992 = vmatpush.msra.mxu0 %v4767
    %4993 = vmatpush.msra.mxu0 %v4763
    %4994 = vmatpush.msra.mxu0 %v4759
    %4995 = vmatpush.msra.mxu0 %v4755
    %4996 = vmatpush.msra.mxu0 %v4751
    %4997 = vmatpush.msra.mxu0 %v4747
    %4998 = vmatpush.msra.mxu0 %v4743
    %4999 = vmatpush.msra.mxu0 %v4739
    %5000 = vmatmul.f32.gmra.mxu0 %v4734
    %v5001 = vpop.f32.mrf.mxu0
    %v5002 = vadd.f32 0.0, %v5001
    %5003 = vdwg.mxu0
    %5004 = vmatpush.msra.mxu0 %v4863
    %5005 = vmatpush.msra.mxu0 %v4859
    %5006 = vmatpush.msra.mxu0 %v4855
    %5007 = vmatpush.msra.mxu0 %v4851
    %5008 = vmatpush.msra.mxu0 %v4847
    %5009 = vmatpush.msra.mxu0 %v4843
    %5010 = vmatpush.msra.mxu0 %v4839
    %5011 = vmatpush.msra.mxu0 %v4835
    %5012 = vmatpush.msra.mxu0 %v4831
    %5013 = vmatpush.msra.mxu0 %v4827
    %5014 = vmatpush.msra.mxu0 %v4823
    %5015 = vmatpush.msra.mxu0 %v4819
    %5016 = vmatpush.msra.mxu0 %v4815
    %5017 = vmatpush.msra.mxu0 %v4811
    %5018 = vmatpush.msra.mxu0 %v4807
    %5019 = vmatpush.msra.mxu0 %v4803
    %5020 = vmatmul.f32.gmra.mxu0 %v4735
    %v5021 = vpop.f32.mrf.mxu0
    %v5022 = vadd.f32 %v5002, %v5021
    %5023 = vdwg.mxu0
    %v5024 = vadd.f32 %v4902, %v285
    %v5025 = vadd.f32 %v4942, %v286
    %v5026 = vadd.f32 %v4982, %v287
    %v5027 = vadd.f32 %v5022, %v288
    %v5028 = vmul.f32 %v5024, 0.5
    %v5029 = vtanh.pop %v5028
    %v5030 = vmul.f32 %v5029, 0.5
    %v5031 = vadd.f32 %v5030, 0.5
    %v5032 = vmul.f32 %v5025, 0.5
    %v5033 = vtanh.pop %v5032
    %v5034 = vmul.f32 %v5033, 0.5
    %v5035 = vadd.f32 %v5034, 0.5
    %v5036 = vtanh.pop %v5026
    %v5037 = vmul.f32 %v5027, 0.5
    %v5038 = vtanh.pop %v5037
    %v5039 = vmul.f32 %v5038, 0.5
    %v5040 = vadd.f32 %v5039, 0.5
    %v5041 = vmul.f32 %v5035, %v4700
    %v5042 = vmul.f32 %v5031, %v5036
    %v5043 = vadd.f32 %v5041, %v5042
    %v5044 = vtanh.pop %v5043
    %v5045 = vmul.f32 %v5040, %v5044
    %v5046 = vld [vmem:[%s5] sm:$0x3]
    %v5048 = vsel %vm62, %v5046, 0
    %5050 = vmatpush.msra.mxu0 0.0
    %5051 = vmatpush.msra.mxu0 0.0
    %5052 = vmatpush.msra.mxu0 0.0
    %5053 = vmatpush.msra.mxu0 0.0
    %5054 = vmatpush.msra.mxu0 0.0
    %5055 = vmatpush.msra.mxu0 0.0
    %5056 = vmatpush.msra.mxu0 0.0
    %5057 = vmatpush.msra.mxu0 0.0
    %5058 = vmatpush.msra.mxu0 0.0
    %5059 = vmatpush.msra.mxu0 0.0
    %5060 = vmatpush.msra.mxu0 0.0
    %5061 = vmatpush.msra.mxu0 0.0
    %5062 = vmatpush.msra.mxu0 0.0
    %5063 = vmatpush.msra.mxu0 0.0
    %5064 = vmatpush.msra.mxu0 0.0
    %5065 = vmatpush.msra.mxu0 %v5045
    %5066 = vmatmul.f32.gmra.mxu0 %v5048
    %v5067 = vpop.f32.mrf.mxu0
    %v5068 = vadd.f32 0.0, %v5067
    %5069 = vdwg.mxu0
    %5070 = vst [vmem:[#allocation7] sm:$0x3] %v5068
    // Predicated region
    $region30: #{tpu_custom_call.1} parent=1 // pred_check
      _
    $region31: #{tpu_custom_call.1} parent=1 // pred_check_branch
      %5072 = sbr.rel (0) target = $region33
    $region32: #{tpu_custom_call.1} parent=1 // pred_region
      %5074 = vsyncadd [#allocation6], 0
      %s5076 = sshll.u32 [#allocation7], 4
      %s5077 = int_to_ptr.vmem [resolvable:$true] %s5076
      %s5078 = sshll.u32 %s6, 4
      %s5079 = int_to_ptr.hbm [resolvable:$true] %s5078
      %5081 = dma.vmem_to_hbm [thread:$0]  %s5077, 32, %s5079, [#allocation6]
    $region33: #{tpu_custom_call.1} parent=1 // pred_fallthru
      _
    // Predicated region
    $region34: #{tpu_custom_call.1} parent=1 // pred_check
      _
    $region35: #{tpu_custom_call.1} parent=1 // pred_check_branch
      %5083 = sbr.rel (0) target = $region37
    $region36: #{tpu_custom_call.1} parent=1 // pred_region
      %5085 = dma.done [#allocation6], 32
    $region37: #{tpu_custom_call.1} parent=1 // pred_fallthru
      _
    %5086 = vsyncpa [#allocation5], 1
    %5087 = vsyncpa [#allocation6], 1

</llo_original>
